<compile_context>
chip_gen: v6e
topology: v6e:2x2x1
jax: 0.10.0
libtpu: 0.0.40
codegen_flags: <defaults>
</compile_context>

<pallas_src>
import functools

import jax
import jax.numpy as jnp
from jax.experimental import pallas as pl
from jax.experimental.pallas import tpu as pltpu


def _layer_norm(x, gamma, beta, eps=1e-5):
    # x: (rows, M); gamma/beta: (1, M) -- biased variance, like nn.LayerNorm.
    mu = jnp.mean(x, axis=-1, keepdims=True)
    var = jnp.mean((x - mu) ** 2, axis=-1, keepdims=True)
    return (x - mu) * jax.lax.rsqrt(var + eps) * gamma + beta


def encoder_block_kernel(
    x_ref,                       # (K, M)   f32   (batch dim squeezed)
    wqkv_ref, bqkv_ref,          # (M, 3M)  bf16, (1, 3M) f32
    wo_ref, bo_ref,              # (M, M)   bf16, (1, M)  f32
    g1_ref, b1_ref,              # (1, M)   f32
    wf1_ref, bf1_ref,            # (M, F)   bf16, (1, F)  f32
    wf2_ref, bf2_ref,            # (F, M)   bf16, (1, M)  f32
    g2_ref, b2_ref,              # (1, M)   f32
    o_ref,                       # (TQ, M)  f32
    qkv_ref,                     # scratch: (K, 3M) bf16
    *, num_heads, tq,
):
    f32 = jnp.float32
    bf16 = jnp.bfloat16
    K, M = x_ref.shape
    d = M // num_heads
    qt = pl.program_id(1)

    # ---- fused QKV projection for the whole sequence, once per batch ----
    @pl.when(qt == 0)
    def _():
        w = wqkv_ref[...]            # (M, 3M) bf16
        b = bqkv_ref[...]            # (1, 3M) f32  (Q part pre-scaled by 1/sqrt(d))
        for c in range(K // tq):     # chunked to bound the f32 intermediate
            xc = x_ref[c * tq:(c + 1) * tq, :].astype(bf16)
            proj = jnp.dot(xc, w, preferred_element_type=f32) + b
            qkv_ref[c * tq:(c + 1) * tq, :] = proj.astype(bf16)

    q_row = pl.multiple_of(qt * tq, tq)

    # ---- multi-head attention for this query tile (exact softmax over full K) ----
    attn = jnp.zeros((tq, M), f32)
    for h in range(num_heads):
        lo = h * d
        qh = qkv_ref[pl.ds(q_row, tq), lo:lo + d]            # (TQ, d) bf16
        kh = qkv_ref[:, M + lo:M + lo + d]                   # (K, d)  bf16
        vh = qkv_ref[:, 2 * M + lo:2 * M + lo + d]           # (K, d)  bf16
        s = jax.lax.dot_general(qh, kh, (((1,), (1,)), ((), ())),
                                preferred_element_type=f32)  # (TQ, K) f32
        s = s - jnp.max(s, axis=-1, keepdims=True)
        p = jnp.exp(s)
        p = p * pl.reciprocal(jnp.sum(p, axis=-1, keepdims=True), approx=True)
        ctx = jnp.dot(p.astype(bf16), vh, preferred_element_type=f32)       # (TQ, d)
        # per-head output projection, accumulated in f32 (no head relayouts)
        attn = attn + jnp.dot(ctx.astype(bf16), wo_ref[lo:lo + d, :],
                              preferred_element_type=f32)                    # (TQ, M)

    x_tile = x_ref[pl.ds(q_row, tq), :]
    h1 = attn + bo_ref[...] + x_tile                      # dropout -> identity (eval)
    h1n = _layer_norm(h1, g1_ref[...], b1_ref[...])

    # ---- FeedForward: Linear -> ReLU -> Linear ----
    ff = jnp.dot(h1n.astype(bf16), wf1_ref[...],
                 preferred_element_type=f32) + bf1_ref[...]
    ff = jnp.maximum(ff, 0.0)
    ff = jnp.dot(ff.astype(bf16), wf2_ref[...],
                 preferred_element_type=f32) + bf2_ref[...]

    h2 = ff + h1n                                          # dropout -> identity (eval)
    o_ref[...] = _layer_norm(h2, g2_ref[...], b2_ref[...]).astype(o_ref.dtype)


def encoder_block_pallas(x, p, num_heads):
    N, K, M = x.shape
    assert M % num_heads == 0
    tq = 128 if K % 128 == 0 else K
    n_qt = K // tq

    param_list = [
        p["wqkv_t"], p["bqkv"], p["wo_t"], p["bo"],
        p["ln1_g"], p["ln1_b"],
        p["wf1_t"], p["bf1"], p["wf2_t"], p["bf2"],
        p["ln2_g"], p["ln2_b"],
    ]

    # Weights/biases: whole-array VMEM residency -> loaded once, not
    # double-buffered across the grid.
    resident = pl.BlockSpec(memory_space=pltpu.MemorySpace.VMEM)
    in_specs = [pl.BlockSpec((None, K, M), lambda n, q: (n, 0, 0))] + \
               [resident] * len(param_list)
    out_specs = pl.BlockSpec((None, tq, M), lambda n, q: (n, q, 0))

    kernel = functools.partial(encoder_block_kernel, num_heads=num_heads, tq=tq)
    return pl.pallas_call(
        kernel,
        out_shape=jax.ShapeDtypeStruct((N, K, M), x.dtype),
        grid_spec=pltpu.PrefetchScalarGridSpec(
            num_scalar_prefetch=0,
            grid=(N, n_qt),
            in_specs=in_specs,
            out_specs=out_specs,
            scratch_shapes=[pltpu.VMEM((K, 3 * M), jnp.bfloat16)],
        ),
        compiler_params=pltpu.CompilerParams(
            dimension_semantics=("parallel", "arbitrary"),
            vmem_limit_bytes=64 * 1024 * 1024,
        ),
    )(x, *param_list)


def init_block_params(key, emb_dim, ff_dim, num_heads, dtype=jnp.float32):
    head_dim = emb_dim // num_heads
    scale = 1.0 / float(head_dim) ** 0.5
    ks = jax.random.split(key, 12)
    s = 0.1
    # PyTorch layout: Linear / MHA weights are (out_features, in_features).
    wq = jax.random.normal(ks[0], (emb_dim, emb_dim), dtype) * s
    wk = jax.random.normal(ks[1], (emb_dim, emb_dim), dtype) * s
    wv = jax.random.normal(ks[2], (emb_dim, emb_dim), dtype) * s
    wo = jax.random.normal(ks[3], (emb_dim, emb_dim), dtype) * s
    wf1 = jax.random.normal(ks[4], (ff_dim, emb_dim), dtype) * s
    wf2 = jax.random.normal(ks[5], (emb_dim, ff_dim), dtype) * s
    bq = jax.random.normal(ks[6], (1, emb_dim), dtype) * s
    bk = jax.random.normal(ks[7], (1, emb_dim), dtype) * s
    bv = jax.random.normal(ks[8], (1, emb_dim), dtype) * s
    bo = jax.random.normal(ks[9], (1, emb_dim), dtype) * s
    bf1 = jax.random.normal(ks[10], (1, ff_dim), dtype) * s
    bf2 = jax.random.normal(ks[11], (1, emb_dim), dtype) * s

    # Kernel-ready params: transposed to (in, out), QKV fused, 1/sqrt(d)
    # folded into the Q projection, matmul weights cast to bf16.
    bf = jnp.bfloat16
    return {
        "wqkv_t": jnp.concatenate([wq.T * scale, wk.T, wv.T], axis=1).astype(bf),
        "bqkv": jnp.concatenate([bq * scale, bk, bv], axis=1),
        "wo_t": wo.T.astype(bf),
        "bo": bo,
        "ln1_g": jnp.ones((1, emb_dim), dtype),
        "ln1_b": jnp.zeros((1, emb_dim), dtype),
        "wf1_t": wf1.T.astype(bf),
        "bf1": bf1,
        "wf2_t": wf2.T.astype(bf),
        "bf2": bf2,
        "ln2_g": jnp.ones((1, emb_dim), dtype),
        "ln2_b": jnp.zeros((1, emb_dim), dtype),
    }


def encoder_forward(x, layer_params, num_heads):
    out = x
    for p in layer_params:
        out = encoder_block_pallas(out, p, num_heads)
    return out


# ---- pure-JAX reference (mirrors the kernel's bf16 matmul casts) ----
def _ref_block(x, p, num_heads):
    f32, bf16 = jnp.float32, jnp.bfloat16
    N, K, M = x.shape
    d = M // num_heads
    qkv = (jnp.dot(x.astype(bf16), p["wqkv_t"], preferred_element_type=f32)
           + p["bqkv"]).astype(bf16)                       # (N, K, 3M)
    q, k, v = qkv[..., :M], qkv[..., M:2 * M], qkv[..., 2 * M:]
    qh = q.reshape(N, K, num_heads, d)
    kh = k.reshape(N, K, num_heads, d)
    vh = v.reshape(N, K, num_heads, d)
    s = jnp.einsum("nqhd,nkhd->nhqk", qh, kh, preferred_element_type=f32)
    pr = jax.nn.softmax(s, axis=-1)
    ctx = jnp.einsum("nhqk,nkhd->nqhd", pr.astype(bf16), vh,
                     preferred_element_type=f32).reshape(N, K, M)
    attn = jnp.dot(ctx.astype(bf16), p["wo_t"], preferred_element_type=f32) + p["bo"]

    def ln(z, g, b):
        mu = jnp.mean(z, -1, keepdims=True)
        var = jnp.mean((z - mu) ** 2, -1, keepdims=True)
        return (z - mu) * jax.lax.rsqrt(var + 1e-5) * g + b

    h1 = ln(attn + x, p["ln1_g"], p["ln1_b"])
    ff = jnp.dot(h1.astype(bf16), p["wf1_t"], preferred_element_type=f32) + p["bf1"]
    ff = jnp.maximum(ff, 0.0)
    ff = jnp.dot(ff.astype(bf16), p["wf2_t"], preferred_element_type=f32) + p["bf2"]
    return ln(ff + h1, p["ln2_g"], p["ln2_b"])


if __name__ == "__main__":
    # Small but tile-aligned shapes: batch=2, seq=256, emb=256, heads=2 (d=128),
    # ff=512, layers=2.
    N, K, M = 2, 256, 256
    num_heads = 2
    ff_dim = 512
    num_layers = 2

    root = jax.random.PRNGKey(0)
    kx, kp = jax.random.split(root)
    x = jax.random.normal(kx, (N, K, M), jnp.float32)

    layer_keys = jax.random.split(kp, num_layers)
    layer_params = [init_block_params(lk, M, ff_dim, num_heads) for lk in layer_keys]

    y = encoder_forward(x, layer_params, num_heads)
    y = jax.block_until_ready(y)

    # silent sanity check vs pure-JAX reference (bf16 matmuls => loose tol)
    y_ref = x
    for p in layer_params:
        y_ref = _ref_block(y_ref, p, num_heads)
    max_err = jnp.max(jnp.abs(y - y_ref))
    assert jnp.allclose(y, y_ref, atol=3e-2, rtol=3e-2), f"mismatch vs reference: {max_err}"

    print("KERNEL_OK")
</pallas_src>

<mosaic_0001>
module attributes {stable_mosaic.version = 11 : i64} {
  func.func @encoder_block_kernel(%arg0: i32, %arg1: i32, %arg2: memref<1x256x256xf32, #tpu.memory_space<vmem>>, %arg3: memref<256x768xbf16, #tpu.memory_space<vmem>>, %arg4: memref<1x768xf32, #tpu.memory_space<vmem>>, %arg5: memref<256x256xbf16, #tpu.memory_space<vmem>>, %arg6: memref<1x256xf32, #tpu.memory_space<vmem>>, %arg7: memref<1x256xf32, #tpu.memory_space<vmem>>, %arg8: memref<1x256xf32, #tpu.memory_space<vmem>>, %arg9: memref<256x512xbf16, #tpu.memory_space<vmem>>, %arg10: memref<1x512xf32, #tpu.memory_space<vmem>>, %arg11: memref<512x256xbf16, #tpu.memory_space<vmem>>, %arg12: memref<1x256xf32, #tpu.memory_space<vmem>>, %arg13: memref<1x256xf32, #tpu.memory_space<vmem>>, %arg14: memref<1x256xf32, #tpu.memory_space<vmem>>, %arg15: memref<1x128x256xf32, #tpu.memory_space<vmem>>, %arg16: memref<256x768xbf16, #tpu.memory_space<vmem>>) attributes {dimension_semantics = [#tpu.dimension_semantics<parallel>, #tpu.dimension_semantics<arbitrary>], iteration_bounds = array<i64: 2, 2>, scalar_prefetch = 0 : i64, scratch_operands = 1 : i64, tpu.core_type = #tpu.core_type<tc>, window_params = [{transform_indices = @transform_0, window_bounds = array<i64: 1, 256, 256>}, {pipeline_mode = #tpu.pipeline_mode<synchronous>, transform_indices = @transform_1, window_bounds = array<i64: 256, 768>}, {pipeline_mode = #tpu.pipeline_mode<synchronous>, transform_indices = @transform_2, window_bounds = array<i64: 1, 768>}, {pipeline_mode = #tpu.pipeline_mode<synchronous>, transform_indices = @transform_3, window_bounds = array<i64: 256, 256>}, {pipeline_mode = #tpu.pipeline_mode<synchronous>, transform_indices = @transform_4, window_bounds = array<i64: 1, 256>}, {pipeline_mode = #tpu.pipeline_mode<synchronous>, transform_indices = @transform_5, window_bounds = array<i64: 1, 256>}, {pipeline_mode = #tpu.pipeline_mode<synchronous>, transform_indices = @transform_6, window_bounds = array<i64: 1, 256>}, {pipeline_mode = #tpu.pipeline_mode<synchronous>, transform_indices = @transform_7, window_bounds = array<i64: 256, 512>}, {pipeline_mode = #tpu.pipeline_mode<synchronous>, transform_indices = @transform_8, window_bounds = array<i64: 1, 512>}, {pipeline_mode = #tpu.pipeline_mode<synchronous>, transform_indices = @transform_9, window_bounds = array<i64: 512, 256>}, {pipeline_mode = #tpu.pipeline_mode<synchronous>, transform_indices = @transform_10, window_bounds = array<i64: 1, 256>}, {pipeline_mode = #tpu.pipeline_mode<synchronous>, transform_indices = @transform_11, window_bounds = array<i64: 1, 256>}, {pipeline_mode = #tpu.pipeline_mode<synchronous>, transform_indices = @transform_12, window_bounds = array<i64: 1, 256>}, {transform_indices = @transform_13, window_bounds = array<i64: 1, 128, 256>}]} {
    %c0_i32 = arith.constant 0 : i32
    %0 = arith.cmpi eq, %arg1, %c0_i32 : i32
    %1 = arith.extui %0 : i1 to i32
    %c0_i32_0 = arith.constant 0 : i32
    %2 = arith.cmpi ne, %1, %c0_i32_0 : i32
    scf.if %2 {
      %c0_55 = arith.constant 0 : index
      %c0_56 = arith.constant 0 : index
      %121 = vector.load %arg3[%c0_55, %c0_56] : memref<256x768xbf16, #tpu.memory_space<vmem>>, vector<256x768xbf16>
      %c0_57 = arith.constant 0 : index
      %c0_58 = arith.constant 0 : index
      %122 = vector.load %arg4[%c0_57, %c0_58] : memref<1x768xf32, #tpu.memory_space<vmem>>, vector<1x768xf32>
      %c0_59 = arith.constant 0 : index
      %c0_60 = arith.constant 0 : index
      %c0_61 = arith.constant 0 : index
      %123 = vector.load %arg2[%c0_59, %c0_60, %c0_61] : memref<1x256x256xf32, #tpu.memory_space<vmem>>, vector<1x128x256xf32>
      %124 = vector.shape_cast %123 : vector<1x128x256xf32> to vector<128x256xf32>
      %125 = arith.truncf %124 : vector<128x256xf32> to vector<128x256xbf16>
      %cst_62 = arith.constant dense<0.000000e+00> : vector<128x768xf32>
      %126 = tpu.matmul %125, %121, %cst_62 {dimension_numbers = #tpu.dot_dimension_numbers<[1], [0], [0], [1], [0, 0, 1, 1], [], []>} : vector<128x256xbf16>, vector<256x768xbf16>, vector<128x768xf32> -> vector<128x768xf32>
      %127 = vector.broadcast %122 : vector<1x768xf32> to vector<128x768xf32>
      %128 = arith.addf %126, %127 : vector<128x768xf32>
      %129 = arith.truncf %128 : vector<128x768xf32> to vector<128x768xbf16>
      %c0_63 = arith.constant 0 : index
      %c0_64 = arith.constant 0 : index
      %130 = vector.load %arg16[%c0_63, %c0_64] : memref<256x768xbf16, #tpu.memory_space<vmem>>, vector<128x768xbf16>
      tpu.vector_store %arg16[%c0_63, %c0_64], %129 {strides = array<i32>} : memref<256x768xbf16, #tpu.memory_space<vmem>>, vector<128x768xbf16>,
      %c0_65 = arith.constant 0 : index
      %c128_66 = arith.constant 128 : index
      %c0_67 = arith.constant 0 : index
      %131 = vector.load %arg2[%c0_65, %c128_66, %c0_67] : memref<1x256x256xf32, #tpu.memory_space<vmem>>, vector<1x128x256xf32>
      %132 = vector.shape_cast %131 : vector<1x128x256xf32> to vector<128x256xf32>
      %133 = arith.truncf %132 : vector<128x256xf32> to vector<128x256xbf16>
      %cst_68 = arith.constant dense<0.000000e+00> : vector<128x768xf32>
      %134 = tpu.matmul %133, %121, %cst_68 {dimension_numbers = #tpu.dot_dimension_numbers<[1], [0], [0], [1], [0, 0, 1, 1], [], []>} : vector<128x256xbf16>, vector<256x768xbf16>, vector<128x768xf32> -> vector<128x768xf32>
      %135 = vector.broadcast %122 : vector<1x768xf32> to vector<128x768xf32>
      %136 = arith.addf %134, %135 : vector<128x768xf32>
      %137 = arith.truncf %136 : vector<128x768xf32> to vector<128x768xbf16>
      %c128_69 = arith.constant 128 : index
      %c0_70 = arith.constant 0 : index
      %138 = vector.load %arg16[%c128_69, %c0_70] : memref<256x768xbf16, #tpu.memory_space<vmem>>, vector<128x768xbf16>
      tpu.vector_store %arg16[%c128_69, %c0_70], %137 {strides = array<i32>} : memref<256x768xbf16, #tpu.memory_space<vmem>>, vector<128x768xbf16>,
    } else {
    }
    %c128_i32 = arith.constant 128 : i32
    %3 = arith.muli %arg1, %c128_i32 : i32
    %4 = tpu.assume_multiple %3, 128 : i32
    %cst = arith.constant 0.000000e+00 : f32
    %5 = vector.broadcast %cst : f32 to vector<128x256xf32>
    %6 = arith.index_cast %4 : i32 to index
    %c0 = arith.constant 0 : index
    %7 = vector.load %arg16[%6, %c0] : memref<256x768xbf16, #tpu.memory_space<vmem>>, vector<128x128xbf16>
    %c0_1 = arith.constant 0 : index
    %c256 = arith.constant 256 : index
    %8 = vector.load %arg16[%c0_1, %c256] : memref<256x768xbf16, #tpu.memory_space<vmem>>, vector<256x128xbf16>
    %c0_2 = arith.constant 0 : index
    %c512 = arith.constant 512 : index
    %9 = vector.load %arg16[%c0_2, %c512] : memref<256x768xbf16, #tpu.memory_space<vmem>>, vector<256x128xbf16>
    %cst_3 = arith.constant dense<0.000000e+00> : vector<128x256xf32>
    %10 = tpu.matmul %7, %8, %cst_3 {dimension_numbers = #tpu.dot_dimension_numbers<[1], [1], [0], [0], [0, 0, 1, 0], [], []>} : vector<128x128xbf16>, vector<256x128xbf16>, vector<128x256xf32> -> vector<128x256xf32>
    %cst_4 = arith.constant dense<0xFF800000> : vector<128xf32>
    %11 = vector.multi_reduction <maximumf>, %10, %cst_4 [1] : vector<128x256xf32> to vector<128xf32>
    %12 = vector.shape_cast %11 : vector<128xf32> to vector<128x1xf32>
    %13 = vector.broadcast %12 : vector<128x1xf32> to vector<128x256xf32>
    %14 = arith.subf %10, %13 : vector<128x256xf32>
    %15 = math.exp %14 : vector<128x256xf32>
    %cst_5 = arith.constant dense<0.000000e+00> : vector<128xf32>
    %16 = vector.multi_reduction <add>, %15, %cst_5 [1] : vector<128x256xf32> to vector<128xf32>
    %17 = vector.shape_cast %16 : vector<128xf32> to vector<128x1xf32>
    %18 = tpu.reciprocal %17 {approx = true} : vector<128x1xf32> -> vector<128x1xf32>
    %19 = vector.broadcast %18 : vector<128x1xf32> to vector<128x256xf32>
    %20 = arith.mulf %15, %19 : vector<128x256xf32>
    %21 = arith.truncf %20 : vector<128x256xf32> to vector<128x256xbf16>
    %cst_6 = arith.constant dense<0.000000e+00> : vector<128x128xf32>
    %22 = tpu.matmul %21, %9, %cst_6 {dimension_numbers = #tpu.dot_dimension_numbers<[1], [0], [0], [1], [0, 0, 1, 1], [], []>} : vector<128x256xbf16>, vector<256x128xbf16>, vector<128x128xf32> -> vector<128x128xf32>
    %23 = arith.truncf %22 : vector<128x128xf32> to vector<128x128xbf16>
    %c0_7 = arith.constant 0 : index
    %c0_8 = arith.constant 0 : index
    %24 = vector.load %arg5[%c0_7, %c0_8] : memref<256x256xbf16, #tpu.memory_space<vmem>>, vector<128x256xbf16>
    %cst_9 = arith.constant dense<0.000000e+00> : vector<128x256xf32>
    %25 = tpu.matmul %23, %24, %cst_9 {dimension_numbers = #tpu.dot_dimension_numbers<[1], [0], [0], [1], [0, 0, 1, 1], [], []>} : vector<128x128xbf16>, vector<128x256xbf16>, vector<128x256xf32> -> vector<128x256xf32>
    %26 = arith.addf %5, %25 : vector<128x256xf32>
    %27 = arith.index_cast %4 : i32 to index
    %c128 = arith.constant 128 : index
    %28 = vector.load %arg16[%27, %c128] : memref<256x768xbf16, #tpu.memory_space<vmem>>, vector<128x128xbf16>
    %c0_10 = arith.constant 0 : index
    %c384 = arith.constant 384 : index
    %29 = vector.load %arg16[%c0_10, %c384] : memref<256x768xbf16, #tpu.memory_space<vmem>>, vector<256x128xbf16>
    %c0_11 = arith.constant 0 : index
    %c640 = arith.constant 640 : index
    %30 = vector.load %arg16[%c0_11, %c640] : memref<256x768xbf16, #tpu.memory_space<vmem>>, vector<256x128xbf16>
    %cst_12 = arith.constant dense<0.000000e+00> : vector<128x256xf32>
    %31 = tpu.matmul %28, %29, %cst_12 {dimension_numbers = #tpu.dot_dimension_numbers<[1], [1], [0], [0], [0, 0, 1, 0], [], []>} : vector<128x128xbf16>, vector<256x128xbf16>, vector<128x256xf32> -> vector<128x256xf32>
    %cst_13 = arith.constant dense<0xFF800000> : vector<128xf32>
    %32 = vector.multi_reduction <maximumf>, %31, %cst_13 [1] : vector<128x256xf32> to vector<128xf32>
    %33 = vector.shape_cast %32 : vector<128xf32> to vector<128x1xf32>
    %34 = vector.broadcast %33 : vector<128x1xf32> to vector<128x256xf32>
    %35 = arith.subf %31, %34 : vector<128x256xf32>
    %36 = math.exp %35 : vector<128x256xf32>
    %cst_14 = arith.constant dense<0.000000e+00> : vector<128xf32>
    %37 = vector.multi_reduction <add>, %36, %cst_14 [1] : vector<128x256xf32> to vector<128xf32>
    %38 = vector.shape_cast %37 : vector<128xf32> to vector<128x1xf32>
    %39 = tpu.reciprocal %38 {approx = true} : vector<128x1xf32> -> vector<128x1xf32>
    %40 = vector.broadcast %39 : vector<128x1xf32> to vector<128x256xf32>
    %41 = arith.mulf %36, %40 : vector<128x256xf32>
    %42 = arith.truncf %41 : vector<128x256xf32> to vector<128x256xbf16>
    %cst_15 = arith.constant dense<0.000000e+00> : vector<128x128xf32>
    %43 = tpu.matmul %42, %30, %cst_15 {dimension_numbers = #tpu.dot_dimension_numbers<[1], [0], [0], [1], [0, 0, 1, 1], [], []>} : vector<128x256xbf16>, vector<256x128xbf16>, vector<128x128xf32> -> vector<128x128xf32>
    %44 = arith.truncf %43 : vector<128x128xf32> to vector<128x128xbf16>
    %c128_16 = arith.constant 128 : index
    %c0_17 = arith.constant 0 : index
    %45 = vector.load %arg5[%c128_16, %c0_17] : memref<256x256xbf16, #tpu.memory_space<vmem>>, vector<128x256xbf16>
    %cst_18 = arith.constant dense<0.000000e+00> : vector<128x256xf32>
    %46 = tpu.matmul %44, %45, %cst_18 {dimension_numbers = #tpu.dot_dimension_numbers<[1], [0], [0], [1], [0, 0, 1, 1], [], []>} : vector<128x128xbf16>, vector<128x256xbf16>, vector<128x256xf32> -> vector<128x256xf32>
    %47 = arith.addf %26, %46 : vector<128x256xf32>
    %c0_19 = arith.constant 0 : index
    %48 = arith.index_cast %4 : i32 to index
    %c0_20 = arith.constant 0 : index
    %49 = vector.load %arg2[%c0_19, %48, %c0_20] : memref<1x256x256xf32, #tpu.memory_space<vmem>>, vector<1x128x256xf32>
    %50 = vector.shape_cast %49 : vector<1x128x256xf32> to vector<128x256xf32>
    %c0_21 = arith.constant 0 : index
    %c0_22 = arith.constant 0 : index
    %51 = vector.load %arg6[%c0_21, %c0_22] : memref<1x256xf32, #tpu.memory_space<vmem>>, vector<1x256xf32>
    %52 = vector.broadcast %51 : vector<1x256xf32> to vector<128x256xf32>
    %53 = arith.addf %47, %52 : vector<128x256xf32>
    %54 = arith.addf %53, %50 : vector<128x256xf32>
    %c0_23 = arith.constant 0 : index
    %c0_24 = arith.constant 0 : index
    %55 = vector.load %arg7[%c0_23, %c0_24] : memref<1x256xf32, #tpu.memory_space<vmem>>, vector<1x256xf32>
    %c0_25 = arith.constant 0 : index
    %c0_26 = arith.constant 0 : index
    %56 = vector.load %arg8[%c0_25, %c0_26] : memref<1x256xf32, #tpu.memory_space<vmem>>, vector<1x256xf32>
    %cst_27 = arith.constant dense<0.000000e+00> : vector<128xf32>
    %57 = vector.multi_reduction <add>, %54, %cst_27 [1] : vector<128x256xf32> to vector<128xf32>
    %58 = vector.shape_cast %57 : vector<128xf32> to vector<128x1xf32>
    %cst_28 = arith.constant 2.560000e+02 : f32
    %59 = vector.broadcast %cst_28 : f32 to vector<128x1xf32>
    %60 = arith.divf %58, %59 : vector<128x1xf32>
    %61 = vector.broadcast %60 : vector<128x1xf32> to vector<128x256xf32>
    %62 = arith.subf %54, %61 : vector<128x256xf32>
    %63 = arith.mulf %62, %62 : vector<128x256xf32>
    %cst_29 = arith.constant dense<0.000000e+00> : vector<128xf32>
    %64 = vector.multi_reduction <add>, %63, %cst_29 [1] : vector<128x256xf32> to vector<128xf32>
    %65 = vector.shape_cast %64 : vector<128xf32> to vector<128x1xf32>
    %cst_30 = arith.constant 2.560000e+02 : f32
    %66 = vector.broadcast %cst_30 : f32 to vector<128x1xf32>
    %67 = arith.divf %65, %66 : vector<128x1xf32>
    %68 = vector.broadcast %60 : vector<128x1xf32> to vector<128x256xf32>
    %69 = arith.subf %54, %68 : vector<128x256xf32>
    %cst_31 = arith.constant 9.99999974E-6 : f32
    %70 = vector.broadcast %cst_31 : f32 to vector<128x1xf32>
    %71 = arith.addf %67, %70 : vector<128x1xf32>
    %72 = math.rsqrt %71 : vector<128x1xf32>
    %73 = vector.broadcast %72 : vector<128x1xf32> to vector<128x256xf32>
    %74 = arith.mulf %69, %73 : vector<128x256xf32>
    %75 = vector.broadcast %55 : vector<1x256xf32> to vector<128x256xf32>
    %76 = arith.mulf %74, %75 : vector<128x256xf32>
    %77 = vector.broadcast %56 : vector<1x256xf32> to vector<128x256xf32>
    %78 = arith.addf %76, %77 : vector<128x256xf32>
    %79 = arith.truncf %78 : vector<128x256xf32> to vector<128x256xbf16>
    %c0_32 = arith.constant 0 : index
    %c0_33 = arith.constant 0 : index
    %80 = vector.load %arg9[%c0_32, %c0_33] : memref<256x512xbf16, #tpu.memory_space<vmem>>, vector<256x512xbf16>
    %cst_34 = arith.constant dense<0.000000e+00> : vector<128x512xf32>
    %81 = tpu.matmul %79, %80, %cst_34 {dimension_numbers = #tpu.dot_dimension_numbers<[1], [0], [0], [1], [0, 0, 1, 1], [], []>} : vector<128x256xbf16>, vector<256x512xbf16>, vector<128x512xf32> -> vector<128x512xf32>
    %c0_35 = arith.constant 0 : index
    %c0_36 = arith.constant 0 : index
    %82 = vector.load %arg10[%c0_35, %c0_36] : memref<1x512xf32, #tpu.memory_space<vmem>>, vector<1x512xf32>
    %83 = vector.broadcast %82 : vector<1x512xf32> to vector<128x512xf32>
    %84 = arith.addf %81, %83 : vector<128x512xf32>
    %cst_37 = arith.constant 0.000000e+00 : f32
    %85 = vector.broadcast %cst_37 : f32 to vector<128x512xf32>
    %86 = arith.maximumf %84, %85 : vector<128x512xf32>
    %87 = arith.truncf %86 : vector<128x512xf32> to vector<128x512xbf16>
    %c0_38 = arith.constant 0 : index
    %c0_39 = arith.constant 0 : index
    %88 = vector.load %arg11[%c0_38, %c0_39] : memref<512x256xbf16, #tpu.memory_space<vmem>>, vector<512x256xbf16>
    %cst_40 = arith.constant dense<0.000000e+00> : vector<128x256xf32>
    %89 = tpu.matmul %87, %88, %cst_40 {dimension_numbers = #tpu.dot_dimension_numbers<[1], [0], [0], [1], [0, 0, 1, 1], [], []>} : vector<128x512xbf16>, vector<512x256xbf16>, vector<128x256xf32> -> vector<128x256xf32>
    %c0_41 = arith.constant 0 : index
    %c0_42 = arith.constant 0 : index
    %90 = vector.load %arg12[%c0_41, %c0_42] : memref<1x256xf32, #tpu.memory_space<vmem>>, vector<1x256xf32>
    %91 = vector.broadcast %90 : vector<1x256xf32> to vector<128x256xf32>
    %92 = arith.addf %89, %91 : vector<128x256xf32>
    %93 = arith.addf %92, %78 : vector<128x256xf32>
    %c0_43 = arith.constant 0 : index
    %c0_44 = arith.constant 0 : index
    %94 = vector.load %arg13[%c0_43, %c0_44] : memref<1x256xf32, #tpu.memory_space<vmem>>, vector<1x256xf32>
    %c0_45 = arith.constant 0 : index
    %c0_46 = arith.constant 0 : index
    %95 = vector.load %arg14[%c0_45, %c0_46] : memref<1x256xf32, #tpu.memory_space<vmem>>, vector<1x256xf32>
    %cst_47 = arith.constant dense<0.000000e+00> : vector<128xf32>
    %96 = vector.multi_reduction <add>, %93, %cst_47 [1] : vector<128x256xf32> to vector<128xf32>
    %97 = vector.shape_cast %96 : vector<128xf32> to vector<128x1xf32>
    %cst_48 = arith.constant 2.560000e+02 : f32
    %98 = vector.broadcast %cst_48 : f32 to vector<128x1xf32>
    %99 = arith.divf %97, %98 : vector<128x1xf32>
    %100 = vector.broadcast %99 : vector<128x1xf32> to vector<128x256xf32>
    %101 = arith.subf %93, %100 : vector<128x256xf32>
    %102 = arith.mulf %101, %101 : vector<128x256xf32>
    %cst_49 = arith.constant dense<0.000000e+00> : vector<128xf32>
    %103 = vector.multi_reduction <add>, %102, %cst_49 [1] : vector<128x256xf32> to vector<128xf32>
    %104 = vector.shape_cast %103 : vector<128xf32> to vector<128x1xf32>
    %cst_50 = arith.constant 2.560000e+02 : f32
    %105 = vector.broadcast %cst_50 : f32 to vector<128x1xf32>
    %106 = arith.divf %104, %105 : vector<128x1xf32>
    %107 = vector.broadcast %99 : vector<128x1xf32> to vector<128x256xf32>
    %108 = arith.subf %93, %107 : vector<128x256xf32>
    %cst_51 = arith.constant 9.99999974E-6 : f32
    %109 = vector.broadcast %cst_51 : f32 to vector<128x1xf32>
    %110 = arith.addf %106, %109 : vector<128x1xf32>
    %111 = math.rsqrt %110 : vector<128x1xf32>
    %112 = vector.broadcast %111 : vector<128x1xf32> to vector<128x256xf32>
    %113 = arith.mulf %108, %112 : vector<128x256xf32>
    %114 = vector.broadcast %94 : vector<1x256xf32> to vector<128x256xf32>
    %115 = arith.mulf %113, %114 : vector<128x256xf32>
    %116 = vector.broadcast %95 : vector<1x256xf32> to vector<128x256xf32>
    %117 = arith.addf %115, %116 : vector<128x256xf32>
    %c0_52 = arith.constant 0 : index
    %c0_53 = arith.constant 0 : index
    %c0_54 = arith.constant 0 : index
    %118 = vector.load %arg15[%c0_52, %c0_53, %c0_54] : memref<1x128x256xf32, #tpu.memory_space<vmem>>, vector<1x128x256xf32>
    %119 = vector.shape_cast %118 : vector<1x128x256xf32> to vector<128x256xf32>
    %120 = vector.shape_cast %117 : vector<128x256xf32> to vector<1x128x256xf32>
    tpu.vector_store %arg15[%c0_52, %c0_53, %c0_54], %120 {strides = array<i32>} : memref<1x128x256xf32, #tpu.memory_space<vmem>>, vector<1x128x256xf32>,
    return
  }
  func.func @transform_0(%arg0: i32, %arg1: i32) -> (i32, i32, i32) {
    %c0_i32 = arith.constant 0 : i32
    %c0_i32_0 = arith.constant 0 : i32
    %c0_i32_1 = arith.constant 0 : i32
    return %arg0, %c0_i32, %c0_i32_0 : i32, i32, i32
  }
  func.func @transform_1(%arg0: i32, %arg1: i32) -> (i32, i32) {
    %c0_i32 = arith.constant 0 : i32
    %c0_i32_0 = arith.constant 0 : i32
    %c0_i32_1 = arith.constant 0 : i32
    return %c0_i32, %c0_i32_0 : i32, i32
  }
  func.func @transform_2(%arg0: i32, %arg1: i32) -> (i32, i32) {
    %c0_i32 = arith.constant 0 : i32
    %c0_i32_0 = arith.constant 0 : i32
    %c0_i32_1 = arith.constant 0 : i32
    return %c0_i32, %c0_i32_0 : i32, i32
  }
  func.func @transform_3(%arg0: i32, %arg1: i32) -> (i32, i32) {
    %c0_i32 = arith.constant 0 : i32
    %c0_i32_0 = arith.constant 0 : i32
    %c0_i32_1 = arith.constant 0 : i32
    return %c0_i32, %c0_i32_0 : i32, i32
  }
  func.func @transform_4(%arg0: i32, %arg1: i32) -> (i32, i32) {
    %c0_i32 = arith.constant 0 : i32
    %c0_i32_0 = arith.constant 0 : i32
    %c0_i32_1 = arith.constant 0 : i32
    return %c0_i32, %c0_i32_0 : i32, i32
  }
  func.func @transform_5(%arg0: i32, %arg1: i32) -> (i32, i32) {
    %c0_i32 = arith.constant 0 : i32
    %c0_i32_0 = arith.constant 0 : i32
    %c0_i32_1 = arith.constant 0 : i32
    return %c0_i32, %c0_i32_0 : i32, i32
  }
  func.func @transform_6(%arg0: i32, %arg1: i32) -> (i32, i32) {
    %c0_i32 = arith.constant 0 : i32
    %c0_i32_0 = arith.constant 0 : i32
    %c0_i32_1 = arith.constant 0 : i32
    return %c0_i32, %c0_i32_0 : i32, i32
  }
  func.func @transform_7(%arg0: i32, %arg1: i32) -> (i32, i32) {
    %c0_i32 = arith.constant 0 : i32
    %c0_i32_0 = arith.constant 0 : i32
    %c0_i32_1 = arith.constant 0 : i32
    return %c0_i32, %c0_i32_0 : i32, i32
  }
  func.func @transform_8(%arg0: i32, %arg1: i32) -> (i32, i32) {
    %c0_i32 = arith.constant 0 : i32
    %c0_i32_0 = arith.constant 0 : i32
    %c0_i32_1 = arith.constant 0 : i32
    return %c0_i32, %c0_i32_0 : i32, i32
  }
  func.func @transform_9(%arg0: i32, %arg1: i32) -> (i32, i32) {
    %c0_i32 = arith.constant 0 : i32
    %c0_i32_0 = arith.constant 0 : i32
    %c0_i32_1 = arith.constant 0 : i32
    return %c0_i32, %c0_i32_0 : i32, i32
  }
  func.func @transform_10(%arg0: i32, %arg1: i32) -> (i32, i32) {
    %c0_i32 = arith.constant 0 : i32
    %c0_i32_0 = arith.constant 0 : i32
    %c0_i32_1 = arith.constant 0 : i32
    return %c0_i32, %c0_i32_0 : i32, i32
  }
  func.func @transform_11(%arg0: i32, %arg1: i32) -> (i32, i32) {
    %c0_i32 = arith.constant 0 : i32
    %c0_i32_0 = arith.constant 0 : i32
    %c0_i32_1 = arith.constant 0 : i32
    return %c0_i32, %c0_i32_0 : i32, i32
  }
  func.func @transform_12(%arg0: i32, %arg1: i32) -> (i32, i32) {
    %c0_i32 = arith.constant 0 : i32
    %c0_i32_0 = arith.constant 0 : i32
    %c0_i32_1 = arith.constant 0 : i32
    return %c0_i32, %c0_i32_0 : i32, i32
  }
  func.func @transform_13(%arg0: i32, %arg1: i32) -> (i32, i32, i32) {
    %c0_i32 = arith.constant 0 : i32
    %c0_i32_0 = arith.constant 0 : i32
    return %arg0, %arg1, %c0_i32 : i32, i32, i32
  }
}

</mosaic_0001>

<llo_original>
// kernel: tpu_custom_call.1
$region0: #{tpu_custom_call.1}
  #allocation0 [shape = 'u32[]', space=smem, size = 0x4, offset = 0x4, fixed_abs, tag = 'smem constant byte address 0x4 - core index']
  #allocation1 [shape = 'u32[144,128]{1,0:T(1,128)}', space=vmem, size = 0x12000, scoped, tag = 'internal scratch']
  #allocation2 [shape = 'bf16[256,768]{1,0:T(8,128)(2,1)}', space=vmem, size = 0x60000, scoped, tag = 'scratch operand']
  %s0 = inlined_call_operand.hbm [shape: f32[2,256,256], index: 0, kind: input, shape index: {}]
  %s1 = inlined_call_operand.hbm [shape: bf16[256,768], index: 1, kind: input, shape index: {}]
  %s2 = inlined_call_operand.hbm [shape: f32[1,768], index: 2, kind: input, shape index: {}]
  %s3 = inlined_call_operand.hbm [shape: bf16[256,256], index: 3, kind: input, shape index: {}]
  %s4 = inlined_call_operand.vmem [shape: f32[1,256], index: 4, kind: input, shape index: {}]
  %s5 = inlined_call_operand.vmem [shape: f32[1,256], index: 5, kind: input, shape index: {}]
  %s6 = inlined_call_operand.vmem [shape: f32[1,256], index: 6, kind: input, shape index: {}]
  %s7 = inlined_call_operand.hbm [shape: bf16[256,512], index: 7, kind: input, shape index: {}]
  %s8 = inlined_call_operand.vmem [shape: f32[1,512], index: 8, kind: input, shape index: {}]
  %s9 = inlined_call_operand.hbm [shape: bf16[512,256], index: 9, kind: input, shape index: {}]
  %s10 = inlined_call_operand.vmem [shape: f32[1,256], index: 10, kind: input, shape index: {}]
  %s11 = inlined_call_operand.vmem [shape: f32[1,256], index: 11, kind: input, shape index: {}]
  %s12 = inlined_call_operand.vmem [shape: f32[1,256], index: 12, kind: input, shape index: {}]
  %s13 = inlined_call_operand.hbm [shape: f32[2,256,256], index: 13, kind: output, shape index: {}]
  %s14 = sld [smem:[#allocation0]]
  $region113: #{tpu_custom_call.1} parent=0
    _
  %s16 = ssub.s32 1, %s14
  %s17 = scalar_select 0, %s16, %s14
  $region1: #{tpu_custom_call.1} parent=0
    #allocation3 [shape = 'u8[524288]{0}', space=vmem, size = 0x80000, scoped, tag = 'input window, operand 0']
    #allocation4 [shape = 's32[2]{0}', space=sflag, size = 0x8, scoped, tag = 'scoped memory for tpu_custom_call.1']
    #allocation5 [shape = 's32[2]{0}', space=sflag, size = 0x8, scoped, tag = 'scoped memory for tpu_custom_call.1']
    #allocation6 [shape = 'u8[393216]{0}', space=vmem, size = 0x60000, scoped, tag = 'input window, operand 1, single buffered']
    #allocation7 [shape = 's32[1]{0}', space=sflag, size = 0x4, scoped, tag = 'scoped memory for tpu_custom_call.1']
    #allocation8 [shape = 'u8[3072]{0}', space=vmem, size = 0xc00, scoped, tag = 'input window, operand 2, single buffered']
    #allocation9 [shape = 'u8[131072]{0}', space=vmem, size = 0x20000, scoped, tag = 'input window, operand 3, single buffered']
    #allocation10 [shape = 's32[1]{0}', space=sflag, size = 0x4, scoped, tag = 'scoped memory for tpu_custom_call.1']
    #allocation11 [shape = 'u8[262144]{0}', space=vmem, size = 0x40000, scoped, tag = 'input window, operand 7, single buffered']
    #allocation12 [shape = 'u8[262144]{0}', space=vmem, size = 0x40000, scoped, tag = 'input window, operand 9, single buffered']
    #allocation13 [shape = 's32[1]{0}', space=sflag, size = 0x4, scoped, tag = 'scoped memory for tpu_custom_call.1']
    #allocation14 [shape = 'u8[262144]{0}', space=vmem, size = 0x40000, scoped, tag = 'output window, operand 0']
    %18 = vsyncpa [#allocation4], 0
    %s19 = scalar_lea.sflag [#allocation4], 1
    %20 = vsyncpa %s19, 0
    %21 = vsyncpa [#allocation7], 0
    %22 = vsyncpa [#allocation10], 0
    %23 = vsyncpa [#allocation13], 0
    %24 = vsyncpa [#allocation5], 0
    %s25 = scalar_lea.sflag [#allocation5], 1
    %26 = vsyncpa %s25, 0
    loop: start=0, step=1, limit=6
    $region2: #{tpu_custom_call.1} parent=1 // loop_pre_header
      _
    $region3: #{tpu_custom_call.1} parent=1 // loop_header
      %s28 = sphi 0, %s32
      %p29 = scmp.ge.s32.totalorder %s28, 6
      %s35 = sphi 0, %s47
      %s36 = sphi 0, %s43
      %s37 = sphi 0, %s35
      %s38 = sphi 0, %s36
      %s39 = sphi 0, %s37
      %s40 = sphi 0, %s38
      %s50 = sphi 0, %s52
      %s53 = sphi 0, %s50
      %s54 = sphi 0, %s53
      %s70 = sphi 0, %s54
      %s74 = sphi 0, %s74
      %s76 = sphi 0, %s74
      %s77 = sphi 0, %s76
      %s91 = sphi 0, %s77
      %s95 = sphi 0, %s95
      %s97 = sphi 0, %s95
      %s98 = sphi 0, %s97
      %s112 = sphi 0, %s98
      %s116 = sphi 0, %s116
      %s118 = sphi 0, %s116
      %s119 = sphi 0, %s118
      %s133 = sphi 0, %s119
      %s137 = sphi 0, %s137
      %s139 = sphi 0, %s137
      %s140 = sphi 0, %s139
      %s154 = sphi 0, %s140
      %s158 = sphi 0, %s158
      %s160 = sphi 0, %s158
      %s161 = sphi 0, %s160
      %s175 = sphi 0, %s161
      %s179 = sphi 0, %s179
      %s181 = sphi 0, %s179
      %s182 = sphi 0, %s181
      %s196 = sphi 0, %s182
      %s200 = sphi 0, %s200
      %s202 = sphi 0, %s200
      %s203 = sphi 0, %s202
      %s217 = sphi 0, %s203
      %s221 = sphi 0, %s221
      %s223 = sphi 0, %s221
      %s224 = sphi 0, %s223
      %s238 = sphi 0, %s224
      %s242 = sphi 0, %s242
      %s244 = sphi 0, %s242
      %s245 = sphi 0, %s244
      %s259 = sphi 0, %s245
      %s263 = sphi 0, %s263
      %s265 = sphi 0, %s263
      %s266 = sphi 0, %s265
      %s280 = sphi 0, %s266
      %s284 = sphi 0, %s284
      %s286 = sphi 0, %s284
      %s287 = sphi 0, %s286
      %s301 = sphi 0, %s287
      %s305 = sphi 0, %s305
      %s307 = sphi 0, %s305
      %s308 = sphi 0, %s307
      %s322 = sphi 0, %s308
      %s330 = sphi 0, %s332
      %s333 = sphi 0, %s330
      %s334 = sphi 0, %s333
      %s350 = sphi 0, %s334
    $region4: #{tpu_custom_call.1} parent=1 // loop_header_branch
      %31 = sbr.rel (%p29) target = $region8
    $region5: #{tpu_custom_call.1} parent=1 // loop_body
      %s33 = ssub.s32 %s28, 1
      %s34 = ssub.s32 %s28, 2
      %s41 = sadd.s32 1, %s36
      %p42 = scmp.ge.s32.totalorder %s41, 2
      %s43 = scalar_select %p42, 0, %s41
      %s44 = sadd.s32 1, %s35
      %s45 = scalar_select %p42, %s44, %s35
      %p46 = scmp.ge.s32.totalorder %s45, 2
      %s47 = scalar_select %p46, 0, %s45
      %s48 = ssub.s32 %s35, %s47
      %p49 = scmp.eq.s32.totalorder %s48, 0
      %s51 = sadd.s32 %s50, 1
      %s52 = scalar_select %p49, %s50, %s51
      %p55 = pneg %p49
      %p56 = scmp.eq.s32.totalorder %s28, 3
      %p57 = por %p55, %p56
      %p58 = scmp.ne.s32.totalorder %s50, %s53
      %p59 = scmp.eq.s32.totalorder %s28, 0
      %p60 = por %p58, %p59
      %p61 = scmp.ne.s32.totalorder %s50, %s53
      %p62 = scmp.eq.s32.totalorder %s33, 3
      %p63 = por %p61, %p62
      %p64 = scmp.ne.s32.totalorder %s53, %s54
      %p65 = scmp.eq.s32.totalorder %s33, 0
      %p66 = por %p64, %p65
      %p67 = scmp.ne.s32.totalorder %s53, %s54
      %p68 = scmp.eq.s32.totalorder %s34, 3
      %p69 = por %p67, %p68
      %p71 = scmp.ne.s32.totalorder %s54, %s70
      %p72 = scmp.eq.s32.totalorder %s34, 0
      %p73 = por %p71, %p72
      %s75 = sadd.s32 %s74, 1
      %p78 = scmp.eq.s32.totalorder %s28, 3
      %p79 = scmp.ne.s32.totalorder %s74, %s76
      %p80 = scmp.eq.s32.totalorder %s28, 0
      %p81 = por %p79, %p80
      %p82 = scmp.ne.s32.totalorder %s74, %s76
      %p83 = scmp.eq.s32.totalorder %s33, 3
      %p84 = por %p82, %p83
      %p85 = scmp.ne.s32.totalorder %s76, %s77
      %p86 = scmp.eq.s32.totalorder %s33, 0
      %p87 = por %p85, %p86
      %p88 = scmp.ne.s32.totalorder %s76, %s77
      %p89 = scmp.eq.s32.totalorder %s34, 3
      %p90 = por %p88, %p89
      %p92 = scmp.ne.s32.totalorder %s77, %s91
      %p93 = scmp.eq.s32.totalorder %s34, 0
      %p94 = por %p92, %p93
      %s96 = sadd.s32 %s95, 1
      %p99 = scmp.eq.s32.totalorder %s28, 3
      %p100 = scmp.ne.s32.totalorder %s95, %s97
      %p101 = scmp.eq.s32.totalorder %s28, 0
      %p102 = por %p100, %p101
      %p103 = scmp.ne.s32.totalorder %s95, %s97
      %p104 = scmp.eq.s32.totalorder %s33, 3
      %p105 = por %p103, %p104
      %p106 = scmp.ne.s32.totalorder %s97, %s98
      %p107 = scmp.eq.s32.totalorder %s33, 0
      %p108 = por %p106, %p107
      %p109 = scmp.ne.s32.totalorder %s97, %s98
      %p110 = scmp.eq.s32.totalorder %s34, 3
      %p111 = por %p109, %p110
      %p113 = scmp.ne.s32.totalorder %s98, %s112
      %p114 = scmp.eq.s32.totalorder %s34, 0
      %p115 = por %p113, %p114
      %s117 = sadd.s32 %s116, 1
      %p120 = scmp.eq.s32.totalorder %s28, 3
      %p121 = scmp.ne.s32.totalorder %s116, %s118
      %p122 = scmp.eq.s32.totalorder %s28, 0
      %p123 = por %p121, %p122
      %p124 = scmp.ne.s32.totalorder %s116, %s118
      %p125 = scmp.eq.s32.totalorder %s33, 3
      %p126 = por %p124, %p125
      %p127 = scmp.ne.s32.totalorder %s118, %s119
      %p128 = scmp.eq.s32.totalorder %s33, 0
      %p129 = por %p127, %p128
      %p130 = scmp.ne.s32.totalorder %s118, %s119
      %p131 = scmp.eq.s32.totalorder %s34, 3
      %p132 = por %p130, %p131
      %p134 = scmp.ne.s32.totalorder %s119, %s133
      %p135 = scmp.eq.s32.totalorder %s34, 0
      %p136 = por %p134, %p135
      %s138 = sadd.s32 %s137, 1
      %p141 = scmp.eq.s32.totalorder %s28, 3
      %p142 = scmp.ne.s32.totalorder %s137, %s139
      %p143 = scmp.eq.s32.totalorder %s28, 0
      %p144 = por %p142, %p143
      %p145 = scmp.ne.s32.totalorder %s137, %s139
      %p146 = scmp.eq.s32.totalorder %s33, 3
      %p147 = por %p145, %p146
      %p148 = scmp.ne.s32.totalorder %s139, %s140
      %p149 = scmp.eq.s32.totalorder %s33, 0
      %p150 = por %p148, %p149
      %p151 = scmp.ne.s32.totalorder %s139, %s140
      %p152 = scmp.eq.s32.totalorder %s34, 3
      %p153 = por %p151, %p152
      %p155 = scmp.ne.s32.totalorder %s140, %s154
      %p156 = scmp.eq.s32.totalorder %s34, 0
      %p157 = por %p155, %p156
      %s159 = sadd.s32 %s158, 1
      %p162 = scmp.eq.s32.totalorder %s28, 3
      %p163 = scmp.ne.s32.totalorder %s158, %s160
      %p164 = scmp.eq.s32.totalorder %s28, 0
      %p165 = por %p163, %p164
      %p166 = scmp.ne.s32.totalorder %s158, %s160
      %p167 = scmp.eq.s32.totalorder %s33, 3
      %p168 = por %p166, %p167
      %p169 = scmp.ne.s32.totalorder %s160, %s161
      %p170 = scmp.eq.s32.totalorder %s33, 0
      %p171 = por %p169, %p170
      %p172 = scmp.ne.s32.totalorder %s160, %s161
      %p173 = scmp.eq.s32.totalorder %s34, 3
      %p174 = por %p172, %p173
      %p176 = scmp.ne.s32.totalorder %s161, %s175
      %p177 = scmp.eq.s32.totalorder %s34, 0
      %p178 = por %p176, %p177
      %s180 = sadd.s32 %s179, 1
      %p183 = scmp.eq.s32.totalorder %s28, 3
      %p184 = scmp.ne.s32.totalorder %s179, %s181
      %p185 = scmp.eq.s32.totalorder %s28, 0
      %p186 = por %p184, %p185
      %p187 = scmp.ne.s32.totalorder %s179, %s181
      %p188 = scmp.eq.s32.totalorder %s33, 3
      %p189 = por %p187, %p188
      %p190 = scmp.ne.s32.totalorder %s181, %s182
      %p191 = scmp.eq.s32.totalorder %s33, 0
      %p192 = por %p190, %p191
      %p193 = scmp.ne.s32.totalorder %s181, %s182
      %p194 = scmp.eq.s32.totalorder %s34, 3
      %p195 = por %p193, %p194
      %p197 = scmp.ne.s32.totalorder %s182, %s196
      %p198 = scmp.eq.s32.totalorder %s34, 0
      %p199 = por %p197, %p198
      %s201 = sadd.s32 %s200, 1
      %p204 = scmp.eq.s32.totalorder %s28, 3
      %p205 = scmp.ne.s32.totalorder %s200, %s202
      %p206 = scmp.eq.s32.totalorder %s28, 0
      %p207 = por %p205, %p206
      %p208 = scmp.ne.s32.totalorder %s200, %s202
      %p209 = scmp.eq.s32.totalorder %s33, 3
      %p210 = por %p208, %p209
      %p211 = scmp.ne.s32.totalorder %s202, %s203
      %p212 = scmp.eq.s32.totalorder %s33, 0
      %p213 = por %p211, %p212
      %p214 = scmp.ne.s32.totalorder %s202, %s203
      %p215 = scmp.eq.s32.totalorder %s34, 3
      %p216 = por %p214, %p215
      %p218 = scmp.ne.s32.totalorder %s203, %s217
      %p219 = scmp.eq.s32.totalorder %s34, 0
      %p220 = por %p218, %p219
      %s222 = sadd.s32 %s221, 1
      %p225 = scmp.eq.s32.totalorder %s28, 3
      %p226 = scmp.ne.s32.totalorder %s221, %s223
      %p227 = scmp.eq.s32.totalorder %s28, 0
      %p228 = por %p226, %p227
      %p229 = scmp.ne.s32.totalorder %s221, %s223
      %p230 = scmp.eq.s32.totalorder %s33, 3
      %p231 = por %p229, %p230
      %p232 = scmp.ne.s32.totalorder %s223, %s224
      %p233 = scmp.eq.s32.totalorder %s33, 0
      %p234 = por %p232, %p233
      %p235 = scmp.ne.s32.totalorder %s223, %s224
      %p236 = scmp.eq.s32.totalorder %s34, 3
      %p237 = por %p235, %p236
      %p239 = scmp.ne.s32.totalorder %s224, %s238
      %p240 = scmp.eq.s32.totalorder %s34, 0
      %p241 = por %p239, %p240
      %s243 = sadd.s32 %s242, 1
      %p246 = scmp.eq.s32.totalorder %s28, 3
      %p247 = scmp.ne.s32.totalorder %s242, %s244
      %p248 = scmp.eq.s32.totalorder %s28, 0
      %p249 = por %p247, %p248
      %p250 = scmp.ne.s32.totalorder %s242, %s244
      %p251 = scmp.eq.s32.totalorder %s33, 3
      %p252 = por %p250, %p251
      %p253 = scmp.ne.s32.totalorder %s244, %s245
      %p254 = scmp.eq.s32.totalorder %s33, 0
      %p255 = por %p253, %p254
      %p256 = scmp.ne.s32.totalorder %s244, %s245
      %p257 = scmp.eq.s32.totalorder %s34, 3
      %p258 = por %p256, %p257
      %p260 = scmp.ne.s32.totalorder %s245, %s259
      %p261 = scmp.eq.s32.totalorder %s34, 0
      %p262 = por %p260, %p261
      %s264 = sadd.s32 %s263, 1
      %p267 = scmp.eq.s32.totalorder %s28, 3
      %p268 = scmp.ne.s32.totalorder %s263, %s265
      %p269 = scmp.eq.s32.totalorder %s28, 0
      %p270 = por %p268, %p269
      %p271 = scmp.ne.s32.totalorder %s263, %s265
      %p272 = scmp.eq.s32.totalorder %s33, 3
      %p273 = por %p271, %p272
      %p274 = scmp.ne.s32.totalorder %s265, %s266
      %p275 = scmp.eq.s32.totalorder %s33, 0
      %p276 = por %p274, %p275
      %p277 = scmp.ne.s32.totalorder %s265, %s266
      %p278 = scmp.eq.s32.totalorder %s34, 3
      %p279 = por %p277, %p278
      %p281 = scmp.ne.s32.totalorder %s266, %s280
      %p282 = scmp.eq.s32.totalorder %s34, 0
      %p283 = por %p281, %p282
      %s285 = sadd.s32 %s284, 1
      %p288 = scmp.eq.s32.totalorder %s28, 3
      %p289 = scmp.ne.s32.totalorder %s284, %s286
      %p290 = scmp.eq.s32.totalorder %s28, 0
      %p291 = por %p289, %p290
      %p292 = scmp.ne.s32.totalorder %s284, %s286
      %p293 = scmp.eq.s32.totalorder %s33, 3
      %p294 = por %p292, %p293
      %p295 = scmp.ne.s32.totalorder %s286, %s287
      %p296 = scmp.eq.s32.totalorder %s33, 0
      %p297 = por %p295, %p296
      %p298 = scmp.ne.s32.totalorder %s286, %s287
      %p299 = scmp.eq.s32.totalorder %s34, 3
      %p300 = por %p298, %p299
      %p302 = scmp.ne.s32.totalorder %s287, %s301
      %p303 = scmp.eq.s32.totalorder %s34, 0
      %p304 = por %p302, %p303
      %s306 = sadd.s32 %s305, 1
      %p309 = scmp.eq.s32.totalorder %s28, 3
      %p310 = scmp.ne.s32.totalorder %s305, %s307
      %p311 = scmp.eq.s32.totalorder %s28, 0
      %p312 = por %p310, %p311
      %p313 = scmp.ne.s32.totalorder %s305, %s307
      %p314 = scmp.eq.s32.totalorder %s33, 3
      %p315 = por %p313, %p314
      %p316 = scmp.ne.s32.totalorder %s307, %s308
      %p317 = scmp.eq.s32.totalorder %s33, 0
      %p318 = por %p316, %p317
      %p319 = scmp.ne.s32.totalorder %s307, %s308
      %p320 = scmp.eq.s32.totalorder %s34, 3
      %p321 = por %p319, %p320
      %p323 = scmp.ne.s32.totalorder %s308, %s322
      %p324 = scmp.eq.s32.totalorder %s34, 0
      %p325 = por %p323, %p324
      %s326 = ssub.s32 %s35, %s47
      %s327 = ssub.s32 %s36, %s43
      %s328 = sor.u32 %s326, %s327
      %p329 = scmp.eq.s32.totalorder %s328, 0
      %s331 = sadd.s32 %s330, 1
      %s332 = scalar_select %p329, %s330, %s331
      %p335 = pneg %p329
      %p336 = scmp.eq.s32.totalorder %s28, 3
      %p337 = por %p335, %p336
      %p338 = scmp.ne.s32.totalorder %s330, %s333
      %p339 = scmp.eq.s32.totalorder %s28, 0
      %p340 = por %p338, %p339
      %p341 = scmp.ne.s32.totalorder %s330, %s333
      %p342 = scmp.eq.s32.totalorder %s33, 3
      %p343 = por %p341, %p342
      %p344 = scmp.ne.s32.totalorder %s333, %s334
      %p345 = scmp.eq.s32.totalorder %s33, 0
      %p346 = por %p344, %p345
      %p347 = scmp.ne.s32.totalorder %s333, %s334
      %p348 = scmp.eq.s32.totalorder %s34, 3
      %p349 = por %p347, %p348
      %p351 = scmp.ne.s32.totalorder %s334, %s350
      %p352 = scmp.eq.s32.totalorder %s34, 0
      %p353 = por %p351, %p352
      %p354 = scmp.le.s32.totalorder 1, %s28
      %p355 = scmp.lt.s32.totalorder %s28, 5
      %p356 = pnand %p354, %p355
      %p357 = pneg %p356
      // Predicated region
      $region9: #{tpu_custom_call.1} parent=5 // pred_check
        _
      $region10: #{tpu_custom_call.1} parent=5 // pred_check_branch
        %359 = sbr.rel (%p356) target = $region12
      $region11: #{tpu_custom_call.1} parent=5 // pred_region
        %s360 = ssub.s32 %s28, 1
        // Predicated region
        $region13: #{tpu_custom_call.1} parent=11 // pred_check
          %p361 = pneg %p87
        $region14: #{tpu_custom_call.1} parent=11 // pred_check_branch
          %363 = sbr.rel (%p361) target = $region16
        $region15: #{tpu_custom_call.1} parent=11 // pred_region
          %s365 = ssub.s32 12288, 12288
          %366 = vsyncadd [#allocation7], %s365
          %s367 = sshll.u32 [#allocation6], 4
          %s368 = int_to_ptr.vmem [resolvable:$true] %s367
          %373 = dma.hbm_to_vmem [thread:$0]  %s1, 12288, %s368, [#allocation7], 384, 384, 24
        $region16: #{tpu_custom_call.1} parent=11 // pred_fallthru
          _
        // Predicated region
        $region17: #{tpu_custom_call.1} parent=11 // pred_check
          %p374 = pneg %p108
        $region18: #{tpu_custom_call.1} parent=11 // pred_check_branch
          %376 = sbr.rel (%p374) target = $region20
        $region19: #{tpu_custom_call.1} parent=11 // pred_region
          %s378 = ssub.s32 96, 96
          %379 = vsyncadd [#allocation7], %s378
          %s381 = sshll.u32 [#allocation8], 4
          %s382 = int_to_ptr.vmem [resolvable:$true] %s381
          %384 = dma.hbm_to_vmem [thread:$0]  %s2, 96, %s382, [#allocation7]
        $region20: #{tpu_custom_call.1} parent=11 // pred_fallthru
          _
        // Predicated region
        $region21: #{tpu_custom_call.1} parent=11 // pred_check
          %p385 = pneg %p129
        $region22: #{tpu_custom_call.1} parent=11 // pred_check_branch
          %387 = sbr.rel (%p385) target = $region24
        $region23: #{tpu_custom_call.1} parent=11 // pred_region
          %s389 = ssub.s32 4096, 4096
          %390 = vsyncadd [#allocation10], %s389
          %s391 = sshll.u32 [#allocation9], 4
          %s392 = int_to_ptr.vmem [resolvable:$true] %s391
          %397 = dma.hbm_to_vmem [thread:$0]  %s3, 4096, %s392, [#allocation10], 128, 128, 8
        $region24: #{tpu_custom_call.1} parent=11 // pred_fallthru
          _
        // Predicated region
        $region25: #{tpu_custom_call.1} parent=11 // pred_check
          %p398 = pneg %p150
        $region26: #{tpu_custom_call.1} parent=11 // pred_check_branch
          %400 = sbr.rel (%p398) target = $region28
        $region27: #{tpu_custom_call.1} parent=11 // pred_region
          _
        $region28: #{tpu_custom_call.1} parent=11 // pred_fallthru
          _
        // Predicated region
        $region29: #{tpu_custom_call.1} parent=11 // pred_check
          %p401 = pneg %p171
        $region30: #{tpu_custom_call.1} parent=11 // pred_check_branch
          %403 = sbr.rel (%p401) target = $region32
        $region31: #{tpu_custom_call.1} parent=11 // pred_region
          _
        $region32: #{tpu_custom_call.1} parent=11 // pred_fallthru
          _
        // Predicated region
        $region33: #{tpu_custom_call.1} parent=11 // pred_check
          %p404 = pneg %p192
        $region34: #{tpu_custom_call.1} parent=11 // pred_check_branch
          %406 = sbr.rel (%p404) target = $region36
        $region35: #{tpu_custom_call.1} parent=11 // pred_region
          _
        $region36: #{tpu_custom_call.1} parent=11 // pred_fallthru
          _
        // Predicated region
        $region37: #{tpu_custom_call.1} parent=11 // pred_check
          %p407 = pneg %p213
        $region38: #{tpu_custom_call.1} parent=11 // pred_check_branch
          %409 = sbr.rel (%p407) target = $region40
        $region39: #{tpu_custom_call.1} parent=11 // pred_region
          %s411 = ssub.s32 8192, 8192
          %412 = vsyncadd [#allocation10], %s411
          %s413 = sshll.u32 [#allocation11], 4
          %s414 = int_to_ptr.vmem [resolvable:$true] %s413
          %419 = dma.hbm_to_vmem [thread:$0]  %s7, 8192, %s414, [#allocation10], 256, 256, 16
        $region40: #{tpu_custom_call.1} parent=11 // pred_fallthru
          _
        // Predicated region
        $region41: #{tpu_custom_call.1} parent=11 // pred_check
          %p420 = pneg %p234
        $region42: #{tpu_custom_call.1} parent=11 // pred_check_branch
          %422 = sbr.rel (%p420) target = $region44
        $region43: #{tpu_custom_call.1} parent=11 // pred_region
          _
        $region44: #{tpu_custom_call.1} parent=11 // pred_fallthru
          _
        // Predicated region
        $region45: #{tpu_custom_call.1} parent=11 // pred_check
          %p423 = pneg %p255
        $region46: #{tpu_custom_call.1} parent=11 // pred_check_branch
          %425 = sbr.rel (%p423) target = $region48
        $region47: #{tpu_custom_call.1} parent=11 // pred_region
          %s427 = ssub.s32 8192, 8192
          %428 = vsyncadd [#allocation13], %s427
          %s429 = sshll.u32 [#allocation12], 4
          %s430 = int_to_ptr.vmem [resolvable:$true] %s429
          %435 = dma.hbm_to_vmem [thread:$0]  %s9, 8192, %s430, [#allocation13], 128, 128, 8
        $region48: #{tpu_custom_call.1} parent=11 // pred_fallthru
          _
        // Predicated region
        $region49: #{tpu_custom_call.1} parent=11 // pred_check
          %p436 = pneg %p276
        $region50: #{tpu_custom_call.1} parent=11 // pred_check_branch
          %438 = sbr.rel (%p436) target = $region52
        $region51: #{tpu_custom_call.1} parent=11 // pred_region
          _
        $region52: #{tpu_custom_call.1} parent=11 // pred_fallthru
          _
        // Predicated region
        $region53: #{tpu_custom_call.1} parent=11 // pred_check
          %p439 = pneg %p297
        $region54: #{tpu_custom_call.1} parent=11 // pred_check_branch
          %441 = sbr.rel (%p439) target = $region56
        $region55: #{tpu_custom_call.1} parent=11 // pred_region
          _
        $region56: #{tpu_custom_call.1} parent=11 // pred_fallthru
          _
        // Predicated region
        $region57: #{tpu_custom_call.1} parent=11 // pred_check
          %p442 = pneg %p318
        $region58: #{tpu_custom_call.1} parent=11 // pred_check_branch
          %444 = sbr.rel (%p442) target = $region60
        $region59: #{tpu_custom_call.1} parent=11 // pred_region
          _
        $region60: #{tpu_custom_call.1} parent=11 // pred_fallthru
          _
      $region12: #{tpu_custom_call.1} parent=5 // pred_fallthru
        _
      %p445 = scmp.lt.s32.totalorder %s28, 4
      // Predicated region
      $region61: #{tpu_custom_call.1} parent=5 // pred_check
        %p446 = pneg %p445
      $region62: #{tpu_custom_call.1} parent=5 // pred_check_branch
        %448 = sbr.rel (%p446) target = $region64
      $region63: #{tpu_custom_call.1} parent=5 // pred_region
        // Predicated region
        $region65: #{tpu_custom_call.1} parent=63 // pred_check
          %p449 = pneg %p60
        $region66: #{tpu_custom_call.1} parent=63 // pred_check_branch
          %451 = sbr.rel (%p449) target = $region68
        $region67: #{tpu_custom_call.1} parent=63 // pred_region
          %s452 = sand.u32 %s50, 1
          %s453 = scalar_lea.sflag [#allocation4], %s452
          %s454 = sand.u32 %s50, 1
          %s455 = smul.addr %s454, 512
          %s456 = scalar_lea.vmem [#allocation3], %s455
          %s458 = ssub.s32 8192, 8192
          %459 = vsyncadd %s453, %s458
          %s460 = smul.addr %s35, 64
          %s461 = smul.addr %s460, 128
          %s462 = scalar_lea.hbm %s0, %s461
          %s463 = sshll.u32 %s456, 4
          %s464 = int_to_ptr.vmem [resolvable:$true] %s463
          %469 = dma.hbm_to_vmem [thread:$0]  %s462, 8192, %s464, %s453, 256, 256, 16
        $region68: #{tpu_custom_call.1} parent=63 // pred_fallthru
          _
      $region64: #{tpu_custom_call.1} parent=5 // pred_fallthru
        _
      %p470 = scmp.le.s32.totalorder 1, %s28
      %p471 = scmp.lt.s32.totalorder %s28, 5
      %p472 = pnand %p470, %p471
      %p473 = pneg %p472
      // Predicated region
      $region69: #{tpu_custom_call.1} parent=5 // pred_check
        _
      $region70: #{tpu_custom_call.1} parent=5 // pred_check_branch
        %475 = sbr.rel (%p472) target = $region72
      $region71: #{tpu_custom_call.1} parent=5 // pred_region
        %s476 = ssub.s32 %s28, 1
        %s477 = sand.u32 %s53, 1
        %s478 = scalar_lea.sflag [#allocation4], %s477
        %s479 = sand.u32 %s53, 1
        %s480 = smul.addr %s479, 512
        %s481 = scalar_lea.vmem [#allocation3], %s480
        // Predicated region
        $region73: #{tpu_custom_call.1} parent=71 // pred_check
          %p482 = pneg %p66
        $region74: #{tpu_custom_call.1} parent=71 // pred_check_branch
          %484 = sbr.rel (%p482) target = $region76
        $region75: #{tpu_custom_call.1} parent=71 // pred_region
          %485 = dma.done %s478, 8192
        $region76: #{tpu_custom_call.1} parent=71 // pred_fallthru
          _
        // Predicated region
        $region77: #{tpu_custom_call.1} parent=71 // pred_check
          %p486 = pneg %p87
        $region78: #{tpu_custom_call.1} parent=71 // pred_check_branch
          %488 = sbr.rel (%p486) target = $region80
        $region79: #{tpu_custom_call.1} parent=71 // pred_region
          %489 = dma.done [#allocation7], 12288
        $region80: #{tpu_custom_call.1} parent=71 // pred_fallthru
          _
        // Predicated region
        $region81: #{tpu_custom_call.1} parent=71 // pred_check
          %p490 = pneg %p108
        $region82: #{tpu_custom_call.1} parent=71 // pred_check_branch
          %492 = sbr.rel (%p490) target = $region84
        $region83: #{tpu_custom_call.1} parent=71 // pred_region
          %493 = dma.done [#allocation7], 96
        $region84: #{tpu_custom_call.1} parent=71 // pred_fallthru
          _
        // Predicated region
        $region85: #{tpu_custom_call.1} parent=71 // pred_check
          %p494 = pneg %p129
        $region86: #{tpu_custom_call.1} parent=71 // pred_check_branch
          %496 = sbr.rel (%p494) target = $region88
        $region87: #{tpu_custom_call.1} parent=71 // pred_region
          %497 = dma.done [#allocation10], 4096
        $region88: #{tpu_custom_call.1} parent=71 // pred_fallthru
          _
        // Predicated region
        $region89: #{tpu_custom_call.1} parent=71 // pred_check
          %p498 = pneg %p213
        $region90: #{tpu_custom_call.1} parent=71 // pred_check_branch
          %500 = sbr.rel (%p498) target = $region92
        $region91: #{tpu_custom_call.1} parent=71 // pred_region
          %501 = dma.done [#allocation10], 8192
        $region92: #{tpu_custom_call.1} parent=71 // pred_fallthru
          _
        // Predicated region
        $region93: #{tpu_custom_call.1} parent=71 // pred_check
          %p502 = pneg %p255
        $region94: #{tpu_custom_call.1} parent=71 // pred_check_branch
          %504 = sbr.rel (%p502) target = $region96
        $region95: #{tpu_custom_call.1} parent=71 // pred_region
          %505 = dma.done [#allocation13], 8192
        $region96: #{tpu_custom_call.1} parent=71 // pred_fallthru
          _
        %s506 = sand.u32 %s53, 1
        %s507 = scalar_lea.sflag [#allocation4], %s506
        %s508 = sand.u32 %s53, 1
        %s509 = smul.addr %s508, 512
        %s510 = scalar_lea.vmem [#allocation3], %s509
        %p511 = pneg %p66
        %p512 = pneg %p63
        %p513 = pneg %p87
        %p514 = pneg %p84
        %p515 = pneg %p108
        %p516 = pneg %p105
        %p517 = pneg %p129
        %p518 = pneg %p126
        %p519 = pneg %p150
        %p520 = pneg %p147
        %p521 = pneg %p171
        %p522 = pneg %p168
        %p523 = pneg %p192
        %p524 = pneg %p189
        %p525 = pneg %p213
        %p526 = pneg %p210
        %p527 = pneg %p234
        %p528 = pneg %p231
        %p529 = pneg %p255
        %p530 = pneg %p252
        %p531 = pneg %p276
        %p532 = pneg %p273
        %p533 = pneg %p297
        %p534 = pneg %p294
        %p535 = pneg %p318
        %p536 = pneg %p315
        %p537 = pneg %p346
        %p538 = pneg %p343
        %s539 = sand.u32 %s333, 1
        %s540 = scalar_lea.sflag [#allocation5], %s539
        %s541 = sand.u32 %s333, 1
        %s542 = smul.addr %s541, 256
        %s543 = scalar_lea.vmem [#allocation14], %s542
        %s544 = smul.u32 16, %s38
        %p546 = scmp.eq.s32.totalorder %s38, 0
        // Predicated region
        $region97: #{tpu_custom_call.1} parent=71 // pred_check
          %p547 = pneg %p546
        $region98: #{tpu_custom_call.1} parent=71 // pred_check_branch
          %549 = sbr.rel (%p547) target = $region100
        $region99: #{tpu_custom_call.1} parent=71 // pred_region
          %v550 = vld [vmem:[#allocation6] sm:$0xff]
          %v551 = vld [vmem:[#allocation6 + $0x8] sm:$0xff]
          %v552 = vld [vmem:[#allocation6 + $0x10] sm:$0xff]
          %v553 = vld [vmem:[#allocation6 + $0x18] sm:$0xff]
          %v554 = vld [vmem:[#allocation6 + $0x20] sm:$0xff]
          %v555 = vld [vmem:[#allocation6 + $0x28] sm:$0xff]
          %v556 = vld [vmem:[#allocation6 + $0x30] sm:$0xff]
          %v557 = vld [vmem:[#allocation6 + $0x38] sm:$0xff]
          %v558 = vld [vmem:[#allocation6 + $0x40] sm:$0xff]
          %v559 = vld [vmem:[#allocation6 + $0x48] sm:$0xff]
          %v560 = vld [vmem:[#allocation6 + $0x50] sm:$0xff]
          %v561 = vld [vmem:[#allocation6 + $0x58] sm:$0xff]
          %v562 = vld [vmem:[#allocation6 + $0x60] sm:$0xff]
          %v563 = vld [vmem:[#allocation6 + $0x68] sm:$0xff]
          %v564 = vld [vmem:[#allocation6 + $0x70] sm:$0xff]
          %v565 = vld [vmem:[#allocation6 + $0x78] sm:$0xff]
          %v566 = vld [vmem:[#allocation6 + $0x80] sm:$0xff]
          %v567 = vld [vmem:[#allocation6 + $0x88] sm:$0xff]
          %v568 = vld [vmem:[#allocation6 + $0x90] sm:$0xff]
          %v569 = vld [vmem:[#allocation6 + $0x98] sm:$0xff]
          %v570 = vld [vmem:[#allocation6 + $0xa0] sm:$0xff]
          %v571 = vld [vmem:[#allocation6 + $0xa8] sm:$0xff]
          %v572 = vld [vmem:[#allocation6 + $0xb0] sm:$0xff]
          %v573 = vld [vmem:[#allocation6 + $0xb8] sm:$0xff]
          %v574 = vld [vmem:[#allocation6 + $0xc0] sm:$0xff]
          %v575 = vld [vmem:[#allocation6 + $0xc8] sm:$0xff]
          %v576 = vld [vmem:[#allocation6 + $0xd0] sm:$0xff]
          %v577 = vld [vmem:[#allocation6 + $0xd8] sm:$0xff]
          %v578 = vld [vmem:[#allocation6 + $0xe0] sm:$0xff]
          %v579 = vld [vmem:[#allocation6 + $0xe8] sm:$0xff]
          %v580 = vld [vmem:[#allocation6 + $0xf0] sm:$0xff]
          %v581 = vld [vmem:[#allocation6 + $0xf8] sm:$0xff]
          %v582 = vld [vmem:[#allocation6 + $0x100] sm:$0xff]
          %v583 = vld [vmem:[#allocation6 + $0x108] sm:$0xff]
          %v584 = vld [vmem:[#allocation6 + $0x110] sm:$0xff]
          %v585 = vld [vmem:[#allocation6 + $0x118] sm:$0xff]
          %v586 = vld [vmem:[#allocation6 + $0x120] sm:$0xff]
          %v587 = vld [vmem:[#allocation6 + $0x128] sm:$0xff]
          %v588 = vld [vmem:[#allocation6 + $0x130] sm:$0xff]
          %v589 = vld [vmem:[#allocation6 + $0x138] sm:$0xff]
          %v590 = vld [vmem:[#allocation6 + $0x140] sm:$0xff]
          %v591 = vld [vmem:[#allocation6 + $0x148] sm:$0xff]
          %v592 = vld [vmem:[#allocation6 + $0x150] sm:$0xff]
          %v593 = vld [vmem:[#allocation6 + $0x158] sm:$0xff]
          %v594 = vld [vmem:[#allocation6 + $0x160] sm:$0xff]
          %v595 = vld [vmem:[#allocation6 + $0x168] sm:$0xff]
          %v596 = vld [vmem:[#allocation6 + $0x170] sm:$0xff]
          %v597 = vld [vmem:[#allocation6 + $0x178] sm:$0xff]
          %v598 = vld [vmem:[#allocation6 + $0x180] sm:$0xff]
          %v599 = vld [vmem:[#allocation6 + $0x188] sm:$0xff]
          %v600 = vld [vmem:[#allocation6 + $0x190] sm:$0xff]
          %v601 = vld [vmem:[#allocation6 + $0x198] sm:$0xff]
          %v602 = vld [vmem:[#allocation6 + $0x1a0] sm:$0xff]
          %v603 = vld [vmem:[#allocation6 + $0x1a8] sm:$0xff]
          %v604 = vld [vmem:[#allocation6 + $0x1b0] sm:$0xff]
          %v605 = vld [vmem:[#allocation6 + $0x1b8] sm:$0xff]
          %v606 = vld [vmem:[#allocation6 + $0x1c0] sm:$0xff]
          %v607 = vld [vmem:[#allocation6 + $0x1c8] sm:$0xff]
          %v608 = vld [vmem:[#allocation6 + $0x1d0] sm:$0xff]
          %v609 = vld [vmem:[#allocation6 + $0x1d8] sm:$0xff]
          %v610 = vld [vmem:[#allocation6 + $0x1e0] sm:$0xff]
          %v611 = vld [vmem:[#allocation6 + $0x1e8] sm:$0xff]
          %v612 = vld [vmem:[#allocation6 + $0x1f0] sm:$0xff]
          %v613 = vld [vmem:[#allocation6 + $0x1f8] sm:$0xff]
          %v614 = vld [vmem:[#allocation6 + $0x200] sm:$0xff]
          %v615 = vld [vmem:[#allocation6 + $0x208] sm:$0xff]
          %v616 = vld [vmem:[#allocation6 + $0x210] sm:$0xff]
          %v617 = vld [vmem:[#allocation6 + $0x218] sm:$0xff]
          %v618 = vld [vmem:[#allocation6 + $0x220] sm:$0xff]
          %v619 = vld [vmem:[#allocation6 + $0x228] sm:$0xff]
          %v620 = vld [vmem:[#allocation6 + $0x230] sm:$0xff]
          %v621 = vld [vmem:[#allocation6 + $0x238] sm:$0xff]
          %v622 = vld [vmem:[#allocation6 + $0x240] sm:$0xff]
          %v623 = vld [vmem:[#allocation6 + $0x248] sm:$0xff]
          %v624 = vld [vmem:[#allocation6 + $0x250] sm:$0xff]
          %v625 = vld [vmem:[#allocation6 + $0x258] sm:$0xff]
          %v626 = vld [vmem:[#allocation6 + $0x260] sm:$0xff]
          %v627 = vld [vmem:[#allocation6 + $0x268] sm:$0xff]
          %v628 = vld [vmem:[#allocation6 + $0x270] sm:$0xff]
          %v629 = vld [vmem:[#allocation6 + $0x278] sm:$0xff]
          %v630 = vld [vmem:[#allocation6 + $0x280] sm:$0xff]
          %v631 = vld [vmem:[#allocation6 + $0x288] sm:$0xff]
          %v632 = vld [vmem:[#allocation6 + $0x290] sm:$0xff]
          %v633 = vld [vmem:[#allocation6 + $0x298] sm:$0xff]
          %v634 = vld [vmem:[#allocation6 + $0x2a0] sm:$0xff]
          %v635 = vld [vmem:[#allocation6 + $0x2a8] sm:$0xff]
          %v636 = vld [vmem:[#allocation6 + $0x2b0] sm:$0xff]
          %v637 = vld [vmem:[#allocation6 + $0x2b8] sm:$0xff]
          %v638 = vld [vmem:[#allocation6 + $0x2c0] sm:$0xff]
          %v639 = vld [vmem:[#allocation6 + $0x2c8] sm:$0xff]
          %v640 = vld [vmem:[#allocation6 + $0x2d0] sm:$0xff]
          %v641 = vld [vmem:[#allocation6 + $0x2d8] sm:$0xff]
          %v642 = vld [vmem:[#allocation6 + $0x2e0] sm:$0xff]
          %v643 = vld [vmem:[#allocation6 + $0x2e8] sm:$0xff]
          %v644 = vld [vmem:[#allocation6 + $0x2f0] sm:$0xff]
          %v645 = vld [vmem:[#allocation6 + $0x2f8] sm:$0xff]
          %v646 = vld [vmem:[#allocation8] sm:$0x3f]
          %v647 = vld [vmem:[%s481] sm:$0xff]
          %v648 = vld [vmem:[%s481 + $0x8] sm:$0xff]
          %v649 = vld [vmem:[%s481 + $0x10] sm:$0xff]
          %v650 = vld [vmem:[%s481 + $0x18] sm:$0xff]
          %v651 = vld [vmem:[%s481 + $0x20] sm:$0xff]
          %v652 = vld [vmem:[%s481 + $0x28] sm:$0xff]
          %v653 = vld [vmem:[%s481 + $0x30] sm:$0xff]
          %v654 = vld [vmem:[%s481 + $0x38] sm:$0xff]
          %v655 = vld [vmem:[%s481 + $0x40] sm:$0xff]
          %v656 = vld [vmem:[%s481 + $0x48] sm:$0xff]
          %v657 = vld [vmem:[%s481 + $0x50] sm:$0xff]
          %v658 = vld [vmem:[%s481 + $0x58] sm:$0xff]
          %v659 = vld [vmem:[%s481 + $0x60] sm:$0xff]
          %v660 = vld [vmem:[%s481 + $0x68] sm:$0xff]
          %v661 = vld [vmem:[%s481 + $0x70] sm:$0xff]
          %v662 = vld [vmem:[%s481 + $0x78] sm:$0xff]
          %v663 = vld [vmem:[%s481 + $0x80] sm:$0xff]
          %v664 = vld [vmem:[%s481 + $0x88] sm:$0xff]
          %v665 = vld [vmem:[%s481 + $0x90] sm:$0xff]
          %v666 = vld [vmem:[%s481 + $0x98] sm:$0xff]
          %v667 = vld [vmem:[%s481 + $0xa0] sm:$0xff]
          %v668 = vld [vmem:[%s481 + $0xa8] sm:$0xff]
          %v669 = vld [vmem:[%s481 + $0xb0] sm:$0xff]
          %v670 = vld [vmem:[%s481 + $0xb8] sm:$0xff]
          %v671 = vld [vmem:[%s481 + $0xc0] sm:$0xff]
          %v672 = vld [vmem:[%s481 + $0xc8] sm:$0xff]
          %v673 = vld [vmem:[%s481 + $0xd0] sm:$0xff]
          %v674 = vld [vmem:[%s481 + $0xd8] sm:$0xff]
          %v675 = vld [vmem:[%s481 + $0xe0] sm:$0xff]
          %v676 = vld [vmem:[%s481 + $0xe8] sm:$0xff]
          %v677 = vld [vmem:[%s481 + $0xf0] sm:$0xff]
          %v678 = vld [vmem:[%s481 + $0xf8] sm:$0xff]
          %v679 = vpack.c.bf16 %v649, %v647
          %v680 = vpack.c.bf16 %v650, %v648
          %v681 = vpack.c.bf16 %v653, %v651
          %v682 = vpack.c.bf16 %v654, %v652
          %v683 = vpack.c.bf16 %v657, %v655
          %v684 = vpack.c.bf16 %v658, %v656
          %v685 = vpack.c.bf16 %v661, %v659
          %v686 = vpack.c.bf16 %v662, %v660
          %v687 = vpack.c.bf16 %v665, %v663
          %v688 = vpack.c.bf16 %v666, %v664
          %v689 = vpack.c.bf16 %v669, %v667
          %v690 = vpack.c.bf16 %v670, %v668
          %v691 = vpack.c.bf16 %v673, %v671
          %v692 = vpack.c.bf16 %v674, %v672
          %v693 = vpack.c.bf16 %v677, %v675
          %v694 = vpack.c.bf16 %v678, %v676
          %v696 = vlaneseq
          %v697 = vshrl.u32 %v696, 7
          %v698 = vsub.s32 0, %v697
          %v699 = vrot.slane %v646, %v698
          %v700 = vlaneseq
          %v701 = vshrl.u32 %v700, 7
          %v702 = vsub.s32 1, %v701
          %v703 = vrot.slane %v646, %v702
          %v704 = vlaneseq
          %v705 = vshrl.u32 %v704, 7
          %v706 = vsub.s32 2, %v705
          %v707 = vrot.slane %v646, %v706
          %v708 = vlaneseq
          %v709 = vshrl.u32 %v708, 7
          %v710 = vsub.s32 3, %v709
          %v711 = vrot.slane %v646, %v710
          %v712 = vlaneseq
          %v713 = vshrl.u32 %v712, 7
          %v714 = vsub.s32 4, %v713
          %v715 = vrot.slane %v646, %v714
          %v716 = vlaneseq
          %v717 = vshrl.u32 %v716, 7
          %v718 = vsub.s32 5, %v717
          %v719 = vrot.slane %v646, %v718
          %v822 = vunpack.c.l.b16 %v550
          %v823 = vunpack.c.h.b16 %v550
          %v824 = vunpack.c.l.b16 %v551
          %v825 = vunpack.c.h.b16 %v551
          %v826 = vunpack.c.l.b16 %v552
          %v827 = vunpack.c.h.b16 %v552
          %v828 = vunpack.c.l.b16 %v553
          %v829 = vunpack.c.h.b16 %v553
          %v830 = vunpack.c.l.b16 %v554
          %v831 = vunpack.c.h.b16 %v554
          %v832 = vunpack.c.l.b16 %v555
          %v833 = vunpack.c.h.b16 %v555
          %v834 = vunpack.c.l.b16 %v556
          %v835 = vunpack.c.h.b16 %v556
          %v836 = vunpack.c.l.b16 %v557
          %v837 = vunpack.c.h.b16 %v557
          %v838 = vunpack.c.l.b16 %v558
          %v839 = vunpack.c.h.b16 %v558
          %v840 = vunpack.c.l.b16 %v559
          %v841 = vunpack.c.h.b16 %v559
          %v842 = vunpack.c.l.b16 %v560
          %v843 = vunpack.c.h.b16 %v560
          %v844 = vunpack.c.l.b16 %v561
          %v845 = vunpack.c.h.b16 %v561
          %v846 = vunpack.c.l.b16 %v562
          %v847 = vunpack.c.h.b16 %v562
          %v848 = vunpack.c.l.b16 %v563
          %v849 = vunpack.c.h.b16 %v563
          %v850 = vunpack.c.l.b16 %v564
          %v851 = vunpack.c.h.b16 %v564
          %v852 = vunpack.c.l.b16 %v565
          %v853 = vunpack.c.h.b16 %v565
          %v854 = vunpack.c.l.b16 %v566
          %v855 = vunpack.c.h.b16 %v566
          %v856 = vunpack.c.l.b16 %v567
          %v857 = vunpack.c.h.b16 %v567
          %v858 = vunpack.c.l.b16 %v568
          %v859 = vunpack.c.h.b16 %v568
          %v860 = vunpack.c.l.b16 %v569
          %v861 = vunpack.c.h.b16 %v569
          %v862 = vunpack.c.l.b16 %v570
          %v863 = vunpack.c.h.b16 %v570
          %v864 = vunpack.c.l.b16 %v571
          %v865 = vunpack.c.h.b16 %v571
          %v866 = vunpack.c.l.b16 %v572
          %v867 = vunpack.c.h.b16 %v572
          %v868 = vunpack.c.l.b16 %v573
          %v869 = vunpack.c.h.b16 %v573
          %v870 = vunpack.c.l.b16 %v574
          %v871 = vunpack.c.h.b16 %v574
          %v872 = vunpack.c.l.b16 %v575
          %v873 = vunpack.c.h.b16 %v575
          %v874 = vunpack.c.l.b16 %v576
          %v875 = vunpack.c.h.b16 %v576
          %v876 = vunpack.c.l.b16 %v577
          %v877 = vunpack.c.h.b16 %v577
          %v878 = vunpack.c.l.b16 %v578
          %v879 = vunpack.c.h.b16 %v578
          %v880 = vunpack.c.l.b16 %v579
          %v881 = vunpack.c.h.b16 %v579
          %v882 = vunpack.c.l.b16 %v580
          %v883 = vunpack.c.h.b16 %v580
          %v884 = vunpack.c.l.b16 %v581
          %v885 = vunpack.c.h.b16 %v581
          %v886 = vunpack.c.l.b16 %v582
          %v887 = vunpack.c.h.b16 %v582
          %v888 = vunpack.c.l.b16 %v583
          %v889 = vunpack.c.h.b16 %v583
          %v890 = vunpack.c.l.b16 %v584
          %v891 = vunpack.c.h.b16 %v584
          %v892 = vunpack.c.l.b16 %v585
          %v893 = vunpack.c.h.b16 %v585
          %v894 = vunpack.c.l.b16 %v586
          %v895 = vunpack.c.h.b16 %v586
          %v896 = vunpack.c.l.b16 %v587
          %v897 = vunpack.c.h.b16 %v587
          %v898 = vunpack.c.l.b16 %v588
          %v899 = vunpack.c.h.b16 %v588
          %v900 = vunpack.c.l.b16 %v589
          %v901 = vunpack.c.h.b16 %v589
          %v902 = vunpack.c.l.b16 %v590
          %v903 = vunpack.c.h.b16 %v590
          %v904 = vunpack.c.l.b16 %v591
          %v905 = vunpack.c.h.b16 %v591
          %v906 = vunpack.c.l.b16 %v592
          %v907 = vunpack.c.h.b16 %v592
          %v908 = vunpack.c.l.b16 %v593
          %v909 = vunpack.c.h.b16 %v593
          %v910 = vunpack.c.l.b16 %v594
          %v911 = vunpack.c.h.b16 %v594
          %v912 = vunpack.c.l.b16 %v595
          %v913 = vunpack.c.h.b16 %v595
          %v914 = vunpack.c.l.b16 %v596
          %v915 = vunpack.c.h.b16 %v596
          %v916 = vunpack.c.l.b16 %v597
          %v917 = vunpack.c.h.b16 %v597
          %v918 = vunpack.c.l.b16 %v598
          %v919 = vunpack.c.h.b16 %v598
          %v920 = vunpack.c.l.b16 %v599
          %v921 = vunpack.c.h.b16 %v599
          %v922 = vunpack.c.l.b16 %v600
          %v923 = vunpack.c.h.b16 %v600
          %v924 = vunpack.c.l.b16 %v601
          %v925 = vunpack.c.h.b16 %v601
          %v926 = vunpack.c.l.b16 %v602
          %v927 = vunpack.c.h.b16 %v602
          %v928 = vunpack.c.l.b16 %v603
          %v929 = vunpack.c.h.b16 %v603
          %v930 = vunpack.c.l.b16 %v604
          %v931 = vunpack.c.h.b16 %v604
          %v932 = vunpack.c.l.b16 %v605
          %v933 = vunpack.c.h.b16 %v605
          %v934 = vunpack.c.l.b16 %v606
          %v935 = vunpack.c.h.b16 %v606
          %v936 = vunpack.c.l.b16 %v607
          %v937 = vunpack.c.h.b16 %v607
          %v938 = vunpack.c.l.b16 %v608
          %v939 = vunpack.c.h.b16 %v608
          %v940 = vunpack.c.l.b16 %v609
          %v941 = vunpack.c.h.b16 %v609
          %v942 = vunpack.c.l.b16 %v610
          %v943 = vunpack.c.h.b16 %v610
          %v944 = vunpack.c.l.b16 %v611
          %v945 = vunpack.c.h.b16 %v611
          %v946 = vunpack.c.l.b16 %v612
          %v947 = vunpack.c.h.b16 %v612
          %v948 = vunpack.c.l.b16 %v613
          %v949 = vunpack.c.h.b16 %v613
          %v950 = vunpack.c.l.b16 %v614
          %v951 = vunpack.c.h.b16 %v614
          %v952 = vunpack.c.l.b16 %v615
          %v953 = vunpack.c.h.b16 %v615
          %v954 = vunpack.c.l.b16 %v616
          %v955 = vunpack.c.h.b16 %v616
          %v956 = vunpack.c.l.b16 %v617
          %v957 = vunpack.c.h.b16 %v617
          %v958 = vunpack.c.l.b16 %v618
          %v959 = vunpack.c.h.b16 %v618
          %v960 = vunpack.c.l.b16 %v619
          %v961 = vunpack.c.h.b16 %v619
          %v962 = vunpack.c.l.b16 %v620
          %v963 = vunpack.c.h.b16 %v620
          %v964 = vunpack.c.l.b16 %v621
          %v965 = vunpack.c.h.b16 %v621
          %v966 = vunpack.c.l.b16 %v622
          %v967 = vunpack.c.h.b16 %v622
          %v968 = vunpack.c.l.b16 %v623
          %v969 = vunpack.c.h.b16 %v623
          %v970 = vunpack.c.l.b16 %v624
          %v971 = vunpack.c.h.b16 %v624
          %v972 = vunpack.c.l.b16 %v625
          %v973 = vunpack.c.h.b16 %v625
          %v974 = vunpack.c.l.b16 %v626
          %v975 = vunpack.c.h.b16 %v626
          %v976 = vunpack.c.l.b16 %v627
          %v977 = vunpack.c.h.b16 %v627
          %v978 = vunpack.c.l.b16 %v628
          %v979 = vunpack.c.h.b16 %v628
          %v980 = vunpack.c.l.b16 %v629
          %v981 = vunpack.c.h.b16 %v629
          %v982 = vunpack.c.l.b16 %v630
          %v983 = vunpack.c.h.b16 %v630
          %v984 = vunpack.c.l.b16 %v631
          %v985 = vunpack.c.h.b16 %v631
          %v986 = vunpack.c.l.b16 %v632
          %v987 = vunpack.c.h.b16 %v632
          %v988 = vunpack.c.l.b16 %v633
          %v989 = vunpack.c.h.b16 %v633
          %v990 = vunpack.c.l.b16 %v634
          %v991 = vunpack.c.h.b16 %v634
          %v992 = vunpack.c.l.b16 %v635
          %v993 = vunpack.c.h.b16 %v635
          %v994 = vunpack.c.l.b16 %v636
          %v995 = vunpack.c.h.b16 %v636
          %v996 = vunpack.c.l.b16 %v637
          %v997 = vunpack.c.h.b16 %v637
          %v998 = vunpack.c.l.b16 %v638
          %v999 = vunpack.c.h.b16 %v638
          %v1000 = vunpack.c.l.b16 %v639
          %v1001 = vunpack.c.h.b16 %v639
          %v1002 = vunpack.c.l.b16 %v640
          %v1003 = vunpack.c.h.b16 %v640
          %v1004 = vunpack.c.l.b16 %v641
          %v1005 = vunpack.c.h.b16 %v641
          %v1006 = vunpack.c.l.b16 %v642
          %v1007 = vunpack.c.h.b16 %v642
          %v1008 = vunpack.c.l.b16 %v643
          %v1009 = vunpack.c.h.b16 %v643
          %v1010 = vunpack.c.l.b16 %v644
          %v1011 = vunpack.c.h.b16 %v644
          %v1012 = vunpack.c.l.b16 %v645
          %v1013 = vunpack.c.h.b16 %v645
          %v1014 = vpack.c.b16 %v828, %v822
          %v1015 = vpack.c.b16 %v829, %v823
          %v1016 = vpack.c.b16 %v830, %v824
          %v1017 = vpack.c.b16 %v831, %v825
          %v1018 = vpack.c.b16 %v832, %v826
          %v1019 = vpack.c.b16 %v833, %v827
          %v1020 = vpack.c.b16 %v840, %v834
          %v1021 = vpack.c.b16 %v841, %v835
          %v1022 = vpack.c.b16 %v842, %v836
          %v1023 = vpack.c.b16 %v843, %v837
          %v1024 = vpack.c.b16 %v844, %v838
          %v1025 = vpack.c.b16 %v845, %v839
          %v1026 = vpack.c.b16 %v852, %v846
          %v1027 = vpack.c.b16 %v853, %v847
          %v1028 = vpack.c.b16 %v854, %v848
          %v1029 = vpack.c.b16 %v855, %v849
          %v1030 = vpack.c.b16 %v856, %v850
          %v1031 = vpack.c.b16 %v857, %v851
          %v1032 = vpack.c.b16 %v864, %v858
          %v1033 = vpack.c.b16 %v865, %v859
          %v1034 = vpack.c.b16 %v866, %v860
          %v1035 = vpack.c.b16 %v867, %v861
          %v1036 = vpack.c.b16 %v868, %v862
          %v1037 = vpack.c.b16 %v869, %v863
          %v1038 = vpack.c.b16 %v876, %v870
          %v1039 = vpack.c.b16 %v877, %v871
          %v1040 = vpack.c.b16 %v878, %v872
          %v1041 = vpack.c.b16 %v879, %v873
          %v1042 = vpack.c.b16 %v880, %v874
          %v1043 = vpack.c.b16 %v881, %v875
          %v1044 = vpack.c.b16 %v888, %v882
          %v1045 = vpack.c.b16 %v889, %v883
          %v1046 = vpack.c.b16 %v890, %v884
          %v1047 = vpack.c.b16 %v891, %v885
          %v1048 = vpack.c.b16 %v892, %v886
          %v1049 = vpack.c.b16 %v893, %v887
          %v1050 = vpack.c.b16 %v900, %v894
          %v1051 = vpack.c.b16 %v901, %v895
          %v1052 = vpack.c.b16 %v902, %v896
          %v1053 = vpack.c.b16 %v903, %v897
          %v1054 = vpack.c.b16 %v904, %v898
          %v1055 = vpack.c.b16 %v905, %v899
          %v1056 = vpack.c.b16 %v912, %v906
          %v1057 = vpack.c.b16 %v913, %v907
          %v1058 = vpack.c.b16 %v914, %v908
          %v1059 = vpack.c.b16 %v915, %v909
          %v1060 = vpack.c.b16 %v916, %v910
          %v1061 = vpack.c.b16 %v917, %v911
          %v1062 = vpack.c.b16 %v924, %v918
          %v1063 = vpack.c.b16 %v925, %v919
          %v1064 = vpack.c.b16 %v926, %v920
          %v1065 = vpack.c.b16 %v927, %v921
          %v1066 = vpack.c.b16 %v928, %v922
          %v1067 = vpack.c.b16 %v929, %v923
          %v1068 = vpack.c.b16 %v936, %v930
          %v1069 = vpack.c.b16 %v937, %v931
          %v1070 = vpack.c.b16 %v938, %v932
          %v1071 = vpack.c.b16 %v939, %v933
          %v1072 = vpack.c.b16 %v940, %v934
          %v1073 = vpack.c.b16 %v941, %v935
          %v1074 = vpack.c.b16 %v948, %v942
          %v1075 = vpack.c.b16 %v949, %v943
          %v1076 = vpack.c.b16 %v950, %v944
          %v1077 = vpack.c.b16 %v951, %v945
          %v1078 = vpack.c.b16 %v952, %v946
          %v1079 = vpack.c.b16 %v953, %v947
          %v1080 = vpack.c.b16 %v960, %v954
          %v1081 = vpack.c.b16 %v961, %v955
          %v1082 = vpack.c.b16 %v962, %v956
          %v1083 = vpack.c.b16 %v963, %v957
          %v1084 = vpack.c.b16 %v964, %v958
          %v1085 = vpack.c.b16 %v965, %v959
          %v1086 = vpack.c.b16 %v972, %v966
          %v1087 = vpack.c.b16 %v973, %v967
          %v1088 = vpack.c.b16 %v974, %v968
          %v1089 = vpack.c.b16 %v975, %v969
          %v1090 = vpack.c.b16 %v976, %v970
          %v1091 = vpack.c.b16 %v977, %v971
          %v1092 = vpack.c.b16 %v984, %v978
          %v1093 = vpack.c.b16 %v985, %v979
          %v1094 = vpack.c.b16 %v986, %v980
          %v1095 = vpack.c.b16 %v987, %v981
          %v1096 = vpack.c.b16 %v988, %v982
          %v1097 = vpack.c.b16 %v989, %v983
          %v1098 = vpack.c.b16 %v996, %v990
          %v1099 = vpack.c.b16 %v997, %v991
          %v1100 = vpack.c.b16 %v998, %v992
          %v1101 = vpack.c.b16 %v999, %v993
          %v1102 = vpack.c.b16 %v1000, %v994
          %v1103 = vpack.c.b16 %v1001, %v995
          %v1104 = vpack.c.b16 %v1008, %v1002
          %v1105 = vpack.c.b16 %v1009, %v1003
          %v1106 = vpack.c.b16 %v1010, %v1004
          %v1107 = vpack.c.b16 %v1011, %v1005
          %v1108 = vpack.c.b16 %v1012, %v1006
          %v1109 = vpack.c.b16 %v1013, %v1007
          %1206 = vmatprep.subr.bf16.mxu0 %v1057
          %1207 = vmatpush1.bf16.msra.mxu0 %v1056
          %1208 = vmatprep.subr.bf16.mxu0 %v1051
          %1209 = vmatpush1.bf16.msra.mxu0 %v1050
          %1210 = vmatprep.subr.bf16.mxu0 %v1045
          %1211 = vmatpush1.bf16.msra.mxu0 %v1044
          %1212 = vmatprep.subr.bf16.mxu0 %v1039
          %1213 = vmatpush1.bf16.msra.mxu0 %v1038
          %1214 = vmatprep.subr.bf16.mxu0 %v1033
          %1215 = vmatpush1.bf16.msra.mxu0 %v1032
          %1216 = vmatprep.subr.bf16.mxu0 %v1027
          %1217 = vmatpush1.bf16.msra.mxu0 %v1026
          %1218 = vmatprep.subr.bf16.mxu0 %v1021
          %1219 = vmatpush1.bf16.msra.mxu0 %v1020
          %1220 = vmatprep.subr.bf16.mxu0 %v1015
          %1221 = vmatpush1.bf16.msra.mxu0 %v1014
          %1222 = vmatprep.subr.bf16.mxu0 %v1105
          %1223 = vmatpush2.bf16.msra.mxu0 %v1104
          %1224 = vmatprep.subr.bf16.mxu0 %v1099
          %1225 = vmatpush2.bf16.msra.mxu0 %v1098
          %1226 = vmatprep.subr.bf16.mxu0 %v1093
          %1227 = vmatpush2.bf16.msra.mxu0 %v1092
          %1228 = vmatprep.subr.bf16.mxu0 %v1087
          %1229 = vmatpush2.bf16.msra.mxu0 %v1086
          %1230 = vmatprep.subr.bf16.mxu0 %v1081
          %1231 = vmatpush2.bf16.msra.mxu0 %v1080
          %1232 = vmatprep.subr.bf16.mxu0 %v1075
          %1233 = vmatpush2.bf16.msra.mxu0 %v1074
          %1234 = vmatprep.subr.bf16.mxu0 %v1069
          %1235 = vmatpush2.bf16.msra.mxu0 %v1068
          %1236 = vmatprep.subr.bf16.mxu0 %v1063
          %1237 = vmatpush2.bf16.msra.mxu0 %v1062
          %1238 = vmatprep.mubr.bf16.mxu0 %v680
          %1239 = vmatmul.mubr.bf16.gmra.mxu0 %v679
          %v1240 = vpop.f32.mrf.mxu0
          %v1241 = vadd.f32 %v699, %v1240
          %v1242 = vpop.f32.mrf.mxu0
          %v1243 = vadd.f32 %v703, %v1242
          %v1244 = vpop.f32.mrf.mxu0
          %v1245 = vadd.f32 %v699, %v1244
          %v1246 = vpop.f32.mrf.mxu0
          %v1247 = vadd.f32 %v703, %v1246
          %1248 = vmatprep.mubr.bf16.mxu0 %v682
          %1249 = vmatmul.mubr.bf16.gmra.mxu0 %v681
          %v1250 = vpop.f32.mrf.mxu0
          %v1251 = vadd.f32 %v699, %v1250
          %v1252 = vpop.f32.mrf.mxu0
          %v1253 = vadd.f32 %v703, %v1252
          %v1254 = vpop.f32.mrf.mxu0
          %v1255 = vadd.f32 %v699, %v1254
          %v1256 = vpop.f32.mrf.mxu0
          %v1257 = vadd.f32 %v703, %v1256
          %1258 = vmatprep.mubr.bf16.mxu0 %v684
          %1259 = vmatmul.mubr.bf16.gmra.mxu0 %v683
          %v1260 = vpop.f32.mrf.mxu0
          %v1261 = vadd.f32 %v699, %v1260
          %v1262 = vpop.f32.mrf.mxu0
          %v1263 = vadd.f32 %v703, %v1262
          %v1264 = vpop.f32.mrf.mxu0
          %v1265 = vadd.f32 %v699, %v1264
          %v1266 = vpop.f32.mrf.mxu0
          %v1267 = vadd.f32 %v703, %v1266
          %1268 = vmatprep.mubr.bf16.mxu0 %v686
          %1269 = vmatmul.mubr.bf16.gmra.mxu0 %v685
          %v1270 = vpop.f32.mrf.mxu0
          %v1271 = vadd.f32 %v699, %v1270
          %v1272 = vpop.f32.mrf.mxu0
          %v1273 = vadd.f32 %v703, %v1272
          %v1274 = vpop.f32.mrf.mxu0
          %v1275 = vadd.f32 %v699, %v1274
          %v1276 = vpop.f32.mrf.mxu0
          %v1277 = vadd.f32 %v703, %v1276
          %1278 = vmatprep.mubr.bf16.mxu0 %v688
          %1279 = vmatmul.mubr.bf16.gmra.mxu0 %v687
          %v1280 = vpop.f32.mrf.mxu0
          %v1281 = vadd.f32 %v699, %v1280
          %v1282 = vpop.f32.mrf.mxu0
          %v1283 = vadd.f32 %v703, %v1282
          %v1284 = vpop.f32.mrf.mxu0
          %v1285 = vadd.f32 %v699, %v1284
          %v1286 = vpop.f32.mrf.mxu0
          %v1287 = vadd.f32 %v703, %v1286
          %1288 = vmatprep.mubr.bf16.mxu0 %v690
          %1289 = vmatmul.mubr.bf16.gmra.mxu0 %v689
          %v1290 = vpop.f32.mrf.mxu0
          %v1291 = vadd.f32 %v699, %v1290
          %v1292 = vpop.f32.mrf.mxu0
          %v1293 = vadd.f32 %v703, %v1292
          %v1294 = vpop.f32.mrf.mxu0
          %v1295 = vadd.f32 %v699, %v1294
          %v1296 = vpop.f32.mrf.mxu0
          %v1297 = vadd.f32 %v703, %v1296
          %1298 = vmatprep.mubr.bf16.mxu0 %v692
          %1299 = vmatmul.mubr.bf16.gmra.mxu0 %v691
          %v1300 = vpop.f32.mrf.mxu0
          %v1301 = vadd.f32 %v699, %v1300
          %v1302 = vpop.f32.mrf.mxu0
          %v1303 = vadd.f32 %v703, %v1302
          %v1304 = vpop.f32.mrf.mxu0
          %v1305 = vadd.f32 %v699, %v1304
          %v1306 = vpop.f32.mrf.mxu0
          %v1307 = vadd.f32 %v703, %v1306
          %1308 = vmatprep.mubr.bf16.mxu0 %v694
          %1309 = vmatmul.mubr.bf16.gmra.mxu0 %v693
          %v1310 = vpop.f32.mrf.mxu0
          %v1311 = vadd.f32 %v699, %v1310
          %v1312 = vpop.f32.mrf.mxu0
          %v1313 = vadd.f32 %v703, %v1312
          %v1314 = vpop.f32.mrf.mxu0
          %v1315 = vadd.f32 %v699, %v1314
          %v1316 = vpop.f32.mrf.mxu0
          %v1317 = vadd.f32 %v703, %v1316
          %1318 = vdwg.mxu0
          %1319 = vmatprep.subr.bf16.mxu0 %v1059
          %1320 = vmatpush1.bf16.msra.mxu0 %v1058
          %1321 = vmatprep.subr.bf16.mxu0 %v1053
          %1322 = vmatpush1.bf16.msra.mxu0 %v1052
          %1323 = vmatprep.subr.bf16.mxu0 %v1047
          %1324 = vmatpush1.bf16.msra.mxu0 %v1046
          %1325 = vmatprep.subr.bf16.mxu0 %v1041
          %1326 = vmatpush1.bf16.msra.mxu0 %v1040
          %1327 = vmatprep.subr.bf16.mxu0 %v1035
          %1328 = vmatpush1.bf16.msra.mxu0 %v1034
          %1329 = vmatprep.subr.bf16.mxu0 %v1029
          %1330 = vmatpush1.bf16.msra.mxu0 %v1028
          %1331 = vmatprep.subr.bf16.mxu0 %v1023
          %1332 = vmatpush1.bf16.msra.mxu0 %v1022
          %1333 = vmatprep.subr.bf16.mxu0 %v1017
          %1334 = vmatpush1.bf16.msra.mxu0 %v1016
          %1335 = vmatprep.subr.bf16.mxu0 %v1107
          %1336 = vmatpush2.bf16.msra.mxu0 %v1106
          %1337 = vmatprep.subr.bf16.mxu0 %v1101
          %1338 = vmatpush2.bf16.msra.mxu0 %v1100
          %1339 = vmatprep.subr.bf16.mxu0 %v1095
          %1340 = vmatpush2.bf16.msra.mxu0 %v1094
          %1341 = vmatprep.subr.bf16.mxu0 %v1089
          %1342 = vmatpush2.bf16.msra.mxu0 %v1088
          %1343 = vmatprep.subr.bf16.mxu0 %v1083
          %1344 = vmatpush2.bf16.msra.mxu0 %v1082
          %1345 = vmatprep.subr.bf16.mxu0 %v1077
          %1346 = vmatpush2.bf16.msra.mxu0 %v1076
          %1347 = vmatprep.subr.bf16.mxu0 %v1071
          %1348 = vmatpush2.bf16.msra.mxu0 %v1070
          %1349 = vmatprep.subr.bf16.mxu0 %v1065
          %1350 = vmatpush2.bf16.msra.mxu0 %v1064
          %1351 = vmatprep.mubr.bf16.mxu0 %v680
          %1352 = vmatmul.mubr.bf16.gmra.mxu0 %v679
          %v1353 = vpop.f32.mrf.mxu0
          %v1354 = vadd.f32 %v707, %v1353
          %v1355 = vpop.f32.mrf.mxu0
          %v1356 = vadd.f32 %v711, %v1355
          %v1357 = vpop.f32.mrf.mxu0
          %v1358 = vadd.f32 %v707, %v1357
          %v1359 = vpop.f32.mrf.mxu0
          %v1360 = vadd.f32 %v711, %v1359
          %1361 = vmatprep.mubr.bf16.mxu0 %v682
          %1362 = vmatmul.mubr.bf16.gmra.mxu0 %v681
          %v1363 = vpop.f32.mrf.mxu0
          %v1364 = vadd.f32 %v707, %v1363
          %v1365 = vpop.f32.mrf.mxu0
          %v1366 = vadd.f32 %v711, %v1365
          %v1367 = vpop.f32.mrf.mxu0
          %v1368 = vadd.f32 %v707, %v1367
          %v1369 = vpop.f32.mrf.mxu0
          %v1370 = vadd.f32 %v711, %v1369
          %1371 = vmatprep.mubr.bf16.mxu0 %v684
          %1372 = vmatmul.mubr.bf16.gmra.mxu0 %v683
          %v1373 = vpop.f32.mrf.mxu0
          %v1374 = vadd.f32 %v707, %v1373
          %v1375 = vpop.f32.mrf.mxu0
          %v1376 = vadd.f32 %v711, %v1375
          %v1377 = vpop.f32.mrf.mxu0
          %v1378 = vadd.f32 %v707, %v1377
          %v1379 = vpop.f32.mrf.mxu0
          %v1380 = vadd.f32 %v711, %v1379
          %1381 = vmatprep.mubr.bf16.mxu0 %v686
          %1382 = vmatmul.mubr.bf16.gmra.mxu0 %v685
          %v1383 = vpop.f32.mrf.mxu0
          %v1384 = vadd.f32 %v707, %v1383
          %v1385 = vpop.f32.mrf.mxu0
          %v1386 = vadd.f32 %v711, %v1385
          %v1387 = vpop.f32.mrf.mxu0
          %v1388 = vadd.f32 %v707, %v1387
          %v1389 = vpop.f32.mrf.mxu0
          %v1390 = vadd.f32 %v711, %v1389
          %1391 = vmatprep.mubr.bf16.mxu0 %v688
          %1392 = vmatmul.mubr.bf16.gmra.mxu0 %v687
          %v1393 = vpop.f32.mrf.mxu0
          %v1394 = vadd.f32 %v707, %v1393
          %v1395 = vpop.f32.mrf.mxu0
          %v1396 = vadd.f32 %v711, %v1395
          %v1397 = vpop.f32.mrf.mxu0
          %v1398 = vadd.f32 %v707, %v1397
          %v1399 = vpop.f32.mrf.mxu0
          %v1400 = vadd.f32 %v711, %v1399
          %1401 = vmatprep.mubr.bf16.mxu0 %v690
          %1402 = vmatmul.mubr.bf16.gmra.mxu0 %v689
          %v1403 = vpop.f32.mrf.mxu0
          %v1404 = vadd.f32 %v707, %v1403
          %v1405 = vpop.f32.mrf.mxu0
          %v1406 = vadd.f32 %v711, %v1405
          %v1407 = vpop.f32.mrf.mxu0
          %v1408 = vadd.f32 %v707, %v1407
          %v1409 = vpop.f32.mrf.mxu0
          %v1410 = vadd.f32 %v711, %v1409
          %1411 = vmatprep.mubr.bf16.mxu0 %v692
          %1412 = vmatmul.mubr.bf16.gmra.mxu0 %v691
          %v1413 = vpop.f32.mrf.mxu0
          %v1414 = vadd.f32 %v707, %v1413
          %v1415 = vpop.f32.mrf.mxu0
          %v1416 = vadd.f32 %v711, %v1415
          %v1417 = vpop.f32.mrf.mxu0
          %v1418 = vadd.f32 %v707, %v1417
          %v1419 = vpop.f32.mrf.mxu0
          %v1420 = vadd.f32 %v711, %v1419
          %1421 = vmatprep.mubr.bf16.mxu0 %v694
          %1422 = vmatmul.mubr.bf16.gmra.mxu0 %v693
          %v1423 = vpop.f32.mrf.mxu0
          %v1424 = vadd.f32 %v707, %v1423
          %v1425 = vpop.f32.mrf.mxu0
          %v1426 = vadd.f32 %v711, %v1425
          %v1427 = vpop.f32.mrf.mxu0
          %v1428 = vadd.f32 %v707, %v1427
          %v1429 = vpop.f32.mrf.mxu0
          %v1430 = vadd.f32 %v711, %v1429
          %1431 = vdwg.mxu0
          %1432 = vmatprep.subr.bf16.mxu0 %v1061
          %1433 = vmatpush1.bf16.msra.mxu0 %v1060
          %1434 = vmatprep.subr.bf16.mxu0 %v1055
          %1435 = vmatpush1.bf16.msra.mxu0 %v1054
          %1436 = vmatprep.subr.bf16.mxu0 %v1049
          %1437 = vmatpush1.bf16.msra.mxu0 %v1048
          %1438 = vmatprep.subr.bf16.mxu0 %v1043
          %1439 = vmatpush1.bf16.msra.mxu0 %v1042
          %1440 = vmatprep.subr.bf16.mxu0 %v1037
          %1441 = vmatpush1.bf16.msra.mxu0 %v1036
          %1442 = vmatprep.subr.bf16.mxu0 %v1031
          %1443 = vmatpush1.bf16.msra.mxu0 %v1030
          %1444 = vmatprep.subr.bf16.mxu0 %v1025
          %1445 = vmatpush1.bf16.msra.mxu0 %v1024
          %1446 = vmatprep.subr.bf16.mxu0 %v1019
          %1447 = vmatpush1.bf16.msra.mxu0 %v1018
          %1448 = vmatprep.subr.bf16.mxu0 %v1109
          %1449 = vmatpush2.bf16.msra.mxu0 %v1108
          %1450 = vmatprep.subr.bf16.mxu0 %v1103
          %1451 = vmatpush2.bf16.msra.mxu0 %v1102
          %1452 = vmatprep.subr.bf16.mxu0 %v1097
          %1453 = vmatpush2.bf16.msra.mxu0 %v1096
          %1454 = vmatprep.subr.bf16.mxu0 %v1091
          %1455 = vmatpush2.bf16.msra.mxu0 %v1090
          %1456 = vmatprep.subr.bf16.mxu0 %v1085
          %1457 = vmatpush2.bf16.msra.mxu0 %v1084
          %1458 = vmatprep.subr.bf16.mxu0 %v1079
          %1459 = vmatpush2.bf16.msra.mxu0 %v1078
          %1460 = vmatprep.subr.bf16.mxu0 %v1073
          %1461 = vmatpush2.bf16.msra.mxu0 %v1072
          %1462 = vmatprep.subr.bf16.mxu0 %v1067
          %1463 = vmatpush2.bf16.msra.mxu0 %v1066
          %1464 = vmatprep.mubr.bf16.mxu0 %v680
          %1465 = vmatmul.mubr.bf16.gmra.mxu0 %v679
          %v1466 = vpop.f32.mrf.mxu0
          %v1467 = vadd.f32 %v715, %v1466
          %v1468 = vpop.f32.mrf.mxu0
          %v1469 = vadd.f32 %v719, %v1468
          %v1470 = vpop.f32.mrf.mxu0
          %v1471 = vadd.f32 %v715, %v1470
          %v1472 = vpop.f32.mrf.mxu0
          %v1473 = vadd.f32 %v719, %v1472
          %1474 = vmatprep.mubr.bf16.mxu0 %v682
          %1475 = vmatmul.mubr.bf16.gmra.mxu0 %v681
          %v1476 = vpop.f32.mrf.mxu0
          %v1477 = vadd.f32 %v715, %v1476
          %v1478 = vpop.f32.mrf.mxu0
          %v1479 = vadd.f32 %v719, %v1478
          %v1480 = vpop.f32.mrf.mxu0
          %v1481 = vadd.f32 %v715, %v1480
          %v1482 = vpop.f32.mrf.mxu0
          %v1483 = vadd.f32 %v719, %v1482
          %1484 = vmatprep.mubr.bf16.mxu0 %v684
          %1485 = vmatmul.mubr.bf16.gmra.mxu0 %v683
          %v1486 = vpop.f32.mrf.mxu0
          %v1487 = vadd.f32 %v715, %v1486
          %v1488 = vpop.f32.mrf.mxu0
          %v1489 = vadd.f32 %v719, %v1488
          %v1490 = vpop.f32.mrf.mxu0
          %v1491 = vadd.f32 %v715, %v1490
          %v1492 = vpop.f32.mrf.mxu0
          %v1493 = vadd.f32 %v719, %v1492
          %1494 = vmatprep.mubr.bf16.mxu0 %v686
          %1495 = vmatmul.mubr.bf16.gmra.mxu0 %v685
          %v1496 = vpop.f32.mrf.mxu0
          %v1497 = vadd.f32 %v715, %v1496
          %v1498 = vpop.f32.mrf.mxu0
          %v1499 = vadd.f32 %v719, %v1498
          %v1500 = vpop.f32.mrf.mxu0
          %v1501 = vadd.f32 %v715, %v1500
          %v1502 = vpop.f32.mrf.mxu0
          %v1503 = vadd.f32 %v719, %v1502
          %1504 = vmatprep.mubr.bf16.mxu0 %v688
          %1505 = vmatmul.mubr.bf16.gmra.mxu0 %v687
          %v1506 = vpop.f32.mrf.mxu0
          %v1507 = vadd.f32 %v715, %v1506
          %v1508 = vpop.f32.mrf.mxu0
          %v1509 = vadd.f32 %v719, %v1508
          %v1510 = vpop.f32.mrf.mxu0
          %v1511 = vadd.f32 %v715, %v1510
          %v1512 = vpop.f32.mrf.mxu0
          %v1513 = vadd.f32 %v719, %v1512
          %1514 = vmatprep.mubr.bf16.mxu0 %v690
          %1515 = vmatmul.mubr.bf16.gmra.mxu0 %v689
          %v1516 = vpop.f32.mrf.mxu0
          %v1517 = vadd.f32 %v715, %v1516
          %v1518 = vpop.f32.mrf.mxu0
          %v1519 = vadd.f32 %v719, %v1518
          %v1520 = vpop.f32.mrf.mxu0
          %v1521 = vadd.f32 %v715, %v1520
          %v1522 = vpop.f32.mrf.mxu0
          %v1523 = vadd.f32 %v719, %v1522
          %1524 = vmatprep.mubr.bf16.mxu0 %v692
          %1525 = vmatmul.mubr.bf16.gmra.mxu0 %v691
          %v1526 = vpop.f32.mrf.mxu0
          %v1527 = vadd.f32 %v715, %v1526
          %v1528 = vpop.f32.mrf.mxu0
          %v1529 = vadd.f32 %v719, %v1528
          %v1530 = vpop.f32.mrf.mxu0
          %v1531 = vadd.f32 %v715, %v1530
          %v1532 = vpop.f32.mrf.mxu0
          %v1533 = vadd.f32 %v719, %v1532
          %1534 = vmatprep.mubr.bf16.mxu0 %v694
          %1535 = vmatmul.mubr.bf16.gmra.mxu0 %v693
          %v1536 = vpop.f32.mrf.mxu0
          %v1537 = vadd.f32 %v715, %v1536
          %v1538 = vpop.f32.mrf.mxu0
          %v1539 = vadd.f32 %v719, %v1538
          %v1540 = vpop.f32.mrf.mxu0
          %v1541 = vadd.f32 %v715, %v1540
          %v1542 = vpop.f32.mrf.mxu0
          %v1543 = vadd.f32 %v719, %v1542
          %1544 = vdwg.mxu0
          %v1545 = vpack.c.bf16 %v1245, %v1241
          %v1546 = vpack.c.bf16 %v1247, %v1243
          %v1547 = vpack.c.bf16 %v1358, %v1354
          %v1548 = vpack.c.bf16 %v1360, %v1356
          %v1549 = vpack.c.bf16 %v1471, %v1467
          %v1550 = vpack.c.bf16 %v1473, %v1469
          %v1551 = vpack.c.bf16 %v1255, %v1251
          %v1552 = vpack.c.bf16 %v1257, %v1253
          %v1553 = vpack.c.bf16 %v1368, %v1364
          %v1554 = vpack.c.bf16 %v1370, %v1366
          %v1555 = vpack.c.bf16 %v1481, %v1477
          %v1556 = vpack.c.bf16 %v1483, %v1479
          %v1557 = vpack.c.bf16 %v1265, %v1261
          %v1558 = vpack.c.bf16 %v1267, %v1263
          %v1559 = vpack.c.bf16 %v1378, %v1374
          %v1560 = vpack.c.bf16 %v1380, %v1376
          %v1561 = vpack.c.bf16 %v1491, %v1487
          %v1562 = vpack.c.bf16 %v1493, %v1489
          %v1563 = vpack.c.bf16 %v1275, %v1271
          %v1564 = vpack.c.bf16 %v1277, %v1273
          %v1565 = vpack.c.bf16 %v1388, %v1384
          %v1566 = vpack.c.bf16 %v1390, %v1386
          %v1567 = vpack.c.bf16 %v1501, %v1497
          %v1568 = vpack.c.bf16 %v1503, %v1499
          %v1569 = vpack.c.bf16 %v1285, %v1281
          %v1570 = vpack.c.bf16 %v1287, %v1283
          %v1571 = vpack.c.bf16 %v1398, %v1394
          %v1572 = vpack.c.bf16 %v1400, %v1396
          %v1573 = vpack.c.bf16 %v1511, %v1507
          %v1574 = vpack.c.bf16 %v1513, %v1509
          %v1575 = vpack.c.bf16 %v1295, %v1291
          %v1576 = vpack.c.bf16 %v1297, %v1293
          %v1577 = vpack.c.bf16 %v1408, %v1404
          %v1578 = vpack.c.bf16 %v1410, %v1406
          %v1579 = vpack.c.bf16 %v1521, %v1517
          %v1580 = vpack.c.bf16 %v1523, %v1519
          %v1581 = vpack.c.bf16 %v1305, %v1301
          %v1582 = vpack.c.bf16 %v1307, %v1303
          %v1583 = vpack.c.bf16 %v1418, %v1414
          %v1584 = vpack.c.bf16 %v1420, %v1416
          %v1585 = vpack.c.bf16 %v1531, %v1527
          %v1586 = vpack.c.bf16 %v1533, %v1529
          %v1587 = vpack.c.bf16 %v1315, %v1311
          %v1588 = vpack.c.bf16 %v1317, %v1313
          %v1589 = vpack.c.bf16 %v1428, %v1424
          %v1590 = vpack.c.bf16 %v1430, %v1426
          %v1591 = vpack.c.bf16 %v1541, %v1537
          %v1592 = vpack.c.bf16 %v1543, %v1539
          %v1641 = vunpack.c.l.b16 %v1545
          %v1642 = vunpack.c.l.b16 %v1546
          %v1643 = vunpack.c.l.b16 %v1547
          %v1644 = vunpack.c.l.b16 %v1548
          %v1645 = vunpack.c.l.b16 %v1549
          %v1646 = vunpack.c.l.b16 %v1550
          %v1647 = vunpack.c.h.b16 %v1545
          %v1648 = vunpack.c.h.b16 %v1546
          %v1649 = vunpack.c.h.b16 %v1547
          %v1650 = vunpack.c.h.b16 %v1548
          %v1651 = vunpack.c.h.b16 %v1549
          %v1652 = vunpack.c.h.b16 %v1550
          %v1653 = vunpack.c.l.b16 %v1551
          %v1654 = vunpack.c.l.b16 %v1552
          %v1655 = vunpack.c.l.b16 %v1553
          %v1656 = vunpack.c.l.b16 %v1554
          %v1657 = vunpack.c.l.b16 %v1555
          %v1658 = vunpack.c.l.b16 %v1556
          %v1659 = vunpack.c.h.b16 %v1551
          %v1660 = vunpack.c.h.b16 %v1552
          %v1661 = vunpack.c.h.b16 %v1553
          %v1662 = vunpack.c.h.b16 %v1554
          %v1663 = vunpack.c.h.b16 %v1555
          %v1664 = vunpack.c.h.b16 %v1556
          %v1665 = vunpack.c.l.b16 %v1557
          %v1666 = vunpack.c.l.b16 %v1558
          %v1667 = vunpack.c.l.b16 %v1559
          %v1668 = vunpack.c.l.b16 %v1560
          %v1669 = vunpack.c.l.b16 %v1561
          %v1670 = vunpack.c.l.b16 %v1562
          %v1671 = vunpack.c.h.b16 %v1557
          %v1672 = vunpack.c.h.b16 %v1558
          %v1673 = vunpack.c.h.b16 %v1559
          %v1674 = vunpack.c.h.b16 %v1560
          %v1675 = vunpack.c.h.b16 %v1561
          %v1676 = vunpack.c.h.b16 %v1562
          %v1677 = vunpack.c.l.b16 %v1563
          %v1678 = vunpack.c.l.b16 %v1564
          %v1679 = vunpack.c.l.b16 %v1565
          %v1680 = vunpack.c.l.b16 %v1566
          %v1681 = vunpack.c.l.b16 %v1567
          %v1682 = vunpack.c.l.b16 %v1568
          %v1683 = vunpack.c.h.b16 %v1563
          %v1684 = vunpack.c.h.b16 %v1564
          %v1685 = vunpack.c.h.b16 %v1565
          %v1686 = vunpack.c.h.b16 %v1566
          %v1687 = vunpack.c.h.b16 %v1567
          %v1688 = vunpack.c.h.b16 %v1568
          %v1689 = vunpack.c.l.b16 %v1569
          %v1690 = vunpack.c.l.b16 %v1570
          %v1691 = vunpack.c.l.b16 %v1571
          %v1692 = vunpack.c.l.b16 %v1572
          %v1693 = vunpack.c.l.b16 %v1573
          %v1694 = vunpack.c.l.b16 %v1574
          %v1695 = vunpack.c.h.b16 %v1569
          %v1696 = vunpack.c.h.b16 %v1570
          %v1697 = vunpack.c.h.b16 %v1571
          %v1698 = vunpack.c.h.b16 %v1572
          %v1699 = vunpack.c.h.b16 %v1573
          %v1700 = vunpack.c.h.b16 %v1574
          %v1701 = vunpack.c.l.b16 %v1575
          %v1702 = vunpack.c.l.b16 %v1576
          %v1703 = vunpack.c.l.b16 %v1577
          %v1704 = vunpack.c.l.b16 %v1578
          %v1705 = vunpack.c.l.b16 %v1579
          %v1706 = vunpack.c.l.b16 %v1580
          %v1707 = vunpack.c.h.b16 %v1575
          %v1708 = vunpack.c.h.b16 %v1576
          %v1709 = vunpack.c.h.b16 %v1577
          %v1710 = vunpack.c.h.b16 %v1578
          %v1711 = vunpack.c.h.b16 %v1579
          %v1712 = vunpack.c.h.b16 %v1580
          %v1713 = vunpack.c.l.b16 %v1581
          %v1714 = vunpack.c.l.b16 %v1582
          %v1715 = vunpack.c.l.b16 %v1583
          %v1716 = vunpack.c.l.b16 %v1584
          %v1717 = vunpack.c.l.b16 %v1585
          %v1718 = vunpack.c.l.b16 %v1586
          %v1719 = vunpack.c.h.b16 %v1581
          %v1720 = vunpack.c.h.b16 %v1582
          %v1721 = vunpack.c.h.b16 %v1583
          %v1722 = vunpack.c.h.b16 %v1584
          %v1723 = vunpack.c.h.b16 %v1585
          %v1724 = vunpack.c.h.b16 %v1586
          %v1725 = vunpack.c.l.b16 %v1587
          %v1726 = vunpack.c.l.b16 %v1588
          %v1727 = vunpack.c.l.b16 %v1589
          %v1728 = vunpack.c.l.b16 %v1590
          %v1729 = vunpack.c.l.b16 %v1591
          %v1730 = vunpack.c.l.b16 %v1592
          %v1731 = vunpack.c.h.b16 %v1587
          %v1732 = vunpack.c.h.b16 %v1588
          %v1733 = vunpack.c.h.b16 %v1589
          %v1734 = vunpack.c.h.b16 %v1590
          %v1735 = vunpack.c.h.b16 %v1591
          %v1736 = vunpack.c.h.b16 %v1592
          %v1737 = vpack.c.b16 %v1642, %v1641
          %v1738 = vpack.c.b16 %v1644, %v1643
          %v1739 = vpack.c.b16 %v1646, %v1645
          %v1740 = vpack.c.b16 %v1648, %v1647
          %v1741 = vpack.c.b16 %v1650, %v1649
          %v1742 = vpack.c.b16 %v1652, %v1651
          %v1743 = vpack.c.b16 %v1654, %v1653
          %v1744 = vpack.c.b16 %v1656, %v1655
          %v1745 = vpack.c.b16 %v1658, %v1657
          %v1746 = vpack.c.b16 %v1660, %v1659
          %v1747 = vpack.c.b16 %v1662, %v1661
          %v1748 = vpack.c.b16 %v1664, %v1663
          %v1749 = vpack.c.b16 %v1666, %v1665
          %v1750 = vpack.c.b16 %v1668, %v1667
          %v1751 = vpack.c.b16 %v1670, %v1669
          %v1752 = vpack.c.b16 %v1672, %v1671
          %v1753 = vpack.c.b16 %v1674, %v1673
          %v1754 = vpack.c.b16 %v1676, %v1675
          %v1755 = vpack.c.b16 %v1678, %v1677
          %v1756 = vpack.c.b16 %v1680, %v1679
          %v1757 = vpack.c.b16 %v1682, %v1681
          %v1758 = vpack.c.b16 %v1684, %v1683
          %v1759 = vpack.c.b16 %v1686, %v1685
          %v1760 = vpack.c.b16 %v1688, %v1687
          %v1761 = vpack.c.b16 %v1690, %v1689
          %v1762 = vpack.c.b16 %v1692, %v1691
          %v1763 = vpack.c.b16 %v1694, %v1693
          %v1764 = vpack.c.b16 %v1696, %v1695
          %v1765 = vpack.c.b16 %v1698, %v1697
          %v1766 = vpack.c.b16 %v1700, %v1699
          %v1767 = vpack.c.b16 %v1702, %v1701
          %v1768 = vpack.c.b16 %v1704, %v1703
          %v1769 = vpack.c.b16 %v1706, %v1705
          %v1770 = vpack.c.b16 %v1708, %v1707
          %v1771 = vpack.c.b16 %v1710, %v1709
          %v1772 = vpack.c.b16 %v1712, %v1711
          %v1773 = vpack.c.b16 %v1714, %v1713
          %v1774 = vpack.c.b16 %v1716, %v1715
          %v1775 = vpack.c.b16 %v1718, %v1717
          %v1776 = vpack.c.b16 %v1720, %v1719
          %v1777 = vpack.c.b16 %v1722, %v1721
          %v1778 = vpack.c.b16 %v1724, %v1723
          %v1779 = vpack.c.b16 %v1726, %v1725
          %v1780 = vpack.c.b16 %v1728, %v1727
          %v1781 = vpack.c.b16 %v1730, %v1729
          %v1782 = vpack.c.b16 %v1732, %v1731
          %v1783 = vpack.c.b16 %v1734, %v1733
          %v1784 = vpack.c.b16 %v1736, %v1735
          %1833 = vst [vmem:[#allocation2] sm:$0xff] %v1737
          %1834 = vst [vmem:[#allocation2 + $0x8] sm:$0xff] %v1738
          %1835 = vst [vmem:[#allocation2 + $0x10] sm:$0xff] %v1739
          %1836 = vst [vmem:[#allocation2 + $0x18] sm:$0xff] %v1740
          %1837 = vst [vmem:[#allocation2 + $0x20] sm:$0xff] %v1741
          %1838 = vst [vmem:[#allocation2 + $0x28] sm:$0xff] %v1742
          %1839 = vst [vmem:[#allocation2 + $0x30] sm:$0xff] %v1743
          %1840 = vst [vmem:[#allocation2 + $0x38] sm:$0xff] %v1744
          %1841 = vst [vmem:[#allocation2 + $0x40] sm:$0xff] %v1745
          %1842 = vst [vmem:[#allocation2 + $0x48] sm:$0xff] %v1746
          %1843 = vst [vmem:[#allocation2 + $0x50] sm:$0xff] %v1747
          %1844 = vst [vmem:[#allocation2 + $0x58] sm:$0xff] %v1748
          %1845 = vst [vmem:[#allocation2 + $0x60] sm:$0xff] %v1749
          %1846 = vst [vmem:[#allocation2 + $0x68] sm:$0xff] %v1750
          %1847 = vst [vmem:[#allocation2 + $0x70] sm:$0xff] %v1751
          %1848 = vst [vmem:[#allocation2 + $0x78] sm:$0xff] %v1752
          %1849 = vst [vmem:[#allocation2 + $0x80] sm:$0xff] %v1753
          %1850 = vst [vmem:[#allocation2 + $0x88] sm:$0xff] %v1754
          %1851 = vst [vmem:[#allocation2 + $0x90] sm:$0xff] %v1755
          %1852 = vst [vmem:[#allocation2 + $0x98] sm:$0xff] %v1756
          %1853 = vst [vmem:[#allocation2 + $0xa0] sm:$0xff] %v1757
          %1854 = vst [vmem:[#allocation2 + $0xa8] sm:$0xff] %v1758
          %1855 = vst [vmem:[#allocation2 + $0xb0] sm:$0xff] %v1759
          %1856 = vst [vmem:[#allocation2 + $0xb8] sm:$0xff] %v1760
          %1857 = vst [vmem:[#allocation2 + $0xc0] sm:$0xff] %v1761
          %1858 = vst [vmem:[#allocation2 + $0xc8] sm:$0xff] %v1762
          %1859 = vst [vmem:[#allocation2 + $0xd0] sm:$0xff] %v1763
          %1860 = vst [vmem:[#allocation2 + $0xd8] sm:$0xff] %v1764
          %1861 = vst [vmem:[#allocation2 + $0xe0] sm:$0xff] %v1765
          %1862 = vst [vmem:[#allocation2 + $0xe8] sm:$0xff] %v1766
          %1863 = vst [vmem:[#allocation2 + $0xf0] sm:$0xff] %v1767
          %1864 = vst [vmem:[#allocation2 + $0xf8] sm:$0xff] %v1768
          %1865 = vst [vmem:[#allocation2 + $0x100] sm:$0xff] %v1769
          %1866 = vst [vmem:[#allocation2 + $0x108] sm:$0xff] %v1770
          %1867 = vst [vmem:[#allocation2 + $0x110] sm:$0xff] %v1771
          %1868 = vst [vmem:[#allocation2 + $0x118] sm:$0xff] %v1772
          %1869 = vst [vmem:[#allocation2 + $0x120] sm:$0xff] %v1773
          %1870 = vst [vmem:[#allocation2 + $0x128] sm:$0xff] %v1774
          %1871 = vst [vmem:[#allocation2 + $0x130] sm:$0xff] %v1775
          %1872 = vst [vmem:[#allocation2 + $0x138] sm:$0xff] %v1776
          %1873 = vst [vmem:[#allocation2 + $0x140] sm:$0xff] %v1777
          %1874 = vst [vmem:[#allocation2 + $0x148] sm:$0xff] %v1778
          %1875 = vst [vmem:[#allocation2 + $0x150] sm:$0xff] %v1779
          %1876 = vst [vmem:[#allocation2 + $0x158] sm:$0xff] %v1780
          %1877 = vst [vmem:[#allocation2 + $0x160] sm:$0xff] %v1781
          %1878 = vst [vmem:[#allocation2 + $0x168] sm:$0xff] %v1782
          %1879 = vst [vmem:[#allocation2 + $0x170] sm:$0xff] %v1783
          %1880 = vst [vmem:[#allocation2 + $0x178] sm:$0xff] %v1784
          %v1881 = vld [vmem:[%s481 + $0x100] sm:$0xff]
          %v1882 = vld [vmem:[%s481 + $0x108] sm:$0xff]
          %v1883 = vld [vmem:[%s481 + $0x110] sm:$0xff]
          %v1884 = vld [vmem:[%s481 + $0x118] sm:$0xff]
          %v1885 = vld [vmem:[%s481 + $0x120] sm:$0xff]
          %v1886 = vld [vmem:[%s481 + $0x128] sm:$0xff]
          %v1887 = vld [vmem:[%s481 + $0x130] sm:$0xff]
          %v1888 = vld [vmem:[%s481 + $0x138] sm:$0xff]
          %v1889 = vld [vmem:[%s481 + $0x140] sm:$0xff]
          %v1890 = vld [vmem:[%s481 + $0x148] sm:$0xff]
          %v1891 = vld [vmem:[%s481 + $0x150] sm:$0xff]
          %v1892 = vld [vmem:[%s481 + $0x158] sm:$0xff]
          %v1893 = vld [vmem:[%s481 + $0x160] sm:$0xff]
          %v1894 = vld [vmem:[%s481 + $0x168] sm:$0xff]
          %v1895 = vld [vmem:[%s481 + $0x170] sm:$0xff]
          %v1896 = vld [vmem:[%s481 + $0x178] sm:$0xff]
          %v1897 = vld [vmem:[%s481 + $0x180] sm:$0xff]
          %v1898 = vld [vmem:[%s481 + $0x188] sm:$0xff]
          %v1899 = vld [vmem:[%s481 + $0x190] sm:$0xff]
          %v1900 = vld [vmem:[%s481 + $0x198] sm:$0xff]
          %v1901 = vld [vmem:[%s481 + $0x1a0] sm:$0xff]
          %v1902 = vld [vmem:[%s481 + $0x1a8] sm:$0xff]
          %v1903 = vld [vmem:[%s481 + $0x1b0] sm:$0xff]
          %v1904 = vld [vmem:[%s481 + $0x1b8] sm:$0xff]
          %v1905 = vld [vmem:[%s481 + $0x1c0] sm:$0xff]
          %v1906 = vld [vmem:[%s481 + $0x1c8] sm:$0xff]
          %v1907 = vld [vmem:[%s481 + $0x1d0] sm:$0xff]
          %v1908 = vld [vmem:[%s481 + $0x1d8] sm:$0xff]
          %v1909 = vld [vmem:[%s481 + $0x1e0] sm:$0xff]
          %v1910 = vld [vmem:[%s481 + $0x1e8] sm:$0xff]
          %v1911 = vld [vmem:[%s481 + $0x1f0] sm:$0xff]
          %v1912 = vld [vmem:[%s481 + $0x1f8] sm:$0xff]
          %v1913 = vpack.c.bf16 %v1883, %v1881
          %v1914 = vpack.c.bf16 %v1884, %v1882
          %v1915 = vpack.c.bf16 %v1887, %v1885
          %v1916 = vpack.c.bf16 %v1888, %v1886
          %v1917 = vpack.c.bf16 %v1891, %v1889
          %v1918 = vpack.c.bf16 %v1892, %v1890
          %v1919 = vpack.c.bf16 %v1895, %v1893
          %v1920 = vpack.c.bf16 %v1896, %v1894
          %v1921 = vpack.c.bf16 %v1899, %v1897
          %v1922 = vpack.c.bf16 %v1900, %v1898
          %v1923 = vpack.c.bf16 %v1903, %v1901
          %v1924 = vpack.c.bf16 %v1904, %v1902
          %v1925 = vpack.c.bf16 %v1907, %v1905
          %v1926 = vpack.c.bf16 %v1908, %v1906
          %v1927 = vpack.c.bf16 %v1911, %v1909
          %v1928 = vpack.c.bf16 %v1912, %v1910
          %1929 = vmatprep.subr.bf16.mxu0 %v1057
          %1930 = vmatpush1.bf16.msra.mxu0 %v1056
          %1931 = vmatprep.subr.bf16.mxu0 %v1051
          %1932 = vmatpush1.bf16.msra.mxu0 %v1050
          %1933 = vmatprep.subr.bf16.mxu0 %v1045
          %1934 = vmatpush1.bf16.msra.mxu0 %v1044
          %1935 = vmatprep.subr.bf16.mxu0 %v1039
          %1936 = vmatpush1.bf16.msra.mxu0 %v1038
          %1937 = vmatprep.subr.bf16.mxu0 %v1033
          %1938 = vmatpush1.bf16.msra.mxu0 %v1032
          %1939 = vmatprep.subr.bf16.mxu0 %v1027
          %1940 = vmatpush1.bf16.msra.mxu0 %v1026
          %1941 = vmatprep.subr.bf16.mxu0 %v1021
          %1942 = vmatpush1.bf16.msra.mxu0 %v1020
          %1943 = vmatprep.subr.bf16.mxu0 %v1015
          %1944 = vmatpush1.bf16.msra.mxu0 %v1014
          %1945 = vmatprep.subr.bf16.mxu0 %v1105
          %1946 = vmatpush2.bf16.msra.mxu0 %v1104
          %1947 = vmatprep.subr.bf16.mxu0 %v1099
          %1948 = vmatpush2.bf16.msra.mxu0 %v1098
          %1949 = vmatprep.subr.bf16.mxu0 %v1093
          %1950 = vmatpush2.bf16.msra.mxu0 %v1092
          %1951 = vmatprep.subr.bf16.mxu0 %v1087
          %1952 = vmatpush2.bf16.msra.mxu0 %v1086
          %1953 = vmatprep.subr.bf16.mxu0 %v1081
          %1954 = vmatpush2.bf16.msra.mxu0 %v1080
          %1955 = vmatprep.subr.bf16.mxu0 %v1075
          %1956 = vmatpush2.bf16.msra.mxu0 %v1074
          %1957 = vmatprep.subr.bf16.mxu0 %v1069
          %1958 = vmatpush2.bf16.msra.mxu0 %v1068
          %1959 = vmatprep.subr.bf16.mxu0 %v1063
          %1960 = vmatpush2.bf16.msra.mxu0 %v1062
          %1961 = vmatprep.mubr.bf16.mxu0 %v1914
          %1962 = vmatmul.mubr.bf16.gmra.mxu0 %v1913
          %v1963 = vpop.f32.mrf.mxu0
          %v1964 = vadd.f32 %v699, %v1963
          %v1965 = vpop.f32.mrf.mxu0
          %v1966 = vadd.f32 %v703, %v1965
          %v1967 = vpop.f32.mrf.mxu0
          %v1968 = vadd.f32 %v699, %v1967
          %v1969 = vpop.f32.mrf.mxu0
          %v1970 = vadd.f32 %v703, %v1969
          %1971 = vmatprep.mubr.bf16.mxu0 %v1916
          %1972 = vmatmul.mubr.bf16.gmra.mxu0 %v1915
          %v1973 = vpop.f32.mrf.mxu0
          %v1974 = vadd.f32 %v699, %v1973
          %v1975 = vpop.f32.mrf.mxu0
          %v1976 = vadd.f32 %v703, %v1975
          %v1977 = vpop.f32.mrf.mxu0
          %v1978 = vadd.f32 %v699, %v1977
          %v1979 = vpop.f32.mrf.mxu0
          %v1980 = vadd.f32 %v703, %v1979
          %1981 = vmatprep.mubr.bf16.mxu0 %v1918
          %1982 = vmatmul.mubr.bf16.gmra.mxu0 %v1917
          %v1983 = vpop.f32.mrf.mxu0
          %v1984 = vadd.f32 %v699, %v1983
          %v1985 = vpop.f32.mrf.mxu0
          %v1986 = vadd.f32 %v703, %v1985
          %v1987 = vpop.f32.mrf.mxu0
          %v1988 = vadd.f32 %v699, %v1987
          %v1989 = vpop.f32.mrf.mxu0
          %v1990 = vadd.f32 %v703, %v1989
          %1991 = vmatprep.mubr.bf16.mxu0 %v1920
          %1992 = vmatmul.mubr.bf16.gmra.mxu0 %v1919
          %v1993 = vpop.f32.mrf.mxu0
          %v1994 = vadd.f32 %v699, %v1993
          %v1995 = vpop.f32.mrf.mxu0
          %v1996 = vadd.f32 %v703, %v1995
          %v1997 = vpop.f32.mrf.mxu0
          %v1998 = vadd.f32 %v699, %v1997
          %v1999 = vpop.f32.mrf.mxu0
          %v2000 = vadd.f32 %v703, %v1999
          %2001 = vmatprep.mubr.bf16.mxu0 %v1922
          %2002 = vmatmul.mubr.bf16.gmra.mxu0 %v1921
          %v2003 = vpop.f32.mrf.mxu0
          %v2004 = vadd.f32 %v699, %v2003
          %v2005 = vpop.f32.mrf.mxu0
          %v2006 = vadd.f32 %v703, %v2005
          %v2007 = vpop.f32.mrf.mxu0
          %v2008 = vadd.f32 %v699, %v2007
          %v2009 = vpop.f32.mrf.mxu0
          %v2010 = vadd.f32 %v703, %v2009
          %2011 = vmatprep.mubr.bf16.mxu0 %v1924
          %2012 = vmatmul.mubr.bf16.gmra.mxu0 %v1923
          %v2013 = vpop.f32.mrf.mxu0
          %v2014 = vadd.f32 %v699, %v2013
          %v2015 = vpop.f32.mrf.mxu0
          %v2016 = vadd.f32 %v703, %v2015
          %v2017 = vpop.f32.mrf.mxu0
          %v2018 = vadd.f32 %v699, %v2017
          %v2019 = vpop.f32.mrf.mxu0
          %v2020 = vadd.f32 %v703, %v2019
          %2021 = vmatprep.mubr.bf16.mxu0 %v1926
          %2022 = vmatmul.mubr.bf16.gmra.mxu0 %v1925
          %v2023 = vpop.f32.mrf.mxu0
          %v2024 = vadd.f32 %v699, %v2023
          %v2025 = vpop.f32.mrf.mxu0
          %v2026 = vadd.f32 %v703, %v2025
          %v2027 = vpop.f32.mrf.mxu0
          %v2028 = vadd.f32 %v699, %v2027
          %v2029 = vpop.f32.mrf.mxu0
          %v2030 = vadd.f32 %v703, %v2029
          %2031 = vmatprep.mubr.bf16.mxu0 %v1928
          %2032 = vmatmul.mubr.bf16.gmra.mxu0 %v1927
          %v2033 = vpop.f32.mrf.mxu0
          %v2034 = vadd.f32 %v699, %v2033
          %v2035 = vpop.f32.mrf.mxu0
          %v2036 = vadd.f32 %v703, %v2035
          %v2037 = vpop.f32.mrf.mxu0
          %v2038 = vadd.f32 %v699, %v2037
          %v2039 = vpop.f32.mrf.mxu0
          %v2040 = vadd.f32 %v703, %v2039
          %2041 = vdwg.mxu0
          %2042 = vmatprep.subr.bf16.mxu0 %v1059
          %2043 = vmatpush1.bf16.msra.mxu0 %v1058
          %2044 = vmatprep.subr.bf16.mxu0 %v1053
          %2045 = vmatpush1.bf16.msra.mxu0 %v1052
          %2046 = vmatprep.subr.bf16.mxu0 %v1047
          %2047 = vmatpush1.bf16.msra.mxu0 %v1046
          %2048 = vmatprep.subr.bf16.mxu0 %v1041
          %2049 = vmatpush1.bf16.msra.mxu0 %v1040
          %2050 = vmatprep.subr.bf16.mxu0 %v1035
          %2051 = vmatpush1.bf16.msra.mxu0 %v1034
          %2052 = vmatprep.subr.bf16.mxu0 %v1029
          %2053 = vmatpush1.bf16.msra.mxu0 %v1028
          %2054 = vmatprep.subr.bf16.mxu0 %v1023
          %2055 = vmatpush1.bf16.msra.mxu0 %v1022
          %2056 = vmatprep.subr.bf16.mxu0 %v1017
          %2057 = vmatpush1.bf16.msra.mxu0 %v1016
          %2058 = vmatprep.subr.bf16.mxu0 %v1107
          %2059 = vmatpush2.bf16.msra.mxu0 %v1106
          %2060 = vmatprep.subr.bf16.mxu0 %v1101
          %2061 = vmatpush2.bf16.msra.mxu0 %v1100
          %2062 = vmatprep.subr.bf16.mxu0 %v1095
          %2063 = vmatpush2.bf16.msra.mxu0 %v1094
          %2064 = vmatprep.subr.bf16.mxu0 %v1089
          %2065 = vmatpush2.bf16.msra.mxu0 %v1088
          %2066 = vmatprep.subr.bf16.mxu0 %v1083
          %2067 = vmatpush2.bf16.msra.mxu0 %v1082
          %2068 = vmatprep.subr.bf16.mxu0 %v1077
          %2069 = vmatpush2.bf16.msra.mxu0 %v1076
          %2070 = vmatprep.subr.bf16.mxu0 %v1071
          %2071 = vmatpush2.bf16.msra.mxu0 %v1070
          %2072 = vmatprep.subr.bf16.mxu0 %v1065
          %2073 = vmatpush2.bf16.msra.mxu0 %v1064
          %2074 = vmatprep.mubr.bf16.mxu0 %v1914
          %2075 = vmatmul.mubr.bf16.gmra.mxu0 %v1913
          %v2076 = vpop.f32.mrf.mxu0
          %v2077 = vadd.f32 %v707, %v2076
          %v2078 = vpop.f32.mrf.mxu0
          %v2079 = vadd.f32 %v711, %v2078
          %v2080 = vpop.f32.mrf.mxu0
          %v2081 = vadd.f32 %v707, %v2080
          %v2082 = vpop.f32.mrf.mxu0
          %v2083 = vadd.f32 %v711, %v2082
          %2084 = vmatprep.mubr.bf16.mxu0 %v1916
          %2085 = vmatmul.mubr.bf16.gmra.mxu0 %v1915
          %v2086 = vpop.f32.mrf.mxu0
          %v2087 = vadd.f32 %v707, %v2086
          %v2088 = vpop.f32.mrf.mxu0
          %v2089 = vadd.f32 %v711, %v2088
          %v2090 = vpop.f32.mrf.mxu0
          %v2091 = vadd.f32 %v707, %v2090
          %v2092 = vpop.f32.mrf.mxu0
          %v2093 = vadd.f32 %v711, %v2092
          %2094 = vmatprep.mubr.bf16.mxu0 %v1918
          %2095 = vmatmul.mubr.bf16.gmra.mxu0 %v1917
          %v2096 = vpop.f32.mrf.mxu0
          %v2097 = vadd.f32 %v707, %v2096
          %v2098 = vpop.f32.mrf.mxu0
          %v2099 = vadd.f32 %v711, %v2098
          %v2100 = vpop.f32.mrf.mxu0
          %v2101 = vadd.f32 %v707, %v2100
          %v2102 = vpop.f32.mrf.mxu0
          %v2103 = vadd.f32 %v711, %v2102
          %2104 = vmatprep.mubr.bf16.mxu0 %v1920
          %2105 = vmatmul.mubr.bf16.gmra.mxu0 %v1919
          %v2106 = vpop.f32.mrf.mxu0
          %v2107 = vadd.f32 %v707, %v2106
          %v2108 = vpop.f32.mrf.mxu0
          %v2109 = vadd.f32 %v711, %v2108
          %v2110 = vpop.f32.mrf.mxu0
          %v2111 = vadd.f32 %v707, %v2110
          %v2112 = vpop.f32.mrf.mxu0
          %v2113 = vadd.f32 %v711, %v2112
          %2114 = vmatprep.mubr.bf16.mxu0 %v1922
          %2115 = vmatmul.mubr.bf16.gmra.mxu0 %v1921
          %v2116 = vpop.f32.mrf.mxu0
          %v2117 = vadd.f32 %v707, %v2116
          %v2118 = vpop.f32.mrf.mxu0
          %v2119 = vadd.f32 %v711, %v2118
          %v2120 = vpop.f32.mrf.mxu0
          %v2121 = vadd.f32 %v707, %v2120
          %v2122 = vpop.f32.mrf.mxu0
          %v2123 = vadd.f32 %v711, %v2122
          %2124 = vmatprep.mubr.bf16.mxu0 %v1924
          %2125 = vmatmul.mubr.bf16.gmra.mxu0 %v1923
          %v2126 = vpop.f32.mrf.mxu0
          %v2127 = vadd.f32 %v707, %v2126
          %v2128 = vpop.f32.mrf.mxu0
          %v2129 = vadd.f32 %v711, %v2128
          %v2130 = vpop.f32.mrf.mxu0
          %v2131 = vadd.f32 %v707, %v2130
          %v2132 = vpop.f32.mrf.mxu0
          %v2133 = vadd.f32 %v711, %v2132
          %2134 = vmatprep.mubr.bf16.mxu0 %v1926
          %2135 = vmatmul.mubr.bf16.gmra.mxu0 %v1925
          %v2136 = vpop.f32.mrf.mxu0
          %v2137 = vadd.f32 %v707, %v2136
          %v2138 = vpop.f32.mrf.mxu0
          %v2139 = vadd.f32 %v711, %v2138
          %v2140 = vpop.f32.mrf.mxu0
          %v2141 = vadd.f32 %v707, %v2140
          %v2142 = vpop.f32.mrf.mxu0
          %v2143 = vadd.f32 %v711, %v2142
          %2144 = vmatprep.mubr.bf16.mxu0 %v1928
          %2145 = vmatmul.mubr.bf16.gmra.mxu0 %v1927
          %v2146 = vpop.f32.mrf.mxu0
          %v2147 = vadd.f32 %v707, %v2146
          %v2148 = vpop.f32.mrf.mxu0
          %v2149 = vadd.f32 %v711, %v2148
          %v2150 = vpop.f32.mrf.mxu0
          %v2151 = vadd.f32 %v707, %v2150
          %v2152 = vpop.f32.mrf.mxu0
          %v2153 = vadd.f32 %v711, %v2152
          %2154 = vdwg.mxu0
          %2155 = vmatprep.subr.bf16.mxu0 %v1061
          %2156 = vmatpush1.bf16.msra.mxu0 %v1060
          %2157 = vmatprep.subr.bf16.mxu0 %v1055
          %2158 = vmatpush1.bf16.msra.mxu0 %v1054
          %2159 = vmatprep.subr.bf16.mxu0 %v1049
          %2160 = vmatpush1.bf16.msra.mxu0 %v1048
          %2161 = vmatprep.subr.bf16.mxu0 %v1043
          %2162 = vmatpush1.bf16.msra.mxu0 %v1042
          %2163 = vmatprep.subr.bf16.mxu0 %v1037
          %2164 = vmatpush1.bf16.msra.mxu0 %v1036
          %2165 = vmatprep.subr.bf16.mxu0 %v1031
          %2166 = vmatpush1.bf16.msra.mxu0 %v1030
          %2167 = vmatprep.subr.bf16.mxu0 %v1025
          %2168 = vmatpush1.bf16.msra.mxu0 %v1024
          %2169 = vmatprep.subr.bf16.mxu0 %v1019
          %2170 = vmatpush1.bf16.msra.mxu0 %v1018
          %2171 = vmatprep.subr.bf16.mxu0 %v1109
          %2172 = vmatpush2.bf16.msra.mxu0 %v1108
          %2173 = vmatprep.subr.bf16.mxu0 %v1103
          %2174 = vmatpush2.bf16.msra.mxu0 %v1102
          %2175 = vmatprep.subr.bf16.mxu0 %v1097
          %2176 = vmatpush2.bf16.msra.mxu0 %v1096
          %2177 = vmatprep.subr.bf16.mxu0 %v1091
          %2178 = vmatpush2.bf16.msra.mxu0 %v1090
          %2179 = vmatprep.subr.bf16.mxu0 %v1085
          %2180 = vmatpush2.bf16.msra.mxu0 %v1084
          %2181 = vmatprep.subr.bf16.mxu0 %v1079
          %2182 = vmatpush2.bf16.msra.mxu0 %v1078
          %2183 = vmatprep.subr.bf16.mxu0 %v1073
          %2184 = vmatpush2.bf16.msra.mxu0 %v1072
          %2185 = vmatprep.subr.bf16.mxu0 %v1067
          %2186 = vmatpush2.bf16.msra.mxu0 %v1066
          %2187 = vmatprep.mubr.bf16.mxu0 %v1914
          %2188 = vmatmul.mubr.bf16.gmra.mxu0 %v1913
          %v2189 = vpop.f32.mrf.mxu0
          %v2190 = vadd.f32 %v715, %v2189
          %v2191 = vpop.f32.mrf.mxu0
          %v2192 = vadd.f32 %v719, %v2191
          %v2193 = vpop.f32.mrf.mxu0
          %v2194 = vadd.f32 %v715, %v2193
          %v2195 = vpop.f32.mrf.mxu0
          %v2196 = vadd.f32 %v719, %v2195
          %2197 = vmatprep.mubr.bf16.mxu0 %v1916
          %2198 = vmatmul.mubr.bf16.gmra.mxu0 %v1915
          %v2199 = vpop.f32.mrf.mxu0
          %v2200 = vadd.f32 %v715, %v2199
          %v2201 = vpop.f32.mrf.mxu0
          %v2202 = vadd.f32 %v719, %v2201
          %v2203 = vpop.f32.mrf.mxu0
          %v2204 = vadd.f32 %v715, %v2203
          %v2205 = vpop.f32.mrf.mxu0
          %v2206 = vadd.f32 %v719, %v2205
          %2207 = vmatprep.mubr.bf16.mxu0 %v1918
          %2208 = vmatmul.mubr.bf16.gmra.mxu0 %v1917
          %v2209 = vpop.f32.mrf.mxu0
          %v2210 = vadd.f32 %v715, %v2209
          %v2211 = vpop.f32.mrf.mxu0
          %v2212 = vadd.f32 %v719, %v2211
          %v2213 = vpop.f32.mrf.mxu0
          %v2214 = vadd.f32 %v715, %v2213
          %v2215 = vpop.f32.mrf.mxu0
          %v2216 = vadd.f32 %v719, %v2215
          %2217 = vmatprep.mubr.bf16.mxu0 %v1920
          %2218 = vmatmul.mubr.bf16.gmra.mxu0 %v1919
          %v2219 = vpop.f32.mrf.mxu0
          %v2220 = vadd.f32 %v715, %v2219
          %v2221 = vpop.f32.mrf.mxu0
          %v2222 = vadd.f32 %v719, %v2221
          %v2223 = vpop.f32.mrf.mxu0
          %v2224 = vadd.f32 %v715, %v2223
          %v2225 = vpop.f32.mrf.mxu0
          %v2226 = vadd.f32 %v719, %v2225
          %2227 = vmatprep.mubr.bf16.mxu0 %v1922
          %2228 = vmatmul.mubr.bf16.gmra.mxu0 %v1921
          %v2229 = vpop.f32.mrf.mxu0
          %v2230 = vadd.f32 %v715, %v2229
          %v2231 = vpop.f32.mrf.mxu0
          %v2232 = vadd.f32 %v719, %v2231
          %v2233 = vpop.f32.mrf.mxu0
          %v2234 = vadd.f32 %v715, %v2233
          %v2235 = vpop.f32.mrf.mxu0
          %v2236 = vadd.f32 %v719, %v2235
          %2237 = vmatprep.mubr.bf16.mxu0 %v1924
          %2238 = vmatmul.mubr.bf16.gmra.mxu0 %v1923
          %v2239 = vpop.f32.mrf.mxu0
          %v2240 = vadd.f32 %v715, %v2239
          %v2241 = vpop.f32.mrf.mxu0
          %v2242 = vadd.f32 %v719, %v2241
          %v2243 = vpop.f32.mrf.mxu0
          %v2244 = vadd.f32 %v715, %v2243
          %v2245 = vpop.f32.mrf.mxu0
          %v2246 = vadd.f32 %v719, %v2245
          %2247 = vmatprep.mubr.bf16.mxu0 %v1926
          %2248 = vmatmul.mubr.bf16.gmra.mxu0 %v1925
          %v2249 = vpop.f32.mrf.mxu0
          %v2250 = vadd.f32 %v715, %v2249
          %v2251 = vpop.f32.mrf.mxu0
          %v2252 = vadd.f32 %v719, %v2251
          %v2253 = vpop.f32.mrf.mxu0
          %v2254 = vadd.f32 %v715, %v2253
          %v2255 = vpop.f32.mrf.mxu0
          %v2256 = vadd.f32 %v719, %v2255
          %2257 = vmatprep.mubr.bf16.mxu0 %v1928
          %2258 = vmatmul.mubr.bf16.gmra.mxu0 %v1927
          %v2259 = vpop.f32.mrf.mxu0
          %v2260 = vadd.f32 %v715, %v2259
          %v2261 = vpop.f32.mrf.mxu0
          %v2262 = vadd.f32 %v719, %v2261
          %v2263 = vpop.f32.mrf.mxu0
          %v2264 = vadd.f32 %v715, %v2263
          %v2265 = vpop.f32.mrf.mxu0
          %v2266 = vadd.f32 %v719, %v2265
          %2267 = vdwg.mxu0
          %v2268 = vpack.c.bf16 %v1968, %v1964
          %v2269 = vpack.c.bf16 %v1970, %v1966
          %v2270 = vpack.c.bf16 %v2081, %v2077
          %v2271 = vpack.c.bf16 %v2083, %v2079
          %v2272 = vpack.c.bf16 %v2194, %v2190
          %v2273 = vpack.c.bf16 %v2196, %v2192
          %v2274 = vpack.c.bf16 %v1978, %v1974
          %v2275 = vpack.c.bf16 %v1980, %v1976
          %v2276 = vpack.c.bf16 %v2091, %v2087
          %v2277 = vpack.c.bf16 %v2093, %v2089
          %v2278 = vpack.c.bf16 %v2204, %v2200
          %v2279 = vpack.c.bf16 %v2206, %v2202
          %v2280 = vpack.c.bf16 %v1988, %v1984
          %v2281 = vpack.c.bf16 %v1990, %v1986
          %v2282 = vpack.c.bf16 %v2101, %v2097
          %v2283 = vpack.c.bf16 %v2103, %v2099
          %v2284 = vpack.c.bf16 %v2214, %v2210
          %v2285 = vpack.c.bf16 %v2216, %v2212
          %v2286 = vpack.c.bf16 %v1998, %v1994
          %v2287 = vpack.c.bf16 %v2000, %v1996
          %v2288 = vpack.c.bf16 %v2111, %v2107
          %v2289 = vpack.c.bf16 %v2113, %v2109
          %v2290 = vpack.c.bf16 %v2224, %v2220
          %v2291 = vpack.c.bf16 %v2226, %v2222
          %v2292 = vpack.c.bf16 %v2008, %v2004
          %v2293 = vpack.c.bf16 %v2010, %v2006
          %v2294 = vpack.c.bf16 %v2121, %v2117
          %v2295 = vpack.c.bf16 %v2123, %v2119
          %v2296 = vpack.c.bf16 %v2234, %v2230
          %v2297 = vpack.c.bf16 %v2236, %v2232
          %v2298 = vpack.c.bf16 %v2018, %v2014
          %v2299 = vpack.c.bf16 %v2020, %v2016
          %v2300 = vpack.c.bf16 %v2131, %v2127
          %v2301 = vpack.c.bf16 %v2133, %v2129
          %v2302 = vpack.c.bf16 %v2244, %v2240
          %v2303 = vpack.c.bf16 %v2246, %v2242
          %v2304 = vpack.c.bf16 %v2028, %v2024
          %v2305 = vpack.c.bf16 %v2030, %v2026
          %v2306 = vpack.c.bf16 %v2141, %v2137
          %v2307 = vpack.c.bf16 %v2143, %v2139
          %v2308 = vpack.c.bf16 %v2254, %v2250
          %v2309 = vpack.c.bf16 %v2256, %v2252
          %v2310 = vpack.c.bf16 %v2038, %v2034
          %v2311 = vpack.c.bf16 %v2040, %v2036
          %v2312 = vpack.c.bf16 %v2151, %v2147
          %v2313 = vpack.c.bf16 %v2153, %v2149
          %v2314 = vpack.c.bf16 %v2264, %v2260
          %v2315 = vpack.c.bf16 %v2266, %v2262
          %v2364 = vunpack.c.l.b16 %v2268
          %v2365 = vunpack.c.l.b16 %v2269
          %v2366 = vunpack.c.l.b16 %v2270
          %v2367 = vunpack.c.l.b16 %v2271
          %v2368 = vunpack.c.l.b16 %v2272
          %v2369 = vunpack.c.l.b16 %v2273
          %v2370 = vunpack.c.h.b16 %v2268
          %v2371 = vunpack.c.h.b16 %v2269
          %v2372 = vunpack.c.h.b16 %v2270
          %v2373 = vunpack.c.h.b16 %v2271
          %v2374 = vunpack.c.h.b16 %v2272
          %v2375 = vunpack.c.h.b16 %v2273
          %v2376 = vunpack.c.l.b16 %v2274
          %v2377 = vunpack.c.l.b16 %v2275
          %v2378 = vunpack.c.l.b16 %v2276
          %v2379 = vunpack.c.l.b16 %v2277
          %v2380 = vunpack.c.l.b16 %v2278
          %v2381 = vunpack.c.l.b16 %v2279
          %v2382 = vunpack.c.h.b16 %v2274
          %v2383 = vunpack.c.h.b16 %v2275
          %v2384 = vunpack.c.h.b16 %v2276
          %v2385 = vunpack.c.h.b16 %v2277
          %v2386 = vunpack.c.h.b16 %v2278
          %v2387 = vunpack.c.h.b16 %v2279
          %v2388 = vunpack.c.l.b16 %v2280
          %v2389 = vunpack.c.l.b16 %v2281
          %v2390 = vunpack.c.l.b16 %v2282
          %v2391 = vunpack.c.l.b16 %v2283
          %v2392 = vunpack.c.l.b16 %v2284
          %v2393 = vunpack.c.l.b16 %v2285
          %v2394 = vunpack.c.h.b16 %v2280
          %v2395 = vunpack.c.h.b16 %v2281
          %v2396 = vunpack.c.h.b16 %v2282
          %v2397 = vunpack.c.h.b16 %v2283
          %v2398 = vunpack.c.h.b16 %v2284
          %v2399 = vunpack.c.h.b16 %v2285
          %v2400 = vunpack.c.l.b16 %v2286
          %v2401 = vunpack.c.l.b16 %v2287
          %v2402 = vunpack.c.l.b16 %v2288
          %v2403 = vunpack.c.l.b16 %v2289
          %v2404 = vunpack.c.l.b16 %v2290
          %v2405 = vunpack.c.l.b16 %v2291
          %v2406 = vunpack.c.h.b16 %v2286
          %v2407 = vunpack.c.h.b16 %v2287
          %v2408 = vunpack.c.h.b16 %v2288
          %v2409 = vunpack.c.h.b16 %v2289
          %v2410 = vunpack.c.h.b16 %v2290
          %v2411 = vunpack.c.h.b16 %v2291
          %v2412 = vunpack.c.l.b16 %v2292
          %v2413 = vunpack.c.l.b16 %v2293
          %v2414 = vunpack.c.l.b16 %v2294
          %v2415 = vunpack.c.l.b16 %v2295
          %v2416 = vunpack.c.l.b16 %v2296
          %v2417 = vunpack.c.l.b16 %v2297
          %v2418 = vunpack.c.h.b16 %v2292
          %v2419 = vunpack.c.h.b16 %v2293
          %v2420 = vunpack.c.h.b16 %v2294
          %v2421 = vunpack.c.h.b16 %v2295
          %v2422 = vunpack.c.h.b16 %v2296
          %v2423 = vunpack.c.h.b16 %v2297
          %v2424 = vunpack.c.l.b16 %v2298
          %v2425 = vunpack.c.l.b16 %v2299
          %v2426 = vunpack.c.l.b16 %v2300
          %v2427 = vunpack.c.l.b16 %v2301
          %v2428 = vunpack.c.l.b16 %v2302
          %v2429 = vunpack.c.l.b16 %v2303
          %v2430 = vunpack.c.h.b16 %v2298
          %v2431 = vunpack.c.h.b16 %v2299
          %v2432 = vunpack.c.h.b16 %v2300
          %v2433 = vunpack.c.h.b16 %v2301
          %v2434 = vunpack.c.h.b16 %v2302
          %v2435 = vunpack.c.h.b16 %v2303
          %v2436 = vunpack.c.l.b16 %v2304
          %v2437 = vunpack.c.l.b16 %v2305
          %v2438 = vunpack.c.l.b16 %v2306
          %v2439 = vunpack.c.l.b16 %v2307
          %v2440 = vunpack.c.l.b16 %v2308
          %v2441 = vunpack.c.l.b16 %v2309
          %v2442 = vunpack.c.h.b16 %v2304
          %v2443 = vunpack.c.h.b16 %v2305
          %v2444 = vunpack.c.h.b16 %v2306
          %v2445 = vunpack.c.h.b16 %v2307
          %v2446 = vunpack.c.h.b16 %v2308
          %v2447 = vunpack.c.h.b16 %v2309
          %v2448 = vunpack.c.l.b16 %v2310
          %v2449 = vunpack.c.l.b16 %v2311
          %v2450 = vunpack.c.l.b16 %v2312
          %v2451 = vunpack.c.l.b16 %v2313
          %v2452 = vunpack.c.l.b16 %v2314
          %v2453 = vunpack.c.l.b16 %v2315
          %v2454 = vunpack.c.h.b16 %v2310
          %v2455 = vunpack.c.h.b16 %v2311
          %v2456 = vunpack.c.h.b16 %v2312
          %v2457 = vunpack.c.h.b16 %v2313
          %v2458 = vunpack.c.h.b16 %v2314
          %v2459 = vunpack.c.h.b16 %v2315
          %v2460 = vpack.c.b16 %v2365, %v2364
          %v2461 = vpack.c.b16 %v2367, %v2366
          %v2462 = vpack.c.b16 %v2369, %v2368
          %v2463 = vpack.c.b16 %v2371, %v2370
          %v2464 = vpack.c.b16 %v2373, %v2372
          %v2465 = vpack.c.b16 %v2375, %v2374
          %v2466 = vpack.c.b16 %v2377, %v2376
          %v2467 = vpack.c.b16 %v2379, %v2378
          %v2468 = vpack.c.b16 %v2381, %v2380
          %v2469 = vpack.c.b16 %v2383, %v2382
          %v2470 = vpack.c.b16 %v2385, %v2384
          %v2471 = vpack.c.b16 %v2387, %v2386
          %v2472 = vpack.c.b16 %v2389, %v2388
          %v2473 = vpack.c.b16 %v2391, %v2390
          %v2474 = vpack.c.b16 %v2393, %v2392
          %v2475 = vpack.c.b16 %v2395, %v2394
          %v2476 = vpack.c.b16 %v2397, %v2396
          %v2477 = vpack.c.b16 %v2399, %v2398
          %v2478 = vpack.c.b16 %v2401, %v2400
          %v2479 = vpack.c.b16 %v2403, %v2402
          %v2480 = vpack.c.b16 %v2405, %v2404
          %v2481 = vpack.c.b16 %v2407, %v2406
          %v2482 = vpack.c.b16 %v2409, %v2408
          %v2483 = vpack.c.b16 %v2411, %v2410
          %v2484 = vpack.c.b16 %v2413, %v2412
          %v2485 = vpack.c.b16 %v2415, %v2414
          %v2486 = vpack.c.b16 %v2417, %v2416
          %v2487 = vpack.c.b16 %v2419, %v2418
          %v2488 = vpack.c.b16 %v2421, %v2420
          %v2489 = vpack.c.b16 %v2423, %v2422
          %v2490 = vpack.c.b16 %v2425, %v2424
          %v2491 = vpack.c.b16 %v2427, %v2426
          %v2492 = vpack.c.b16 %v2429, %v2428
          %v2493 = vpack.c.b16 %v2431, %v2430
          %v2494 = vpack.c.b16 %v2433, %v2432
          %v2495 = vpack.c.b16 %v2435, %v2434
          %v2496 = vpack.c.b16 %v2437, %v2436
          %v2497 = vpack.c.b16 %v2439, %v2438
          %v2498 = vpack.c.b16 %v2441, %v2440
          %v2499 = vpack.c.b16 %v2443, %v2442
          %v2500 = vpack.c.b16 %v2445, %v2444
          %v2501 = vpack.c.b16 %v2447, %v2446
          %v2502 = vpack.c.b16 %v2449, %v2448
          %v2503 = vpack.c.b16 %v2451, %v2450
          %v2504 = vpack.c.b16 %v2453, %v2452
          %v2505 = vpack.c.b16 %v2455, %v2454
          %v2506 = vpack.c.b16 %v2457, %v2456
          %v2507 = vpack.c.b16 %v2459, %v2458
          %2556 = vst [vmem:[#allocation2 + $0x180] sm:$0xff] %v2460
          %2557 = vst [vmem:[#allocation2 + $0x188] sm:$0xff] %v2461
          %2558 = vst [vmem:[#allocation2 + $0x190] sm:$0xff] %v2462
          %2559 = vst [vmem:[#allocation2 + $0x198] sm:$0xff] %v2463
          %2560 = vst [vmem:[#allocation2 + $0x1a0] sm:$0xff] %v2464
          %2561 = vst [vmem:[#allocation2 + $0x1a8] sm:$0xff] %v2465
          %2562 = vst [vmem:[#allocation2 + $0x1b0] sm:$0xff] %v2466
          %2563 = vst [vmem:[#allocation2 + $0x1b8] sm:$0xff] %v2467
          %2564 = vst [vmem:[#allocation2 + $0x1c0] sm:$0xff] %v2468
          %2565 = vst [vmem:[#allocation2 + $0x1c8] sm:$0xff] %v2469
          %2566 = vst [vmem:[#allocation2 + $0x1d0] sm:$0xff] %v2470
          %2567 = vst [vmem:[#allocation2 + $0x1d8] sm:$0xff] %v2471
          %2568 = vst [vmem:[#allocation2 + $0x1e0] sm:$0xff] %v2472
          %2569 = vst [vmem:[#allocation2 + $0x1e8] sm:$0xff] %v2473
          %2570 = vst [vmem:[#allocation2 + $0x1f0] sm:$0xff] %v2474
          %2571 = vst [vmem:[#allocation2 + $0x1f8] sm:$0xff] %v2475
          %2572 = vst [vmem:[#allocation2 + $0x200] sm:$0xff] %v2476
          %2573 = vst [vmem:[#allocation2 + $0x208] sm:$0xff] %v2477
          %2574 = vst [vmem:[#allocation2 + $0x210] sm:$0xff] %v2478
          %2575 = vst [vmem:[#allocation2 + $0x218] sm:$0xff] %v2479
          %2576 = vst [vmem:[#allocation2 + $0x220] sm:$0xff] %v2480
          %2577 = vst [vmem:[#allocation2 + $0x228] sm:$0xff] %v2481
          %2578 = vst [vmem:[#allocation2 + $0x230] sm:$0xff] %v2482
          %2579 = vst [vmem:[#allocation2 + $0x238] sm:$0xff] %v2483
          %2580 = vst [vmem:[#allocation2 + $0x240] sm:$0xff] %v2484
          %2581 = vst [vmem:[#allocation2 + $0x248] sm:$0xff] %v2485
          %2582 = vst [vmem:[#allocation2 + $0x250] sm:$0xff] %v2486
          %2583 = vst [vmem:[#allocation2 + $0x258] sm:$0xff] %v2487
          %2584 = vst [vmem:[#allocation2 + $0x260] sm:$0xff] %v2488
          %2585 = vst [vmem:[#allocation2 + $0x268] sm:$0xff] %v2489
          %2586 = vst [vmem:[#allocation2 + $0x270] sm:$0xff] %v2490
          %2587 = vst [vmem:[#allocation2 + $0x278] sm:$0xff] %v2491
          %2588 = vst [vmem:[#allocation2 + $0x280] sm:$0xff] %v2492
          %2589 = vst [vmem:[#allocation2 + $0x288] sm:$0xff] %v2493
          %2590 = vst [vmem:[#allocation2 + $0x290] sm:$0xff] %v2494
          %2591 = vst [vmem:[#allocation2 + $0x298] sm:$0xff] %v2495
          %2592 = vst [vmem:[#allocation2 + $0x2a0] sm:$0xff] %v2496
          %2593 = vst [vmem:[#allocation2 + $0x2a8] sm:$0xff] %v2497
          %2594 = vst [vmem:[#allocation2 + $0x2b0] sm:$0xff] %v2498
          %2595 = vst [vmem:[#allocation2 + $0x2b8] sm:$0xff] %v2499
          %2596 = vst [vmem:[#allocation2 + $0x2c0] sm:$0xff] %v2500
          %2597 = vst [vmem:[#allocation2 + $0x2c8] sm:$0xff] %v2501
          %2598 = vst [vmem:[#allocation2 + $0x2d0] sm:$0xff] %v2502
          %2599 = vst [vmem:[#allocation2 + $0x2d8] sm:$0xff] %v2503
          %2600 = vst [vmem:[#allocation2 + $0x2e0] sm:$0xff] %v2504
          %2601 = vst [vmem:[#allocation2 + $0x2e8] sm:$0xff] %v2505
          %2602 = vst [vmem:[#allocation2 + $0x2f0] sm:$0xff] %v2506
          %2603 = vst [vmem:[#allocation2 + $0x2f8] sm:$0xff] %v2507
        $region100: #{tpu_custom_call.1} parent=71 // pred_fallthru
          _
        %s2604 = smul.u32 %s38, 128
        %s2605 = sshra.s32 %s2604, 3
        %s2606 = sand.u32 %s2604, 7
        %s2607 = smul.u32 %s2605, 6
        %s2608 = smul.addr %s2607, 4
        %s2609 = scalar_lea.vmem [#allocation2], %s2608
        %v2610 = vld [vmem:[%s2609] sm:$0xf]
        %v2611 = vld [vmem:[%s2609 + $0x18] sm:$0xf]
        %v2612 = vld [vmem:[%s2609 + $0x30] sm:$0xf]
        %v2613 = vld [vmem:[%s2609 + $0x48] sm:$0xf]
        %v2614 = vld [vmem:[%s2609 + $0x60] sm:$0xf]
        %v2615 = vld [vmem:[%s2609 + $0x78] sm:$0xf]
        %v2616 = vld [vmem:[%s2609 + $0x90] sm:$0xf]
        %v2617 = vld [vmem:[%s2609 + $0xa8] sm:$0xf]
        %v2618 = vld [vmem:[%s2609 + $0xc0] sm:$0xf]
        %v2619 = vld [vmem:[%s2609 + $0xd8] sm:$0xf]
        %v2620 = vld [vmem:[%s2609 + $0xf0] sm:$0xf]
        %v2621 = vld [vmem:[%s2609 + $0x108] sm:$0xf]
        %v2622 = vld [vmem:[%s2609 + $0x120] sm:$0xf]
        %v2623 = vld [vmem:[%s2609 + $0x138] sm:$0xf]
        %v2624 = vld [vmem:[%s2609 + $0x150] sm:$0xf]
        %v2625 = vld [vmem:[%s2609 + $0x168] sm:$0xf]
        %v2626 = vld [vmem:[#allocation2 + $0x8] sm:$0xf]
        %v2627 = vld [vmem:[#allocation2 + $0x20] sm:$0xf]
        %v2628 = vld [vmem:[#allocation2 + $0x38] sm:$0xf]
        %v2629 = vld [vmem:[#allocation2 + $0x50] sm:$0xf]
        %v2630 = vld [vmem:[#allocation2 + $0x68] sm:$0xf]
        %v2631 = vld [vmem:[#allocation2 + $0x80] sm:$0xf]
        %v2632 = vld [vmem:[#allocation2 + $0x98] sm:$0xf]
        %v2633 = vld [vmem:[#allocation2 + $0xb0] sm:$0xf]
        %v2634 = vld [vmem:[#allocation2 + $0xc8] sm:$0xf]
        %v2635 = vld [vmem:[#allocation2 + $0xe0] sm:$0xf]
        %v2636 = vld [vmem:[#allocation2 + $0xf8] sm:$0xf]
        %v2637 = vld [vmem:[#allocation2 + $0x110] sm:$0xf]
        %v2638 = vld [vmem:[#allocation2 + $0x128] sm:$0xf]
        %v2639 = vld [vmem:[#allocation2 + $0x140] sm:$0xf]
        %v2640 = vld [vmem:[#allocation2 + $0x158] sm:$0xf]
        %v2641 = vld [vmem:[#allocation2 + $0x170] sm:$0xf]
        %v2642 = vld [vmem:[#allocation2 + $0x188] sm:$0xf]
        %v2643 = vld [vmem:[#allocation2 + $0x1a0] sm:$0xf]
        %v2644 = vld [vmem:[#allocation2 + $0x1b8] sm:$0xf]
        %v2645 = vld [vmem:[#allocation2 + $0x1d0] sm:$0xf]
        %v2646 = vld [vmem:[#allocation2 + $0x1e8] sm:$0xf]
        %v2647 = vld [vmem:[#allocation2 + $0x200] sm:$0xf]
        %v2648 = vld [vmem:[#allocation2 + $0x218] sm:$0xf]
        %v2649 = vld [vmem:[#allocation2 + $0x230] sm:$0xf]
        %v2650 = vld [vmem:[#allocation2 + $0x248] sm:$0xf]
        %v2651 = vld [vmem:[#allocation2 + $0x260] sm:$0xf]
        %v2652 = vld [vmem:[#allocation2 + $0x278] sm:$0xf]
        %v2653 = vld [vmem:[#allocation2 + $0x290] sm:$0xf]
        %v2654 = vld [vmem:[#allocation2 + $0x2a8] sm:$0xf]
        %v2655 = vld [vmem:[#allocation2 + $0x2c0] sm:$0xf]
        %v2656 = vld [vmem:[#allocation2 + $0x2d8] sm:$0xf]
        %v2657 = vld [vmem:[#allocation2 + $0x2f0] sm:$0xf]
        %v2658 = vld [vmem:[#allocation2 + $0x10] sm:$0xf]
        %v2659 = vld [vmem:[#allocation2 + $0x28] sm:$0xf]
        %v2660 = vld [vmem:[#allocation2 + $0x40] sm:$0xf]
        %v2661 = vld [vmem:[#allocation2 + $0x58] sm:$0xf]
        %v2662 = vld [vmem:[#allocation2 + $0x70] sm:$0xf]
        %v2663 = vld [vmem:[#allocation2 + $0x88] sm:$0xf]
        %v2664 = vld [vmem:[#allocation2 + $0xa0] sm:$0xf]
        %v2665 = vld [vmem:[#allocation2 + $0xb8] sm:$0xf]
        %v2666 = vld [vmem:[#allocation2 + $0xd0] sm:$0xf]
        %v2667 = vld [vmem:[#allocation2 + $0xe8] sm:$0xf]
        %v2668 = vld [vmem:[#allocation2 + $0x100] sm:$0xf]
        %v2669 = vld [vmem:[#allocation2 + $0x118] sm:$0xf]
        %v2670 = vld [vmem:[#allocation2 + $0x130] sm:$0xf]
        %v2671 = vld [vmem:[#allocation2 + $0x148] sm:$0xf]
        %v2672 = vld [vmem:[#allocation2 + $0x160] sm:$0xf]
        %v2673 = vld [vmem:[#allocation2 + $0x178] sm:$0xf]
        %v2674 = vld [vmem:[#allocation2 + $0x190] sm:$0xf]
        %v2675 = vld [vmem:[#allocation2 + $0x1a8] sm:$0xf]
        %v2676 = vld [vmem:[#allocation2 + $0x1c0] sm:$0xf]
        %v2677 = vld [vmem:[#allocation2 + $0x1d8] sm:$0xf]
        %v2678 = vld [vmem:[#allocation2 + $0x1f0] sm:$0xf]
        %v2679 = vld [vmem:[#allocation2 + $0x208] sm:$0xf]
        %v2680 = vld [vmem:[#allocation2 + $0x220] sm:$0xf]
        %v2681 = vld [vmem:[#allocation2 + $0x238] sm:$0xf]
        %v2682 = vld [vmem:[#allocation2 + $0x250] sm:$0xf]
        %v2683 = vld [vmem:[#allocation2 + $0x268] sm:$0xf]
        %v2684 = vld [vmem:[#allocation2 + $0x280] sm:$0xf]
        %v2685 = vld [vmem:[#allocation2 + $0x298] sm:$0xf]
        %v2686 = vld [vmem:[#allocation2 + $0x2b0] sm:$0xf]
        %v2687 = vld [vmem:[#allocation2 + $0x2c8] sm:$0xf]
        %v2688 = vld [vmem:[#allocation2 + $0x2e0] sm:$0xf]
        %v2689 = vld [vmem:[#allocation2 + $0x2f8] sm:$0xf]
        %v2706 = vunpack.c.l.b16 %v2610
        %v2707 = vunpack.c.l.b16 %v2611
        %v2708 = vunpack.c.l.b16 %v2612
        %v2709 = vunpack.c.l.b16 %v2613
        %v2710 = vunpack.c.l.b16 %v2614
        %v2711 = vunpack.c.l.b16 %v2615
        %v2712 = vunpack.c.l.b16 %v2616
        %v2713 = vunpack.c.l.b16 %v2617
        %v2714 = vunpack.c.l.b16 %v2618
        %v2715 = vunpack.c.l.b16 %v2619
        %v2716 = vunpack.c.l.b16 %v2620
        %v2717 = vunpack.c.l.b16 %v2621
        %v2718 = vunpack.c.l.b16 %v2622
        %v2719 = vunpack.c.l.b16 %v2623
        %v2720 = vunpack.c.l.b16 %v2624
        %v2721 = vunpack.c.l.b16 %v2625
        %v2722 = vpack.c.b16 %v2707, %v2706
        %v2723 = vpack.c.b16 %v2709, %v2708
        %v2724 = vpack.c.b16 %v2711, %v2710
        %v2725 = vpack.c.b16 %v2713, %v2712
        %v2726 = vpack.c.b16 %v2715, %v2714
        %v2727 = vpack.c.b16 %v2717, %v2716
        %v2728 = vpack.c.b16 %v2719, %v2718
        %v2729 = vpack.c.b16 %v2721, %v2720
        %v2770 = vunpack.c.l.b16 %v2626
        %v2771 = vunpack.c.l.b16 %v2627
        %v2772 = vunpack.c.l.b16 %v2628
        %v2773 = vunpack.c.l.b16 %v2629
        %v2774 = vunpack.c.l.b16 %v2630
        %v2775 = vunpack.c.l.b16 %v2631
        %v2776 = vunpack.c.l.b16 %v2632
        %v2777 = vunpack.c.l.b16 %v2633
        %v2778 = vunpack.c.l.b16 %v2634
        %v2779 = vunpack.c.l.b16 %v2635
        %v2780 = vunpack.c.l.b16 %v2636
        %v2781 = vunpack.c.l.b16 %v2637
        %v2782 = vunpack.c.l.b16 %v2638
        %v2783 = vunpack.c.l.b16 %v2639
        %v2784 = vunpack.c.l.b16 %v2640
        %v2785 = vunpack.c.l.b16 %v2641
        %v2786 = vunpack.c.l.b16 %v2642
        %v2787 = vunpack.c.l.b16 %v2643
        %v2788 = vunpack.c.l.b16 %v2644
        %v2789 = vunpack.c.l.b16 %v2645
        %v2790 = vunpack.c.l.b16 %v2646
        %v2791 = vunpack.c.l.b16 %v2647
        %v2792 = vunpack.c.l.b16 %v2648
        %v2793 = vunpack.c.l.b16 %v2649
        %v2794 = vunpack.c.l.b16 %v2650
        %v2795 = vunpack.c.l.b16 %v2651
        %v2796 = vunpack.c.l.b16 %v2652
        %v2797 = vunpack.c.l.b16 %v2653
        %v2798 = vunpack.c.l.b16 %v2654
        %v2799 = vunpack.c.l.b16 %v2655
        %v2800 = vunpack.c.l.b16 %v2656
        %v2801 = vunpack.c.l.b16 %v2657
        %v2802 = vpack.c.b16 %v2771, %v2770
        %v2803 = vpack.c.b16 %v2773, %v2772
        %v2804 = vpack.c.b16 %v2775, %v2774
        %v2805 = vpack.c.b16 %v2777, %v2776
        %v2806 = vpack.c.b16 %v2779, %v2778
        %v2807 = vpack.c.b16 %v2781, %v2780
        %v2808 = vpack.c.b16 %v2783, %v2782
        %v2809 = vpack.c.b16 %v2785, %v2784
        %v2810 = vpack.c.b16 %v2787, %v2786
        %v2811 = vpack.c.b16 %v2789, %v2788
        %v2812 = vpack.c.b16 %v2791, %v2790
        %v2813 = vpack.c.b16 %v2793, %v2792
        %v2814 = vpack.c.b16 %v2795, %v2794
        %v2815 = vpack.c.b16 %v2797, %v2796
        %v2816 = vpack.c.b16 %v2799, %v2798
        %v2817 = vpack.c.b16 %v2801, %v2800
        %2834 = vmatprep.subr.bf16.mxu0 0
        %2835 = vmatpush1.bf16.xpose.msra.mxu0 %v2809
        %2836 = vmatprep.subr.bf16.mxu0 0
        %2837 = vmatpush1.bf16.xpose.msra.mxu0 %v2808
        %2838 = vmatprep.subr.bf16.mxu0 0
        %2839 = vmatpush1.bf16.xpose.msra.mxu0 %v2807
        %2840 = vmatprep.subr.bf16.mxu0 0
        %2841 = vmatpush1.bf16.xpose.msra.mxu0 %v2806
        %2842 = vmatprep.subr.bf16.mxu0 0
        %2843 = vmatpush1.bf16.xpose.msra.mxu0 %v2805
        %2844 = vmatprep.subr.bf16.mxu0 0
        %2845 = vmatpush1.bf16.xpose.msra.mxu0 %v2804
        %2846 = vmatprep.subr.bf16.mxu0 0
        %2847 = vmatpush1.bf16.xpose.msra.mxu0 %v2803
        %2848 = vmatprep.subr.bf16.mxu0 0
        %2849 = vmatpush1.bf16.xpose.msra.mxu0 %v2802
        %2850 = vmatprep.subr.bf16.mxu0 0
        %2851 = vmatpush2.bf16.xpose.msra.mxu0 %v2817
        %2852 = vmatprep.subr.bf16.mxu0 0
        %2853 = vmatpush2.bf16.xpose.msra.mxu0 %v2816
        %2854 = vmatprep.subr.bf16.mxu0 0
        %2855 = vmatpush2.bf16.xpose.msra.mxu0 %v2815
        %2856 = vmatprep.subr.bf16.mxu0 0
        %2857 = vmatpush2.bf16.xpose.msra.mxu0 %v2814
        %2858 = vmatprep.subr.bf16.mxu0 0
        %2859 = vmatpush2.bf16.xpose.msra.mxu0 %v2813
        %2860 = vmatprep.subr.bf16.mxu0 0
        %2861 = vmatpush2.bf16.xpose.msra.mxu0 %v2812
        %2862 = vmatprep.subr.bf16.mxu0 0
        %2863 = vmatpush2.bf16.xpose.msra.mxu0 %v2811
        %2864 = vmatprep.subr.bf16.mxu0 0
        %2865 = vmatpush2.bf16.xpose.msra.mxu0 %v2810
        %2866 = vmatprep.mubr.bf16.mxu0 0
        %2867 = vmatmul.mubr.bf16.gmra.mxu0 %v2722
        %v2868 = vpop.f32.mrf.mxu0
        %v2869 = vadd.f32 0.0, %v2868
        %v2870 = vpop.f32.mrf.mxu0
        %v2871 = vadd.f32 0.0, %v2870
        %v2872 = vpop.f32.mrf.mxu0
        %v2873 = vadd.f32 0.0, %v2872
        %v2874 = vpop.f32.mrf.mxu0
        %v2875 = vadd.f32 0.0, %v2874
        %2876 = vmatprep.mubr.bf16.mxu0 0
        %2877 = vmatmul.mubr.bf16.gmra.mxu0 %v2723
        %v2878 = vpop.f32.mrf.mxu0
        %v2879 = vadd.f32 0.0, %v2878
        %v2880 = vpop.f32.mrf.mxu0
        %v2881 = vadd.f32 0.0, %v2880
        %v2882 = vpop.f32.mrf.mxu0
        %v2883 = vadd.f32 0.0, %v2882
        %v2884 = vpop.f32.mrf.mxu0
        %v2885 = vadd.f32 0.0, %v2884
        %2886 = vmatprep.mubr.bf16.mxu0 0
        %2887 = vmatmul.mubr.bf16.gmra.mxu0 %v2724
        %v2888 = vpop.f32.mrf.mxu0
        %v2889 = vadd.f32 0.0, %v2888
        %v2890 = vpop.f32.mrf.mxu0
        %v2891 = vadd.f32 0.0, %v2890
        %v2892 = vpop.f32.mrf.mxu0
        %v2893 = vadd.f32 0.0, %v2892
        %v2894 = vpop.f32.mrf.mxu0
        %v2895 = vadd.f32 0.0, %v2894
        %2896 = vmatprep.mubr.bf16.mxu0 0
        %2897 = vmatmul.mubr.bf16.gmra.mxu0 %v2725
        %v2898 = vpop.f32.mrf.mxu0
        %v2899 = vadd.f32 0.0, %v2898
        %v2900 = vpop.f32.mrf.mxu0
        %v2901 = vadd.f32 0.0, %v2900
        %v2902 = vpop.f32.mrf.mxu0
        %v2903 = vadd.f32 0.0, %v2902
        %v2904 = vpop.f32.mrf.mxu0
        %v2905 = vadd.f32 0.0, %v2904
        %2906 = vmatprep.mubr.bf16.mxu0 0
        %2907 = vmatmul.mubr.bf16.gmra.mxu0 %v2726
        %v2908 = vpop.f32.mrf.mxu0
        %v2909 = vadd.f32 0.0, %v2908
        %v2910 = vpop.f32.mrf.mxu0
        %v2911 = vadd.f32 0.0, %v2910
        %v2912 = vpop.f32.mrf.mxu0
        %v2913 = vadd.f32 0.0, %v2912
        %v2914 = vpop.f32.mrf.mxu0
        %v2915 = vadd.f32 0.0, %v2914
        %2916 = vmatprep.mubr.bf16.mxu0 0
        %2917 = vmatmul.mubr.bf16.gmra.mxu0 %v2727
        %v2918 = vpop.f32.mrf.mxu0
        %v2919 = vadd.f32 0.0, %v2918
        %v2920 = vpop.f32.mrf.mxu0
        %v2921 = vadd.f32 0.0, %v2920
        %v2922 = vpop.f32.mrf.mxu0
        %v2923 = vadd.f32 0.0, %v2922
        %v2924 = vpop.f32.mrf.mxu0
        %v2925 = vadd.f32 0.0, %v2924
        %2926 = vmatprep.mubr.bf16.mxu0 0
        %2927 = vmatmul.mubr.bf16.gmra.mxu0 %v2728
        %v2928 = vpop.f32.mrf.mxu0
        %v2929 = vadd.f32 0.0, %v2928
        %v2930 = vpop.f32.mrf.mxu0
        %v2931 = vadd.f32 0.0, %v2930
        %v2932 = vpop.f32.mrf.mxu0
        %v2933 = vadd.f32 0.0, %v2932
        %v2934 = vpop.f32.mrf.mxu0
        %v2935 = vadd.f32 0.0, %v2934
        %2936 = vmatprep.mubr.bf16.mxu0 0
        %2937 = vmatmul.mubr.bf16.gmra.mxu0 %v2729
        %v2938 = vpop.f32.mrf.mxu0
        %v2939 = vadd.f32 0.0, %v2938
        %v2940 = vpop.f32.mrf.mxu0
        %v2941 = vadd.f32 0.0, %v2940
        %v2942 = vpop.f32.mrf.mxu0
        %v2943 = vadd.f32 0.0, %v2942
        %v2944 = vpop.f32.mrf.mxu0
        %v2945 = vadd.f32 0.0, %v2944
        %2946 = vdwg.mxu0
        %v2947 = vmax.f32 %v2869, %v2871
        %2948 = vmax.xlane.f32.xlu0 %v2947
        %v2949 = vpop.xlane.xlu0 %2948
        %v2950 = vmax.f32 %v2873, %v2875
        %2951 = vmax.xlane.f32.xlu0 %v2950
        %v2952 = vpop.xlane.xlu0 %2951
        %v2953 = vmax.f32 %v2879, %v2881
        %2954 = vmax.xlane.f32.xlu0 %v2953
        %v2955 = vpop.xlane.xlu0 %2954
        %v2956 = vmax.f32 %v2883, %v2885
        %2957 = vmax.xlane.f32.xlu0 %v2956
        %v2958 = vpop.xlane.xlu0 %2957
        %v2959 = vmax.f32 %v2889, %v2891
        %2960 = vmax.xlane.f32.xlu0 %v2959
        %v2961 = vpop.xlane.xlu0 %2960
        %v2962 = vmax.f32 %v2893, %v2895
        %2963 = vmax.xlane.f32.xlu0 %v2962
        %v2964 = vpop.xlane.xlu0 %2963
        %v2965 = vmax.f32 %v2899, %v2901
        %2966 = vmax.xlane.f32.xlu0 %v2965
        %v2967 = vpop.xlane.xlu0 %2966
        %v2968 = vmax.f32 %v2903, %v2905
        %2969 = vmax.xlane.f32.xlu0 %v2968
        %v2970 = vpop.xlane.xlu0 %2969
        %v2971 = vmax.f32 %v2909, %v2911
        %2972 = vmax.xlane.f32.xlu0 %v2971
        %v2973 = vpop.xlane.xlu0 %2972
        %v2974 = vmax.f32 %v2913, %v2915
        %2975 = vmax.xlane.f32.xlu0 %v2974
        %v2976 = vpop.xlane.xlu0 %2975
        %v2977 = vmax.f32 %v2919, %v2921
        %2978 = vmax.xlane.f32.xlu0 %v2977
        %v2979 = vpop.xlane.xlu0 %2978
        %v2980 = vmax.f32 %v2923, %v2925
        %2981 = vmax.xlane.f32.xlu0 %v2980
        %v2982 = vpop.xlane.xlu0 %2981
        %v2983 = vmax.f32 %v2929, %v2931
        %2984 = vmax.xlane.f32.xlu0 %v2983
        %v2985 = vpop.xlane.xlu0 %2984
        %v2986 = vmax.f32 %v2933, %v2935
        %2987 = vmax.xlane.f32.xlu0 %v2986
        %v2988 = vpop.xlane.xlu0 %2987
        %v2989 = vmax.f32 %v2939, %v2941
        %2990 = vmax.xlane.f32.xlu0 %v2989
        %v2991 = vpop.xlane.xlu0 %2990
        %v2992 = vmax.f32 %v2943, %v2945
        %2993 = vmax.xlane.f32.xlu0 %v2992
        %v2994 = vpop.xlane.xlu0 %2993
        %v2995 = vsub.f32 %v2869, %v2949
        %v2996 = vsub.f32 %v2871, %v2949
        %v2997 = vsub.f32 %v2873, %v2952
        %v2998 = vsub.f32 %v2875, %v2952
        %v2999 = vsub.f32 %v2879, %v2955
        %v3000 = vsub.f32 %v2881, %v2955
        %v3001 = vsub.f32 %v2883, %v2958
        %v3002 = vsub.f32 %v2885, %v2958
        %v3003 = vsub.f32 %v2889, %v2961
        %v3004 = vsub.f32 %v2891, %v2961
        %v3005 = vsub.f32 %v2893, %v2964
        %v3006 = vsub.f32 %v2895, %v2964
        %v3007 = vsub.f32 %v2899, %v2967
        %v3008 = vsub.f32 %v2901, %v2967
        %v3009 = vsub.f32 %v2903, %v2970
        %v3010 = vsub.f32 %v2905, %v2970
        %v3011 = vsub.f32 %v2909, %v2973
        %v3012 = vsub.f32 %v2911, %v2973
        %v3013 = vsub.f32 %v2913, %v2976
        %v3014 = vsub.f32 %v2915, %v2976
        %v3015 = vsub.f32 %v2919, %v2979
        %v3016 = vsub.f32 %v2921, %v2979
        %v3017 = vsub.f32 %v2923, %v2982
        %v3018 = vsub.f32 %v2925, %v2982
        %v3019 = vsub.f32 %v2929, %v2985
        %v3020 = vsub.f32 %v2931, %v2985
        %v3021 = vsub.f32 %v2933, %v2988
        %v3022 = vsub.f32 %v2935, %v2988
        %v3023 = vsub.f32 %v2939, %v2991
        %v3024 = vsub.f32 %v2941, %v2991
        %v3025 = vsub.f32 %v2943, %v2994
        %v3026 = vsub.f32 %v2945, %v2994
        %v3027 = vmul.f32 %v2995, 1.442695
        %v3028 = vpow.pop %v3027
        %v3029 = vmul.f32 %v2996, 1.442695
        %v3030 = vpow.pop %v3029
        %v3031 = vmul.f32 %v2997, 1.442695
        %v3032 = vpow.pop %v3031
        %v3033 = vmul.f32 %v2998, 1.442695
        %v3034 = vpow.pop %v3033
        %v3035 = vmul.f32 %v2999, 1.442695
        %v3036 = vpow.pop %v3035
        %v3037 = vmul.f32 %v3000, 1.442695
        %v3038 = vpow.pop %v3037
        %v3039 = vmul.f32 %v3001, 1.442695
        %v3040 = vpow.pop %v3039
        %v3041 = vmul.f32 %v3002, 1.442695
        %v3042 = vpow.pop %v3041
        %v3043 = vmul.f32 %v3003, 1.442695
        %v3044 = vpow.pop %v3043
        %v3045 = vmul.f32 %v3004, 1.442695
        %v3046 = vpow.pop %v3045
        %v3047 = vmul.f32 %v3005, 1.442695
        %v3048 = vpow.pop %v3047
        %v3049 = vmul.f32 %v3006, 1.442695
        %v3050 = vpow.pop %v3049
        %v3051 = vmul.f32 %v3007, 1.442695
        %v3052 = vpow.pop %v3051
        %v3053 = vmul.f32 %v3008, 1.442695
        %v3054 = vpow.pop %v3053
        %v3055 = vmul.f32 %v3009, 1.442695
        %v3056 = vpow.pop %v3055
        %v3057 = vmul.f32 %v3010, 1.442695
        %v3058 = vpow.pop %v3057
        %v3059 = vmul.f32 %v3011, 1.442695
        %v3060 = vpow.pop %v3059
        %v3061 = vmul.f32 %v3012, 1.442695
        %v3062 = vpow.pop %v3061
        %v3063 = vmul.f32 %v3013, 1.442695
        %v3064 = vpow.pop %v3063
        %v3065 = vmul.f32 %v3014, 1.442695
        %v3066 = vpow.pop %v3065
        %v3067 = vmul.f32 %v3015, 1.442695
        %v3068 = vpow.pop %v3067
        %v3069 = vmul.f32 %v3016, 1.442695
        %v3070 = vpow.pop %v3069
        %v3071 = vmul.f32 %v3017, 1.442695
        %v3072 = vpow.pop %v3071
        %v3073 = vmul.f32 %v3018, 1.442695
        %v3074 = vpow.pop %v3073
        %v3075 = vmul.f32 %v3019, 1.442695
        %v3076 = vpow.pop %v3075
        %v3077 = vmul.f32 %v3020, 1.442695
        %v3078 = vpow.pop %v3077
        %v3079 = vmul.f32 %v3021, 1.442695
        %v3080 = vpow.pop %v3079
        %v3081 = vmul.f32 %v3022, 1.442695
        %v3082 = vpow.pop %v3081
        %v3083 = vmul.f32 %v3023, 1.442695
        %v3084 = vpow.pop %v3083
        %v3085 = vmul.f32 %v3024, 1.442695
        %v3086 = vpow.pop %v3085
        %v3087 = vmul.f32 %v3025, 1.442695
        %v3088 = vpow.pop %v3087
        %v3089 = vmul.f32 %v3026, 1.442695
        %v3090 = vpow.pop %v3089
        %v3091 = vadd.f32 %v3028, %v3030
        %3092 = vadd.xlane.f32.xlu0 %v3091
        %v3093 = vpop.xlane.xlu0 %3092
        %v3094 = vadd.f32 %v3032, %v3034
        %3095 = vadd.xlane.f32.xlu0 %v3094
        %v3096 = vpop.xlane.xlu0 %3095
        %v3097 = vadd.f32 %v3036, %v3038
        %3098 = vadd.xlane.f32.xlu0 %v3097
        %v3099 = vpop.xlane.xlu0 %3098
        %v3100 = vadd.f32 %v3040, %v3042
        %3101 = vadd.xlane.f32.xlu0 %v3100
        %v3102 = vpop.xlane.xlu0 %3101
        %v3103 = vadd.f32 %v3044, %v3046
        %3104 = vadd.xlane.f32.xlu0 %v3103
        %v3105 = vpop.xlane.xlu0 %3104
        %v3106 = vadd.f32 %v3048, %v3050
        %3107 = vadd.xlane.f32.xlu0 %v3106
        %v3108 = vpop.xlane.xlu0 %3107
        %v3109 = vadd.f32 %v3052, %v3054
        %3110 = vadd.xlane.f32.xlu0 %v3109
        %v3111 = vpop.xlane.xlu0 %3110
        %v3112 = vadd.f32 %v3056, %v3058
        %3113 = vadd.xlane.f32.xlu0 %v3112
        %v3114 = vpop.xlane.xlu0 %3113
        %v3115 = vadd.f32 %v3060, %v3062
        %3116 = vadd.xlane.f32.xlu0 %v3115
        %v3117 = vpop.xlane.xlu0 %3116
        %v3118 = vadd.f32 %v3064, %v3066
        %3119 = vadd.xlane.f32.xlu0 %v3118
        %v3120 = vpop.xlane.xlu0 %3119
        %v3121 = vadd.f32 %v3068, %v3070
        %3122 = vadd.xlane.f32.xlu0 %v3121
        %v3123 = vpop.xlane.xlu0 %3122
        %v3124 = vadd.f32 %v3072, %v3074
        %3125 = vadd.xlane.f32.xlu0 %v3124
        %v3126 = vpop.xlane.xlu0 %3125
        %v3127 = vadd.f32 %v3076, %v3078
        %3128 = vadd.xlane.f32.xlu0 %v3127
        %v3129 = vpop.xlane.xlu0 %3128
        %v3130 = vadd.f32 %v3080, %v3082
        %3131 = vadd.xlane.f32.xlu0 %v3130
        %v3132 = vpop.xlane.xlu0 %3131
        %v3133 = vadd.f32 %v3084, %v3086
        %3134 = vadd.xlane.f32.xlu0 %v3133
        %v3135 = vpop.xlane.xlu0 %3134
        %v3136 = vadd.f32 %v3088, %v3090
        %3137 = vadd.xlane.f32.xlu0 %v3136
        %v3138 = vpop.xlane.xlu0 %3137
        %v3139 = vrcp.pop %v3093
        %v3140 = vrcp.pop %v3096
        %v3141 = vrcp.pop %v3099
        %v3142 = vrcp.pop %v3102
        %v3143 = vrcp.pop %v3105
        %v3144 = vrcp.pop %v3108
        %v3145 = vrcp.pop %v3111
        %v3146 = vrcp.pop %v3114
        %v3147 = vrcp.pop %v3117
        %v3148 = vrcp.pop %v3120
        %v3149 = vrcp.pop %v3123
        %v3150 = vrcp.pop %v3126
        %v3151 = vrcp.pop %v3129
        %v3152 = vrcp.pop %v3132
        %v3153 = vrcp.pop %v3135
        %v3154 = vrcp.pop %v3138
        %v3155 = vmul.f32 %v3028, %v3139
        %v3156 = vmul.f32 %v3030, %v3139
        %v3157 = vmul.f32 %v3032, %v3140
        %v3158 = vmul.f32 %v3034, %v3140
        %v3159 = vmul.f32 %v3036, %v3141
        %v3160 = vmul.f32 %v3038, %v3141
        %v3161 = vmul.f32 %v3040, %v3142
        %v3162 = vmul.f32 %v3042, %v3142
        %v3163 = vmul.f32 %v3044, %v3143
        %v3164 = vmul.f32 %v3046, %v3143
        %v3165 = vmul.f32 %v3048, %v3144
        %v3166 = vmul.f32 %v3050, %v3144
        %v3167 = vmul.f32 %v3052, %v3145
        %v3168 = vmul.f32 %v3054, %v3145
        %v3169 = vmul.f32 %v3056, %v3146
        %v3170 = vmul.f32 %v3058, %v3146
        %v3171 = vmul.f32 %v3060, %v3147
        %v3172 = vmul.f32 %v3062, %v3147
        %v3173 = vmul.f32 %v3064, %v3148
        %v3174 = vmul.f32 %v3066, %v3148
        %v3175 = vmul.f32 %v3068, %v3149
        %v3176 = vmul.f32 %v3070, %v3149
        %v3177 = vmul.f32 %v3072, %v3150
        %v3178 = vmul.f32 %v3074, %v3150
        %v3179 = vmul.f32 %v3076, %v3151
        %v3180 = vmul.f32 %v3078, %v3151
        %v3181 = vmul.f32 %v3080, %v3152
        %v3182 = vmul.f32 %v3082, %v3152
        %v3183 = vmul.f32 %v3084, %v3153
        %v3184 = vmul.f32 %v3086, %v3153
        %v3185 = vmul.f32 %v3088, %v3154
        %v3186 = vmul.f32 %v3090, %v3154
        %v3187 = vpack.c.bf16 %v3157, %v3155
        %v3188 = vpack.c.bf16 %v3158, %v3156
        %v3189 = vpack.c.bf16 %v3161, %v3159
        %v3190 = vpack.c.bf16 %v3162, %v3160
        %v3191 = vpack.c.bf16 %v3165, %v3163
        %v3192 = vpack.c.bf16 %v3166, %v3164
        %v3193 = vpack.c.bf16 %v3169, %v3167
        %v3194 = vpack.c.bf16 %v3170, %v3168
        %v3195 = vpack.c.bf16 %v3173, %v3171
        %v3196 = vpack.c.bf16 %v3174, %v3172
        %v3197 = vpack.c.bf16 %v3177, %v3175
        %v3198 = vpack.c.bf16 %v3178, %v3176
        %v3199 = vpack.c.bf16 %v3181, %v3179
        %v3200 = vpack.c.bf16 %v3182, %v3180
        %v3201 = vpack.c.bf16 %v3185, %v3183
        %v3202 = vpack.c.bf16 %v3186, %v3184
        %v3235 = vunpack.c.l.b16 %v2658
        %v3236 = vunpack.c.l.b16 %v2659
        %v3237 = vunpack.c.l.b16 %v2660
        %v3238 = vunpack.c.l.b16 %v2661
        %v3239 = vunpack.c.l.b16 %v2662
        %v3240 = vunpack.c.l.b16 %v2663
        %v3241 = vunpack.c.l.b16 %v2664
        %v3242 = vunpack.c.l.b16 %v2665
        %v3243 = vunpack.c.l.b16 %v2666
        %v3244 = vunpack.c.l.b16 %v2667
        %v3245 = vunpack.c.l.b16 %v2668
        %v3246 = vunpack.c.l.b16 %v2669
        %v3247 = vunpack.c.l.b16 %v2670
        %v3248 = vunpack.c.l.b16 %v2671
        %v3249 = vunpack.c.l.b16 %v2672
        %v3250 = vunpack.c.l.b16 %v2673
        %v3251 = vunpack.c.l.b16 %v2674
        %v3252 = vunpack.c.l.b16 %v2675
        %v3253 = vunpack.c.l.b16 %v2676
        %v3254 = vunpack.c.l.b16 %v2677
        %v3255 = vunpack.c.l.b16 %v2678
        %v3256 = vunpack.c.l.b16 %v2679
        %v3257 = vunpack.c.l.b16 %v2680
        %v3258 = vunpack.c.l.b16 %v2681
        %v3259 = vunpack.c.l.b16 %v2682
        %v3260 = vunpack.c.l.b16 %v2683
        %v3261 = vunpack.c.l.b16 %v2684
        %v3262 = vunpack.c.l.b16 %v2685
        %v3263 = vunpack.c.l.b16 %v2686
        %v3264 = vunpack.c.l.b16 %v2687
        %v3265 = vunpack.c.l.b16 %v2688
        %v3266 = vunpack.c.l.b16 %v2689
        %v3267 = vpack.c.b16 %v3236, %v3235
        %v3268 = vpack.c.b16 %v3238, %v3237
        %v3269 = vpack.c.b16 %v3240, %v3239
        %v3270 = vpack.c.b16 %v3242, %v3241
        %v3271 = vpack.c.b16 %v3244, %v3243
        %v3272 = vpack.c.b16 %v3246, %v3245
        %v3273 = vpack.c.b16 %v3248, %v3247
        %v3274 = vpack.c.b16 %v3250, %v3249
        %v3275 = vpack.c.b16 %v3252, %v3251
        %v3276 = vpack.c.b16 %v3254, %v3253
        %v3277 = vpack.c.b16 %v3256, %v3255
        %v3278 = vpack.c.b16 %v3258, %v3257
        %v3279 = vpack.c.b16 %v3260, %v3259
        %v3280 = vpack.c.b16 %v3262, %v3261
        %v3281 = vpack.c.b16 %v3264, %v3263
        %v3282 = vpack.c.b16 %v3266, %v3265
        %3299 = vmatprep.subr.bf16.mxu0 0
        %3300 = vmatpush1.bf16.msra.mxu0 %v3274
        %3301 = vmatprep.subr.bf16.mxu0 0
        %3302 = vmatpush1.bf16.msra.mxu0 %v3273
        %3303 = vmatprep.subr.bf16.mxu0 0
        %3304 = vmatpush1.bf16.msra.mxu0 %v3272
        %3305 = vmatprep.subr.bf16.mxu0 0
        %3306 = vmatpush1.bf16.msra.mxu0 %v3271
        %3307 = vmatprep.subr.bf16.mxu0 0
        %3308 = vmatpush1.bf16.msra.mxu0 %v3270
        %3309 = vmatprep.subr.bf16.mxu0 0
        %3310 = vmatpush1.bf16.msra.mxu0 %v3269
        %3311 = vmatprep.subr.bf16.mxu0 0
        %3312 = vmatpush1.bf16.msra.mxu0 %v3268
        %3313 = vmatprep.subr.bf16.mxu0 0
        %3314 = vmatpush1.bf16.msra.mxu0 %v3267
        %3315 = vmatprep.subr.bf16.mxu0 0
        %3316 = vmatpush2.bf16.msra.mxu0 %v3282
        %3317 = vmatprep.subr.bf16.mxu0 0
        %3318 = vmatpush2.bf16.msra.mxu0 %v3281
        %3319 = vmatprep.subr.bf16.mxu0 0
        %3320 = vmatpush2.bf16.msra.mxu0 %v3280
        %3321 = vmatprep.subr.bf16.mxu0 0
        %3322 = vmatpush2.bf16.msra.mxu0 %v3279
        %3323 = vmatprep.subr.bf16.mxu0 0
        %3324 = vmatpush2.bf16.msra.mxu0 %v3278
        %3325 = vmatprep.subr.bf16.mxu0 0
        %3326 = vmatpush2.bf16.msra.mxu0 %v3277
        %3327 = vmatprep.subr.bf16.mxu0 0
        %3328 = vmatpush2.bf16.msra.mxu0 %v3276
        %3329 = vmatprep.subr.bf16.mxu0 0
        %3330 = vmatpush2.bf16.msra.mxu0 %v3275
        %3331 = vmatprep.mubr.bf16.mxu0 %v3188
        %3332 = vmatmul.mubr.bf16.gmra.mxu0 %v3187
        %v3333 = vpop.f32.mrf.mxu0
        %v3334 = vadd.f32 0.0, %v3333
        %v3335 = vpop.f32.mrf.mxu0
        %v3336 = vpop.f32.mrf.mxu0
        %v3337 = vadd.f32 0.0, %v3336
        %v3338 = vpop.f32.mrf.mxu0
        %3339 = vmatprep.mubr.bf16.mxu0 %v3190
        %3340 = vmatmul.mubr.bf16.gmra.mxu0 %v3189
        %v3341 = vpop.f32.mrf.mxu0
        %v3342 = vadd.f32 0.0, %v3341
        %v3343 = vpop.f32.mrf.mxu0
        %v3344 = vpop.f32.mrf.mxu0
        %v3345 = vadd.f32 0.0, %v3344
        %v3346 = vpop.f32.mrf.mxu0
        %3347 = vmatprep.mubr.bf16.mxu0 %v3192
        %3348 = vmatmul.mubr.bf16.gmra.mxu0 %v3191
        %v3349 = vpop.f32.mrf.mxu0
        %v3350 = vadd.f32 0.0, %v3349
        %v3351 = vpop.f32.mrf.mxu0
        %v3352 = vpop.f32.mrf.mxu0
        %v3353 = vadd.f32 0.0, %v3352
        %v3354 = vpop.f32.mrf.mxu0
        %3355 = vmatprep.mubr.bf16.mxu0 %v3194
        %3356 = vmatmul.mubr.bf16.gmra.mxu0 %v3193
        %v3357 = vpop.f32.mrf.mxu0
        %v3358 = vadd.f32 0.0, %v3357
        %v3359 = vpop.f32.mrf.mxu0
        %v3360 = vpop.f32.mrf.mxu0
        %v3361 = vadd.f32 0.0, %v3360
        %v3362 = vpop.f32.mrf.mxu0
        %3363 = vmatprep.mubr.bf16.mxu0 %v3196
        %3364 = vmatmul.mubr.bf16.gmra.mxu0 %v3195
        %v3365 = vpop.f32.mrf.mxu0
        %v3366 = vadd.f32 0.0, %v3365
        %v3367 = vpop.f32.mrf.mxu0
        %v3368 = vpop.f32.mrf.mxu0
        %v3369 = vadd.f32 0.0, %v3368
        %v3370 = vpop.f32.mrf.mxu0
        %3371 = vmatprep.mubr.bf16.mxu0 %v3198
        %3372 = vmatmul.mubr.bf16.gmra.mxu0 %v3197
        %v3373 = vpop.f32.mrf.mxu0
        %v3374 = vadd.f32 0.0, %v3373
        %v3375 = vpop.f32.mrf.mxu0
        %v3376 = vpop.f32.mrf.mxu0
        %v3377 = vadd.f32 0.0, %v3376
        %v3378 = vpop.f32.mrf.mxu0
        %3379 = vmatprep.mubr.bf16.mxu0 %v3200
        %3380 = vmatmul.mubr.bf16.gmra.mxu0 %v3199
        %v3381 = vpop.f32.mrf.mxu0
        %v3382 = vadd.f32 0.0, %v3381
        %v3383 = vpop.f32.mrf.mxu0
        %v3384 = vpop.f32.mrf.mxu0
        %v3385 = vadd.f32 0.0, %v3384
        %v3386 = vpop.f32.mrf.mxu0
        %3387 = vmatprep.mubr.bf16.mxu0 %v3202
        %3388 = vmatmul.mubr.bf16.gmra.mxu0 %v3201
        %v3389 = vpop.f32.mrf.mxu0
        %v3390 = vadd.f32 0.0, %v3389
        %v3391 = vpop.f32.mrf.mxu0
        %v3392 = vpop.f32.mrf.mxu0
        %v3393 = vadd.f32 0.0, %v3392
        %v3394 = vpop.f32.mrf.mxu0
        %3395 = vdwg.mxu0
        %v3396 = vpack.c.bf16 %v3337, %v3334
        %v3397 = vpack.c.bf16 %v3345, %v3342
        %v3398 = vpack.c.bf16 %v3353, %v3350
        %v3399 = vpack.c.bf16 %v3361, %v3358
        %v3400 = vpack.c.bf16 %v3369, %v3366
        %v3401 = vpack.c.bf16 %v3377, %v3374
        %v3402 = vpack.c.bf16 %v3385, %v3382
        %v3403 = vpack.c.bf16 %v3393, %v3390
        %v3404 = vld [vmem:[#allocation9] sm:$0xff]
        %v3405 = vld [vmem:[#allocation9 + $0x8] sm:$0xff]
        %v3406 = vld [vmem:[#allocation9 + $0x10] sm:$0xff]
        %v3407 = vld [vmem:[#allocation9 + $0x18] sm:$0xff]
        %v3408 = vld [vmem:[#allocation9 + $0x20] sm:$0xff]
        %v3409 = vld [vmem:[#allocation9 + $0x28] sm:$0xff]
        %v3410 = vld [vmem:[#allocation9 + $0x30] sm:$0xff]
        %v3411 = vld [vmem:[#allocation9 + $0x38] sm:$0xff]
        %v3412 = vld [vmem:[#allocation9 + $0x40] sm:$0xff]
        %v3413 = vld [vmem:[#allocation9 + $0x48] sm:$0xff]
        %v3414 = vld [vmem:[#allocation9 + $0x50] sm:$0xff]
        %v3415 = vld [vmem:[#allocation9 + $0x58] sm:$0xff]
        %v3416 = vld [vmem:[#allocation9 + $0x60] sm:$0xff]
        %v3417 = vld [vmem:[#allocation9 + $0x68] sm:$0xff]
        %v3418 = vld [vmem:[#allocation9 + $0x70] sm:$0xff]
        %v3419 = vld [vmem:[#allocation9 + $0x78] sm:$0xff]
        %v3420 = vld [vmem:[%s2609 + $0x4] sm:$0xf]
        %v3421 = vld [vmem:[%s2609 + $0x1c] sm:$0xf]
        %v3422 = vld [vmem:[%s2609 + $0x34] sm:$0xf]
        %v3423 = vld [vmem:[%s2609 + $0x4c] sm:$0xf]
        %v3424 = vld [vmem:[%s2609 + $0x64] sm:$0xf]
        %v3425 = vld [vmem:[%s2609 + $0x7c] sm:$0xf]
        %v3426 = vld [vmem:[%s2609 + $0x94] sm:$0xf]
        %v3427 = vld [vmem:[%s2609 + $0xac] sm:$0xf]
        %v3428 = vld [vmem:[%s2609 + $0xc4] sm:$0xf]
        %v3429 = vld [vmem:[%s2609 + $0xdc] sm:$0xf]
        %v3430 = vld [vmem:[%s2609 + $0xf4] sm:$0xf]
        %v3431 = vld [vmem:[%s2609 + $0x10c] sm:$0xf]
        %v3432 = vld [vmem:[%s2609 + $0x124] sm:$0xf]
        %v3433 = vld [vmem:[%s2609 + $0x13c] sm:$0xf]
        %v3434 = vld [vmem:[%s2609 + $0x154] sm:$0xf]
        %v3435 = vld [vmem:[%s2609 + $0x16c] sm:$0xf]
        %v3436 = vld [vmem:[#allocation2 + $0xc] sm:$0xf]
        %v3437 = vld [vmem:[#allocation2 + $0x24] sm:$0xf]
        %v3438 = vld [vmem:[#allocation2 + $0x3c] sm:$0xf]
        %v3439 = vld [vmem:[#allocation2 + $0x54] sm:$0xf]
        %v3440 = vld [vmem:[#allocation2 + $0x6c] sm:$0xf]
        %v3441 = vld [vmem:[#allocation2 + $0x84] sm:$0xf]
        %v3442 = vld [vmem:[#allocation2 + $0x9c] sm:$0xf]
        %v3443 = vld [vmem:[#allocation2 + $0xb4] sm:$0xf]
        %v3444 = vld [vmem:[#allocation2 + $0xcc] sm:$0xf]
        %v3445 = vld [vmem:[#allocation2 + $0xe4] sm:$0xf]
        %v3446 = vld [vmem:[#allocation2 + $0xfc] sm:$0xf]
        %v3447 = vld [vmem:[#allocation2 + $0x114] sm:$0xf]
        %v3448 = vld [vmem:[#allocation2 + $0x12c] sm:$0xf]
        %v3449 = vld [vmem:[#allocation2 + $0x144] sm:$0xf]
        %v3450 = vld [vmem:[#allocation2 + $0x15c] sm:$0xf]
        %v3451 = vld [vmem:[#allocation2 + $0x174] sm:$0xf]
        %v3452 = vld [vmem:[#allocation2 + $0x18c] sm:$0xf]
        %v3453 = vld [vmem:[#allocation2 + $0x1a4] sm:$0xf]
        %v3454 = vld [vmem:[#allocation2 + $0x1bc] sm:$0xf]
        %v3455 = vld [vmem:[#allocation2 + $0x1d4] sm:$0xf]
        %v3456 = vld [vmem:[#allocation2 + $0x1ec] sm:$0xf]
        %v3457 = vld [vmem:[#allocation2 + $0x204] sm:$0xf]
        %v3458 = vld [vmem:[#allocation2 + $0x21c] sm:$0xf]
        %v3459 = vld [vmem:[#allocation2 + $0x234] sm:$0xf]
        %v3460 = vld [vmem:[#allocation2 + $0x24c] sm:$0xf]
        %v3461 = vld [vmem:[#allocation2 + $0x264] sm:$0xf]
        %v3462 = vld [vmem:[#allocation2 + $0x27c] sm:$0xf]
        %v3463 = vld [vmem:[#allocation2 + $0x294] sm:$0xf]
        %v3464 = vld [vmem:[#allocation2 + $0x2ac] sm:$0xf]
        %v3465 = vld [vmem:[#allocation2 + $0x2c4] sm:$0xf]
        %v3466 = vld [vmem:[#allocation2 + $0x2dc] sm:$0xf]
        %v3467 = vld [vmem:[#allocation2 + $0x2f4] sm:$0xf]
        %v3468 = vld [vmem:[#allocation2 + $0x14] sm:$0xf]
        %v3469 = vld [vmem:[#allocation2 + $0x2c] sm:$0xf]
        %v3470 = vld [vmem:[#allocation2 + $0x44] sm:$0xf]
        %v3471 = vld [vmem:[#allocation2 + $0x5c] sm:$0xf]
        %v3472 = vld [vmem:[#allocation2 + $0x74] sm:$0xf]
        %v3473 = vld [vmem:[#allocation2 + $0x8c] sm:$0xf]
        %v3474 = vld [vmem:[#allocation2 + $0xa4] sm:$0xf]
        %v3475 = vld [vmem:[#allocation2 + $0xbc] sm:$0xf]
        %v3476 = vld [vmem:[#allocation2 + $0xd4] sm:$0xf]
        %v3477 = vld [vmem:[#allocation2 + $0xec] sm:$0xf]
        %v3478 = vld [vmem:[#allocation2 + $0x104] sm:$0xf]
        %v3479 = vld [vmem:[#allocation2 + $0x11c] sm:$0xf]
        %v3480 = vld [vmem:[#allocation2 + $0x134] sm:$0xf]
        %v3481 = vld [vmem:[#allocation2 + $0x14c] sm:$0xf]
        %v3482 = vld [vmem:[#allocation2 + $0x164] sm:$0xf]
        %v3483 = vld [vmem:[#allocation2 + $0x17c] sm:$0xf]
        %v3484 = vld [vmem:[#allocation2 + $0x194] sm:$0xf]
        %v3485 = vld [vmem:[#allocation2 + $0x1ac] sm:$0xf]
        %v3486 = vld [vmem:[#allocation2 + $0x1c4] sm:$0xf]
        %v3487 = vld [vmem:[#allocation2 + $0x1dc] sm:$0xf]
        %v3488 = vld [vmem:[#allocation2 + $0x1f4] sm:$0xf]
        %v3489 = vld [vmem:[#allocation2 + $0x20c] sm:$0xf]
        %v3490 = vld [vmem:[#allocation2 + $0x224] sm:$0xf]
        %v3491 = vld [vmem:[#allocation2 + $0x23c] sm:$0xf]
        %v3492 = vld [vmem:[#allocation2 + $0x254] sm:$0xf]
        %v3493 = vld [vmem:[#allocation2 + $0x26c] sm:$0xf]
        %v3494 = vld [vmem:[#allocation2 + $0x284] sm:$0xf]
        %v3495 = vld [vmem:[#allocation2 + $0x29c] sm:$0xf]
        %v3496 = vld [vmem:[#allocation2 + $0x2b4] sm:$0xf]
        %v3497 = vld [vmem:[#allocation2 + $0x2cc] sm:$0xf]
        %v3498 = vld [vmem:[#allocation2 + $0x2e4] sm:$0xf]
        %v3499 = vld [vmem:[#allocation2 + $0x2fc] sm:$0xf]
        %v3516 = vunpack.c.l.b16 %v3420
        %v3517 = vunpack.c.l.b16 %v3421
        %v3518 = vunpack.c.l.b16 %v3422
        %v3519 = vunpack.c.l.b16 %v3423
        %v3520 = vunpack.c.l.b16 %v3424
        %v3521 = vunpack.c.l.b16 %v3425
        %v3522 = vunpack.c.l.b16 %v3426
        %v3523 = vunpack.c.l.b16 %v3427
        %v3524 = vunpack.c.l.b16 %v3428
        %v3525 = vunpack.c.l.b16 %v3429
        %v3526 = vunpack.c.l.b16 %v3430
        %v3527 = vunpack.c.l.b16 %v3431
        %v3528 = vunpack.c.l.b16 %v3432
        %v3529 = vunpack.c.l.b16 %v3433
        %v3530 = vunpack.c.l.b16 %v3434
        %v3531 = vunpack.c.l.b16 %v3435
        %v3532 = vpack.c.b16 %v3517, %v3516
        %v3533 = vpack.c.b16 %v3519, %v3518
        %v3534 = vpack.c.b16 %v3521, %v3520
        %v3535 = vpack.c.b16 %v3523, %v3522
        %v3536 = vpack.c.b16 %v3525, %v3524
        %v3537 = vpack.c.b16 %v3527, %v3526
        %v3538 = vpack.c.b16 %v3529, %v3528
        %v3539 = vpack.c.b16 %v3531, %v3530
        %v3580 = vunpack.c.l.b16 %v3436
        %v3581 = vunpack.c.l.b16 %v3437
        %v3582 = vunpack.c.l.b16 %v3438
        %v3583 = vunpack.c.l.b16 %v3439
        %v3584 = vunpack.c.l.b16 %v3440
        %v3585 = vunpack.c.l.b16 %v3441
        %v3586 = vunpack.c.l.b16 %v3442
        %v3587 = vunpack.c.l.b16 %v3443
        %v3588 = vunpack.c.l.b16 %v3444
        %v3589 = vunpack.c.l.b16 %v3445
        %v3590 = vunpack.c.l.b16 %v3446
        %v3591 = vunpack.c.l.b16 %v3447
        %v3592 = vunpack.c.l.b16 %v3448
        %v3593 = vunpack.c.l.b16 %v3449
        %v3594 = vunpack.c.l.b16 %v3450
        %v3595 = vunpack.c.l.b16 %v3451
        %v3596 = vunpack.c.l.b16 %v3452
        %v3597 = vunpack.c.l.b16 %v3453
        %v3598 = vunpack.c.l.b16 %v3454
        %v3599 = vunpack.c.l.b16 %v3455
        %v3600 = vunpack.c.l.b16 %v3456
        %v3601 = vunpack.c.l.b16 %v3457
        %v3602 = vunpack.c.l.b16 %v3458
        %v3603 = vunpack.c.l.b16 %v3459
        %v3604 = vunpack.c.l.b16 %v3460
        %v3605 = vunpack.c.l.b16 %v3461
        %v3606 = vunpack.c.l.b16 %v3462
        %v3607 = vunpack.c.l.b16 %v3463
        %v3608 = vunpack.c.l.b16 %v3464
        %v3609 = vunpack.c.l.b16 %v3465
        %v3610 = vunpack.c.l.b16 %v3466
        %v3611 = vunpack.c.l.b16 %v3467
        %v3612 = vpack.c.b16 %v3581, %v3580
        %v3613 = vpack.c.b16 %v3583, %v3582
        %v3614 = vpack.c.b16 %v3585, %v3584
        %v3615 = vpack.c.b16 %v3587, %v3586
        %v3616 = vpack.c.b16 %v3589, %v3588
        %v3617 = vpack.c.b16 %v3591, %v3590
        %v3618 = vpack.c.b16 %v3593, %v3592
        %v3619 = vpack.c.b16 %v3595, %v3594
        %v3620 = vpack.c.b16 %v3597, %v3596
        %v3621 = vpack.c.b16 %v3599, %v3598
        %v3622 = vpack.c.b16 %v3601, %v3600
        %v3623 = vpack.c.b16 %v3603, %v3602
        %v3624 = vpack.c.b16 %v3605, %v3604
        %v3625 = vpack.c.b16 %v3607, %v3606
        %v3626 = vpack.c.b16 %v3609, %v3608
        %v3627 = vpack.c.b16 %v3611, %v3610
        %3644 = vmatprep.subr.bf16.mxu0 0
        %3645 = vmatpush1.bf16.xpose.msra.mxu0 %v3619
        %3646 = vmatprep.subr.bf16.mxu0 0
        %3647 = vmatpush1.bf16.xpose.msra.mxu0 %v3618
        %3648 = vmatprep.subr.bf16.mxu0 0
        %3649 = vmatpush1.bf16.xpose.msra.mxu0 %v3617
        %3650 = vmatprep.subr.bf16.mxu0 0
        %3651 = vmatpush1.bf16.xpose.msra.mxu0 %v3616
        %3652 = vmatprep.subr.bf16.mxu0 0
        %3653 = vmatpush1.bf16.xpose.msra.mxu0 %v3615
        %3654 = vmatprep.subr.bf16.mxu0 0
        %3655 = vmatpush1.bf16.xpose.msra.mxu0 %v3614
        %3656 = vmatprep.subr.bf16.mxu0 0
        %3657 = vmatpush1.bf16.xpose.msra.mxu0 %v3613
        %3658 = vmatprep.subr.bf16.mxu0 0
        %3659 = vmatpush1.bf16.xpose.msra.mxu0 %v3612
        %3660 = vmatprep.subr.bf16.mxu0 0
        %3661 = vmatpush2.bf16.xpose.msra.mxu0 %v3627
        %3662 = vmatprep.subr.bf16.mxu0 0
        %3663 = vmatpush2.bf16.xpose.msra.mxu0 %v3626
        %3664 = vmatprep.subr.bf16.mxu0 0
        %3665 = vmatpush2.bf16.xpose.msra.mxu0 %v3625
        %3666 = vmatprep.subr.bf16.mxu0 0
        %3667 = vmatpush2.bf16.xpose.msra.mxu0 %v3624
        %3668 = vmatprep.subr.bf16.mxu0 0
        %3669 = vmatpush2.bf16.xpose.msra.mxu0 %v3623
        %3670 = vmatprep.subr.bf16.mxu0 0
        %3671 = vmatpush2.bf16.xpose.msra.mxu0 %v3622
        %3672 = vmatprep.subr.bf16.mxu0 0
        %3673 = vmatpush2.bf16.xpose.msra.mxu0 %v3621
        %3674 = vmatprep.subr.bf16.mxu0 0
        %3675 = vmatpush2.bf16.xpose.msra.mxu0 %v3620
        %3676 = vmatprep.mubr.bf16.mxu0 0
        %3677 = vmatmul.mubr.bf16.gmra.mxu0 %v3532
        %v3678 = vpop.f32.mrf.mxu0
        %v3679 = vadd.f32 0.0, %v3678
        %v3680 = vpop.f32.mrf.mxu0
        %v3681 = vadd.f32 0.0, %v3680
        %v3682 = vpop.f32.mrf.mxu0
        %v3683 = vadd.f32 0.0, %v3682
        %v3684 = vpop.f32.mrf.mxu0
        %v3685 = vadd.f32 0.0, %v3684
        %3686 = vmatprep.mubr.bf16.mxu0 0
        %3687 = vmatmul.mubr.bf16.gmra.mxu0 %v3533
        %v3688 = vpop.f32.mrf.mxu0
        %v3689 = vadd.f32 0.0, %v3688
        %v3690 = vpop.f32.mrf.mxu0
        %v3691 = vadd.f32 0.0, %v3690
        %v3692 = vpop.f32.mrf.mxu0
        %v3693 = vadd.f32 0.0, %v3692
        %v3694 = vpop.f32.mrf.mxu0
        %v3695 = vadd.f32 0.0, %v3694
        %3696 = vmatprep.mubr.bf16.mxu0 0
        %3697 = vmatmul.mubr.bf16.gmra.mxu0 %v3534
        %v3698 = vpop.f32.mrf.mxu0
        %v3699 = vadd.f32 0.0, %v3698
        %v3700 = vpop.f32.mrf.mxu0
        %v3701 = vadd.f32 0.0, %v3700
        %v3702 = vpop.f32.mrf.mxu0
        %v3703 = vadd.f32 0.0, %v3702
        %v3704 = vpop.f32.mrf.mxu0
        %v3705 = vadd.f32 0.0, %v3704
        %3706 = vmatprep.mubr.bf16.mxu0 0
        %3707 = vmatmul.mubr.bf16.gmra.mxu0 %v3535
        %v3708 = vpop.f32.mrf.mxu0
        %v3709 = vadd.f32 0.0, %v3708
        %v3710 = vpop.f32.mrf.mxu0
        %v3711 = vadd.f32 0.0, %v3710
        %v3712 = vpop.f32.mrf.mxu0
        %v3713 = vadd.f32 0.0, %v3712
        %v3714 = vpop.f32.mrf.mxu0
        %v3715 = vadd.f32 0.0, %v3714
        %3716 = vmatprep.mubr.bf16.mxu0 0
        %3717 = vmatmul.mubr.bf16.gmra.mxu0 %v3536
        %v3718 = vpop.f32.mrf.mxu0
        %v3719 = vadd.f32 0.0, %v3718
        %v3720 = vpop.f32.mrf.mxu0
        %v3721 = vadd.f32 0.0, %v3720
        %v3722 = vpop.f32.mrf.mxu0
        %v3723 = vadd.f32 0.0, %v3722
        %v3724 = vpop.f32.mrf.mxu0
        %v3725 = vadd.f32 0.0, %v3724
        %3726 = vmatprep.mubr.bf16.mxu0 0
        %3727 = vmatmul.mubr.bf16.gmra.mxu0 %v3537
        %v3728 = vpop.f32.mrf.mxu0
        %v3729 = vadd.f32 0.0, %v3728
        %v3730 = vpop.f32.mrf.mxu0
        %v3731 = vadd.f32 0.0, %v3730
        %v3732 = vpop.f32.mrf.mxu0
        %v3733 = vadd.f32 0.0, %v3732
        %v3734 = vpop.f32.mrf.mxu0
        %v3735 = vadd.f32 0.0, %v3734
        %3736 = vmatprep.mubr.bf16.mxu0 0
        %3737 = vmatmul.mubr.bf16.gmra.mxu0 %v3538
        %v3738 = vpop.f32.mrf.mxu0
        %v3739 = vadd.f32 0.0, %v3738
        %v3740 = vpop.f32.mrf.mxu0
        %v3741 = vadd.f32 0.0, %v3740
        %v3742 = vpop.f32.mrf.mxu0
        %v3743 = vadd.f32 0.0, %v3742
        %v3744 = vpop.f32.mrf.mxu0
        %v3745 = vadd.f32 0.0, %v3744
        %3746 = vmatprep.mubr.bf16.mxu0 0
        %3747 = vmatmul.mubr.bf16.gmra.mxu0 %v3539
        %v3748 = vpop.f32.mrf.mxu0
        %v3749 = vadd.f32 0.0, %v3748
        %v3750 = vpop.f32.mrf.mxu0
        %v3751 = vadd.f32 0.0, %v3750
        %v3752 = vpop.f32.mrf.mxu0
        %v3753 = vadd.f32 0.0, %v3752
        %v3754 = vpop.f32.mrf.mxu0
        %v3755 = vadd.f32 0.0, %v3754
        %3756 = vdwg.mxu0
        %v3757 = vmax.f32 %v3679, %v3681
        %3758 = vmax.xlane.f32.xlu0 %v3757
        %v3759 = vpop.xlane.xlu0 %3758
        %v3760 = vmax.f32 %v3683, %v3685
        %3761 = vmax.xlane.f32.xlu0 %v3760
        %v3762 = vpop.xlane.xlu0 %3761
        %v3763 = vmax.f32 %v3689, %v3691
        %3764 = vmax.xlane.f32.xlu0 %v3763
        %v3765 = vpop.xlane.xlu0 %3764
        %v3766 = vmax.f32 %v3693, %v3695
        %3767 = vmax.xlane.f32.xlu0 %v3766
        %v3768 = vpop.xlane.xlu0 %3767
        %v3769 = vmax.f32 %v3699, %v3701
        %3770 = vmax.xlane.f32.xlu0 %v3769
        %v3771 = vpop.xlane.xlu0 %3770
        %v3772 = vmax.f32 %v3703, %v3705
        %3773 = vmax.xlane.f32.xlu0 %v3772
        %v3774 = vpop.xlane.xlu0 %3773
        %v3775 = vmax.f32 %v3709, %v3711
        %3776 = vmax.xlane.f32.xlu0 %v3775
        %v3777 = vpop.xlane.xlu0 %3776
        %v3778 = vmax.f32 %v3713, %v3715
        %3779 = vmax.xlane.f32.xlu0 %v3778
        %v3780 = vpop.xlane.xlu0 %3779
        %v3781 = vmax.f32 %v3719, %v3721
        %3782 = vmax.xlane.f32.xlu0 %v3781
        %v3783 = vpop.xlane.xlu0 %3782
        %v3784 = vmax.f32 %v3723, %v3725
        %3785 = vmax.xlane.f32.xlu0 %v3784
        %v3786 = vpop.xlane.xlu0 %3785
        %v3787 = vmax.f32 %v3729, %v3731
        %3788 = vmax.xlane.f32.xlu0 %v3787
        %v3789 = vpop.xlane.xlu0 %3788
        %v3790 = vmax.f32 %v3733, %v3735
        %3791 = vmax.xlane.f32.xlu0 %v3790
        %v3792 = vpop.xlane.xlu0 %3791
        %v3793 = vmax.f32 %v3739, %v3741
        %3794 = vmax.xlane.f32.xlu0 %v3793
        %v3795 = vpop.xlane.xlu0 %3794
        %v3796 = vmax.f32 %v3743, %v3745
        %3797 = vmax.xlane.f32.xlu0 %v3796
        %v3798 = vpop.xlane.xlu0 %3797
        %v3799 = vmax.f32 %v3749, %v3751
        %3800 = vmax.xlane.f32.xlu0 %v3799
        %v3801 = vpop.xlane.xlu0 %3800
        %v3802 = vmax.f32 %v3753, %v3755
        %3803 = vmax.xlane.f32.xlu0 %v3802
        %v3804 = vpop.xlane.xlu0 %3803
        %v3805 = vsub.f32 %v3679, %v3759
        %v3806 = vsub.f32 %v3681, %v3759
        %v3807 = vsub.f32 %v3683, %v3762
        %v3808 = vsub.f32 %v3685, %v3762
        %v3809 = vsub.f32 %v3689, %v3765
        %v3810 = vsub.f32 %v3691, %v3765
        %v3811 = vsub.f32 %v3693, %v3768
        %v3812 = vsub.f32 %v3695, %v3768
        %v3813 = vsub.f32 %v3699, %v3771
        %v3814 = vsub.f32 %v3701, %v3771
        %v3815 = vsub.f32 %v3703, %v3774
        %v3816 = vsub.f32 %v3705, %v3774
        %v3817 = vsub.f32 %v3709, %v3777
        %v3818 = vsub.f32 %v3711, %v3777
        %v3819 = vsub.f32 %v3713, %v3780
        %v3820 = vsub.f32 %v3715, %v3780
        %v3821 = vsub.f32 %v3719, %v3783
        %v3822 = vsub.f32 %v3721, %v3783
        %v3823 = vsub.f32 %v3723, %v3786
        %v3824 = vsub.f32 %v3725, %v3786
        %v3825 = vsub.f32 %v3729, %v3789
        %v3826 = vsub.f32 %v3731, %v3789
        %v3827 = vsub.f32 %v3733, %v3792
        %v3828 = vsub.f32 %v3735, %v3792
        %v3829 = vsub.f32 %v3739, %v3795
        %v3830 = vsub.f32 %v3741, %v3795
        %v3831 = vsub.f32 %v3743, %v3798
        %v3832 = vsub.f32 %v3745, %v3798
        %v3833 = vsub.f32 %v3749, %v3801
        %v3834 = vsub.f32 %v3751, %v3801
        %v3835 = vsub.f32 %v3753, %v3804
        %v3836 = vsub.f32 %v3755, %v3804
        %v3837 = vmul.f32 %v3805, 1.442695
        %v3838 = vpow.pop %v3837
        %v3839 = vmul.f32 %v3806, 1.442695
        %v3840 = vpow.pop %v3839
        %v3841 = vmul.f32 %v3807, 1.442695
        %v3842 = vpow.pop %v3841
        %v3843 = vmul.f32 %v3808, 1.442695
        %v3844 = vpow.pop %v3843
        %v3845 = vmul.f32 %v3809, 1.442695
        %v3846 = vpow.pop %v3845
        %v3847 = vmul.f32 %v3810, 1.442695
        %v3848 = vpow.pop %v3847
        %v3849 = vmul.f32 %v3811, 1.442695
        %v3850 = vpow.pop %v3849
        %v3851 = vmul.f32 %v3812, 1.442695
        %v3852 = vpow.pop %v3851
        %v3853 = vmul.f32 %v3813, 1.442695
        %v3854 = vpow.pop %v3853
        %v3855 = vmul.f32 %v3814, 1.442695
        %v3856 = vpow.pop %v3855
        %v3857 = vmul.f32 %v3815, 1.442695
        %v3858 = vpow.pop %v3857
        %v3859 = vmul.f32 %v3816, 1.442695
        %v3860 = vpow.pop %v3859
        %v3861 = vmul.f32 %v3817, 1.442695
        %v3862 = vpow.pop %v3861
        %v3863 = vmul.f32 %v3818, 1.442695
        %v3864 = vpow.pop %v3863
        %v3865 = vmul.f32 %v3819, 1.442695
        %v3866 = vpow.pop %v3865
        %v3867 = vmul.f32 %v3820, 1.442695
        %v3868 = vpow.pop %v3867
        %v3869 = vmul.f32 %v3821, 1.442695
        %v3870 = vpow.pop %v3869
        %v3871 = vmul.f32 %v3822, 1.442695
        %v3872 = vpow.pop %v3871
        %v3873 = vmul.f32 %v3823, 1.442695
        %v3874 = vpow.pop %v3873
        %v3875 = vmul.f32 %v3824, 1.442695
        %v3876 = vpow.pop %v3875
        %v3877 = vmul.f32 %v3825, 1.442695
        %v3878 = vpow.pop %v3877
        %v3879 = vmul.f32 %v3826, 1.442695
        %v3880 = vpow.pop %v3879
        %v3881 = vmul.f32 %v3827, 1.442695
        %v3882 = vpow.pop %v3881
        %v3883 = vmul.f32 %v3828, 1.442695
        %v3884 = vpow.pop %v3883
        %v3885 = vmul.f32 %v3829, 1.442695
        %v3886 = vpow.pop %v3885
        %v3887 = vmul.f32 %v3830, 1.442695
        %v3888 = vpow.pop %v3887
        %v3889 = vmul.f32 %v3831, 1.442695
        %v3890 = vpow.pop %v3889
        %v3891 = vmul.f32 %v3832, 1.442695
        %v3892 = vpow.pop %v3891
        %v3893 = vmul.f32 %v3833, 1.442695
        %v3894 = vpow.pop %v3893
        %v3895 = vmul.f32 %v3834, 1.442695
        %v3896 = vpow.pop %v3895
        %v3897 = vmul.f32 %v3835, 1.442695
        %v3898 = vpow.pop %v3897
        %v3899 = vmul.f32 %v3836, 1.442695
        %v3900 = vpow.pop %v3899
        %v3901 = vadd.f32 %v3838, %v3840
        %3902 = vadd.xlane.f32.xlu0 %v3901
        %v3903 = vpop.xlane.xlu0 %3902
        %v3904 = vadd.f32 %v3842, %v3844
        %3905 = vadd.xlane.f32.xlu0 %v3904
        %v3906 = vpop.xlane.xlu0 %3905
        %v3907 = vadd.f32 %v3846, %v3848
        %3908 = vadd.xlane.f32.xlu0 %v3907
        %v3909 = vpop.xlane.xlu0 %3908
        %v3910 = vadd.f32 %v3850, %v3852
        %3911 = vadd.xlane.f32.xlu0 %v3910
        %v3912 = vpop.xlane.xlu0 %3911
        %v3913 = vadd.f32 %v3854, %v3856
        %3914 = vadd.xlane.f32.xlu0 %v3913
        %v3915 = vpop.xlane.xlu0 %3914
        %v3916 = vadd.f32 %v3858, %v3860
        %3917 = vadd.xlane.f32.xlu0 %v3916
        %v3918 = vpop.xlane.xlu0 %3917
        %v3919 = vadd.f32 %v3862, %v3864
        %3920 = vadd.xlane.f32.xlu0 %v3919
        %v3921 = vpop.xlane.xlu0 %3920
        %v3922 = vadd.f32 %v3866, %v3868
        %3923 = vadd.xlane.f32.xlu0 %v3922
        %v3924 = vpop.xlane.xlu0 %3923
        %v3925 = vadd.f32 %v3870, %v3872
        %3926 = vadd.xlane.f32.xlu0 %v3925
        %v3927 = vpop.xlane.xlu0 %3926
        %v3928 = vadd.f32 %v3874, %v3876
        %3929 = vadd.xlane.f32.xlu0 %v3928
        %v3930 = vpop.xlane.xlu0 %3929
        %v3931 = vadd.f32 %v3878, %v3880
        %3932 = vadd.xlane.f32.xlu0 %v3931
        %v3933 = vpop.xlane.xlu0 %3932
        %v3934 = vadd.f32 %v3882, %v3884
        %3935 = vadd.xlane.f32.xlu0 %v3934
        %v3936 = vpop.xlane.xlu0 %3935
        %v3937 = vadd.f32 %v3886, %v3888
        %3938 = vadd.xlane.f32.xlu0 %v3937
        %v3939 = vpop.xlane.xlu0 %3938
        %v3940 = vadd.f32 %v3890, %v3892
        %3941 = vadd.xlane.f32.xlu0 %v3940
        %v3942 = vpop.xlane.xlu0 %3941
        %v3943 = vadd.f32 %v3894, %v3896
        %3944 = vadd.xlane.f32.xlu0 %v3943
        %v3945 = vpop.xlane.xlu0 %3944
        %v3946 = vadd.f32 %v3898, %v3900
        %3947 = vadd.xlane.f32.xlu0 %v3946
        %v3948 = vpop.xlane.xlu0 %3947
        %v3949 = vrcp.pop %v3903
        %v3950 = vrcp.pop %v3906
        %v3951 = vrcp.pop %v3909
        %v3952 = vrcp.pop %v3912
        %v3953 = vrcp.pop %v3915
        %v3954 = vrcp.pop %v3918
        %v3955 = vrcp.pop %v3921
        %v3956 = vrcp.pop %v3924
        %v3957 = vrcp.pop %v3927
        %v3958 = vrcp.pop %v3930
        %v3959 = vrcp.pop %v3933
        %v3960 = vrcp.pop %v3936
        %v3961 = vrcp.pop %v3939
        %v3962 = vrcp.pop %v3942
        %v3963 = vrcp.pop %v3945
        %v3964 = vrcp.pop %v3948
        %v3965 = vmul.f32 %v3838, %v3949
        %v3966 = vmul.f32 %v3840, %v3949
        %v3967 = vmul.f32 %v3842, %v3950
        %v3968 = vmul.f32 %v3844, %v3950
        %v3969 = vmul.f32 %v3846, %v3951
        %v3970 = vmul.f32 %v3848, %v3951
        %v3971 = vmul.f32 %v3850, %v3952
        %v3972 = vmul.f32 %v3852, %v3952
        %v3973 = vmul.f32 %v3854, %v3953
        %v3974 = vmul.f32 %v3856, %v3953
        %v3975 = vmul.f32 %v3858, %v3954
        %v3976 = vmul.f32 %v3860, %v3954
        %v3977 = vmul.f32 %v3862, %v3955
        %v3978 = vmul.f32 %v3864, %v3955
        %v3979 = vmul.f32 %v3866, %v3956
        %v3980 = vmul.f32 %v3868, %v3956
        %v3981 = vmul.f32 %v3870, %v3957
        %v3982 = vmul.f32 %v3872, %v3957
        %v3983 = vmul.f32 %v3874, %v3958
        %v3984 = vmul.f32 %v3876, %v3958
        %v3985 = vmul.f32 %v3878, %v3959
        %v3986 = vmul.f32 %v3880, %v3959
        %v3987 = vmul.f32 %v3882, %v3960
        %v3988 = vmul.f32 %v3884, %v3960
        %v3989 = vmul.f32 %v3886, %v3961
        %v3990 = vmul.f32 %v3888, %v3961
        %v3991 = vmul.f32 %v3890, %v3962
        %v3992 = vmul.f32 %v3892, %v3962
        %v3993 = vmul.f32 %v3894, %v3963
        %v3994 = vmul.f32 %v3896, %v3963
        %v3995 = vmul.f32 %v3898, %v3964
        %v3996 = vmul.f32 %v3900, %v3964
        %v3997 = vpack.c.bf16 %v3967, %v3965
        %v3998 = vpack.c.bf16 %v3968, %v3966
        %v3999 = vpack.c.bf16 %v3971, %v3969
        %v4000 = vpack.c.bf16 %v3972, %v3970
        %v4001 = vpack.c.bf16 %v3975, %v3973
        %v4002 = vpack.c.bf16 %v3976, %v3974
        %v4003 = vpack.c.bf16 %v3979, %v3977
        %v4004 = vpack.c.bf16 %v3980, %v3978
        %v4005 = vpack.c.bf16 %v3983, %v3981
        %v4006 = vpack.c.bf16 %v3984, %v3982
        %v4007 = vpack.c.bf16 %v3987, %v3985
        %v4008 = vpack.c.bf16 %v3988, %v3986
        %v4009 = vpack.c.bf16 %v3991, %v3989
        %v4010 = vpack.c.bf16 %v3992, %v3990
        %v4011 = vpack.c.bf16 %v3995, %v3993
        %v4012 = vpack.c.bf16 %v3996, %v3994
        %v4045 = vunpack.c.l.b16 %v3468
        %v4046 = vunpack.c.l.b16 %v3469
        %v4047 = vunpack.c.l.b16 %v3470
        %v4048 = vunpack.c.l.b16 %v3471
        %v4049 = vunpack.c.l.b16 %v3472
        %v4050 = vunpack.c.l.b16 %v3473
        %v4051 = vunpack.c.l.b16 %v3474
        %v4052 = vunpack.c.l.b16 %v3475
        %v4053 = vunpack.c.l.b16 %v3476
        %v4054 = vunpack.c.l.b16 %v3477
        %v4055 = vunpack.c.l.b16 %v3478
        %v4056 = vunpack.c.l.b16 %v3479
        %v4057 = vunpack.c.l.b16 %v3480
        %v4058 = vunpack.c.l.b16 %v3481
        %v4059 = vunpack.c.l.b16 %v3482
        %v4060 = vunpack.c.l.b16 %v3483
        %v4061 = vunpack.c.l.b16 %v3484
        %v4062 = vunpack.c.l.b16 %v3485
        %v4063 = vunpack.c.l.b16 %v3486
        %v4064 = vunpack.c.l.b16 %v3487
        %v4065 = vunpack.c.l.b16 %v3488
        %v4066 = vunpack.c.l.b16 %v3489
        %v4067 = vunpack.c.l.b16 %v3490
        %v4068 = vunpack.c.l.b16 %v3491
        %v4069 = vunpack.c.l.b16 %v3492
        %v4070 = vunpack.c.l.b16 %v3493
        %v4071 = vunpack.c.l.b16 %v3494
        %v4072 = vunpack.c.l.b16 %v3495
        %v4073 = vunpack.c.l.b16 %v3496
        %v4074 = vunpack.c.l.b16 %v3497
        %v4075 = vunpack.c.l.b16 %v3498
        %v4076 = vunpack.c.l.b16 %v3499
        %v4077 = vpack.c.b16 %v4046, %v4045
        %v4078 = vpack.c.b16 %v4048, %v4047
        %v4079 = vpack.c.b16 %v4050, %v4049
        %v4080 = vpack.c.b16 %v4052, %v4051
        %v4081 = vpack.c.b16 %v4054, %v4053
        %v4082 = vpack.c.b16 %v4056, %v4055
        %v4083 = vpack.c.b16 %v4058, %v4057
        %v4084 = vpack.c.b16 %v4060, %v4059
        %v4085 = vpack.c.b16 %v4062, %v4061
        %v4086 = vpack.c.b16 %v4064, %v4063
        %v4087 = vpack.c.b16 %v4066, %v4065
        %v4088 = vpack.c.b16 %v4068, %v4067
        %v4089 = vpack.c.b16 %v4070, %v4069
        %v4090 = vpack.c.b16 %v4072, %v4071
        %v4091 = vpack.c.b16 %v4074, %v4073
        %v4092 = vpack.c.b16 %v4076, %v4075
        %4109 = vmatprep.subr.bf16.mxu0 0
        %4110 = vmatpush1.bf16.msra.mxu0 %v4084
        %4111 = vmatprep.subr.bf16.mxu0 0
        %4112 = vmatpush1.bf16.msra.mxu0 %v4083
        %4113 = vmatprep.subr.bf16.mxu0 0
        %4114 = vmatpush1.bf16.msra.mxu0 %v4082
        %4115 = vmatprep.subr.bf16.mxu0 0
        %4116 = vmatpush1.bf16.msra.mxu0 %v4081
        %4117 = vmatprep.subr.bf16.mxu0 0
        %4118 = vmatpush1.bf16.msra.mxu0 %v4080
        %4119 = vmatprep.subr.bf16.mxu0 0
        %4120 = vmatpush1.bf16.msra.mxu0 %v4079
        %4121 = vmatprep.subr.bf16.mxu0 0
        %4122 = vmatpush1.bf16.msra.mxu0 %v4078
        %4123 = vmatprep.subr.bf16.mxu0 0
        %4124 = vmatpush1.bf16.msra.mxu0 %v4077
        %4125 = vmatprep.subr.bf16.mxu0 0
        %4126 = vmatpush2.bf16.msra.mxu0 %v4092
        %4127 = vmatprep.subr.bf16.mxu0 0
        %4128 = vmatpush2.bf16.msra.mxu0 %v4091
        %4129 = vmatprep.subr.bf16.mxu0 0
        %4130 = vmatpush2.bf16.msra.mxu0 %v4090
        %4131 = vmatprep.subr.bf16.mxu0 0
        %4132 = vmatpush2.bf16.msra.mxu0 %v4089
        %4133 = vmatprep.subr.bf16.mxu0 0
        %4134 = vmatpush2.bf16.msra.mxu0 %v4088
        %4135 = vmatprep.subr.bf16.mxu0 0
        %4136 = vmatpush2.bf16.msra.mxu0 %v4087
        %4137 = vmatprep.subr.bf16.mxu0 0
        %4138 = vmatpush2.bf16.msra.mxu0 %v4086
        %4139 = vmatprep.subr.bf16.mxu0 0
        %4140 = vmatpush2.bf16.msra.mxu0 %v4085
        %4141 = vmatprep.mubr.bf16.mxu0 %v3998
        %4142 = vmatmul.mubr.bf16.gmra.mxu0 %v3997
        %v4143 = vpop.f32.mrf.mxu0
        %v4144 = vadd.f32 0.0, %v4143
        %v4145 = vpop.f32.mrf.mxu0
        %v4146 = vpop.f32.mrf.mxu0
        %v4147 = vadd.f32 0.0, %v4146
        %v4148 = vpop.f32.mrf.mxu0
        %4149 = vmatprep.mubr.bf16.mxu0 %v4000
        %4150 = vmatmul.mubr.bf16.gmra.mxu0 %v3999
        %v4151 = vpop.f32.mrf.mxu0
        %v4152 = vadd.f32 0.0, %v4151
        %v4153 = vpop.f32.mrf.mxu0
        %v4154 = vpop.f32.mrf.mxu0
        %v4155 = vadd.f32 0.0, %v4154
        %v4156 = vpop.f32.mrf.mxu0
        %4157 = vmatprep.mubr.bf16.mxu0 %v4002
        %4158 = vmatmul.mubr.bf16.gmra.mxu0 %v4001
        %v4159 = vpop.f32.mrf.mxu0
        %v4160 = vadd.f32 0.0, %v4159
        %v4161 = vpop.f32.mrf.mxu0
        %v4162 = vpop.f32.mrf.mxu0
        %v4163 = vadd.f32 0.0, %v4162
        %v4164 = vpop.f32.mrf.mxu0
        %4165 = vmatprep.mubr.bf16.mxu0 %v4004
        %4166 = vmatmul.mubr.bf16.gmra.mxu0 %v4003
        %v4167 = vpop.f32.mrf.mxu0
        %v4168 = vadd.f32 0.0, %v4167
        %v4169 = vpop.f32.mrf.mxu0
        %v4170 = vpop.f32.mrf.mxu0
        %v4171 = vadd.f32 0.0, %v4170
        %v4172 = vpop.f32.mrf.mxu0
        %4173 = vmatprep.mubr.bf16.mxu0 %v4006
        %4174 = vmatmul.mubr.bf16.gmra.mxu0 %v4005
        %v4175 = vpop.f32.mrf.mxu0
        %v4176 = vadd.f32 0.0, %v4175
        %v4177 = vpop.f32.mrf.mxu0
        %v4178 = vpop.f32.mrf.mxu0
        %v4179 = vadd.f32 0.0, %v4178
        %v4180 = vpop.f32.mrf.mxu0
        %4181 = vmatprep.mubr.bf16.mxu0 %v4008
        %4182 = vmatmul.mubr.bf16.gmra.mxu0 %v4007
        %v4183 = vpop.f32.mrf.mxu0
        %v4184 = vadd.f32 0.0, %v4183
        %v4185 = vpop.f32.mrf.mxu0
        %v4186 = vpop.f32.mrf.mxu0
        %v4187 = vadd.f32 0.0, %v4186
        %v4188 = vpop.f32.mrf.mxu0
        %4189 = vmatprep.mubr.bf16.mxu0 %v4010
        %4190 = vmatmul.mubr.bf16.gmra.mxu0 %v4009
        %v4191 = vpop.f32.mrf.mxu0
        %v4192 = vadd.f32 0.0, %v4191
        %v4193 = vpop.f32.mrf.mxu0
        %v4194 = vpop.f32.mrf.mxu0
        %v4195 = vadd.f32 0.0, %v4194
        %v4196 = vpop.f32.mrf.mxu0
        %4197 = vmatprep.mubr.bf16.mxu0 %v4012
        %4198 = vmatmul.mubr.bf16.gmra.mxu0 %v4011
        %v4199 = vpop.f32.mrf.mxu0
        %v4200 = vadd.f32 0.0, %v4199
        %v4201 = vpop.f32.mrf.mxu0
        %v4202 = vpop.f32.mrf.mxu0
        %v4203 = vadd.f32 0.0, %v4202
        %v4204 = vpop.f32.mrf.mxu0
        %4205 = vdwg.mxu0
        %v4206 = vpack.c.bf16 %v4147, %v4144
        %v4207 = vpack.c.bf16 %v4155, %v4152
        %v4208 = vpack.c.bf16 %v4163, %v4160
        %v4209 = vpack.c.bf16 %v4171, %v4168
        %v4210 = vpack.c.bf16 %v4179, %v4176
        %v4211 = vpack.c.bf16 %v4187, %v4184
        %v4212 = vpack.c.bf16 %v4195, %v4192
        %v4213 = vpack.c.bf16 %v4203, %v4200
        %v4214 = vld [vmem:[#allocation9 + $0x80] sm:$0xff]
        %v4215 = vld [vmem:[#allocation9 + $0x88] sm:$0xff]
        %v4216 = vld [vmem:[#allocation9 + $0x90] sm:$0xff]
        %v4217 = vld [vmem:[#allocation9 + $0x98] sm:$0xff]
        %v4218 = vld [vmem:[#allocation9 + $0xa0] sm:$0xff]
        %v4219 = vld [vmem:[#allocation9 + $0xa8] sm:$0xff]
        %v4220 = vld [vmem:[#allocation9 + $0xb0] sm:$0xff]
        %v4221 = vld [vmem:[#allocation9 + $0xb8] sm:$0xff]
        %v4222 = vld [vmem:[#allocation9 + $0xc0] sm:$0xff]
        %v4223 = vld [vmem:[#allocation9 + $0xc8] sm:$0xff]
        %v4224 = vld [vmem:[#allocation9 + $0xd0] sm:$0xff]
        %v4225 = vld [vmem:[#allocation9 + $0xd8] sm:$0xff]
        %v4226 = vld [vmem:[#allocation9 + $0xe0] sm:$0xff]
        %v4227 = vld [vmem:[#allocation9 + $0xe8] sm:$0xff]
        %v4228 = vld [vmem:[#allocation9 + $0xf0] sm:$0xff]
        %v4229 = vld [vmem:[#allocation9 + $0xf8] sm:$0xff]
        %v4246 = vunpack.c.l.b16 %v4214
        %v4247 = vunpack.c.h.b16 %v4214
        %v4248 = vunpack.c.l.b16 %v4215
        %v4249 = vunpack.c.h.b16 %v4215
        %v4250 = vunpack.c.l.b16 %v4216
        %v4251 = vunpack.c.h.b16 %v4216
        %v4252 = vunpack.c.l.b16 %v4217
        %v4253 = vunpack.c.h.b16 %v4217
        %v4254 = vunpack.c.l.b16 %v4218
        %v4255 = vunpack.c.h.b16 %v4218
        %v4256 = vunpack.c.l.b16 %v4219
        %v4257 = vunpack.c.h.b16 %v4219
        %v4258 = vunpack.c.l.b16 %v4220
        %v4259 = vunpack.c.h.b16 %v4220
        %v4260 = vunpack.c.l.b16 %v4221
        %v4261 = vunpack.c.h.b16 %v4221
        %v4262 = vunpack.c.l.b16 %v4222
        %v4263 = vunpack.c.h.b16 %v4222
        %v4264 = vunpack.c.l.b16 %v4223
        %v4265 = vunpack.c.h.b16 %v4223
        %v4266 = vunpack.c.l.b16 %v4224
        %v4267 = vunpack.c.h.b16 %v4224
        %v4268 = vunpack.c.l.b16 %v4225
        %v4269 = vunpack.c.h.b16 %v4225
        %v4270 = vunpack.c.l.b16 %v4226
        %v4271 = vunpack.c.h.b16 %v4226
        %v4272 = vunpack.c.l.b16 %v4227
        %v4273 = vunpack.c.h.b16 %v4227
        %v4274 = vunpack.c.l.b16 %v4228
        %v4275 = vunpack.c.h.b16 %v4228
        %v4276 = vunpack.c.l.b16 %v4229
        %v4277 = vunpack.c.h.b16 %v4229
        %v4278 = vpack.c.b16 %v4248, %v4246
        %v4279 = vpack.c.b16 %v4249, %v4247
        %v4280 = vpack.c.b16 %v4252, %v4250
        %v4281 = vpack.c.b16 %v4253, %v4251
        %v4282 = vpack.c.b16 %v4256, %v4254
        %v4283 = vpack.c.b16 %v4257, %v4255
        %v4284 = vpack.c.b16 %v4260, %v4258
        %v4285 = vpack.c.b16 %v4261, %v4259
        %v4286 = vpack.c.b16 %v4264, %v4262
        %v4287 = vpack.c.b16 %v4265, %v4263
        %v4288 = vpack.c.b16 %v4268, %v4266
        %v4289 = vpack.c.b16 %v4269, %v4267
        %v4290 = vpack.c.b16 %v4272, %v4270
        %v4291 = vpack.c.b16 %v4273, %v4271
        %v4292 = vpack.c.b16 %v4276, %v4274
        %v4293 = vpack.c.b16 %v4277, %v4275
        %4310 = vmatprep.subr.bf16.mxu0 %v4293
        %4311 = vmatpush1.bf16.msra.mxu0 %v4292
        %4312 = vmatprep.subr.bf16.mxu0 %v4291
        %4313 = vmatpush1.bf16.msra.mxu0 %v4290
        %4314 = vmatprep.subr.bf16.mxu0 %v4289
        %4315 = vmatpush1.bf16.msra.mxu0 %v4288
        %4316 = vmatprep.subr.bf16.mxu0 %v4287
        %4317 = vmatpush1.bf16.msra.mxu0 %v4286
        %4318 = vmatprep.subr.bf16.mxu0 %v4285
        %4319 = vmatpush1.bf16.msra.mxu0 %v4284
        %4320 = vmatprep.subr.bf16.mxu0 %v4283
        %4321 = vmatpush1.bf16.msra.mxu0 %v4282
        %4322 = vmatprep.subr.bf16.mxu0 %v4281
        %4323 = vmatpush1.bf16.msra.mxu0 %v4280
        %4324 = vmatprep.subr.bf16.mxu0 %v4279
        %4325 = vmatpush1.bf16.msra.mxu0 %v4278
        %4326 = vmatprep.subr.bf16.mxu0 0
        %4327 = vmatpush2.bf16.msra.mxu0 0
        %4328 = vmatprep.subr.bf16.mxu0 0
        %4329 = vmatpush2.bf16.msra.mxu0 0
        %4330 = vmatprep.subr.bf16.mxu0 0
        %4331 = vmatpush2.bf16.msra.mxu0 0
        %4332 = vmatprep.subr.bf16.mxu0 0
        %4333 = vmatpush2.bf16.msra.mxu0 0
        %4334 = vmatprep.subr.bf16.mxu0 0
        %4335 = vmatpush2.bf16.msra.mxu0 0
        %4336 = vmatprep.subr.bf16.mxu0 0
        %4337 = vmatpush2.bf16.msra.mxu0 0
        %4338 = vmatprep.subr.bf16.mxu0 0
        %4339 = vmatpush2.bf16.msra.mxu0 0
        %4340 = vmatprep.subr.bf16.mxu0 0
        %4341 = vmatpush2.bf16.msra.mxu0 0
        %4342 = vmatprep.mubr.bf16.mxu0 0
        %4343 = vmatmul.mubr.bf16.gmra.mxu0 %v4206
        %v4344 = vpop.f32.mrf.mxu0
        %v4345 = vadd.f32 0.0, %v4344
        %v4346 = vpop.f32.mrf.mxu0
        %v4347 = vadd.f32 0.0, %v4346
        %v4348 = vpop.f32.mrf.mxu0
        %v4349 = vadd.f32 0.0, %v4348
        %v4350 = vpop.f32.mrf.mxu0
        %v4351 = vadd.f32 0.0, %v4350
        %4352 = vmatprep.mubr.bf16.mxu0 0
        %4353 = vmatmul.mubr.bf16.gmra.mxu0 %v4207
        %v4354 = vpop.f32.mrf.mxu0
        %v4355 = vadd.f32 0.0, %v4354
        %v4356 = vpop.f32.mrf.mxu0
        %v4357 = vadd.f32 0.0, %v4356
        %v4358 = vpop.f32.mrf.mxu0
        %v4359 = vadd.f32 0.0, %v4358
        %v4360 = vpop.f32.mrf.mxu0
        %v4361 = vadd.f32 0.0, %v4360
        %4362 = vmatprep.mubr.bf16.mxu0 0
        %4363 = vmatmul.mubr.bf16.gmra.mxu0 %v4208
        %v4364 = vpop.f32.mrf.mxu0
        %v4365 = vadd.f32 0.0, %v4364
        %v4366 = vpop.f32.mrf.mxu0
        %v4367 = vadd.f32 0.0, %v4366
        %v4368 = vpop.f32.mrf.mxu0
        %v4369 = vadd.f32 0.0, %v4368
        %v4370 = vpop.f32.mrf.mxu0
        %v4371 = vadd.f32 0.0, %v4370
        %4372 = vmatprep.mubr.bf16.mxu0 0
        %4373 = vmatmul.mubr.bf16.gmra.mxu0 %v4209
        %v4374 = vpop.f32.mrf.mxu0
        %v4375 = vadd.f32 0.0, %v4374
        %v4376 = vpop.f32.mrf.mxu0
        %v4377 = vadd.f32 0.0, %v4376
        %v4378 = vpop.f32.mrf.mxu0
        %v4379 = vadd.f32 0.0, %v4378
        %v4380 = vpop.f32.mrf.mxu0
        %v4381 = vadd.f32 0.0, %v4380
        %4382 = vmatprep.mubr.bf16.mxu0 0
        %4383 = vmatmul.mubr.bf16.gmra.mxu0 %v4210
        %v4384 = vpop.f32.mrf.mxu0
        %v4385 = vadd.f32 0.0, %v4384
        %v4386 = vpop.f32.mrf.mxu0
        %v4387 = vadd.f32 0.0, %v4386
        %v4388 = vpop.f32.mrf.mxu0
        %v4389 = vadd.f32 0.0, %v4388
        %v4390 = vpop.f32.mrf.mxu0
        %v4391 = vadd.f32 0.0, %v4390
        %4392 = vmatprep.mubr.bf16.mxu0 0
        %4393 = vmatmul.mubr.bf16.gmra.mxu0 %v4211
        %v4394 = vpop.f32.mrf.mxu0
        %v4395 = vadd.f32 0.0, %v4394
        %v4396 = vpop.f32.mrf.mxu0
        %v4397 = vadd.f32 0.0, %v4396
        %v4398 = vpop.f32.mrf.mxu0
        %v4399 = vadd.f32 0.0, %v4398
        %v4400 = vpop.f32.mrf.mxu0
        %v4401 = vadd.f32 0.0, %v4400
        %4402 = vmatprep.mubr.bf16.mxu0 0
        %4403 = vmatmul.mubr.bf16.gmra.mxu0 %v4212
        %v4404 = vpop.f32.mrf.mxu0
        %v4405 = vadd.f32 0.0, %v4404
        %v4406 = vpop.f32.mrf.mxu0
        %v4407 = vadd.f32 0.0, %v4406
        %v4408 = vpop.f32.mrf.mxu0
        %v4409 = vadd.f32 0.0, %v4408
        %v4410 = vpop.f32.mrf.mxu0
        %v4411 = vadd.f32 0.0, %v4410
        %4412 = vmatprep.mubr.bf16.mxu0 0
        %4413 = vmatmul.mubr.bf16.gmra.mxu0 %v4213
        %v4414 = vpop.f32.mrf.mxu0
        %v4415 = vadd.f32 0.0, %v4414
        %v4416 = vpop.f32.mrf.mxu0
        %v4417 = vadd.f32 0.0, %v4416
        %v4418 = vpop.f32.mrf.mxu0
        %v4419 = vadd.f32 0.0, %v4418
        %v4420 = vpop.f32.mrf.mxu0
        %v4421 = vadd.f32 0.0, %v4420
        %4422 = vdwg.mxu0
        %v4439 = vunpack.c.l.b16 %v3404
        %v4440 = vunpack.c.h.b16 %v3404
        %v4441 = vunpack.c.l.b16 %v3405
        %v4442 = vunpack.c.h.b16 %v3405
        %v4443 = vunpack.c.l.b16 %v3406
        %v4444 = vunpack.c.h.b16 %v3406
        %v4445 = vunpack.c.l.b16 %v3407
        %v4446 = vunpack.c.h.b16 %v3407
        %v4447 = vunpack.c.l.b16 %v3408
        %v4448 = vunpack.c.h.b16 %v3408
        %v4449 = vunpack.c.l.b16 %v3409
        %v4450 = vunpack.c.h.b16 %v3409
        %v4451 = vunpack.c.l.b16 %v3410
        %v4452 = vunpack.c.h.b16 %v3410
        %v4453 = vunpack.c.l.b16 %v3411
        %v4454 = vunpack.c.h.b16 %v3411
        %v4455 = vunpack.c.l.b16 %v3412
        %v4456 = vunpack.c.h.b16 %v3412
        %v4457 = vunpack.c.l.b16 %v3413
        %v4458 = vunpack.c.h.b16 %v3413
        %v4459 = vunpack.c.l.b16 %v3414
        %v4460 = vunpack.c.h.b16 %v3414
        %v4461 = vunpack.c.l.b16 %v3415
        %v4462 = vunpack.c.h.b16 %v3415
        %v4463 = vunpack.c.l.b16 %v3416
        %v4464 = vunpack.c.h.b16 %v3416
        %v4465 = vunpack.c.l.b16 %v3417
        %v4466 = vunpack.c.h.b16 %v3417
        %v4467 = vunpack.c.l.b16 %v3418
        %v4468 = vunpack.c.h.b16 %v3418
        %v4469 = vunpack.c.l.b16 %v3419
        %v4470 = vunpack.c.h.b16 %v3419
        %v4471 = vpack.c.b16 %v4441, %v4439
        %v4472 = vpack.c.b16 %v4442, %v4440
        %v4473 = vpack.c.b16 %v4445, %v4443
        %v4474 = vpack.c.b16 %v4446, %v4444
        %v4475 = vpack.c.b16 %v4449, %v4447
        %v4476 = vpack.c.b16 %v4450, %v4448
        %v4477 = vpack.c.b16 %v4453, %v4451
        %v4478 = vpack.c.b16 %v4454, %v4452
        %v4479 = vpack.c.b16 %v4457, %v4455
        %v4480 = vpack.c.b16 %v4458, %v4456
        %v4481 = vpack.c.b16 %v4461, %v4459
        %v4482 = vpack.c.b16 %v4462, %v4460
        %v4483 = vpack.c.b16 %v4465, %v4463
        %v4484 = vpack.c.b16 %v4466, %v4464
        %v4485 = vpack.c.b16 %v4469, %v4467
        %v4486 = vpack.c.b16 %v4470, %v4468
        %4503 = vmatprep.subr.bf16.mxu0 %v4486
        %4504 = vmatpush1.bf16.msra.mxu0 %v4485
        %4505 = vmatprep.subr.bf16.mxu0 %v4484
        %4506 = vmatpush1.bf16.msra.mxu0 %v4483
        %4507 = vmatprep.subr.bf16.mxu0 %v4482
        %4508 = vmatpush1.bf16.msra.mxu0 %v4481
        %4509 = vmatprep.subr.bf16.mxu0 %v4480
        %4510 = vmatpush1.bf16.msra.mxu0 %v4479
        %4511 = vmatprep.subr.bf16.mxu0 %v4478
        %4512 = vmatpush1.bf16.msra.mxu0 %v4477
        %4513 = vmatprep.subr.bf16.mxu0 %v4476
        %4514 = vmatpush1.bf16.msra.mxu0 %v4475
        %4515 = vmatprep.subr.bf16.mxu0 %v4474
        %4516 = vmatpush1.bf16.msra.mxu0 %v4473
        %4517 = vmatprep.subr.bf16.mxu0 %v4472
        %4518 = vmatpush1.bf16.msra.mxu0 %v4471
        %4519 = vmatprep.subr.bf16.mxu0 0
        %4520 = vmatpush2.bf16.msra.mxu0 0
        %4521 = vmatprep.subr.bf16.mxu0 0
        %4522 = vmatpush2.bf16.msra.mxu0 0
        %4523 = vmatprep.subr.bf16.mxu0 0
        %4524 = vmatpush2.bf16.msra.mxu0 0
        %4525 = vmatprep.subr.bf16.mxu0 0
        %4526 = vmatpush2.bf16.msra.mxu0 0
        %4527 = vmatprep.subr.bf16.mxu0 0
        %4528 = vmatpush2.bf16.msra.mxu0 0
        %4529 = vmatprep.subr.bf16.mxu0 0
        %4530 = vmatpush2.bf16.msra.mxu0 0
        %4531 = vmatprep.subr.bf16.mxu0 0
        %4532 = vmatpush2.bf16.msra.mxu0 0
        %4533 = vmatprep.subr.bf16.mxu0 0
        %4534 = vmatpush2.bf16.msra.mxu0 0
        %4535 = vmatprep.mubr.bf16.mxu0 0
        %4536 = vmatmul.mubr.bf16.gmra.mxu0 %v3396
        %v4537 = vpop.f32.mrf.mxu0
        %v4538 = vadd.f32 %v4345, %v4537
        %v4539 = vpop.f32.mrf.mxu0
        %v4540 = vadd.f32 %v4347, %v4539
        %v4541 = vpop.f32.mrf.mxu0
        %v4542 = vadd.f32 %v4349, %v4541
        %v4543 = vpop.f32.mrf.mxu0
        %v4544 = vadd.f32 %v4351, %v4543
        %4545 = vmatprep.mubr.bf16.mxu0 0
        %4546 = vmatmul.mubr.bf16.gmra.mxu0 %v3397
        %v4547 = vpop.f32.mrf.mxu0
        %v4548 = vadd.f32 %v4355, %v4547
        %v4549 = vpop.f32.mrf.mxu0
        %v4550 = vadd.f32 %v4357, %v4549
        %v4551 = vpop.f32.mrf.mxu0
        %v4552 = vadd.f32 %v4359, %v4551
        %v4553 = vpop.f32.mrf.mxu0
        %v4554 = vadd.f32 %v4361, %v4553
        %4555 = vmatprep.mubr.bf16.mxu0 0
        %4556 = vmatmul.mubr.bf16.gmra.mxu0 %v3398
        %v4557 = vpop.f32.mrf.mxu0
        %v4558 = vadd.f32 %v4365, %v4557
        %v4559 = vpop.f32.mrf.mxu0
        %v4560 = vadd.f32 %v4367, %v4559
        %v4561 = vpop.f32.mrf.mxu0
        %v4562 = vadd.f32 %v4369, %v4561
        %v4563 = vpop.f32.mrf.mxu0
        %v4564 = vadd.f32 %v4371, %v4563
        %4565 = vmatprep.mubr.bf16.mxu0 0
        %4566 = vmatmul.mubr.bf16.gmra.mxu0 %v3399
        %v4567 = vpop.f32.mrf.mxu0
        %v4568 = vadd.f32 %v4375, %v4567
        %v4569 = vpop.f32.mrf.mxu0
        %v4570 = vadd.f32 %v4377, %v4569
        %v4571 = vpop.f32.mrf.mxu0
        %v4572 = vadd.f32 %v4379, %v4571
        %v4573 = vpop.f32.mrf.mxu0
        %v4574 = vadd.f32 %v4381, %v4573
        %4575 = vmatprep.mubr.bf16.mxu0 0
        %4576 = vmatmul.mubr.bf16.gmra.mxu0 %v3400
        %v4577 = vpop.f32.mrf.mxu0
        %v4578 = vadd.f32 %v4385, %v4577
        %v4579 = vpop.f32.mrf.mxu0
        %v4580 = vadd.f32 %v4387, %v4579
        %v4581 = vpop.f32.mrf.mxu0
        %v4582 = vadd.f32 %v4389, %v4581
        %v4583 = vpop.f32.mrf.mxu0
        %v4584 = vadd.f32 %v4391, %v4583
        %4585 = vmatprep.mubr.bf16.mxu0 0
        %4586 = vmatmul.mubr.bf16.gmra.mxu0 %v3401
        %v4587 = vpop.f32.mrf.mxu0
        %v4588 = vadd.f32 %v4395, %v4587
        %v4589 = vpop.f32.mrf.mxu0
        %v4590 = vadd.f32 %v4397, %v4589
        %v4591 = vpop.f32.mrf.mxu0
        %v4592 = vadd.f32 %v4399, %v4591
        %v4593 = vpop.f32.mrf.mxu0
        %v4594 = vadd.f32 %v4401, %v4593
        %4595 = vmatprep.mubr.bf16.mxu0 0
        %4596 = vmatmul.mubr.bf16.gmra.mxu0 %v3402
        %v4597 = vpop.f32.mrf.mxu0
        %v4598 = vadd.f32 %v4405, %v4597
        %v4599 = vpop.f32.mrf.mxu0
        %v4600 = vadd.f32 %v4407, %v4599
        %v4601 = vpop.f32.mrf.mxu0
        %v4602 = vadd.f32 %v4409, %v4601
        %v4603 = vpop.f32.mrf.mxu0
        %v4604 = vadd.f32 %v4411, %v4603
        %4605 = vmatprep.mubr.bf16.mxu0 0
        %4606 = vmatmul.mubr.bf16.gmra.mxu0 %v3403
        %v4607 = vpop.f32.mrf.mxu0
        %v4608 = vadd.f32 %v4415, %v4607
        %v4609 = vpop.f32.mrf.mxu0
        %v4610 = vadd.f32 %v4417, %v4609
        %v4611 = vpop.f32.mrf.mxu0
        %v4612 = vadd.f32 %v4419, %v4611
        %v4613 = vpop.f32.mrf.mxu0
        %v4614 = vadd.f32 %v4421, %v4613
        %4615 = vdwg.mxu0
        %s4616 = smul.u32 %s2605, 2
        %s4617 = smul.addr %s4616, 8
        %s4618 = scalar_lea.vmem %s481, %s4617 [#allocation3]
        %v4619 = vld [vmem:[%s4618] sm:$0xff]
        %v4620 = vld [vmem:[%s4618 + $0x8] sm:$0xff]
        %v4621 = vld [vmem:[%s4618 + $0x10] sm:$0xff]
        %v4622 = vld [vmem:[%s4618 + $0x18] sm:$0xff]
        %v4623 = vld [vmem:[%s4618 + $0x20] sm:$0xff]
        %v4624 = vld [vmem:[%s4618 + $0x28] sm:$0xff]
        %v4625 = vld [vmem:[%s4618 + $0x30] sm:$0xff]
        %v4626 = vld [vmem:[%s4618 + $0x38] sm:$0xff]
        %v4627 = vld [vmem:[%s4618 + $0x40] sm:$0xff]
        %v4628 = vld [vmem:[%s4618 + $0x48] sm:$0xff]
        %v4629 = vld [vmem:[%s4618 + $0x50] sm:$0xff]
        %v4630 = vld [vmem:[%s4618 + $0x58] sm:$0xff]
        %v4631 = vld [vmem:[%s4618 + $0x60] sm:$0xff]
        %v4632 = vld [vmem:[%s4618 + $0x68] sm:$0xff]
        %v4633 = vld [vmem:[%s4618 + $0x70] sm:$0xff]
        %v4634 = vld [vmem:[%s4618 + $0x78] sm:$0xff]
        %v4635 = vld [vmem:[%s4618 + $0x80] sm:$0xff]
        %v4636 = vld [vmem:[%s4618 + $0x88] sm:$0xff]
        %v4637 = vld [vmem:[%s4618 + $0x90] sm:$0xff]
        %v4638 = vld [vmem:[%s4618 + $0x98] sm:$0xff]
        %v4639 = vld [vmem:[%s4618 + $0xa0] sm:$0xff]
        %v4640 = vld [vmem:[%s4618 + $0xa8] sm:$0xff]
        %v4641 = vld [vmem:[%s4618 + $0xb0] sm:$0xff]
        %v4642 = vld [vmem:[%s4618 + $0xb8] sm:$0xff]
        %v4643 = vld [vmem:[%s4618 + $0xc0] sm:$0xff]
        %v4644 = vld [vmem:[%s4618 + $0xc8] sm:$0xff]
        %v4645 = vld [vmem:[%s4618 + $0xd0] sm:$0xff]
        %v4646 = vld [vmem:[%s4618 + $0xd8] sm:$0xff]
        %v4647 = vld [vmem:[%s4618 + $0xe0] sm:$0xff]
        %v4648 = vld [vmem:[%s4618 + $0xe8] sm:$0xff]
        %v4649 = vld [vmem:[%s4618 + $0xf0] sm:$0xff]
        %v4650 = vld [vmem:[%s4618 + $0xf8] sm:$0xff]
        %v4651 = vld [vmem:[%s4] sm:$0x3]
        %v4653 = vlaneseq
        %v4654 = vshrl.u32 %v4653, 7
        %v4655 = vsub.s32 0, %v4654
        %v4656 = vrot.slane %v4651, %v4655
        %v4657 = vlaneseq
        %v4658 = vshrl.u32 %v4657, 7
        %v4659 = vsub.s32 1, %v4658
        %v4660 = vrot.slane %v4651, %v4659
        %v4663 = vadd.f32 %v4538, %v4656
        %v4664 = vadd.f32 %v4540, %v4660
        %v4665 = vadd.f32 %v4542, %v4656
        %v4666 = vadd.f32 %v4544, %v4660
        %v4667 = vadd.f32 %v4548, %v4656
        %v4668 = vadd.f32 %v4550, %v4660
        %v4669 = vadd.f32 %v4552, %v4656
        %v4670 = vadd.f32 %v4554, %v4660
        %v4671 = vadd.f32 %v4558, %v4656
        %v4672 = vadd.f32 %v4560, %v4660
        %v4673 = vadd.f32 %v4562, %v4656
        %v4674 = vadd.f32 %v4564, %v4660
        %v4675 = vadd.f32 %v4568, %v4656
        %v4676 = vadd.f32 %v4570, %v4660
        %v4677 = vadd.f32 %v4572, %v4656
        %v4678 = vadd.f32 %v4574, %v4660
        %v4679 = vadd.f32 %v4578, %v4656
        %v4680 = vadd.f32 %v4580, %v4660
        %v4681 = vadd.f32 %v4582, %v4656
        %v4682 = vadd.f32 %v4584, %v4660
        %v4683 = vadd.f32 %v4588, %v4656
        %v4684 = vadd.f32 %v4590, %v4660
        %v4685 = vadd.f32 %v4592, %v4656
        %v4686 = vadd.f32 %v4594, %v4660
        %v4687 = vadd.f32 %v4598, %v4656
        %v4688 = vadd.f32 %v4600, %v4660
        %v4689 = vadd.f32 %v4602, %v4656
        %v4690 = vadd.f32 %v4604, %v4660
        %v4691 = vadd.f32 %v4608, %v4656
        %v4692 = vadd.f32 %v4610, %v4660
        %v4693 = vadd.f32 %v4612, %v4656
        %v4694 = vadd.f32 %v4614, %v4660
        %v4695 = vadd.f32 %v4663, %v4619
        %v4696 = vadd.f32 %v4664, %v4620
        %v4697 = vadd.f32 %v4665, %v4621
        %v4698 = vadd.f32 %v4666, %v4622
        %v4699 = vadd.f32 %v4667, %v4623
        %v4700 = vadd.f32 %v4668, %v4624
        %v4701 = vadd.f32 %v4669, %v4625
        %v4702 = vadd.f32 %v4670, %v4626
        %v4703 = vadd.f32 %v4671, %v4627
        %v4704 = vadd.f32 %v4672, %v4628
        %v4705 = vadd.f32 %v4673, %v4629
        %v4706 = vadd.f32 %v4674, %v4630
        %v4707 = vadd.f32 %v4675, %v4631
        %v4708 = vadd.f32 %v4676, %v4632
        %v4709 = vadd.f32 %v4677, %v4633
        %v4710 = vadd.f32 %v4678, %v4634
        %v4711 = vadd.f32 %v4679, %v4635
        %v4712 = vadd.f32 %v4680, %v4636
        %v4713 = vadd.f32 %v4681, %v4637
        %v4714 = vadd.f32 %v4682, %v4638
        %v4715 = vadd.f32 %v4683, %v4639
        %v4716 = vadd.f32 %v4684, %v4640
        %v4717 = vadd.f32 %v4685, %v4641
        %v4718 = vadd.f32 %v4686, %v4642
        %v4719 = vadd.f32 %v4687, %v4643
        %v4720 = vadd.f32 %v4688, %v4644
        %v4721 = vadd.f32 %v4689, %v4645
        %v4722 = vadd.f32 %v4690, %v4646
        %v4723 = vadd.f32 %v4691, %v4647
        %v4724 = vadd.f32 %v4692, %v4648
        %v4725 = vadd.f32 %v4693, %v4649
        %v4726 = vadd.f32 %v4694, %v4650
        %v4727 = vld [vmem:[%s5] sm:$0x3]
        %v4728 = vld [vmem:[%s6] sm:$0x3]
        %v4729 = vadd.f32 %v4695, %v4696
        %4730 = vadd.xlane.f32.xlu0 %v4729
        %v4731 = vpop.xlane.xlu0 %4730
        %v4732 = vadd.f32 %v4697, %v4698
        %4733 = vadd.xlane.f32.xlu0 %v4732
        %v4734 = vpop.xlane.xlu0 %4733
        %v4735 = vadd.f32 %v4699, %v4700
        %4736 = vadd.xlane.f32.xlu0 %v4735
        %v4737 = vpop.xlane.xlu0 %4736
        %v4738 = vadd.f32 %v4701, %v4702
        %4739 = vadd.xlane.f32.xlu0 %v4738
        %v4740 = vpop.xlane.xlu0 %4739
        %v4741 = vadd.f32 %v4703, %v4704
        %4742 = vadd.xlane.f32.xlu0 %v4741
        %v4743 = vpop.xlane.xlu0 %4742
        %v4744 = vadd.f32 %v4705, %v4706
        %4745 = vadd.xlane.f32.xlu0 %v4744
        %v4746 = vpop.xlane.xlu0 %4745
        %v4747 = vadd.f32 %v4707, %v4708
        %4748 = vadd.xlane.f32.xlu0 %v4747
        %v4749 = vpop.xlane.xlu0 %4748
        %v4750 = vadd.f32 %v4709, %v4710
        %4751 = vadd.xlane.f32.xlu0 %v4750
        %v4752 = vpop.xlane.xlu0 %4751
        %v4753 = vadd.f32 %v4711, %v4712
        %4754 = vadd.xlane.f32.xlu0 %v4753
        %v4755 = vpop.xlane.xlu0 %4754
        %v4756 = vadd.f32 %v4713, %v4714
        %4757 = vadd.xlane.f32.xlu0 %v4756
        %v4758 = vpop.xlane.xlu0 %4757
        %v4759 = vadd.f32 %v4715, %v4716
        %4760 = vadd.xlane.f32.xlu0 %v4759
        %v4761 = vpop.xlane.xlu0 %4760
        %v4762 = vadd.f32 %v4717, %v4718
        %4763 = vadd.xlane.f32.xlu0 %v4762
        %v4764 = vpop.xlane.xlu0 %4763
        %v4765 = vadd.f32 %v4719, %v4720
        %4766 = vadd.xlane.f32.xlu0 %v4765
        %v4767 = vpop.xlane.xlu0 %4766
        %v4768 = vadd.f32 %v4721, %v4722
        %4769 = vadd.xlane.f32.xlu0 %v4768
        %v4770 = vpop.xlane.xlu0 %4769
        %v4771 = vadd.f32 %v4723, %v4724
        %4772 = vadd.xlane.f32.xlu0 %v4771
        %v4773 = vpop.xlane.xlu0 %4772
        %v4774 = vadd.f32 %v4725, %v4726
        %4775 = vadd.xlane.f32.xlu0 %v4774
        %v4776 = vpop.xlane.xlu0 %4775
        %v4777 = vrcp.pop 256.0
        %v4778 = vmul.f32 %v4731, %v4777
        %v4779 = vmul.f32 %v4734, %v4777
        %v4780 = vmul.f32 %v4737, %v4777
        %v4781 = vmul.f32 %v4740, %v4777
        %v4782 = vmul.f32 %v4743, %v4777
        %v4783 = vmul.f32 %v4746, %v4777
        %v4784 = vmul.f32 %v4749, %v4777
        %v4785 = vmul.f32 %v4752, %v4777
        %v4786 = vmul.f32 %v4755, %v4777
        %v4787 = vmul.f32 %v4758, %v4777
        %v4788 = vmul.f32 %v4761, %v4777
        %v4789 = vmul.f32 %v4764, %v4777
        %v4790 = vmul.f32 %v4767, %v4777
        %v4791 = vmul.f32 %v4770, %v4777
        %v4792 = vmul.f32 %v4773, %v4777
        %v4793 = vmul.f32 %v4776, %v4777
        %v4794 = vsub.f32 %v4695, %v4778
        %v4795 = vsub.f32 %v4696, %v4778
        %v4796 = vsub.f32 %v4697, %v4779
        %v4797 = vsub.f32 %v4698, %v4779
        %v4798 = vsub.f32 %v4699, %v4780
        %v4799 = vsub.f32 %v4700, %v4780
        %v4800 = vsub.f32 %v4701, %v4781
        %v4801 = vsub.f32 %v4702, %v4781
        %v4802 = vsub.f32 %v4703, %v4782
        %v4803 = vsub.f32 %v4704, %v4782
        %v4804 = vsub.f32 %v4705, %v4783
        %v4805 = vsub.f32 %v4706, %v4783
        %v4806 = vsub.f32 %v4707, %v4784
        %v4807 = vsub.f32 %v4708, %v4784
        %v4808 = vsub.f32 %v4709, %v4785
        %v4809 = vsub.f32 %v4710, %v4785
        %v4810 = vsub.f32 %v4711, %v4786
        %v4811 = vsub.f32 %v4712, %v4786
        %v4812 = vsub.f32 %v4713, %v4787
        %v4813 = vsub.f32 %v4714, %v4787
        %v4814 = vsub.f32 %v4715, %v4788
        %v4815 = vsub.f32 %v4716, %v4788
        %v4816 = vsub.f32 %v4717, %v4789
        %v4817 = vsub.f32 %v4718, %v4789
        %v4818 = vsub.f32 %v4719, %v4790
        %v4819 = vsub.f32 %v4720, %v4790
        %v4820 = vsub.f32 %v4721, %v4791
        %v4821 = vsub.f32 %v4722, %v4791
        %v4822 = vsub.f32 %v4723, %v4792
        %v4823 = vsub.f32 %v4724, %v4792
        %v4824 = vsub.f32 %v4725, %v4793
        %v4825 = vsub.f32 %v4726, %v4793
        %v4826 = vmul.f32 %v4794, %v4794
        %v4827 = vmul.f32 %v4795, %v4795
        %v4828 = vmul.f32 %v4796, %v4796
        %v4829 = vmul.f32 %v4797, %v4797
        %v4830 = vmul.f32 %v4798, %v4798
        %v4831 = vmul.f32 %v4799, %v4799
        %v4832 = vmul.f32 %v4800, %v4800
        %v4833 = vmul.f32 %v4801, %v4801
        %v4834 = vmul.f32 %v4802, %v4802
        %v4835 = vmul.f32 %v4803, %v4803
        %v4836 = vmul.f32 %v4804, %v4804
        %v4837 = vmul.f32 %v4805, %v4805
        %v4838 = vmul.f32 %v4806, %v4806
        %v4839 = vmul.f32 %v4807, %v4807
        %v4840 = vmul.f32 %v4808, %v4808
        %v4841 = vmul.f32 %v4809, %v4809
        %v4842 = vmul.f32 %v4810, %v4810
        %v4843 = vmul.f32 %v4811, %v4811
        %v4844 = vmul.f32 %v4812, %v4812
        %v4845 = vmul.f32 %v4813, %v4813
        %v4846 = vmul.f32 %v4814, %v4814
        %v4847 = vmul.f32 %v4815, %v4815
        %v4848 = vmul.f32 %v4816, %v4816
        %v4849 = vmul.f32 %v4817, %v4817
        %v4850 = vmul.f32 %v4818, %v4818
        %v4851 = vmul.f32 %v4819, %v4819
        %v4852 = vmul.f32 %v4820, %v4820
        %v4853 = vmul.f32 %v4821, %v4821
        %v4854 = vmul.f32 %v4822, %v4822
        %v4855 = vmul.f32 %v4823, %v4823
        %v4856 = vmul.f32 %v4824, %v4824
        %v4857 = vmul.f32 %v4825, %v4825
        %v4858 = vadd.f32 %v4826, %v4827
        %4859 = vadd.xlane.f32.xlu0 %v4858
        %v4860 = vpop.xlane.xlu0 %4859
        %v4861 = vadd.f32 %v4828, %v4829
        %4862 = vadd.xlane.f32.xlu0 %v4861
        %v4863 = vpop.xlane.xlu0 %4862
        %v4864 = vadd.f32 %v4830, %v4831
        %4865 = vadd.xlane.f32.xlu0 %v4864
        %v4866 = vpop.xlane.xlu0 %4865
        %v4867 = vadd.f32 %v4832, %v4833
        %4868 = vadd.xlane.f32.xlu0 %v4867
        %v4869 = vpop.xlane.xlu0 %4868
        %v4870 = vadd.f32 %v4834, %v4835
        %4871 = vadd.xlane.f32.xlu0 %v4870
        %v4872 = vpop.xlane.xlu0 %4871
        %v4873 = vadd.f32 %v4836, %v4837
        %4874 = vadd.xlane.f32.xlu0 %v4873
        %v4875 = vpop.xlane.xlu0 %4874
        %v4876 = vadd.f32 %v4838, %v4839
        %4877 = vadd.xlane.f32.xlu0 %v4876
        %v4878 = vpop.xlane.xlu0 %4877
        %v4879 = vadd.f32 %v4840, %v4841
        %4880 = vadd.xlane.f32.xlu0 %v4879
        %v4881 = vpop.xlane.xlu0 %4880
        %v4882 = vadd.f32 %v4842, %v4843
        %4883 = vadd.xlane.f32.xlu0 %v4882
        %v4884 = vpop.xlane.xlu0 %4883
        %v4885 = vadd.f32 %v4844, %v4845
        %4886 = vadd.xlane.f32.xlu0 %v4885
        %v4887 = vpop.xlane.xlu0 %4886
        %v4888 = vadd.f32 %v4846, %v4847
        %4889 = vadd.xlane.f32.xlu0 %v4888
        %v4890 = vpop.xlane.xlu0 %4889
        %v4891 = vadd.f32 %v4848, %v4849
        %4892 = vadd.xlane.f32.xlu0 %v4891
        %v4893 = vpop.xlane.xlu0 %4892
        %v4894 = vadd.f32 %v4850, %v4851
        %4895 = vadd.xlane.f32.xlu0 %v4894
        %v4896 = vpop.xlane.xlu0 %4895
        %v4897 = vadd.f32 %v4852, %v4853
        %4898 = vadd.xlane.f32.xlu0 %v4897
        %v4899 = vpop.xlane.xlu0 %4898
        %v4900 = vadd.f32 %v4854, %v4855
        %4901 = vadd.xlane.f32.xlu0 %v4900
        %v4902 = vpop.xlane.xlu0 %4901
        %v4903 = vadd.f32 %v4856, %v4857
        %4904 = vadd.xlane.f32.xlu0 %v4903
        %v4905 = vpop.xlane.xlu0 %4904
        %v4906 = vmul.f32 %v4860, %v4777
        %v4907 = vmul.f32 %v4863, %v4777
        %v4908 = vmul.f32 %v4866, %v4777
        %v4909 = vmul.f32 %v4869, %v4777
        %v4910 = vmul.f32 %v4872, %v4777
        %v4911 = vmul.f32 %v4875, %v4777
        %v4912 = vmul.f32 %v4878, %v4777
        %v4913 = vmul.f32 %v4881, %v4777
        %v4914 = vmul.f32 %v4884, %v4777
        %v4915 = vmul.f32 %v4887, %v4777
        %v4916 = vmul.f32 %v4890, %v4777
        %v4917 = vmul.f32 %v4893, %v4777
        %v4918 = vmul.f32 %v4896, %v4777
        %v4919 = vmul.f32 %v4899, %v4777
        %v4920 = vmul.f32 %v4902, %v4777
        %v4921 = vmul.f32 %v4905, %v4777
        %v4922 = vadd.f32 %v4906, 1e-05
        %v4923 = vadd.f32 %v4907, 1e-05
        %v4924 = vadd.f32 %v4908, 1e-05
        %v4925 = vadd.f32 %v4909, 1e-05
        %v4926 = vadd.f32 %v4910, 1e-05
        %v4927 = vadd.f32 %v4911, 1e-05
        %v4928 = vadd.f32 %v4912, 1e-05
        %v4929 = vadd.f32 %v4913, 1e-05
        %v4930 = vadd.f32 %v4914, 1e-05
        %v4931 = vadd.f32 %v4915, 1e-05
        %v4932 = vadd.f32 %v4916, 1e-05
        %v4933 = vadd.f32 %v4917, 1e-05
        %v4934 = vadd.f32 %v4918, 1e-05
        %v4935 = vadd.f32 %v4919, 1e-05
        %v4936 = vadd.f32 %v4920, 1e-05
        %v4937 = vadd.f32 %v4921, 1e-05
        %v4938 = vrsqrt.pop %v4922
        %v4939 = vrsqrt.pop %v4923
        %v4940 = vrsqrt.pop %v4924
        %v4941 = vrsqrt.pop %v4925
        %v4942 = vrsqrt.pop %v4926
        %v4943 = vrsqrt.pop %v4927
        %v4944 = vrsqrt.pop %v4928
        %v4945 = vrsqrt.pop %v4929
        %v4946 = vrsqrt.pop %v4930
        %v4947 = vrsqrt.pop %v4931
        %v4948 = vrsqrt.pop %v4932
        %v4949 = vrsqrt.pop %v4933
        %v4950 = vrsqrt.pop %v4934
        %v4951 = vrsqrt.pop %v4935
        %v4952 = vrsqrt.pop %v4936
        %v4953 = vrsqrt.pop %v4937
        %v4954 = vmul.f32 %v4794, %v4938
        %v4955 = vmul.f32 %v4795, %v4938
        %v4956 = vmul.f32 %v4796, %v4939
        %v4957 = vmul.f32 %v4797, %v4939
        %v4958 = vmul.f32 %v4798, %v4940
        %v4959 = vmul.f32 %v4799, %v4940
        %v4960 = vmul.f32 %v4800, %v4941
        %v4961 = vmul.f32 %v4801, %v4941
        %v4962 = vmul.f32 %v4802, %v4942
        %v4963 = vmul.f32 %v4803, %v4942
        %v4964 = vmul.f32 %v4804, %v4943
        %v4965 = vmul.f32 %v4805, %v4943
        %v4966 = vmul.f32 %v4806, %v4944
        %v4967 = vmul.f32 %v4807, %v4944
        %v4968 = vmul.f32 %v4808, %v4945
        %v4969 = vmul.f32 %v4809, %v4945
        %v4970 = vmul.f32 %v4810, %v4946
        %v4971 = vmul.f32 %v4811, %v4946
        %v4972 = vmul.f32 %v4812, %v4947
        %v4973 = vmul.f32 %v4813, %v4947
        %v4974 = vmul.f32 %v4814, %v4948
        %v4975 = vmul.f32 %v4815, %v4948
        %v4976 = vmul.f32 %v4816, %v4949
        %v4977 = vmul.f32 %v4817, %v4949
        %v4978 = vmul.f32 %v4818, %v4950
        %v4979 = vmul.f32 %v4819, %v4950
        %v4980 = vmul.f32 %v4820, %v4951
        %v4981 = vmul.f32 %v4821, %v4951
        %v4982 = vmul.f32 %v4822, %v4952
        %v4983 = vmul.f32 %v4823, %v4952
        %v4984 = vmul.f32 %v4824, %v4953
        %v4985 = vmul.f32 %v4825, %v4953
        %v4987 = vlaneseq
        %v4988 = vshrl.u32 %v4987, 7
        %v4989 = vsub.s32 0, %v4988
        %v4990 = vrot.slane %v4727, %v4989
        %v4991 = vlaneseq
        %v4992 = vshrl.u32 %v4991, 7
        %v4993 = vsub.s32 1, %v4992
        %v4994 = vrot.slane %v4727, %v4993
        %v4997 = vmul.f32 %v4954, %v4990
        %v4998 = vmul.f32 %v4955, %v4994
        %v4999 = vmul.f32 %v4956, %v4990
        %v5000 = vmul.f32 %v4957, %v4994
        %v5001 = vmul.f32 %v4958, %v4990
        %v5002 = vmul.f32 %v4959, %v4994
        %v5003 = vmul.f32 %v4960, %v4990
        %v5004 = vmul.f32 %v4961, %v4994
        %v5005 = vmul.f32 %v4962, %v4990
        %v5006 = vmul.f32 %v4963, %v4994
        %v5007 = vmul.f32 %v4964, %v4990
        %v5008 = vmul.f32 %v4965, %v4994
        %v5009 = vmul.f32 %v4966, %v4990
        %v5010 = vmul.f32 %v4967, %v4994
        %v5011 = vmul.f32 %v4968, %v4990
        %v5012 = vmul.f32 %v4969, %v4994
        %v5013 = vmul.f32 %v4970, %v4990
        %v5014 = vmul.f32 %v4971, %v4994
        %v5015 = vmul.f32 %v4972, %v4990
        %v5016 = vmul.f32 %v4973, %v4994
        %v5017 = vmul.f32 %v4974, %v4990
        %v5018 = vmul.f32 %v4975, %v4994
        %v5019 = vmul.f32 %v4976, %v4990
        %v5020 = vmul.f32 %v4977, %v4994
        %v5021 = vmul.f32 %v4978, %v4990
        %v5022 = vmul.f32 %v4979, %v4994
        %v5023 = vmul.f32 %v4980, %v4990
        %v5024 = vmul.f32 %v4981, %v4994
        %v5025 = vmul.f32 %v4982, %v4990
        %v5026 = vmul.f32 %v4983, %v4994
        %v5027 = vmul.f32 %v4984, %v4990
        %v5028 = vmul.f32 %v4985, %v4994
        %v5030 = vlaneseq
        %v5031 = vshrl.u32 %v5030, 7
        %v5032 = vsub.s32 0, %v5031
        %v5033 = vrot.slane %v4728, %v5032
        %v5034 = vlaneseq
        %v5035 = vshrl.u32 %v5034, 7
        %v5036 = vsub.s32 1, %v5035
        %v5037 = vrot.slane %v4728, %v5036
        %v5040 = vadd.f32 %v4997, %v5033
        %v5041 = vadd.f32 %v4998, %v5037
        %v5042 = vadd.f32 %v4999, %v5033
        %v5043 = vadd.f32 %v5000, %v5037
        %v5044 = vadd.f32 %v5001, %v5033
        %v5045 = vadd.f32 %v5002, %v5037
        %v5046 = vadd.f32 %v5003, %v5033
        %v5047 = vadd.f32 %v5004, %v5037
        %v5048 = vadd.f32 %v5005, %v5033
        %v5049 = vadd.f32 %v5006, %v5037
        %v5050 = vadd.f32 %v5007, %v5033
        %v5051 = vadd.f32 %v5008, %v5037
        %v5052 = vadd.f32 %v5009, %v5033
        %v5053 = vadd.f32 %v5010, %v5037
        %v5054 = vadd.f32 %v5011, %v5033
        %v5055 = vadd.f32 %v5012, %v5037
        %v5056 = vadd.f32 %v5013, %v5033
        %v5057 = vadd.f32 %v5014, %v5037
        %v5058 = vadd.f32 %v5015, %v5033
        %v5059 = vadd.f32 %v5016, %v5037
        %v5060 = vadd.f32 %v5017, %v5033
        %v5061 = vadd.f32 %v5018, %v5037
        %v5062 = vadd.f32 %v5019, %v5033
        %v5063 = vadd.f32 %v5020, %v5037
        %v5064 = vadd.f32 %v5021, %v5033
        %v5065 = vadd.f32 %v5022, %v5037
        %v5066 = vadd.f32 %v5023, %v5033
        %v5067 = vadd.f32 %v5024, %v5037
        %v5068 = vadd.f32 %v5025, %v5033
        %v5069 = vadd.f32 %v5026, %v5037
        %v5070 = vadd.f32 %v5027, %v5033
        %v5071 = vadd.f32 %v5028, %v5037
        %v5072 = vpack.c.bf16 %v5042, %v5040
        %v5073 = vpack.c.bf16 %v5043, %v5041
        %v5074 = vpack.c.bf16 %v5046, %v5044
        %v5075 = vpack.c.bf16 %v5047, %v5045
        %v5076 = vpack.c.bf16 %v5050, %v5048
        %v5077 = vpack.c.bf16 %v5051, %v5049
        %v5078 = vpack.c.bf16 %v5054, %v5052
        %v5079 = vpack.c.bf16 %v5055, %v5053
        %v5080 = vpack.c.bf16 %v5058, %v5056
        %v5081 = vpack.c.bf16 %v5059, %v5057
        %v5082 = vpack.c.bf16 %v5062, %v5060
        %v5083 = vpack.c.bf16 %v5063, %v5061
        %v5084 = vpack.c.bf16 %v5066, %v5064
        %v5085 = vpack.c.bf16 %v5067, %v5065
        %v5086 = vpack.c.bf16 %v5070, %v5068
        %v5087 = vpack.c.bf16 %v5071, %v5069
        %v5088 = vld [vmem:[#allocation11] sm:$0xff]
        %v5089 = vld [vmem:[#allocation11 + $0x8] sm:$0xff]
        %v5090 = vld [vmem:[#allocation11 + $0x10] sm:$0xff]
        %v5091 = vld [vmem:[#allocation11 + $0x18] sm:$0xff]
        %v5092 = vld [vmem:[#allocation11 + $0x20] sm:$0xff]
        %v5093 = vld [vmem:[#allocation11 + $0x28] sm:$0xff]
        %v5094 = vld [vmem:[#allocation11 + $0x30] sm:$0xff]
        %v5095 = vld [vmem:[#allocation11 + $0x38] sm:$0xff]
        %v5096 = vld [vmem:[#allocation11 + $0x40] sm:$0xff]
        %v5097 = vld [vmem:[#allocation11 + $0x48] sm:$0xff]
        %v5098 = vld [vmem:[#allocation11 + $0x50] sm:$0xff]
        %v5099 = vld [vmem:[#allocation11 + $0x58] sm:$0xff]
        %v5100 = vld [vmem:[#allocation11 + $0x60] sm:$0xff]
        %v5101 = vld [vmem:[#allocation11 + $0x68] sm:$0xff]
        %v5102 = vld [vmem:[#allocation11 + $0x70] sm:$0xff]
        %v5103 = vld [vmem:[#allocation11 + $0x78] sm:$0xff]
        %v5104 = vld [vmem:[#allocation11 + $0x80] sm:$0xff]
        %v5105 = vld [vmem:[#allocation11 + $0x88] sm:$0xff]
        %v5106 = vld [vmem:[#allocation11 + $0x90] sm:$0xff]
        %v5107 = vld [vmem:[#allocation11 + $0x98] sm:$0xff]
        %v5108 = vld [vmem:[#allocation11 + $0xa0] sm:$0xff]
        %v5109 = vld [vmem:[#allocation11 + $0xa8] sm:$0xff]
        %v5110 = vld [vmem:[#allocation11 + $0xb0] sm:$0xff]
        %v5111 = vld [vmem:[#allocation11 + $0xb8] sm:$0xff]
        %v5112 = vld [vmem:[#allocation11 + $0xc0] sm:$0xff]
        %v5113 = vld [vmem:[#allocation11 + $0xc8] sm:$0xff]
        %v5114 = vld [vmem:[#allocation11 + $0xd0] sm:$0xff]
        %v5115 = vld [vmem:[#allocation11 + $0xd8] sm:$0xff]
        %v5116 = vld [vmem:[#allocation11 + $0xe0] sm:$0xff]
        %v5117 = vld [vmem:[#allocation11 + $0xe8] sm:$0xff]
        %v5118 = vld [vmem:[#allocation11 + $0xf0] sm:$0xff]
        %v5119 = vld [vmem:[#allocation11 + $0xf8] sm:$0xff]
        %v5120 = vld [vmem:[#allocation11 + $0x100] sm:$0xff]
        %v5121 = vld [vmem:[#allocation11 + $0x108] sm:$0xff]
        %v5122 = vld [vmem:[#allocation11 + $0x110] sm:$0xff]
        %v5123 = vld [vmem:[#allocation11 + $0x118] sm:$0xff]
        %v5124 = vld [vmem:[#allocation11 + $0x120] sm:$0xff]
        %v5125 = vld [vmem:[#allocation11 + $0x128] sm:$0xff]
        %v5126 = vld [vmem:[#allocation11 + $0x130] sm:$0xff]
        %v5127 = vld [vmem:[#allocation11 + $0x138] sm:$0xff]
        %v5128 = vld [vmem:[#allocation11 + $0x140] sm:$0xff]
        %v5129 = vld [vmem:[#allocation11 + $0x148] sm:$0xff]
        %v5130 = vld [vmem:[#allocation11 + $0x150] sm:$0xff]
        %v5131 = vld [vmem:[#allocation11 + $0x158] sm:$0xff]
        %v5132 = vld [vmem:[#allocation11 + $0x160] sm:$0xff]
        %v5133 = vld [vmem:[#allocation11 + $0x168] sm:$0xff]
        %v5134 = vld [vmem:[#allocation11 + $0x170] sm:$0xff]
        %v5135 = vld [vmem:[#allocation11 + $0x178] sm:$0xff]
        %v5136 = vld [vmem:[#allocation11 + $0x180] sm:$0xff]
        %v5137 = vld [vmem:[#allocation11 + $0x188] sm:$0xff]
        %v5138 = vld [vmem:[#allocation11 + $0x190] sm:$0xff]
        %v5139 = vld [vmem:[#allocation11 + $0x198] sm:$0xff]
        %v5140 = vld [vmem:[#allocation11 + $0x1a0] sm:$0xff]
        %v5141 = vld [vmem:[#allocation11 + $0x1a8] sm:$0xff]
        %v5142 = vld [vmem:[#allocation11 + $0x1b0] sm:$0xff]
        %v5143 = vld [vmem:[#allocation11 + $0x1b8] sm:$0xff]
        %v5144 = vld [vmem:[#allocation11 + $0x1c0] sm:$0xff]
        %v5145 = vld [vmem:[#allocation11 + $0x1c8] sm:$0xff]
        %v5146 = vld [vmem:[#allocation11 + $0x1d0] sm:$0xff]
        %v5147 = vld [vmem:[#allocation11 + $0x1d8] sm:$0xff]
        %v5148 = vld [vmem:[#allocation11 + $0x1e0] sm:$0xff]
        %v5149 = vld [vmem:[#allocation11 + $0x1e8] sm:$0xff]
        %v5150 = vld [vmem:[#allocation11 + $0x1f0] sm:$0xff]
        %v5151 = vld [vmem:[#allocation11 + $0x1f8] sm:$0xff]
        %v5152 = vld [vmem:[%s8] sm:$0xf]
        %v5154 = vlaneseq
        %v5155 = vshrl.u32 %v5154, 7
        %v5156 = vsub.s32 0, %v5155
        %v5157 = vrot.slane %v5152, %v5156
        %v5158 = vlaneseq
        %v5159 = vshrl.u32 %v5158, 7
        %v5160 = vsub.s32 1, %v5159
        %v5161 = vrot.slane %v5152, %v5160
        %v5162 = vlaneseq
        %v5163 = vshrl.u32 %v5162, 7
        %v5164 = vsub.s32 2, %v5163
        %v5165 = vrot.slane %v5152, %v5164
        %v5166 = vlaneseq
        %v5167 = vshrl.u32 %v5166, 7
        %v5168 = vsub.s32 3, %v5167
        %v5169 = vrot.slane %v5152, %v5168
        %v5238 = vunpack.c.l.b16 %v5088
        %v5239 = vunpack.c.h.b16 %v5088
        %v5240 = vunpack.c.l.b16 %v5089
        %v5241 = vunpack.c.h.b16 %v5089
        %v5242 = vunpack.c.l.b16 %v5090
        %v5243 = vunpack.c.h.b16 %v5090
        %v5244 = vunpack.c.l.b16 %v5091
        %v5245 = vunpack.c.h.b16 %v5091
        %v5246 = vunpack.c.l.b16 %v5092
        %v5247 = vunpack.c.h.b16 %v5092
        %v5248 = vunpack.c.l.b16 %v5093
        %v5249 = vunpack.c.h.b16 %v5093
        %v5250 = vunpack.c.l.b16 %v5094
        %v5251 = vunpack.c.h.b16 %v5094
        %v5252 = vunpack.c.l.b16 %v5095
        %v5253 = vunpack.c.h.b16 %v5095
        %v5254 = vunpack.c.l.b16 %v5096
        %v5255 = vunpack.c.h.b16 %v5096
        %v5256 = vunpack.c.l.b16 %v5097
        %v5257 = vunpack.c.h.b16 %v5097
        %v5258 = vunpack.c.l.b16 %v5098
        %v5259 = vunpack.c.h.b16 %v5098
        %v5260 = vunpack.c.l.b16 %v5099
        %v5261 = vunpack.c.h.b16 %v5099
        %v5262 = vunpack.c.l.b16 %v5100
        %v5263 = vunpack.c.h.b16 %v5100
        %v5264 = vunpack.c.l.b16 %v5101
        %v5265 = vunpack.c.h.b16 %v5101
        %v5266 = vunpack.c.l.b16 %v5102
        %v5267 = vunpack.c.h.b16 %v5102
        %v5268 = vunpack.c.l.b16 %v5103
        %v5269 = vunpack.c.h.b16 %v5103
        %v5270 = vunpack.c.l.b16 %v5104
        %v5271 = vunpack.c.h.b16 %v5104
        %v5272 = vunpack.c.l.b16 %v5105
        %v5273 = vunpack.c.h.b16 %v5105
        %v5274 = vunpack.c.l.b16 %v5106
        %v5275 = vunpack.c.h.b16 %v5106
        %v5276 = vunpack.c.l.b16 %v5107
        %v5277 = vunpack.c.h.b16 %v5107
        %v5278 = vunpack.c.l.b16 %v5108
        %v5279 = vunpack.c.h.b16 %v5108
        %v5280 = vunpack.c.l.b16 %v5109
        %v5281 = vunpack.c.h.b16 %v5109
        %v5282 = vunpack.c.l.b16 %v5110
        %v5283 = vunpack.c.h.b16 %v5110
        %v5284 = vunpack.c.l.b16 %v5111
        %v5285 = vunpack.c.h.b16 %v5111
        %v5286 = vunpack.c.l.b16 %v5112
        %v5287 = vunpack.c.h.b16 %v5112
        %v5288 = vunpack.c.l.b16 %v5113
        %v5289 = vunpack.c.h.b16 %v5113
        %v5290 = vunpack.c.l.b16 %v5114
        %v5291 = vunpack.c.h.b16 %v5114
        %v5292 = vunpack.c.l.b16 %v5115
        %v5293 = vunpack.c.h.b16 %v5115
        %v5294 = vunpack.c.l.b16 %v5116
        %v5295 = vunpack.c.h.b16 %v5116
        %v5296 = vunpack.c.l.b16 %v5117
        %v5297 = vunpack.c.h.b16 %v5117
        %v5298 = vunpack.c.l.b16 %v5118
        %v5299 = vunpack.c.h.b16 %v5118
        %v5300 = vunpack.c.l.b16 %v5119
        %v5301 = vunpack.c.h.b16 %v5119
        %v5302 = vunpack.c.l.b16 %v5120
        %v5303 = vunpack.c.h.b16 %v5120
        %v5304 = vunpack.c.l.b16 %v5121
        %v5305 = vunpack.c.h.b16 %v5121
        %v5306 = vunpack.c.l.b16 %v5122
        %v5307 = vunpack.c.h.b16 %v5122
        %v5308 = vunpack.c.l.b16 %v5123
        %v5309 = vunpack.c.h.b16 %v5123
        %v5310 = vunpack.c.l.b16 %v5124
        %v5311 = vunpack.c.h.b16 %v5124
        %v5312 = vunpack.c.l.b16 %v5125
        %v5313 = vunpack.c.h.b16 %v5125
        %v5314 = vunpack.c.l.b16 %v5126
        %v5315 = vunpack.c.h.b16 %v5126
        %v5316 = vunpack.c.l.b16 %v5127
        %v5317 = vunpack.c.h.b16 %v5127
        %v5318 = vunpack.c.l.b16 %v5128
        %v5319 = vunpack.c.h.b16 %v5128
        %v5320 = vunpack.c.l.b16 %v5129
        %v5321 = vunpack.c.h.b16 %v5129
        %v5322 = vunpack.c.l.b16 %v5130
        %v5323 = vunpack.c.h.b16 %v5130
        %v5324 = vunpack.c.l.b16 %v5131
        %v5325 = vunpack.c.h.b16 %v5131
        %v5326 = vunpack.c.l.b16 %v5132
        %v5327 = vunpack.c.h.b16 %v5132
        %v5328 = vunpack.c.l.b16 %v5133
        %v5329 = vunpack.c.h.b16 %v5133
        %v5330 = vunpack.c.l.b16 %v5134
        %v5331 = vunpack.c.h.b16 %v5134
        %v5332 = vunpack.c.l.b16 %v5135
        %v5333 = vunpack.c.h.b16 %v5135
        %v5334 = vunpack.c.l.b16 %v5136
        %v5335 = vunpack.c.h.b16 %v5136
        %v5336 = vunpack.c.l.b16 %v5137
        %v5337 = vunpack.c.h.b16 %v5137
        %v5338 = vunpack.c.l.b16 %v5138
        %v5339 = vunpack.c.h.b16 %v5138
        %v5340 = vunpack.c.l.b16 %v5139
        %v5341 = vunpack.c.h.b16 %v5139
        %v5342 = vunpack.c.l.b16 %v5140
        %v5343 = vunpack.c.h.b16 %v5140
        %v5344 = vunpack.c.l.b16 %v5141
        %v5345 = vunpack.c.h.b16 %v5141
        %v5346 = vunpack.c.l.b16 %v5142
        %v5347 = vunpack.c.h.b16 %v5142
        %v5348 = vunpack.c.l.b16 %v5143
        %v5349 = vunpack.c.h.b16 %v5143
        %v5350 = vunpack.c.l.b16 %v5144
        %v5351 = vunpack.c.h.b16 %v5144
        %v5352 = vunpack.c.l.b16 %v5145
        %v5353 = vunpack.c.h.b16 %v5145
        %v5354 = vunpack.c.l.b16 %v5146
        %v5355 = vunpack.c.h.b16 %v5146
        %v5356 = vunpack.c.l.b16 %v5147
        %v5357 = vunpack.c.h.b16 %v5147
        %v5358 = vunpack.c.l.b16 %v5148
        %v5359 = vunpack.c.h.b16 %v5148
        %v5360 = vunpack.c.l.b16 %v5149
        %v5361 = vunpack.c.h.b16 %v5149
        %v5362 = vunpack.c.l.b16 %v5150
        %v5363 = vunpack.c.h.b16 %v5150
        %v5364 = vunpack.c.l.b16 %v5151
        %v5365 = vunpack.c.h.b16 %v5151
        %v5366 = vpack.c.b16 %v5242, %v5238
        %v5367 = vpack.c.b16 %v5243, %v5239
        %v5368 = vpack.c.b16 %v5244, %v5240
        %v5369 = vpack.c.b16 %v5245, %v5241
        %v5370 = vpack.c.b16 %v5250, %v5246
        %v5371 = vpack.c.b16 %v5251, %v5247
        %v5372 = vpack.c.b16 %v5252, %v5248
        %v5373 = vpack.c.b16 %v5253, %v5249
        %v5374 = vpack.c.b16 %v5258, %v5254
        %v5375 = vpack.c.b16 %v5259, %v5255
        %v5376 = vpack.c.b16 %v5260, %v5256
        %v5377 = vpack.c.b16 %v5261, %v5257
        %v5378 = vpack.c.b16 %v5266, %v5262
        %v5379 = vpack.c.b16 %v5267, %v5263
        %v5380 = vpack.c.b16 %v5268, %v5264
        %v5381 = vpack.c.b16 %v5269, %v5265
        %v5382 = vpack.c.b16 %v5274, %v5270
        %v5383 = vpack.c.b16 %v5275, %v5271
        %v5384 = vpack.c.b16 %v5276, %v5272
        %v5385 = vpack.c.b16 %v5277, %v5273
        %v5386 = vpack.c.b16 %v5282, %v5278
        %v5387 = vpack.c.b16 %v5283, %v5279
        %v5388 = vpack.c.b16 %v5284, %v5280
        %v5389 = vpack.c.b16 %v5285, %v5281
        %v5390 = vpack.c.b16 %v5290, %v5286
        %v5391 = vpack.c.b16 %v5291, %v5287
        %v5392 = vpack.c.b16 %v5292, %v5288
        %v5393 = vpack.c.b16 %v5293, %v5289
        %v5394 = vpack.c.b16 %v5298, %v5294
        %v5395 = vpack.c.b16 %v5299, %v5295
        %v5396 = vpack.c.b16 %v5300, %v5296
        %v5397 = vpack.c.b16 %v5301, %v5297
        %v5398 = vpack.c.b16 %v5306, %v5302
        %v5399 = vpack.c.b16 %v5307, %v5303
        %v5400 = vpack.c.b16 %v5308, %v5304
        %v5401 = vpack.c.b16 %v5309, %v5305
        %v5402 = vpack.c.b16 %v5314, %v5310
        %v5403 = vpack.c.b16 %v5315, %v5311
        %v5404 = vpack.c.b16 %v5316, %v5312
        %v5405 = vpack.c.b16 %v5317, %v5313
        %v5406 = vpack.c.b16 %v5322, %v5318
        %v5407 = vpack.c.b16 %v5323, %v5319
        %v5408 = vpack.c.b16 %v5324, %v5320
        %v5409 = vpack.c.b16 %v5325, %v5321
        %v5410 = vpack.c.b16 %v5330, %v5326
        %v5411 = vpack.c.b16 %v5331, %v5327
        %v5412 = vpack.c.b16 %v5332, %v5328
        %v5413 = vpack.c.b16 %v5333, %v5329
        %v5414 = vpack.c.b16 %v5338, %v5334
        %v5415 = vpack.c.b16 %v5339, %v5335
        %v5416 = vpack.c.b16 %v5340, %v5336
        %v5417 = vpack.c.b16 %v5341, %v5337
        %v5418 = vpack.c.b16 %v5346, %v5342
        %v5419 = vpack.c.b16 %v5347, %v5343
        %v5420 = vpack.c.b16 %v5348, %v5344
        %v5421 = vpack.c.b16 %v5349, %v5345
        %v5422 = vpack.c.b16 %v5354, %v5350
        %v5423 = vpack.c.b16 %v5355, %v5351
        %v5424 = vpack.c.b16 %v5356, %v5352
        %v5425 = vpack.c.b16 %v5357, %v5353
        %v5426 = vpack.c.b16 %v5362, %v5358
        %v5427 = vpack.c.b16 %v5363, %v5359
        %v5428 = vpack.c.b16 %v5364, %v5360
        %v5429 = vpack.c.b16 %v5365, %v5361
        %5494 = vmatprep.subr.bf16.mxu0 %v5395
        %5495 = vmatpush1.bf16.msra.mxu0 %v5394
        %5496 = vmatprep.subr.bf16.mxu0 %v5391
        %5497 = vmatpush1.bf16.msra.mxu0 %v5390
        %5498 = vmatprep.subr.bf16.mxu0 %v5387
        %5499 = vmatpush1.bf16.msra.mxu0 %v5386
        %5500 = vmatprep.subr.bf16.mxu0 %v5383
        %5501 = vmatpush1.bf16.msra.mxu0 %v5382
        %5502 = vmatprep.subr.bf16.mxu0 %v5379
        %5503 = vmatpush1.bf16.msra.mxu0 %v5378
        %5504 = vmatprep.subr.bf16.mxu0 %v5375
        %5505 = vmatpush1.bf16.msra.mxu0 %v5374
        %5506 = vmatprep.subr.bf16.mxu0 %v5371
        %5507 = vmatpush1.bf16.msra.mxu0 %v5370
        %5508 = vmatprep.subr.bf16.mxu0 %v5367
        %5509 = vmatpush1.bf16.msra.mxu0 %v5366
        %5510 = vmatprep.subr.bf16.mxu0 %v5427
        %5511 = vmatpush2.bf16.msra.mxu0 %v5426
        %5512 = vmatprep.subr.bf16.mxu0 %v5423
        %5513 = vmatpush2.bf16.msra.mxu0 %v5422
        %5514 = vmatprep.subr.bf16.mxu0 %v5419
        %5515 = vmatpush2.bf16.msra.mxu0 %v5418
        %5516 = vmatprep.subr.bf16.mxu0 %v5415
        %5517 = vmatpush2.bf16.msra.mxu0 %v5414
        %5518 = vmatprep.subr.bf16.mxu0 %v5411
        %5519 = vmatpush2.bf16.msra.mxu0 %v5410
        %5520 = vmatprep.subr.bf16.mxu0 %v5407
        %5521 = vmatpush2.bf16.msra.mxu0 %v5406
        %5522 = vmatprep.subr.bf16.mxu0 %v5403
        %5523 = vmatpush2.bf16.msra.mxu0 %v5402
        %5524 = vmatprep.subr.bf16.mxu0 %v5399
        %5525 = vmatpush2.bf16.msra.mxu0 %v5398
        %5526 = vmatprep.mubr.bf16.mxu0 %v5073
        %5527 = vmatmul.mubr.bf16.gmra.mxu0 %v5072
        %v5528 = vpop.f32.mrf.mxu0
        %v5529 = vadd.f32 %v5157, %v5528
        %v5530 = vpop.f32.mrf.mxu0
        %v5531 = vadd.f32 %v5161, %v5530
        %v5532 = vpop.f32.mrf.mxu0
        %v5533 = vadd.f32 %v5157, %v5532
        %v5534 = vpop.f32.mrf.mxu0
        %v5535 = vadd.f32 %v5161, %v5534
        %5536 = vmatprep.mubr.bf16.mxu0 %v5075
        %5537 = vmatmul.mubr.bf16.gmra.mxu0 %v5074
        %v5538 = vpop.f32.mrf.mxu0
        %v5539 = vadd.f32 %v5157, %v5538
        %v5540 = vpop.f32.mrf.mxu0
        %v5541 = vadd.f32 %v5161, %v5540
        %v5542 = vpop.f32.mrf.mxu0
        %v5543 = vadd.f32 %v5157, %v5542
        %v5544 = vpop.f32.mrf.mxu0
        %v5545 = vadd.f32 %v5161, %v5544
        %5546 = vmatprep.mubr.bf16.mxu0 %v5077
        %5547 = vmatmul.mubr.bf16.gmra.mxu0 %v5076
        %v5548 = vpop.f32.mrf.mxu0
        %v5549 = vadd.f32 %v5157, %v5548
        %v5550 = vpop.f32.mrf.mxu0
        %v5551 = vadd.f32 %v5161, %v5550
        %v5552 = vpop.f32.mrf.mxu0
        %v5553 = vadd.f32 %v5157, %v5552
        %v5554 = vpop.f32.mrf.mxu0
        %v5555 = vadd.f32 %v5161, %v5554
        %5556 = vmatprep.mubr.bf16.mxu0 %v5079
        %5557 = vmatmul.mubr.bf16.gmra.mxu0 %v5078
        %v5558 = vpop.f32.mrf.mxu0
        %v5559 = vadd.f32 %v5157, %v5558
        %v5560 = vpop.f32.mrf.mxu0
        %v5561 = vadd.f32 %v5161, %v5560
        %v5562 = vpop.f32.mrf.mxu0
        %v5563 = vadd.f32 %v5157, %v5562
        %v5564 = vpop.f32.mrf.mxu0
        %v5565 = vadd.f32 %v5161, %v5564
        %5566 = vmatprep.mubr.bf16.mxu0 %v5081
        %5567 = vmatmul.mubr.bf16.gmra.mxu0 %v5080
        %v5568 = vpop.f32.mrf.mxu0
        %v5569 = vadd.f32 %v5157, %v5568
        %v5570 = vpop.f32.mrf.mxu0
        %v5571 = vadd.f32 %v5161, %v5570
        %v5572 = vpop.f32.mrf.mxu0
        %v5573 = vadd.f32 %v5157, %v5572
        %v5574 = vpop.f32.mrf.mxu0
        %v5575 = vadd.f32 %v5161, %v5574
        %5576 = vmatprep.mubr.bf16.mxu0 %v5083
        %5577 = vmatmul.mubr.bf16.gmra.mxu0 %v5082
        %v5578 = vpop.f32.mrf.mxu0
        %v5579 = vadd.f32 %v5157, %v5578
        %v5580 = vpop.f32.mrf.mxu0
        %v5581 = vadd.f32 %v5161, %v5580
        %v5582 = vpop.f32.mrf.mxu0
        %v5583 = vadd.f32 %v5157, %v5582
        %v5584 = vpop.f32.mrf.mxu0
        %v5585 = vadd.f32 %v5161, %v5584
        %5586 = vmatprep.mubr.bf16.mxu0 %v5085
        %5587 = vmatmul.mubr.bf16.gmra.mxu0 %v5084
        %v5588 = vpop.f32.mrf.mxu0
        %v5589 = vadd.f32 %v5157, %v5588
        %v5590 = vpop.f32.mrf.mxu0
        %v5591 = vadd.f32 %v5161, %v5590
        %v5592 = vpop.f32.mrf.mxu0
        %v5593 = vadd.f32 %v5157, %v5592
        %v5594 = vpop.f32.mrf.mxu0
        %v5595 = vadd.f32 %v5161, %v5594
        %5596 = vmatprep.mubr.bf16.mxu0 %v5087
        %5597 = vmatmul.mubr.bf16.gmra.mxu0 %v5086
        %v5598 = vpop.f32.mrf.mxu0
        %v5599 = vadd.f32 %v5157, %v5598
        %v5600 = vpop.f32.mrf.mxu0
        %v5601 = vadd.f32 %v5161, %v5600
        %v5602 = vpop.f32.mrf.mxu0
        %v5603 = vadd.f32 %v5157, %v5602
        %v5604 = vpop.f32.mrf.mxu0
        %v5605 = vadd.f32 %v5161, %v5604
        %5606 = vdwg.mxu0
        %5607 = vmatprep.subr.bf16.mxu0 %v5397
        %5608 = vmatpush1.bf16.msra.mxu0 %v5396
        %5609 = vmatprep.subr.bf16.mxu0 %v5393
        %5610 = vmatpush1.bf16.msra.mxu0 %v5392
        %5611 = vmatprep.subr.bf16.mxu0 %v5389
        %5612 = vmatpush1.bf16.msra.mxu0 %v5388
        %5613 = vmatprep.subr.bf16.mxu0 %v5385
        %5614 = vmatpush1.bf16.msra.mxu0 %v5384
        %5615 = vmatprep.subr.bf16.mxu0 %v5381
        %5616 = vmatpush1.bf16.msra.mxu0 %v5380
        %5617 = vmatprep.subr.bf16.mxu0 %v5377
        %5618 = vmatpush1.bf16.msra.mxu0 %v5376
        %5619 = vmatprep.subr.bf16.mxu0 %v5373
        %5620 = vmatpush1.bf16.msra.mxu0 %v5372
        %5621 = vmatprep.subr.bf16.mxu0 %v5369
        %5622 = vmatpush1.bf16.msra.mxu0 %v5368
        %5623 = vmatprep.subr.bf16.mxu0 %v5429
        %5624 = vmatpush2.bf16.msra.mxu0 %v5428
        %5625 = vmatprep.subr.bf16.mxu0 %v5425
        %5626 = vmatpush2.bf16.msra.mxu0 %v5424
        %5627 = vmatprep.subr.bf16.mxu0 %v5421
        %5628 = vmatpush2.bf16.msra.mxu0 %v5420
        %5629 = vmatprep.subr.bf16.mxu0 %v5417
        %5630 = vmatpush2.bf16.msra.mxu0 %v5416
        %5631 = vmatprep.subr.bf16.mxu0 %v5413
        %5632 = vmatpush2.bf16.msra.mxu0 %v5412
        %5633 = vmatprep.subr.bf16.mxu0 %v5409
        %5634 = vmatpush2.bf16.msra.mxu0 %v5408
        %5635 = vmatprep.subr.bf16.mxu0 %v5405
        %5636 = vmatpush2.bf16.msra.mxu0 %v5404
        %5637 = vmatprep.subr.bf16.mxu0 %v5401
        %5638 = vmatpush2.bf16.msra.mxu0 %v5400
        %5639 = vmatprep.mubr.bf16.mxu0 %v5073
        %5640 = vmatmul.mubr.bf16.gmra.mxu0 %v5072
        %v5641 = vpop.f32.mrf.mxu0
        %v5642 = vadd.f32 %v5165, %v5641
        %v5643 = vpop.f32.mrf.mxu0
        %v5644 = vadd.f32 %v5169, %v5643
        %v5645 = vpop.f32.mrf.mxu0
        %v5646 = vadd.f32 %v5165, %v5645
        %v5647 = vpop.f32.mrf.mxu0
        %v5648 = vadd.f32 %v5169, %v5647
        %5649 = vmatprep.mubr.bf16.mxu0 %v5075
        %5650 = vmatmul.mubr.bf16.gmra.mxu0 %v5074
        %v5651 = vpop.f32.mrf.mxu0
        %v5652 = vadd.f32 %v5165, %v5651
        %v5653 = vpop.f32.mrf.mxu0
        %v5654 = vadd.f32 %v5169, %v5653
        %v5655 = vpop.f32.mrf.mxu0
        %v5656 = vadd.f32 %v5165, %v5655
        %v5657 = vpop.f32.mrf.mxu0
        %v5658 = vadd.f32 %v5169, %v5657
        %5659 = vmatprep.mubr.bf16.mxu0 %v5077
        %5660 = vmatmul.mubr.bf16.gmra.mxu0 %v5076
        %v5661 = vpop.f32.mrf.mxu0
        %v5662 = vadd.f32 %v5165, %v5661
        %v5663 = vpop.f32.mrf.mxu0
        %v5664 = vadd.f32 %v5169, %v5663
        %v5665 = vpop.f32.mrf.mxu0
        %v5666 = vadd.f32 %v5165, %v5665
        %v5667 = vpop.f32.mrf.mxu0
        %v5668 = vadd.f32 %v5169, %v5667
        %5669 = vmatprep.mubr.bf16.mxu0 %v5079
        %5670 = vmatmul.mubr.bf16.gmra.mxu0 %v5078
        %v5671 = vpop.f32.mrf.mxu0
        %v5672 = vadd.f32 %v5165, %v5671
        %v5673 = vpop.f32.mrf.mxu0
        %v5674 = vadd.f32 %v5169, %v5673
        %v5675 = vpop.f32.mrf.mxu0
        %v5676 = vadd.f32 %v5165, %v5675
        %v5677 = vpop.f32.mrf.mxu0
        %v5678 = vadd.f32 %v5169, %v5677
        %5679 = vmatprep.mubr.bf16.mxu0 %v5081
        %5680 = vmatmul.mubr.bf16.gmra.mxu0 %v5080
        %v5681 = vpop.f32.mrf.mxu0
        %v5682 = vadd.f32 %v5165, %v5681
        %v5683 = vpop.f32.mrf.mxu0
        %v5684 = vadd.f32 %v5169, %v5683
        %v5685 = vpop.f32.mrf.mxu0
        %v5686 = vadd.f32 %v5165, %v5685
        %v5687 = vpop.f32.mrf.mxu0
        %v5688 = vadd.f32 %v5169, %v5687
        %5689 = vmatprep.mubr.bf16.mxu0 %v5083
        %5690 = vmatmul.mubr.bf16.gmra.mxu0 %v5082
        %v5691 = vpop.f32.mrf.mxu0
        %v5692 = vadd.f32 %v5165, %v5691
        %v5693 = vpop.f32.mrf.mxu0
        %v5694 = vadd.f32 %v5169, %v5693
        %v5695 = vpop.f32.mrf.mxu0
        %v5696 = vadd.f32 %v5165, %v5695
        %v5697 = vpop.f32.mrf.mxu0
        %v5698 = vadd.f32 %v5169, %v5697
        %5699 = vmatprep.mubr.bf16.mxu0 %v5085
        %5700 = vmatmul.mubr.bf16.gmra.mxu0 %v5084
        %v5701 = vpop.f32.mrf.mxu0
        %v5702 = vadd.f32 %v5165, %v5701
        %v5703 = vpop.f32.mrf.mxu0
        %v5704 = vadd.f32 %v5169, %v5703
        %v5705 = vpop.f32.mrf.mxu0
        %v5706 = vadd.f32 %v5165, %v5705
        %v5707 = vpop.f32.mrf.mxu0
        %v5708 = vadd.f32 %v5169, %v5707
        %5709 = vmatprep.mubr.bf16.mxu0 %v5087
        %5710 = vmatmul.mubr.bf16.gmra.mxu0 %v5086
        %v5711 = vpop.f32.mrf.mxu0
        %v5712 = vadd.f32 %v5165, %v5711
        %v5713 = vpop.f32.mrf.mxu0
        %v5714 = vadd.f32 %v5169, %v5713
        %v5715 = vpop.f32.mrf.mxu0
        %v5716 = vadd.f32 %v5165, %v5715
        %v5717 = vpop.f32.mrf.mxu0
        %v5718 = vadd.f32 %v5169, %v5717
        %5719 = vdwg.mxu0
        %v5720 = vmax.f32 %v5529, 0.0
        %v5721 = vmax.f32 %v5531, 0.0
        %v5722 = vmax.f32 %v5642, 0.0
        %v5723 = vmax.f32 %v5644, 0.0
        %v5724 = vmax.f32 %v5533, 0.0
        %v5725 = vmax.f32 %v5535, 0.0
        %v5726 = vmax.f32 %v5646, 0.0
        %v5727 = vmax.f32 %v5648, 0.0
        %v5728 = vmax.f32 %v5539, 0.0
        %v5729 = vmax.f32 %v5541, 0.0
        %v5730 = vmax.f32 %v5652, 0.0
        %v5731 = vmax.f32 %v5654, 0.0
        %v5732 = vmax.f32 %v5543, 0.0
        %v5733 = vmax.f32 %v5545, 0.0
        %v5734 = vmax.f32 %v5656, 0.0
        %v5735 = vmax.f32 %v5658, 0.0
        %v5736 = vmax.f32 %v5549, 0.0
        %v5737 = vmax.f32 %v5551, 0.0
        %v5738 = vmax.f32 %v5662, 0.0
        %v5739 = vmax.f32 %v5664, 0.0
        %v5740 = vmax.f32 %v5553, 0.0
        %v5741 = vmax.f32 %v5555, 0.0
        %v5742 = vmax.f32 %v5666, 0.0
        %v5743 = vmax.f32 %v5668, 0.0
        %v5744 = vmax.f32 %v5559, 0.0
        %v5745 = vmax.f32 %v5561, 0.0
        %v5746 = vmax.f32 %v5672, 0.0
        %v5747 = vmax.f32 %v5674, 0.0
        %v5748 = vmax.f32 %v5563, 0.0
        %v5749 = vmax.f32 %v5565, 0.0
        %v5750 = vmax.f32 %v5676, 0.0
        %v5751 = vmax.f32 %v5678, 0.0
        %v5752 = vmax.f32 %v5569, 0.0
        %v5753 = vmax.f32 %v5571, 0.0
        %v5754 = vmax.f32 %v5682, 0.0
        %v5755 = vmax.f32 %v5684, 0.0
        %v5756 = vmax.f32 %v5573, 0.0
        %v5757 = vmax.f32 %v5575, 0.0
        %v5758 = vmax.f32 %v5686, 0.0
        %v5759 = vmax.f32 %v5688, 0.0
        %v5760 = vmax.f32 %v5579, 0.0
        %v5761 = vmax.f32 %v5581, 0.0
        %v5762 = vmax.f32 %v5692, 0.0
        %v5763 = vmax.f32 %v5694, 0.0
        %v5764 = vmax.f32 %v5583, 0.0
        %v5765 = vmax.f32 %v5585, 0.0
        %v5766 = vmax.f32 %v5696, 0.0
        %v5767 = vmax.f32 %v5698, 0.0
        %v5768 = vmax.f32 %v5589, 0.0
        %v5769 = vmax.f32 %v5591, 0.0
        %v5770 = vmax.f32 %v5702, 0.0
        %v5771 = vmax.f32 %v5704, 0.0
        %v5772 = vmax.f32 %v5593, 0.0
        %v5773 = vmax.f32 %v5595, 0.0
        %v5774 = vmax.f32 %v5706, 0.0
        %v5775 = vmax.f32 %v5708, 0.0
        %v5776 = vmax.f32 %v5599, 0.0
        %v5777 = vmax.f32 %v5601, 0.0
        %v5778 = vmax.f32 %v5712, 0.0
        %v5779 = vmax.f32 %v5714, 0.0
        %v5780 = vmax.f32 %v5603, 0.0
        %v5781 = vmax.f32 %v5605, 0.0
        %v5782 = vmax.f32 %v5716, 0.0
        %v5783 = vmax.f32 %v5718, 0.0
        %v5784 = vpack.c.bf16 %v5724, %v5720
        %v5785 = vpack.c.bf16 %v5725, %v5721
        %v5786 = vpack.c.bf16 %v5726, %v5722
        %v5787 = vpack.c.bf16 %v5727, %v5723
        %v5788 = vpack.c.bf16 %v5732, %v5728
        %v5789 = vpack.c.bf16 %v5733, %v5729
        %v5790 = vpack.c.bf16 %v5734, %v5730
        %v5791 = vpack.c.bf16 %v5735, %v5731
        %v5792 = vpack.c.bf16 %v5740, %v5736
        %v5793 = vpack.c.bf16 %v5741, %v5737
        %v5794 = vpack.c.bf16 %v5742, %v5738
        %v5795 = vpack.c.bf16 %v5743, %v5739
        %v5796 = vpack.c.bf16 %v5748, %v5744
        %v5797 = vpack.c.bf16 %v5749, %v5745
        %v5798 = vpack.c.bf16 %v5750, %v5746
        %v5799 = vpack.c.bf16 %v5751, %v5747
        %v5800 = vpack.c.bf16 %v5756, %v5752
        %v5801 = vpack.c.bf16 %v5757, %v5753
        %v5802 = vpack.c.bf16 %v5758, %v5754
        %v5803 = vpack.c.bf16 %v5759, %v5755
        %v5804 = vpack.c.bf16 %v5764, %v5760
        %v5805 = vpack.c.bf16 %v5765, %v5761
        %v5806 = vpack.c.bf16 %v5766, %v5762
        %v5807 = vpack.c.bf16 %v5767, %v5763
        %v5808 = vpack.c.bf16 %v5772, %v5768
        %v5809 = vpack.c.bf16 %v5773, %v5769
        %v5810 = vpack.c.bf16 %v5774, %v5770
        %v5811 = vpack.c.bf16 %v5775, %v5771
        %v5812 = vpack.c.bf16 %v5780, %v5776
        %v5813 = vpack.c.bf16 %v5781, %v5777
        %v5814 = vpack.c.bf16 %v5782, %v5778
        %v5815 = vpack.c.bf16 %v5783, %v5779
        %v5816 = vld [vmem:[#allocation12] sm:$0xff]
        %v5817 = vld [vmem:[#allocation12 + $0x8] sm:$0xff]
        %v5818 = vld [vmem:[#allocation12 + $0x10] sm:$0xff]
        %v5819 = vld [vmem:[#allocation12 + $0x18] sm:$0xff]
        %v5820 = vld [vmem:[#allocation12 + $0x20] sm:$0xff]
        %v5821 = vld [vmem:[#allocation12 + $0x28] sm:$0xff]
        %v5822 = vld [vmem:[#allocation12 + $0x30] sm:$0xff]
        %v5823 = vld [vmem:[#allocation12 + $0x38] sm:$0xff]
        %v5824 = vld [vmem:[#allocation12 + $0x40] sm:$0xff]
        %v5825 = vld [vmem:[#allocation12 + $0x48] sm:$0xff]
        %v5826 = vld [vmem:[#allocation12 + $0x50] sm:$0xff]
        %v5827 = vld [vmem:[#allocation12 + $0x58] sm:$0xff]
        %v5828 = vld [vmem:[#allocation12 + $0x60] sm:$0xff]
        %v5829 = vld [vmem:[#allocation12 + $0x68] sm:$0xff]
        %v5830 = vld [vmem:[#allocation12 + $0x70] sm:$0xff]
        %v5831 = vld [vmem:[#allocation12 + $0x78] sm:$0xff]
        %v5832 = vld [vmem:[#allocation12 + $0x80] sm:$0xff]
        %v5833 = vld [vmem:[#allocation12 + $0x88] sm:$0xff]
        %v5834 = vld [vmem:[#allocation12 + $0x90] sm:$0xff]
        %v5835 = vld [vmem:[#allocation12 + $0x98] sm:$0xff]
        %v5836 = vld [vmem:[#allocation12 + $0xa0] sm:$0xff]
        %v5837 = vld [vmem:[#allocation12 + $0xa8] sm:$0xff]
        %v5838 = vld [vmem:[#allocation12 + $0xb0] sm:$0xff]
        %v5839 = vld [vmem:[#allocation12 + $0xb8] sm:$0xff]
        %v5840 = vld [vmem:[#allocation12 + $0xc0] sm:$0xff]
        %v5841 = vld [vmem:[#allocation12 + $0xc8] sm:$0xff]
        %v5842 = vld [vmem:[#allocation12 + $0xd0] sm:$0xff]
        %v5843 = vld [vmem:[#allocation12 + $0xd8] sm:$0xff]
        %v5844 = vld [vmem:[#allocation12 + $0xe0] sm:$0xff]
        %v5845 = vld [vmem:[#allocation12 + $0xe8] sm:$0xff]
        %v5846 = vld [vmem:[#allocation12 + $0xf0] sm:$0xff]
        %v5847 = vld [vmem:[#allocation12 + $0xf8] sm:$0xff]
        %v5848 = vld [vmem:[#allocation12 + $0x100] sm:$0xff]
        %v5849 = vld [vmem:[#allocation12 + $0x108] sm:$0xff]
        %v5850 = vld [vmem:[#allocation12 + $0x110] sm:$0xff]
        %v5851 = vld [vmem:[#allocation12 + $0x118] sm:$0xff]
        %v5852 = vld [vmem:[#allocation12 + $0x120] sm:$0xff]
        %v5853 = vld [vmem:[#allocation12 + $0x128] sm:$0xff]
        %v5854 = vld [vmem:[#allocation12 + $0x130] sm:$0xff]
        %v5855 = vld [vmem:[#allocation12 + $0x138] sm:$0xff]
        %v5856 = vld [vmem:[#allocation12 + $0x140] sm:$0xff]
        %v5857 = vld [vmem:[#allocation12 + $0x148] sm:$0xff]
        %v5858 = vld [vmem:[#allocation12 + $0x150] sm:$0xff]
        %v5859 = vld [vmem:[#allocation12 + $0x158] sm:$0xff]
        %v5860 = vld [vmem:[#allocation12 + $0x160] sm:$0xff]
        %v5861 = vld [vmem:[#allocation12 + $0x168] sm:$0xff]
        %v5862 = vld [vmem:[#allocation12 + $0x170] sm:$0xff]
        %v5863 = vld [vmem:[#allocation12 + $0x178] sm:$0xff]
        %v5864 = vld [vmem:[#allocation12 + $0x180] sm:$0xff]
        %v5865 = vld [vmem:[#allocation12 + $0x188] sm:$0xff]
        %v5866 = vld [vmem:[#allocation12 + $0x190] sm:$0xff]
        %v5867 = vld [vmem:[#allocation12 + $0x198] sm:$0xff]
        %v5868 = vld [vmem:[#allocation12 + $0x1a0] sm:$0xff]
        %v5869 = vld [vmem:[#allocation12 + $0x1a8] sm:$0xff]
        %v5870 = vld [vmem:[#allocation12 + $0x1b0] sm:$0xff]
        %v5871 = vld [vmem:[#allocation12 + $0x1b8] sm:$0xff]
        %v5872 = vld [vmem:[#allocation12 + $0x1c0] sm:$0xff]
        %v5873 = vld [vmem:[#allocation12 + $0x1c8] sm:$0xff]
        %v5874 = vld [vmem:[#allocation12 + $0x1d0] sm:$0xff]
        %v5875 = vld [vmem:[#allocation12 + $0x1d8] sm:$0xff]
        %v5876 = vld [vmem:[#allocation12 + $0x1e0] sm:$0xff]
        %v5877 = vld [vmem:[#allocation12 + $0x1e8] sm:$0xff]
        %v5878 = vld [vmem:[#allocation12 + $0x1f0] sm:$0xff]
        %v5879 = vld [vmem:[#allocation12 + $0x1f8] sm:$0xff]
        %v5880 = vld [vmem:[%s10] sm:$0x3]
        %v5882 = vlaneseq
        %v5883 = vshrl.u32 %v5882, 7
        %v5884 = vsub.s32 0, %v5883
        %v5885 = vrot.slane %v5880, %v5884
        %v5886 = vlaneseq
        %v5887 = vshrl.u32 %v5886, 7
        %v5888 = vsub.s32 1, %v5887
        %v5889 = vrot.slane %v5880, %v5888
        %v5956 = vunpack.c.l.b16 %v5816
        %v5957 = vunpack.c.h.b16 %v5816
        %v5958 = vunpack.c.l.b16 %v5817
        %v5959 = vunpack.c.h.b16 %v5817
        %v5960 = vunpack.c.l.b16 %v5818
        %v5961 = vunpack.c.h.b16 %v5818
        %v5962 = vunpack.c.l.b16 %v5819
        %v5963 = vunpack.c.h.b16 %v5819
        %v5964 = vunpack.c.l.b16 %v5820
        %v5965 = vunpack.c.h.b16 %v5820
        %v5966 = vunpack.c.l.b16 %v5821
        %v5967 = vunpack.c.h.b16 %v5821
        %v5968 = vunpack.c.l.b16 %v5822
        %v5969 = vunpack.c.h.b16 %v5822
        %v5970 = vunpack.c.l.b16 %v5823
        %v5971 = vunpack.c.h.b16 %v5823
        %v5972 = vunpack.c.l.b16 %v5824
        %v5973 = vunpack.c.h.b16 %v5824
        %v5974 = vunpack.c.l.b16 %v5825
        %v5975 = vunpack.c.h.b16 %v5825
        %v5976 = vunpack.c.l.b16 %v5826
        %v5977 = vunpack.c.h.b16 %v5826
        %v5978 = vunpack.c.l.b16 %v5827
        %v5979 = vunpack.c.h.b16 %v5827
        %v5980 = vunpack.c.l.b16 %v5828
        %v5981 = vunpack.c.h.b16 %v5828
        %v5982 = vunpack.c.l.b16 %v5829
        %v5983 = vunpack.c.h.b16 %v5829
        %v5984 = vunpack.c.l.b16 %v5830
        %v5985 = vunpack.c.h.b16 %v5830
        %v5986 = vunpack.c.l.b16 %v5831
        %v5987 = vunpack.c.h.b16 %v5831
        %v5988 = vunpack.c.l.b16 %v5832
        %v5989 = vunpack.c.h.b16 %v5832
        %v5990 = vunpack.c.l.b16 %v5833
        %v5991 = vunpack.c.h.b16 %v5833
        %v5992 = vunpack.c.l.b16 %v5834
        %v5993 = vunpack.c.h.b16 %v5834
        %v5994 = vunpack.c.l.b16 %v5835
        %v5995 = vunpack.c.h.b16 %v5835
        %v5996 = vunpack.c.l.b16 %v5836
        %v5997 = vunpack.c.h.b16 %v5836
        %v5998 = vunpack.c.l.b16 %v5837
        %v5999 = vunpack.c.h.b16 %v5837
        %v6000 = vunpack.c.l.b16 %v5838
        %v6001 = vunpack.c.h.b16 %v5838
        %v6002 = vunpack.c.l.b16 %v5839
        %v6003 = vunpack.c.h.b16 %v5839
        %v6004 = vunpack.c.l.b16 %v5840
        %v6005 = vunpack.c.h.b16 %v5840
        %v6006 = vunpack.c.l.b16 %v5841
        %v6007 = vunpack.c.h.b16 %v5841
        %v6008 = vunpack.c.l.b16 %v5842
        %v6009 = vunpack.c.h.b16 %v5842
        %v6010 = vunpack.c.l.b16 %v5843
        %v6011 = vunpack.c.h.b16 %v5843
        %v6012 = vunpack.c.l.b16 %v5844
        %v6013 = vunpack.c.h.b16 %v5844
        %v6014 = vunpack.c.l.b16 %v5845
        %v6015 = vunpack.c.h.b16 %v5845
        %v6016 = vunpack.c.l.b16 %v5846
        %v6017 = vunpack.c.h.b16 %v5846
        %v6018 = vunpack.c.l.b16 %v5847
        %v6019 = vunpack.c.h.b16 %v5847
        %v6020 = vunpack.c.l.b16 %v5848
        %v6021 = vunpack.c.h.b16 %v5848
        %v6022 = vunpack.c.l.b16 %v5849
        %v6023 = vunpack.c.h.b16 %v5849
        %v6024 = vunpack.c.l.b16 %v5850
        %v6025 = vunpack.c.h.b16 %v5850
        %v6026 = vunpack.c.l.b16 %v5851
        %v6027 = vunpack.c.h.b16 %v5851
        %v6028 = vunpack.c.l.b16 %v5852
        %v6029 = vunpack.c.h.b16 %v5852
        %v6030 = vunpack.c.l.b16 %v5853
        %v6031 = vunpack.c.h.b16 %v5853
        %v6032 = vunpack.c.l.b16 %v5854
        %v6033 = vunpack.c.h.b16 %v5854
        %v6034 = vunpack.c.l.b16 %v5855
        %v6035 = vunpack.c.h.b16 %v5855
        %v6036 = vunpack.c.l.b16 %v5856
        %v6037 = vunpack.c.h.b16 %v5856
        %v6038 = vunpack.c.l.b16 %v5857
        %v6039 = vunpack.c.h.b16 %v5857
        %v6040 = vunpack.c.l.b16 %v5858
        %v6041 = vunpack.c.h.b16 %v5858
        %v6042 = vunpack.c.l.b16 %v5859
        %v6043 = vunpack.c.h.b16 %v5859
        %v6044 = vunpack.c.l.b16 %v5860
        %v6045 = vunpack.c.h.b16 %v5860
        %v6046 = vunpack.c.l.b16 %v5861
        %v6047 = vunpack.c.h.b16 %v5861
        %v6048 = vunpack.c.l.b16 %v5862
        %v6049 = vunpack.c.h.b16 %v5862
        %v6050 = vunpack.c.l.b16 %v5863
        %v6051 = vunpack.c.h.b16 %v5863
        %v6052 = vunpack.c.l.b16 %v5864
        %v6053 = vunpack.c.h.b16 %v5864
        %v6054 = vunpack.c.l.b16 %v5865
        %v6055 = vunpack.c.h.b16 %v5865
        %v6056 = vunpack.c.l.b16 %v5866
        %v6057 = vunpack.c.h.b16 %v5866
        %v6058 = vunpack.c.l.b16 %v5867
        %v6059 = vunpack.c.h.b16 %v5867
        %v6060 = vunpack.c.l.b16 %v5868
        %v6061 = vunpack.c.h.b16 %v5868
        %v6062 = vunpack.c.l.b16 %v5869
        %v6063 = vunpack.c.h.b16 %v5869
        %v6064 = vunpack.c.l.b16 %v5870
        %v6065 = vunpack.c.h.b16 %v5870
        %v6066 = vunpack.c.l.b16 %v5871
        %v6067 = vunpack.c.h.b16 %v5871
        %v6068 = vunpack.c.l.b16 %v5872
        %v6069 = vunpack.c.h.b16 %v5872
        %v6070 = vunpack.c.l.b16 %v5873
        %v6071 = vunpack.c.h.b16 %v5873
        %v6072 = vunpack.c.l.b16 %v5874
        %v6073 = vunpack.c.h.b16 %v5874
        %v6074 = vunpack.c.l.b16 %v5875
        %v6075 = vunpack.c.h.b16 %v5875
        %v6076 = vunpack.c.l.b16 %v5876
        %v6077 = vunpack.c.h.b16 %v5876
        %v6078 = vunpack.c.l.b16 %v5877
        %v6079 = vunpack.c.h.b16 %v5877
        %v6080 = vunpack.c.l.b16 %v5878
        %v6081 = vunpack.c.h.b16 %v5878
        %v6082 = vunpack.c.l.b16 %v5879
        %v6083 = vunpack.c.h.b16 %v5879
        %v6084 = vpack.c.b16 %v5958, %v5956
        %v6085 = vpack.c.b16 %v5959, %v5957
        %v6086 = vpack.c.b16 %v5962, %v5960
        %v6087 = vpack.c.b16 %v5963, %v5961
        %v6088 = vpack.c.b16 %v5966, %v5964
        %v6089 = vpack.c.b16 %v5967, %v5965
        %v6090 = vpack.c.b16 %v5970, %v5968
        %v6091 = vpack.c.b16 %v5971, %v5969
        %v6092 = vpack.c.b16 %v5974, %v5972
        %v6093 = vpack.c.b16 %v5975, %v5973
        %v6094 = vpack.c.b16 %v5978, %v5976
        %v6095 = vpack.c.b16 %v5979, %v5977
        %v6096 = vpack.c.b16 %v5982, %v5980
        %v6097 = vpack.c.b16 %v5983, %v5981
        %v6098 = vpack.c.b16 %v5986, %v5984
        %v6099 = vpack.c.b16 %v5987, %v5985
        %v6100 = vpack.c.b16 %v5990, %v5988
        %v6101 = vpack.c.b16 %v5991, %v5989
        %v6102 = vpack.c.b16 %v5994, %v5992
        %v6103 = vpack.c.b16 %v5995, %v5993
        %v6104 = vpack.c.b16 %v5998, %v5996
        %v6105 = vpack.c.b16 %v5999, %v5997
        %v6106 = vpack.c.b16 %v6002, %v6000
        %v6107 = vpack.c.b16 %v6003, %v6001
        %v6108 = vpack.c.b16 %v6006, %v6004
        %v6109 = vpack.c.b16 %v6007, %v6005
        %v6110 = vpack.c.b16 %v6010, %v6008
        %v6111 = vpack.c.b16 %v6011, %v6009
        %v6112 = vpack.c.b16 %v6014, %v6012
        %v6113 = vpack.c.b16 %v6015, %v6013
        %v6114 = vpack.c.b16 %v6018, %v6016
        %v6115 = vpack.c.b16 %v6019, %v6017
        %v6116 = vpack.c.b16 %v6022, %v6020
        %v6117 = vpack.c.b16 %v6023, %v6021
        %v6118 = vpack.c.b16 %v6026, %v6024
        %v6119 = vpack.c.b16 %v6027, %v6025
        %v6120 = vpack.c.b16 %v6030, %v6028
        %v6121 = vpack.c.b16 %v6031, %v6029
        %v6122 = vpack.c.b16 %v6034, %v6032
        %v6123 = vpack.c.b16 %v6035, %v6033
        %v6124 = vpack.c.b16 %v6038, %v6036
        %v6125 = vpack.c.b16 %v6039, %v6037
        %v6126 = vpack.c.b16 %v6042, %v6040
        %v6127 = vpack.c.b16 %v6043, %v6041
        %v6128 = vpack.c.b16 %v6046, %v6044
        %v6129 = vpack.c.b16 %v6047, %v6045
        %v6130 = vpack.c.b16 %v6050, %v6048
        %v6131 = vpack.c.b16 %v6051, %v6049
        %v6132 = vpack.c.b16 %v6054, %v6052
        %v6133 = vpack.c.b16 %v6055, %v6053
        %v6134 = vpack.c.b16 %v6058, %v6056
        %v6135 = vpack.c.b16 %v6059, %v6057
        %v6136 = vpack.c.b16 %v6062, %v6060
        %v6137 = vpack.c.b16 %v6063, %v6061
        %v6138 = vpack.c.b16 %v6066, %v6064
        %v6139 = vpack.c.b16 %v6067, %v6065
        %v6140 = vpack.c.b16 %v6070, %v6068
        %v6141 = vpack.c.b16 %v6071, %v6069
        %v6142 = vpack.c.b16 %v6074, %v6072
        %v6143 = vpack.c.b16 %v6075, %v6073
        %v6144 = vpack.c.b16 %v6078, %v6076
        %v6145 = vpack.c.b16 %v6079, %v6077
        %v6146 = vpack.c.b16 %v6082, %v6080
        %v6147 = vpack.c.b16 %v6083, %v6081
        %6212 = vmatprep.subr.bf16.mxu0 %v6099
        %6213 = vmatpush1.bf16.msra.mxu0 %v6098
        %6214 = vmatprep.subr.bf16.mxu0 %v6097
        %6215 = vmatpush1.bf16.msra.mxu0 %v6096
        %6216 = vmatprep.subr.bf16.mxu0 %v6095
        %6217 = vmatpush1.bf16.msra.mxu0 %v6094
        %6218 = vmatprep.subr.bf16.mxu0 %v6093
        %6219 = vmatpush1.bf16.msra.mxu0 %v6092
        %6220 = vmatprep.subr.bf16.mxu0 %v6091
        %6221 = vmatpush1.bf16.msra.mxu0 %v6090
        %6222 = vmatprep.subr.bf16.mxu0 %v6089
        %6223 = vmatpush1.bf16.msra.mxu0 %v6088
        %6224 = vmatprep.subr.bf16.mxu0 %v6087
        %6225 = vmatpush1.bf16.msra.mxu0 %v6086
        %6226 = vmatprep.subr.bf16.mxu0 %v6085
        %6227 = vmatpush1.bf16.msra.mxu0 %v6084
        %6228 = vmatprep.subr.bf16.mxu0 %v6115
        %6229 = vmatpush2.bf16.msra.mxu0 %v6114
        %6230 = vmatprep.subr.bf16.mxu0 %v6113
        %6231 = vmatpush2.bf16.msra.mxu0 %v6112
        %6232 = vmatprep.subr.bf16.mxu0 %v6111
        %6233 = vmatpush2.bf16.msra.mxu0 %v6110
        %6234 = vmatprep.subr.bf16.mxu0 %v6109
        %6235 = vmatpush2.bf16.msra.mxu0 %v6108
        %6236 = vmatprep.subr.bf16.mxu0 %v6107
        %6237 = vmatpush2.bf16.msra.mxu0 %v6106
        %6238 = vmatprep.subr.bf16.mxu0 %v6105
        %6239 = vmatpush2.bf16.msra.mxu0 %v6104
        %6240 = vmatprep.subr.bf16.mxu0 %v6103
        %6241 = vmatpush2.bf16.msra.mxu0 %v6102
        %6242 = vmatprep.subr.bf16.mxu0 %v6101
        %6243 = vmatpush2.bf16.msra.mxu0 %v6100
        %6244 = vmatprep.mubr.bf16.mxu0 %v5785
        %6245 = vmatmul.mubr.bf16.gmra.mxu0 %v5784
        %v6246 = vpop.f32.mrf.mxu0
        %v6247 = vadd.f32 %v5885, %v6246
        %v6248 = vpop.f32.mrf.mxu0
        %v6249 = vadd.f32 %v5889, %v6248
        %v6250 = vpop.f32.mrf.mxu0
        %v6251 = vadd.f32 %v5885, %v6250
        %v6252 = vpop.f32.mrf.mxu0
        %v6253 = vadd.f32 %v5889, %v6252
        %6254 = vmatprep.mubr.bf16.mxu0 %v5789
        %6255 = vmatmul.mubr.bf16.gmra.mxu0 %v5788
        %v6256 = vpop.f32.mrf.mxu0
        %v6257 = vadd.f32 %v5885, %v6256
        %v6258 = vpop.f32.mrf.mxu0
        %v6259 = vadd.f32 %v5889, %v6258
        %v6260 = vpop.f32.mrf.mxu0
        %v6261 = vadd.f32 %v5885, %v6260
        %v6262 = vpop.f32.mrf.mxu0
        %v6263 = vadd.f32 %v5889, %v6262
        %6264 = vmatprep.mubr.bf16.mxu0 %v5793
        %6265 = vmatmul.mubr.bf16.gmra.mxu0 %v5792
        %v6266 = vpop.f32.mrf.mxu0
        %v6267 = vadd.f32 %v5885, %v6266
        %v6268 = vpop.f32.mrf.mxu0
        %v6269 = vadd.f32 %v5889, %v6268
        %v6270 = vpop.f32.mrf.mxu0
        %v6271 = vadd.f32 %v5885, %v6270
        %v6272 = vpop.f32.mrf.mxu0
        %v6273 = vadd.f32 %v5889, %v6272
        %6274 = vmatprep.mubr.bf16.mxu0 %v5797
        %6275 = vmatmul.mubr.bf16.gmra.mxu0 %v5796
        %v6276 = vpop.f32.mrf.mxu0
        %v6277 = vadd.f32 %v5885, %v6276
        %v6278 = vpop.f32.mrf.mxu0
        %v6279 = vadd.f32 %v5889, %v6278
        %v6280 = vpop.f32.mrf.mxu0
        %v6281 = vadd.f32 %v5885, %v6280
        %v6282 = vpop.f32.mrf.mxu0
        %v6283 = vadd.f32 %v5889, %v6282
        %6284 = vmatprep.mubr.bf16.mxu0 %v5801
        %6285 = vmatmul.mubr.bf16.gmra.mxu0 %v5800
        %v6286 = vpop.f32.mrf.mxu0
        %v6287 = vadd.f32 %v5885, %v6286
        %v6288 = vpop.f32.mrf.mxu0
        %v6289 = vadd.f32 %v5889, %v6288
        %v6290 = vpop.f32.mrf.mxu0
        %v6291 = vadd.f32 %v5885, %v6290
        %v6292 = vpop.f32.mrf.mxu0
        %v6293 = vadd.f32 %v5889, %v6292
        %6294 = vmatprep.mubr.bf16.mxu0 %v5805
        %6295 = vmatmul.mubr.bf16.gmra.mxu0 %v5804
        %v6296 = vpop.f32.mrf.mxu0
        %v6297 = vadd.f32 %v5885, %v6296
        %v6298 = vpop.f32.mrf.mxu0
        %v6299 = vadd.f32 %v5889, %v6298
        %v6300 = vpop.f32.mrf.mxu0
        %v6301 = vadd.f32 %v5885, %v6300
        %v6302 = vpop.f32.mrf.mxu0
        %v6303 = vadd.f32 %v5889, %v6302
        %6304 = vmatprep.mubr.bf16.mxu0 %v5809
        %6305 = vmatmul.mubr.bf16.gmra.mxu0 %v5808
        %v6306 = vpop.f32.mrf.mxu0
        %v6307 = vadd.f32 %v5885, %v6306
        %v6308 = vpop.f32.mrf.mxu0
        %v6309 = vadd.f32 %v5889, %v6308
        %v6310 = vpop.f32.mrf.mxu0
        %v6311 = vadd.f32 %v5885, %v6310
        %v6312 = vpop.f32.mrf.mxu0
        %v6313 = vadd.f32 %v5889, %v6312
        %6314 = vmatprep.mubr.bf16.mxu0 %v5813
        %6315 = vmatmul.mubr.bf16.gmra.mxu0 %v5812
        %v6316 = vpop.f32.mrf.mxu0
        %v6317 = vadd.f32 %v5885, %v6316
        %v6318 = vpop.f32.mrf.mxu0
        %v6319 = vadd.f32 %v5889, %v6318
        %v6320 = vpop.f32.mrf.mxu0
        %v6321 = vadd.f32 %v5885, %v6320
        %v6322 = vpop.f32.mrf.mxu0
        %v6323 = vadd.f32 %v5889, %v6322
        %6324 = vdwg.mxu0
        %6325 = vmatprep.subr.bf16.mxu0 %v6131
        %6326 = vmatpush1.bf16.msra.mxu0 %v6130
        %6327 = vmatprep.subr.bf16.mxu0 %v6129
        %6328 = vmatpush1.bf16.msra.mxu0 %v6128
        %6329 = vmatprep.subr.bf16.mxu0 %v6127
        %6330 = vmatpush1.bf16.msra.mxu0 %v6126
        %6331 = vmatprep.subr.bf16.mxu0 %v6125
        %6332 = vmatpush1.bf16.msra.mxu0 %v6124
        %6333 = vmatprep.subr.bf16.mxu0 %v6123
        %6334 = vmatpush1.bf16.msra.mxu0 %v6122
        %6335 = vmatprep.subr.bf16.mxu0 %v6121
        %6336 = vmatpush1.bf16.msra.mxu0 %v6120
        %6337 = vmatprep.subr.bf16.mxu0 %v6119
        %6338 = vmatpush1.bf16.msra.mxu0 %v6118
        %6339 = vmatprep.subr.bf16.mxu0 %v6117
        %6340 = vmatpush1.bf16.msra.mxu0 %v6116
        %6341 = vmatprep.subr.bf16.mxu0 %v6147
        %6342 = vmatpush2.bf16.msra.mxu0 %v6146
        %6343 = vmatprep.subr.bf16.mxu0 %v6145
        %6344 = vmatpush2.bf16.msra.mxu0 %v6144
        %6345 = vmatprep.subr.bf16.mxu0 %v6143
        %6346 = vmatpush2.bf16.msra.mxu0 %v6142
        %6347 = vmatprep.subr.bf16.mxu0 %v6141
        %6348 = vmatpush2.bf16.msra.mxu0 %v6140
        %6349 = vmatprep.subr.bf16.mxu0 %v6139
        %6350 = vmatpush2.bf16.msra.mxu0 %v6138
        %6351 = vmatprep.subr.bf16.mxu0 %v6137
        %6352 = vmatpush2.bf16.msra.mxu0 %v6136
        %6353 = vmatprep.subr.bf16.mxu0 %v6135
        %6354 = vmatpush2.bf16.msra.mxu0 %v6134
        %6355 = vmatprep.subr.bf16.mxu0 %v6133
        %6356 = vmatpush2.bf16.msra.mxu0 %v6132
        %6357 = vmatprep.mubr.bf16.mxu0 %v5787
        %6358 = vmatmul.mubr.bf16.gmra.mxu0 %v5786
        %v6359 = vpop.f32.mrf.mxu0
        %v6360 = vadd.f32 %v6247, %v6359
        %v6361 = vpop.f32.mrf.mxu0
        %v6362 = vadd.f32 %v6249, %v6361
        %v6363 = vpop.f32.mrf.mxu0
        %v6364 = vadd.f32 %v6251, %v6363
        %v6365 = vpop.f32.mrf.mxu0
        %v6366 = vadd.f32 %v6253, %v6365
        %6367 = vmatprep.mubr.bf16.mxu0 %v5791
        %6368 = vmatmul.mubr.bf16.gmra.mxu0 %v5790
        %v6369 = vpop.f32.mrf.mxu0
        %v6370 = vadd.f32 %v6257, %v6369
        %v6371 = vpop.f32.mrf.mxu0
        %v6372 = vadd.f32 %v6259, %v6371
        %v6373 = vpop.f32.mrf.mxu0
        %v6374 = vadd.f32 %v6261, %v6373
        %v6375 = vpop.f32.mrf.mxu0
        %v6376 = vadd.f32 %v6263, %v6375
        %6377 = vmatprep.mubr.bf16.mxu0 %v5795
        %6378 = vmatmul.mubr.bf16.gmra.mxu0 %v5794
        %v6379 = vpop.f32.mrf.mxu0
        %v6380 = vadd.f32 %v6267, %v6379
        %v6381 = vpop.f32.mrf.mxu0
        %v6382 = vadd.f32 %v6269, %v6381
        %v6383 = vpop.f32.mrf.mxu0
        %v6384 = vadd.f32 %v6271, %v6383
        %v6385 = vpop.f32.mrf.mxu0
        %v6386 = vadd.f32 %v6273, %v6385
        %6387 = vmatprep.mubr.bf16.mxu0 %v5799
        %6388 = vmatmul.mubr.bf16.gmra.mxu0 %v5798
        %v6389 = vpop.f32.mrf.mxu0
        %v6390 = vadd.f32 %v6277, %v6389
        %v6391 = vpop.f32.mrf.mxu0
        %v6392 = vadd.f32 %v6279, %v6391
        %v6393 = vpop.f32.mrf.mxu0
        %v6394 = vadd.f32 %v6281, %v6393
        %v6395 = vpop.f32.mrf.mxu0
        %v6396 = vadd.f32 %v6283, %v6395
        %6397 = vmatprep.mubr.bf16.mxu0 %v5803
        %6398 = vmatmul.mubr.bf16.gmra.mxu0 %v5802
        %v6399 = vpop.f32.mrf.mxu0
        %v6400 = vadd.f32 %v6287, %v6399
        %v6401 = vpop.f32.mrf.mxu0
        %v6402 = vadd.f32 %v6289, %v6401
        %v6403 = vpop.f32.mrf.mxu0
        %v6404 = vadd.f32 %v6291, %v6403
        %v6405 = vpop.f32.mrf.mxu0
        %v6406 = vadd.f32 %v6293, %v6405
        %6407 = vmatprep.mubr.bf16.mxu0 %v5807
        %6408 = vmatmul.mubr.bf16.gmra.mxu0 %v5806
        %v6409 = vpop.f32.mrf.mxu0
        %v6410 = vadd.f32 %v6297, %v6409
        %v6411 = vpop.f32.mrf.mxu0
        %v6412 = vadd.f32 %v6299, %v6411
        %v6413 = vpop.f32.mrf.mxu0
        %v6414 = vadd.f32 %v6301, %v6413
        %v6415 = vpop.f32.mrf.mxu0
        %v6416 = vadd.f32 %v6303, %v6415
        %6417 = vmatprep.mubr.bf16.mxu0 %v5811
        %6418 = vmatmul.mubr.bf16.gmra.mxu0 %v5810
        %v6419 = vpop.f32.mrf.mxu0
        %v6420 = vadd.f32 %v6307, %v6419
        %v6421 = vpop.f32.mrf.mxu0
        %v6422 = vadd.f32 %v6309, %v6421
        %v6423 = vpop.f32.mrf.mxu0
        %v6424 = vadd.f32 %v6311, %v6423
        %v6425 = vpop.f32.mrf.mxu0
        %v6426 = vadd.f32 %v6313, %v6425
        %6427 = vmatprep.mubr.bf16.mxu0 %v5815
        %6428 = vmatmul.mubr.bf16.gmra.mxu0 %v5814
        %v6429 = vpop.f32.mrf.mxu0
        %v6430 = vadd.f32 %v6317, %v6429
        %v6431 = vpop.f32.mrf.mxu0
        %v6432 = vadd.f32 %v6319, %v6431
        %v6433 = vpop.f32.mrf.mxu0
        %v6434 = vadd.f32 %v6321, %v6433
        %v6435 = vpop.f32.mrf.mxu0
        %v6436 = vadd.f32 %v6323, %v6435
        %6437 = vdwg.mxu0
        %v6438 = vadd.f32 %v6360, %v5040
        %v6439 = vadd.f32 %v6362, %v5041
        %v6440 = vadd.f32 %v6364, %v5042
        %v6441 = vadd.f32 %v6366, %v5043
        %v6442 = vadd.f32 %v6370, %v5044
        %v6443 = vadd.f32 %v6372, %v5045
        %v6444 = vadd.f32 %v6374, %v5046
        %v6445 = vadd.f32 %v6376, %v5047
        %v6446 = vadd.f32 %v6380, %v5048
        %v6447 = vadd.f32 %v6382, %v5049
        %v6448 = vadd.f32 %v6384, %v5050
        %v6449 = vadd.f32 %v6386, %v5051
        %v6450 = vadd.f32 %v6390, %v5052
        %v6451 = vadd.f32 %v6392, %v5053
        %v6452 = vadd.f32 %v6394, %v5054
        %v6453 = vadd.f32 %v6396, %v5055
        %v6454 = vadd.f32 %v6400, %v5056
        %v6455 = vadd.f32 %v6402, %v5057
        %v6456 = vadd.f32 %v6404, %v5058
        %v6457 = vadd.f32 %v6406, %v5059
        %v6458 = vadd.f32 %v6410, %v5060
        %v6459 = vadd.f32 %v6412, %v5061
        %v6460 = vadd.f32 %v6414, %v5062
        %v6461 = vadd.f32 %v6416, %v5063
        %v6462 = vadd.f32 %v6420, %v5064
        %v6463 = vadd.f32 %v6422, %v5065
        %v6464 = vadd.f32 %v6424, %v5066
        %v6465 = vadd.f32 %v6426, %v5067
        %v6466 = vadd.f32 %v6430, %v5068
        %v6467 = vadd.f32 %v6432, %v5069
        %v6468 = vadd.f32 %v6434, %v5070
        %v6469 = vadd.f32 %v6436, %v5071
        %v6470 = vld [vmem:[%s11] sm:$0x3]
        %v6471 = vld [vmem:[%s12] sm:$0x3]
        %v6472 = vadd.f32 %v6438, %v6439
        %6473 = vadd.xlane.f32.xlu0 %v6472
        %v6474 = vpop.xlane.xlu0 %6473
        %v6475 = vadd.f32 %v6440, %v6441
        %6476 = vadd.xlane.f32.xlu0 %v6475
        %v6477 = vpop.xlane.xlu0 %6476
        %v6478 = vadd.f32 %v6442, %v6443
        %6479 = vadd.xlane.f32.xlu0 %v6478
        %v6480 = vpop.xlane.xlu0 %6479
        %v6481 = vadd.f32 %v6444, %v6445
        %6482 = vadd.xlane.f32.xlu0 %v6481
        %v6483 = vpop.xlane.xlu0 %6482
        %v6484 = vadd.f32 %v6446, %v6447
        %6485 = vadd.xlane.f32.xlu0 %v6484
        %v6486 = vpop.xlane.xlu0 %6485
        %v6487 = vadd.f32 %v6448, %v6449
        %6488 = vadd.xlane.f32.xlu0 %v6487
        %v6489 = vpop.xlane.xlu0 %6488
        %v6490 = vadd.f32 %v6450, %v6451
        %6491 = vadd.xlane.f32.xlu0 %v6490
        %v6492 = vpop.xlane.xlu0 %6491
        %v6493 = vadd.f32 %v6452, %v6453
        %6494 = vadd.xlane.f32.xlu0 %v6493
        %v6495 = vpop.xlane.xlu0 %6494
        %v6496 = vadd.f32 %v6454, %v6455
        %6497 = vadd.xlane.f32.xlu0 %v6496
        %v6498 = vpop.xlane.xlu0 %6497
        %v6499 = vadd.f32 %v6456, %v6457
        %6500 = vadd.xlane.f32.xlu0 %v6499
        %v6501 = vpop.xlane.xlu0 %6500
        %v6502 = vadd.f32 %v6458, %v6459
        %6503 = vadd.xlane.f32.xlu0 %v6502
        %v6504 = vpop.xlane.xlu0 %6503
        %v6505 = vadd.f32 %v6460, %v6461
        %6506 = vadd.xlane.f32.xlu0 %v6505
        %v6507 = vpop.xlane.xlu0 %6506
        %v6508 = vadd.f32 %v6462, %v6463
        %6509 = vadd.xlane.f32.xlu0 %v6508
        %v6510 = vpop.xlane.xlu0 %6509
        %v6511 = vadd.f32 %v6464, %v6465
        %6512 = vadd.xlane.f32.xlu0 %v6511
        %v6513 = vpop.xlane.xlu0 %6512
        %v6514 = vadd.f32 %v6466, %v6467
        %6515 = vadd.xlane.f32.xlu0 %v6514
        %v6516 = vpop.xlane.xlu0 %6515
        %v6517 = vadd.f32 %v6468, %v6469
        %6518 = vadd.xlane.f32.xlu0 %v6517
        %v6519 = vpop.xlane.xlu0 %6518
        %v6520 = vmul.f32 %v6474, %v4777
        %v6521 = vmul.f32 %v6477, %v4777
        %v6522 = vmul.f32 %v6480, %v4777
        %v6523 = vmul.f32 %v6483, %v4777
        %v6524 = vmul.f32 %v6486, %v4777
        %v6525 = vmul.f32 %v6489, %v4777
        %v6526 = vmul.f32 %v6492, %v4777
        %v6527 = vmul.f32 %v6495, %v4777
        %v6528 = vmul.f32 %v6498, %v4777
        %v6529 = vmul.f32 %v6501, %v4777
        %v6530 = vmul.f32 %v6504, %v4777
        %v6531 = vmul.f32 %v6507, %v4777
        %v6532 = vmul.f32 %v6510, %v4777
        %v6533 = vmul.f32 %v6513, %v4777
        %v6534 = vmul.f32 %v6516, %v4777
        %v6535 = vmul.f32 %v6519, %v4777
        %v6536 = vsub.f32 %v6438, %v6520
        %v6537 = vsub.f32 %v6439, %v6520
        %v6538 = vsub.f32 %v6440, %v6521
        %v6539 = vsub.f32 %v6441, %v6521
        %v6540 = vsub.f32 %v6442, %v6522
        %v6541 = vsub.f32 %v6443, %v6522
        %v6542 = vsub.f32 %v6444, %v6523
        %v6543 = vsub.f32 %v6445, %v6523
        %v6544 = vsub.f32 %v6446, %v6524
        %v6545 = vsub.f32 %v6447, %v6524
        %v6546 = vsub.f32 %v6448, %v6525
        %v6547 = vsub.f32 %v6449, %v6525
        %v6548 = vsub.f32 %v6450, %v6526
        %v6549 = vsub.f32 %v6451, %v6526
        %v6550 = vsub.f32 %v6452, %v6527
        %v6551 = vsub.f32 %v6453, %v6527
        %v6552 = vsub.f32 %v6454, %v6528
        %v6553 = vsub.f32 %v6455, %v6528
        %v6554 = vsub.f32 %v6456, %v6529
        %v6555 = vsub.f32 %v6457, %v6529
        %v6556 = vsub.f32 %v6458, %v6530
        %v6557 = vsub.f32 %v6459, %v6530
        %v6558 = vsub.f32 %v6460, %v6531
        %v6559 = vsub.f32 %v6461, %v6531
        %v6560 = vsub.f32 %v6462, %v6532
        %v6561 = vsub.f32 %v6463, %v6532
        %v6562 = vsub.f32 %v6464, %v6533
        %v6563 = vsub.f32 %v6465, %v6533
        %v6564 = vsub.f32 %v6466, %v6534
        %v6565 = vsub.f32 %v6467, %v6534
        %v6566 = vsub.f32 %v6468, %v6535
        %v6567 = vsub.f32 %v6469, %v6535
        %v6568 = vmul.f32 %v6536, %v6536
        %v6569 = vmul.f32 %v6537, %v6537
        %v6570 = vmul.f32 %v6538, %v6538
        %v6571 = vmul.f32 %v6539, %v6539
        %v6572 = vmul.f32 %v6540, %v6540
        %v6573 = vmul.f32 %v6541, %v6541
        %v6574 = vmul.f32 %v6542, %v6542
        %v6575 = vmul.f32 %v6543, %v6543
        %v6576 = vmul.f32 %v6544, %v6544
        %v6577 = vmul.f32 %v6545, %v6545
        %v6578 = vmul.f32 %v6546, %v6546
        %v6579 = vmul.f32 %v6547, %v6547
        %v6580 = vmul.f32 %v6548, %v6548
        %v6581 = vmul.f32 %v6549, %v6549
        %v6582 = vmul.f32 %v6550, %v6550
        %v6583 = vmul.f32 %v6551, %v6551
        %v6584 = vmul.f32 %v6552, %v6552
        %v6585 = vmul.f32 %v6553, %v6553
        %v6586 = vmul.f32 %v6554, %v6554
        %v6587 = vmul.f32 %v6555, %v6555
        %v6588 = vmul.f32 %v6556, %v6556
        %v6589 = vmul.f32 %v6557, %v6557
        %v6590 = vmul.f32 %v6558, %v6558
        %v6591 = vmul.f32 %v6559, %v6559
        %v6592 = vmul.f32 %v6560, %v6560
        %v6593 = vmul.f32 %v6561, %v6561
        %v6594 = vmul.f32 %v6562, %v6562
        %v6595 = vmul.f32 %v6563, %v6563
        %v6596 = vmul.f32 %v6564, %v6564
        %v6597 = vmul.f32 %v6565, %v6565
        %v6598 = vmul.f32 %v6566, %v6566
        %v6599 = vmul.f32 %v6567, %v6567
        %v6600 = vadd.f32 %v6568, %v6569
        %6601 = vadd.xlane.f32.xlu0 %v6600
        %v6602 = vpop.xlane.xlu0 %6601
        %v6603 = vadd.f32 %v6570, %v6571
        %6604 = vadd.xlane.f32.xlu0 %v6603
        %v6605 = vpop.xlane.xlu0 %6604
        %v6606 = vadd.f32 %v6572, %v6573
        %6607 = vadd.xlane.f32.xlu0 %v6606
        %v6608 = vpop.xlane.xlu0 %6607
        %v6609 = vadd.f32 %v6574, %v6575
        %6610 = vadd.xlane.f32.xlu0 %v6609
        %v6611 = vpop.xlane.xlu0 %6610
        %v6612 = vadd.f32 %v6576, %v6577
        %6613 = vadd.xlane.f32.xlu0 %v6612
        %v6614 = vpop.xlane.xlu0 %6613
        %v6615 = vadd.f32 %v6578, %v6579
        %6616 = vadd.xlane.f32.xlu0 %v6615
        %v6617 = vpop.xlane.xlu0 %6616
        %v6618 = vadd.f32 %v6580, %v6581
        %6619 = vadd.xlane.f32.xlu0 %v6618
        %v6620 = vpop.xlane.xlu0 %6619
        %v6621 = vadd.f32 %v6582, %v6583
        %6622 = vadd.xlane.f32.xlu0 %v6621
        %v6623 = vpop.xlane.xlu0 %6622
        %v6624 = vadd.f32 %v6584, %v6585
        %6625 = vadd.xlane.f32.xlu0 %v6624
        %v6626 = vpop.xlane.xlu0 %6625
        %v6627 = vadd.f32 %v6586, %v6587
        %6628 = vadd.xlane.f32.xlu0 %v6627
        %v6629 = vpop.xlane.xlu0 %6628
        %v6630 = vadd.f32 %v6588, %v6589
        %6631 = vadd.xlane.f32.xlu0 %v6630
        %v6632 = vpop.xlane.xlu0 %6631
        %v6633 = vadd.f32 %v6590, %v6591
        %6634 = vadd.xlane.f32.xlu0 %v6633
        %v6635 = vpop.xlane.xlu0 %6634
        %v6636 = vadd.f32 %v6592, %v6593
        %6637 = vadd.xlane.f32.xlu0 %v6636
        %v6638 = vpop.xlane.xlu0 %6637
        %v6639 = vadd.f32 %v6594, %v6595
        %6640 = vadd.xlane.f32.xlu0 %v6639
        %v6641 = vpop.xlane.xlu0 %6640
        %v6642 = vadd.f32 %v6596, %v6597
        %6643 = vadd.xlane.f32.xlu0 %v6642
        %v6644 = vpop.xlane.xlu0 %6643
        %v6645 = vadd.f32 %v6598, %v6599
        %6646 = vadd.xlane.f32.xlu0 %v6645
        %v6647 = vpop.xlane.xlu0 %6646
        %v6648 = vmul.f32 %v6602, %v4777
        %v6649 = vmul.f32 %v6605, %v4777
        %v6650 = vmul.f32 %v6608, %v4777
        %v6651 = vmul.f32 %v6611, %v4777
        %v6652 = vmul.f32 %v6614, %v4777
        %v6653 = vmul.f32 %v6617, %v4777
        %v6654 = vmul.f32 %v6620, %v4777
        %v6655 = vmul.f32 %v6623, %v4777
        %v6656 = vmul.f32 %v6626, %v4777
        %v6657 = vmul.f32 %v6629, %v4777
        %v6658 = vmul.f32 %v6632, %v4777
        %v6659 = vmul.f32 %v6635, %v4777
        %v6660 = vmul.f32 %v6638, %v4777
        %v6661 = vmul.f32 %v6641, %v4777
        %v6662 = vmul.f32 %v6644, %v4777
        %v6663 = vmul.f32 %v6647, %v4777
        %v6664 = vadd.f32 %v6648, 1e-05
        %v6665 = vadd.f32 %v6649, 1e-05
        %v6666 = vadd.f32 %v6650, 1e-05
        %v6667 = vadd.f32 %v6651, 1e-05
        %v6668 = vadd.f32 %v6652, 1e-05
        %v6669 = vadd.f32 %v6653, 1e-05
        %v6670 = vadd.f32 %v6654, 1e-05
        %v6671 = vadd.f32 %v6655, 1e-05
        %v6672 = vadd.f32 %v6656, 1e-05
        %v6673 = vadd.f32 %v6657, 1e-05
        %v6674 = vadd.f32 %v6658, 1e-05
        %v6675 = vadd.f32 %v6659, 1e-05
        %v6676 = vadd.f32 %v6660, 1e-05
        %v6677 = vadd.f32 %v6661, 1e-05
        %v6678 = vadd.f32 %v6662, 1e-05
        %v6679 = vadd.f32 %v6663, 1e-05
        %v6680 = vrsqrt.pop %v6664
        %v6681 = vrsqrt.pop %v6665
        %v6682 = vrsqrt.pop %v6666
        %v6683 = vrsqrt.pop %v6667
        %v6684 = vrsqrt.pop %v6668
        %v6685 = vrsqrt.pop %v6669
        %v6686 = vrsqrt.pop %v6670
        %v6687 = vrsqrt.pop %v6671
        %v6688 = vrsqrt.pop %v6672
        %v6689 = vrsqrt.pop %v6673
        %v6690 = vrsqrt.pop %v6674
        %v6691 = vrsqrt.pop %v6675
        %v6692 = vrsqrt.pop %v6676
        %v6693 = vrsqrt.pop %v6677
        %v6694 = vrsqrt.pop %v6678
        %v6695 = vrsqrt.pop %v6679
        %v6696 = vmul.f32 %v6536, %v6680
        %v6697 = vmul.f32 %v6537, %v6680
        %v6698 = vmul.f32 %v6538, %v6681
        %v6699 = vmul.f32 %v6539, %v6681
        %v6700 = vmul.f32 %v6540, %v6682
        %v6701 = vmul.f32 %v6541, %v6682
        %v6702 = vmul.f32 %v6542, %v6683
        %v6703 = vmul.f32 %v6543, %v6683
        %v6704 = vmul.f32 %v6544, %v6684
        %v6705 = vmul.f32 %v6545, %v6684
        %v6706 = vmul.f32 %v6546, %v6685
        %v6707 = vmul.f32 %v6547, %v6685
        %v6708 = vmul.f32 %v6548, %v6686
        %v6709 = vmul.f32 %v6549, %v6686
        %v6710 = vmul.f32 %v6550, %v6687
        %v6711 = vmul.f32 %v6551, %v6687
        %v6712 = vmul.f32 %v6552, %v6688
        %v6713 = vmul.f32 %v6553, %v6688
        %v6714 = vmul.f32 %v6554, %v6689
        %v6715 = vmul.f32 %v6555, %v6689
        %v6716 = vmul.f32 %v6556, %v6690
        %v6717 = vmul.f32 %v6557, %v6690
        %v6718 = vmul.f32 %v6558, %v6691
        %v6719 = vmul.f32 %v6559, %v6691
        %v6720 = vmul.f32 %v6560, %v6692
        %v6721 = vmul.f32 %v6561, %v6692
        %v6722 = vmul.f32 %v6562, %v6693
        %v6723 = vmul.f32 %v6563, %v6693
        %v6724 = vmul.f32 %v6564, %v6694
        %v6725 = vmul.f32 %v6565, %v6694
        %v6726 = vmul.f32 %v6566, %v6695
        %v6727 = vmul.f32 %v6567, %v6695
        %v6729 = vlaneseq
        %v6730 = vshrl.u32 %v6729, 7
        %v6731 = vsub.s32 0, %v6730
        %v6732 = vrot.slane %v6470, %v6731
        %v6733 = vlaneseq
        %v6734 = vshrl.u32 %v6733, 7
        %v6735 = vsub.s32 1, %v6734
        %v6736 = vrot.slane %v6470, %v6735
        %v6739 = vmul.f32 %v6696, %v6732
        %v6740 = vmul.f32 %v6697, %v6736
        %v6741 = vmul.f32 %v6698, %v6732
        %v6742 = vmul.f32 %v6699, %v6736
        %v6743 = vmul.f32 %v6700, %v6732
        %v6744 = vmul.f32 %v6701, %v6736
        %v6745 = vmul.f32 %v6702, %v6732
        %v6746 = vmul.f32 %v6703, %v6736
        %v6747 = vmul.f32 %v6704, %v6732
        %v6748 = vmul.f32 %v6705, %v6736
        %v6749 = vmul.f32 %v6706, %v6732
        %v6750 = vmul.f32 %v6707, %v6736
        %v6751 = vmul.f32 %v6708, %v6732
        %v6752 = vmul.f32 %v6709, %v6736
        %v6753 = vmul.f32 %v6710, %v6732
        %v6754 = vmul.f32 %v6711, %v6736
        %v6755 = vmul.f32 %v6712, %v6732
        %v6756 = vmul.f32 %v6713, %v6736
        %v6757 = vmul.f32 %v6714, %v6732
        %v6758 = vmul.f32 %v6715, %v6736
        %v6759 = vmul.f32 %v6716, %v6732
        %v6760 = vmul.f32 %v6717, %v6736
        %v6761 = vmul.f32 %v6718, %v6732
        %v6762 = vmul.f32 %v6719, %v6736
        %v6763 = vmul.f32 %v6720, %v6732
        %v6764 = vmul.f32 %v6721, %v6736
        %v6765 = vmul.f32 %v6722, %v6732
        %v6766 = vmul.f32 %v6723, %v6736
        %v6767 = vmul.f32 %v6724, %v6732
        %v6768 = vmul.f32 %v6725, %v6736
        %v6769 = vmul.f32 %v6726, %v6732
        %v6770 = vmul.f32 %v6727, %v6736
        %v6772 = vlaneseq
        %v6773 = vshrl.u32 %v6772, 7
        %v6774 = vsub.s32 0, %v6773
        %v6775 = vrot.slane %v6471, %v6774
        %v6776 = vlaneseq
        %v6777 = vshrl.u32 %v6776, 7
        %v6778 = vsub.s32 1, %v6777
        %v6779 = vrot.slane %v6471, %v6778
        %v6782 = vadd.f32 %v6739, %v6775
        %v6783 = vadd.f32 %v6740, %v6779
        %v6784 = vadd.f32 %v6741, %v6775
        %v6785 = vadd.f32 %v6742, %v6779
        %v6786 = vadd.f32 %v6743, %v6775
        %v6787 = vadd.f32 %v6744, %v6779
        %v6788 = vadd.f32 %v6745, %v6775
        %v6789 = vadd.f32 %v6746, %v6779
        %v6790 = vadd.f32 %v6747, %v6775
        %v6791 = vadd.f32 %v6748, %v6779
        %v6792 = vadd.f32 %v6749, %v6775
        %v6793 = vadd.f32 %v6750, %v6779
        %v6794 = vadd.f32 %v6751, %v6775
        %v6795 = vadd.f32 %v6752, %v6779
        %v6796 = vadd.f32 %v6753, %v6775
        %v6797 = vadd.f32 %v6754, %v6779
        %v6798 = vadd.f32 %v6755, %v6775
        %v6799 = vadd.f32 %v6756, %v6779
        %v6800 = vadd.f32 %v6757, %v6775
        %v6801 = vadd.f32 %v6758, %v6779
        %v6802 = vadd.f32 %v6759, %v6775
        %v6803 = vadd.f32 %v6760, %v6779
        %v6804 = vadd.f32 %v6761, %v6775
        %v6805 = vadd.f32 %v6762, %v6779
        %v6806 = vadd.f32 %v6763, %v6775
        %v6807 = vadd.f32 %v6764, %v6779
        %v6808 = vadd.f32 %v6765, %v6775
        %v6809 = vadd.f32 %v6766, %v6779
        %v6810 = vadd.f32 %v6767, %v6775
        %v6811 = vadd.f32 %v6768, %v6779
        %v6812 = vadd.f32 %v6769, %v6775
        %v6813 = vadd.f32 %v6770, %v6779
        %6814 = vst [vmem:[%s543] sm:$0xff] %v6782
        %6815 = vst [vmem:[%s543 + $0x8] sm:$0xff] %v6783
        %6816 = vst [vmem:[%s543 + $0x10] sm:$0xff] %v6784
        %6817 = vst [vmem:[%s543 + $0x18] sm:$0xff] %v6785
        %6818 = vst [vmem:[%s543 + $0x20] sm:$0xff] %v6786
        %6819 = vst [vmem:[%s543 + $0x28] sm:$0xff] %v6787
        %6820 = vst [vmem:[%s543 + $0x30] sm:$0xff] %v6788
        %6821 = vst [vmem:[%s543 + $0x38] sm:$0xff] %v6789
        %6822 = vst [vmem:[%s543 + $0x40] sm:$0xff] %v6790
        %6823 = vst [vmem:[%s543 + $0x48] sm:$0xff] %v6791
        %6824 = vst [vmem:[%s543 + $0x50] sm:$0xff] %v6792
        %6825 = vst [vmem:[%s543 + $0x58] sm:$0xff] %v6793
        %6826 = vst [vmem:[%s543 + $0x60] sm:$0xff] %v6794
        %6827 = vst [vmem:[%s543 + $0x68] sm:$0xff] %v6795
        %6828 = vst [vmem:[%s543 + $0x70] sm:$0xff] %v6796
        %6829 = vst [vmem:[%s543 + $0x78] sm:$0xff] %v6797
        %6830 = vst [vmem:[%s543 + $0x80] sm:$0xff] %v6798
        %6831 = vst [vmem:[%s543 + $0x88] sm:$0xff] %v6799
        %6832 = vst [vmem:[%s543 + $0x90] sm:$0xff] %v6800
        %6833 = vst [vmem:[%s543 + $0x98] sm:$0xff] %v6801
        %6834 = vst [vmem:[%s543 + $0xa0] sm:$0xff] %v6802
        %6835 = vst [vmem:[%s543 + $0xa8] sm:$0xff] %v6803
        %6836 = vst [vmem:[%s543 + $0xb0] sm:$0xff] %v6804
        %6837 = vst [vmem:[%s543 + $0xb8] sm:$0xff] %v6805
        %6838 = vst [vmem:[%s543 + $0xc0] sm:$0xff] %v6806
        %6839 = vst [vmem:[%s543 + $0xc8] sm:$0xff] %v6807
        %6840 = vst [vmem:[%s543 + $0xd0] sm:$0xff] %v6808
        %6841 = vst [vmem:[%s543 + $0xd8] sm:$0xff] %v6809
        %6842 = vst [vmem:[%s543 + $0xe0] sm:$0xff] %v6810
        %6843 = vst [vmem:[%s543 + $0xe8] sm:$0xff] %v6811
        %6844 = vst [vmem:[%s543 + $0xf0] sm:$0xff] %v6812
        %6845 = vst [vmem:[%s543 + $0xf8] sm:$0xff] %v6813
        %s6846 = sand.u32 %s333, 1
        %s6847 = scalar_lea.sflag [#allocation5], %s6846
        %s6848 = sand.u32 %s333, 1
        %s6849 = smul.addr %s6848, 256
        %s6850 = scalar_lea.vmem [#allocation14], %s6849
        // Predicated region
        $region101: #{tpu_custom_call.1} parent=71 // pred_check
          %p6851 = pneg %p343
        $region102: #{tpu_custom_call.1} parent=71 // pred_check_branch
          %6853 = sbr.rel (%p6851) target = $region104
        $region103: #{tpu_custom_call.1} parent=71 // pred_region
          %s6854 = smul.u32 16, %s38
          %s6856 = ssub.s32 4096, 4096
          %6857 = vsyncadd %s6847, %s6856
          %s6858 = smul.addr %s6854, 2
          %s6859 = smul.addr %s37, 64
          %s6860 = sadd.s32 %s6858, %s6859
          %s6861 = smul.addr %s6860, 128
          %s6862 = scalar_lea.hbm %s13, %s6861
          %s6863 = sshll.u32 %s6850, 4
          %s6864 = int_to_ptr.vmem [resolvable:$true] %s6863
          %6869 = dma.vmem_to_hbm [thread:$0]  %s6864, 4096, %s6862, %s6847, 256, 256, 16
        $region104: #{tpu_custom_call.1} parent=71 // pred_fallthru
          _
      $region72: #{tpu_custom_call.1} parent=5 // pred_fallthru
        _
      %p6870 = scmp.le.s32.totalorder 2, %s28
      // Predicated region
      $region105: #{tpu_custom_call.1} parent=5 // pred_check
        %p6871 = pneg %p6870
      $region106: #{tpu_custom_call.1} parent=5 // pred_check_branch
        %6873 = sbr.rel (%p6871) target = $region108
      $region107: #{tpu_custom_call.1} parent=5 // pred_region
        %s6874 = ssub.s32 %s28, 2
        // Predicated region
        $region109: #{tpu_custom_call.1} parent=107 // pred_check
          %p6875 = pneg %p349
        $region110: #{tpu_custom_call.1} parent=107 // pred_check_branch
          %6877 = sbr.rel (%p6875) target = $region112
        $region111: #{tpu_custom_call.1} parent=107 // pred_region
          %s6878 = sand.u32 %s334, 1
          %s6879 = scalar_lea.sflag [#allocation5], %s6878
          %s6880 = sand.u32 %s334, 1
          %s6881 = smul.addr %s6880, 256
          %s6882 = scalar_lea.vmem [#allocation14], %s6881
          %6883 = dma.done %s6879, 4096
        $region112: #{tpu_custom_call.1} parent=107 // pred_fallthru
          _
      $region108: #{tpu_custom_call.1} parent=5 // pred_fallthru
        _
    $region6: #{tpu_custom_call.1} parent=1 // loop_footer
      %s32 = sadd.s32 1, %s28
    $region7: #{tpu_custom_call.1} parent=1 // loop_footer_branch
      %27 = sbr.rel target = $region3
    $region8: #{tpu_custom_call.1} parent=1 // loop_exit
      _
    %6884 = vsyncpa [#allocation4], 1
    %s6885 = scalar_lea.sflag [#allocation4], 1
    %6886 = vsyncpa %s6885, 1
    %6887 = vsyncpa [#allocation7], 1
    %6888 = vsyncpa [#allocation10], 1
    %6889 = vsyncpa [#allocation13], 1
    %6890 = vsyncpa [#allocation5], 1
    %s6891 = scalar_lea.sflag [#allocation5], 1
    %6892 = vsyncpa %s6891, 1

</llo_original>
